<compile_context>
chip_gen: v7x
topology: tpu7x:2x2x1
jax: 0.10.0
libtpu: 0.0.40
codegen_flags: <defaults>
</compile_context>

<pallas_src>
import functools

import jax
import jax.numpy as jnp
from jax.experimental import pallas as pl
from jax.experimental.pallas import tpu as pltpu

BN_EPS = 1e-5


def _two_convbn_kernel(x_ref, w1_ref, s1_ref, b1_ref, w2_ref, s2_ref, b2_ref,
                       out_ref, mid_ref, pad1_ref, pad2_ref, *, H, W):
    """Fused conv3x3+BN+ReLU -> conv3x3+BN+ReLU for one batch element.

    x_ref:   (1, N, Cin)     channels-last, N = H*W (row-major h*W + w)
    w1_ref:  (9, Cin, Cmid)  per-tap weights, tap k = ky*3 + kx
    s1/b1:   (1, Cmid)       folded BN1 scale / shift (conv1 bias folded in)
    w2_ref:  (9, Cmid, Cout)
    s2/b2:   (1, Cout)
    out_ref: (1, N, Cout)    final feature (channels-last)
    mid_ref: (1, N, Cmid)    intermediate feature (after first BN+ReLU)
    pad1/2:  VMEM scratch, (N + 2*(W+1), C) zero-padded flat buffers
    """
    N = H * W
    pad = W + 1

    # Column index of each flattened spatial position, for masking the
    # horizontal (dx = +/-1) taps that would otherwise read the adjacent row.
    col = jax.lax.broadcasted_iota(jnp.int32, (N, 1), 0) % W
    mask_l = col > 0          # dx = -1 neighbour exists
    mask_r = col < (W - 1)    # dx = +1 neighbour exists

    def conv3x3(pad_ref, w_ref, n_out):
        acc = jnp.zeros((N, n_out), jnp.float32)
        for k in range(9):                     # static unroll: 9 MXU dots
            dy, dx = k // 3 - 1, k % 3 - 1
            off = pad + dy * W + dx            # static slice offset
            patch = pad_ref[pl.ds(off, N), :]  # (N, n_in)
            if dx == -1:
                patch = jnp.where(mask_l, patch, 0.0)
            elif dx == 1:
                patch = jnp.where(mask_r, patch, 0.0)
            acc = acc + jnp.dot(patch, w_ref[k],
                                preferred_element_type=jnp.float32)
        return acc

    cmid = w1_ref.shape[2]
    cout = w2_ref.shape[2]

    # ---- stage 1: conv1 + BN1 + ReLU1 ----
    pad1_ref[...] = jnp.zeros_like(pad1_ref)
    pad1_ref[pl.ds(pad, N), :] = x_ref[0]
    feat1 = conv3x3(pad1_ref, w1_ref, cmid)
    feat1 = jnp.maximum(feat1 * s1_ref[...] + b1_ref[...], 0.0)
    mid_ref[0] = feat1.astype(mid_ref.dtype)

    # ---- stage 2: conv2 + BN2 + ReLU2 (intermediate never leaves VMEM) ----
    pad2_ref[...] = jnp.zeros_like(pad2_ref)
    pad2_ref[pl.ds(pad, N), :] = feat1
    feat2 = conv3x3(pad2_ref, w2_ref, cout)
    feat2 = jnp.maximum(feat2 * s2_ref[...] + b2_ref[...], 0.0)
    out_ref[0] = feat2.astype(out_ref.dtype)


def two_conv_bn_rule_forward(x, params, mid=False):
    """x: (B, Cin, H, W) NCHW.  params: conv/BN parameters (see __main__)."""
    B, Cin, H, W = x.shape
    Cmid = params["w1"].shape[0]
    Cout = params["w2"].shape[0]
    N = H * W

    # TODO(synk): BatchNorm is implemented in eval mode (running statistics
    # folded into a per-channel scale/shift); training-mode batch statistics
    # are not computed in-kernel.
    def fold(w, b, gamma, beta, mean, var):
        # (O, I, 3, 3) -> (9, I, O) with tap order k = ky*3 + kx.
        wt = jnp.transpose(w, (2, 3, 1, 0)).reshape(9, w.shape[1], w.shape[0])
        scale = gamma * jax.lax.rsqrt(var + BN_EPS)
        shift = (b - mean) * scale + beta
        return (wt.astype(jnp.float32),
                scale.reshape(1, -1).astype(jnp.float32),
                shift.reshape(1, -1).astype(jnp.float32))

    w1, s1, b1 = fold(params["w1"], params["b1"], params["g1"],
                      params["beta1"], params["m1"], params["v1"])
    w2, s2, b2 = fold(params["w2"], params["b2"], params["g2"],
                      params["beta2"], params["m2"], params["v2"])

    # Channels-last flattened spatial layout for MXU-friendly matmuls.
    x_flat = x.reshape(B, Cin, N).transpose(0, 2, 1).astype(jnp.float32)

    # Pad the input-channel axis to a sublane multiple for clean layouts.
    cin_p = max(8, -(-Cin // 8) * 8)
    if cin_p != Cin:
        x_flat = jnp.pad(x_flat, ((0, 0), (0, 0), (0, cin_p - Cin)))
        w1 = jnp.pad(w1, ((0, 0), (0, cin_p - Cin), (0, 0)))

    kernel = functools.partial(_two_convbn_kernel, H=H, W=W)
    out, feat_mid = pl.pallas_call(
        kernel,
        out_shape=(jax.ShapeDtypeStruct((B, N, Cout), jnp.float32),
                   jax.ShapeDtypeStruct((B, N, Cmid), jnp.float32)),
        grid_spec=pltpu.PrefetchScalarGridSpec(
            num_scalar_prefetch=0,
            grid=(B,),
            in_specs=[
                pl.BlockSpec((1, N, cin_p), lambda i: (i, 0, 0)),
                pl.BlockSpec((9, cin_p, Cmid), lambda i: (0, 0, 0)),
                pl.BlockSpec((1, Cmid), lambda i: (0, 0)),
                pl.BlockSpec((1, Cmid), lambda i: (0, 0)),
                pl.BlockSpec((9, Cmid, Cout), lambda i: (0, 0, 0)),
                pl.BlockSpec((1, Cout), lambda i: (0, 0)),
                pl.BlockSpec((1, Cout), lambda i: (0, 0)),
            ],
            out_specs=[
                pl.BlockSpec((1, N, Cout), lambda i: (i, 0, 0)),
                pl.BlockSpec((1, N, Cmid), lambda i: (i, 0, 0)),
            ],
            scratch_shapes=[
                pltpu.VMEM((N + 2 * (W + 1), cin_p), jnp.float32),
                pltpu.VMEM((N + 2 * (W + 1), Cmid), jnp.float32),
            ],
        ),
        compiler_params=pltpu.CompilerParams(
            dimension_semantics=("parallel",)),
    )(x_flat, w1, s1, b1, w2, s2, b2)

    out_nchw = out.transpose(0, 2, 1).reshape(B, Cout, H, W)
    if mid:
        mid_nchw = feat_mid.transpose(0, 2, 1).reshape(B, Cmid, H, W)
        return out_nchw, mid_nchw
    return out_nchw


def two_conv_bn_rule_reference(x, params, mid=False):
    """Plain-JAX reference mirroring the PyTorch forward (eval-mode BN)."""
    def stage(v, w, b, gamma, beta, mean, var):
        y = jax.lax.conv_general_dilated(
            v, w, window_strides=(1, 1), padding=((1, 1), (1, 1)),
            dimension_numbers=("NCHW", "OIHW", "NCHW"))
        y = y + b[None, :, None, None]
        y = (y - mean[None, :, None, None]) * jax.lax.rsqrt(
            var[None, :, None, None] + BN_EPS)
        y = gamma[None, :, None, None] * y + beta[None, :, None, None]
        return jnp.maximum(y, 0.0)

    f1 = stage(x, params["w1"], params["b1"], params["g1"], params["beta1"],
               params["m1"], params["v1"])
    f2 = stage(f1, params["w2"], params["b2"], params["g2"], params["beta2"],
               params["m2"], params["v2"])
    return (f2, f1) if mid else f2


if __name__ == "__main__":
    B, Cin, Cout, H, W = 2, 4, 64, 16, 16   # module default out_chan=64
    key = jax.random.PRNGKey(0)
    keys = jax.random.split(key, 13)

    x = jax.random.normal(keys[0], (B, Cin, H, W), dtype=jnp.float32)
    params = {
        "w1": 0.1 * jax.random.normal(keys[1], (Cout, Cin, 3, 3), jnp.float32),
        "b1": 0.01 * jax.random.normal(keys[2], (Cout,), jnp.float32),
        "g1": 1.0 + 0.1 * jax.random.normal(keys[3], (Cout,), jnp.float32),
        "beta1": 0.1 * jax.random.normal(keys[4], (Cout,), jnp.float32),
        "m1": 0.1 * jax.random.normal(keys[5], (Cout,), jnp.float32),
        "v1": 0.5 + jnp.abs(jax.random.normal(keys[6], (Cout,), jnp.float32)),
        "w2": 0.05 * jax.random.normal(keys[7], (Cout, Cout, 3, 3), jnp.float32),
        "b2": 0.01 * jax.random.normal(keys[8], (Cout,), jnp.float32),
        "g2": 1.0 + 0.1 * jax.random.normal(keys[9], (Cout,), jnp.float32),
        "beta2": 0.1 * jax.random.normal(keys[10], (Cout,), jnp.float32),
        "m2": 0.1 * jax.random.normal(keys[11], (Cout,), jnp.float32),
        "v2": 0.5 + jnp.abs(jax.random.normal(keys[12], (Cout,), jnp.float32)),
    }

    out, feat_mid = two_conv_bn_rule_forward(x, params, mid=True)
    out = jax.block_until_ready(out)
    feat_mid = jax.block_until_ready(feat_mid)

    ref_out, ref_mid = two_conv_bn_rule_reference(x, params, mid=True)
    assert out.shape == (B, Cout, H, W) and feat_mid.shape == (B, Cout, H, W)
    assert jnp.allclose(out, ref_out, atol=1e-4, rtol=1e-4), (
        f"max abs diff {jnp.max(jnp.abs(out - ref_out))}")
    assert jnp.allclose(feat_mid, ref_mid, atol=1e-4, rtol=1e-4), (
        f"max abs diff (mid) {jnp.max(jnp.abs(feat_mid - ref_mid))}")

    print("KERNEL_OK")
</pallas_src>

<mosaic_0001>
module attributes {stable_mosaic.version = 11 : i64} {
  func.func @_two_convbn_kernel(%arg0: i32, %arg1: memref<1x256x8xf32, #tpu.memory_space<vmem>>, %arg2: memref<9x8x64xf32, #tpu.memory_space<vmem>>, %arg3: memref<1x64xf32, #tpu.memory_space<vmem>>, %arg4: memref<1x64xf32, #tpu.memory_space<vmem>>, %arg5: memref<9x64x64xf32, #tpu.memory_space<vmem>>, %arg6: memref<1x64xf32, #tpu.memory_space<vmem>>, %arg7: memref<1x64xf32, #tpu.memory_space<vmem>>, %arg8: memref<1x256x64xf32, #tpu.memory_space<vmem>>, %arg9: memref<1x256x64xf32, #tpu.memory_space<vmem>>, %arg10: memref<290x8xf32, #tpu.memory_space<vmem>>, %arg11: memref<290x64xf32, #tpu.memory_space<vmem>>) attributes {dimension_semantics = [#tpu.dimension_semantics<parallel>], iteration_bounds = array<i64: 2>, scalar_prefetch = 0 : i64, scratch_operands = 2 : i64, tpu.core_type = #tpu.core_type<tc>, window_params = [{transform_indices = @transform_0, window_bounds = array<i64: 1, 256, 8>}, {pipeline_mode = #tpu.pipeline_mode<synchronous>, transform_indices = @transform_1, window_bounds = array<i64: 9, 8, 64>}, {pipeline_mode = #tpu.pipeline_mode<synchronous>, transform_indices = @transform_2, window_bounds = array<i64: 1, 64>}, {pipeline_mode = #tpu.pipeline_mode<synchronous>, transform_indices = @transform_3, window_bounds = array<i64: 1, 64>}, {pipeline_mode = #tpu.pipeline_mode<synchronous>, transform_indices = @transform_4, window_bounds = array<i64: 9, 64, 64>}, {pipeline_mode = #tpu.pipeline_mode<synchronous>, transform_indices = @transform_5, window_bounds = array<i64: 1, 64>}, {pipeline_mode = #tpu.pipeline_mode<synchronous>, transform_indices = @transform_6, window_bounds = array<i64: 1, 64>}, {transform_indices = @transform_7, window_bounds = array<i64: 1, 256, 64>}, {transform_indices = @transform_8, window_bounds = array<i64: 1, 256, 64>}]} {
    %0 = tpu.iota {dimensions = array<i32: 0>} : vector<256x1xi32>
    %c16_i32 = arith.constant 16 : i32
    %c0_i32 = arith.constant 0 : i32
    %1 = arith.cmpi eq, %c16_i32, %c0_i32 : i32
    %c1_i32 = arith.constant 1 : i32
    %2 = arith.select %1, %c1_i32, %c16_i32 : i32
    %3 = vector.broadcast %2 : i32 to vector<256x1xi32>
    %4 = arith.remsi %0, %3 : vector<256x1xi32>
    %c0_i32_0 = arith.constant 0 : i32
    %5 = vector.broadcast %c0_i32_0 : i32 to vector<256x1xi32>
    %6 = arith.cmpi ne, %4, %5 : vector<256x1xi32>
    %c0_i32_1 = arith.constant 0 : i32
    %7 = vector.broadcast %c0_i32_1 : i32 to vector<256x1xi32>
    %8 = arith.cmpi slt, %4, %7 : vector<256x1xi32>
    %c0_i32_2 = arith.constant 0 : i32
    %9 = arith.cmpi slt, %2, %c0_i32_2 : i32
    %10 = vector.broadcast %9 : i1 to vector<256x1xi1>
    %11 = vector.broadcast %10 : vector<256x1xi1> to vector<256x1xi1>
    %12 = arith.xori %8, %11 : vector<256x1xi1>
    %13 = arith.andi %12, %6 : vector<256x1xi1>
    %14 = vector.broadcast %2 : i32 to vector<256x1xi32>
    %15 = arith.addi %4, %14 : vector<256x1xi32>
    %16 = arith.select %13, %15, %4 : vector<256x1xi1>, vector<256x1xi32>
    %c0_i32_3 = arith.constant 0 : i32
    %17 = vector.broadcast %c0_i32_3 : i32 to vector<256x1xi32>
    %18 = arith.cmpi sgt, %16, %17 : vector<256x1xi32>
    %c15_i32 = arith.constant 15 : i32
    %19 = vector.broadcast %c15_i32 : i32 to vector<256x1xi32>
    %20 = arith.cmpi slt, %16, %19 : vector<256x1xi32>
    %cst = arith.constant 0.000000e+00 : f32
    %21 = vector.broadcast %cst : f32 to vector<290x8xf32>
    %c0 = arith.constant 0 : index
    %c0_4 = arith.constant 0 : index
    %22 = vector.load %arg10[%c0, %c0_4] : memref<290x8xf32, #tpu.memory_space<vmem>>, vector<290x8xf32>
    tpu.vector_store %arg10[%c0, %c0_4], %21 {strides = array<i32>} : memref<290x8xf32, #tpu.memory_space<vmem>>, vector<290x8xf32>,
    %c0_5 = arith.constant 0 : index
    %c0_6 = arith.constant 0 : index
    %c0_7 = arith.constant 0 : index
    %23 = vector.load %arg1[%c0_5, %c0_6, %c0_7] : memref<1x256x8xf32, #tpu.memory_space<vmem>>, vector<1x256x8xf32>
    %24 = vector.shape_cast %23 : vector<1x256x8xf32> to vector<256x8xf32>
    %c17 = arith.constant 17 : index
    %c0_8 = arith.constant 0 : index
    %25 = vector.load %arg10[%c17, %c0_8] : memref<290x8xf32, #tpu.memory_space<vmem>>, vector<256x8xf32>
    tpu.vector_store %arg10[%c17, %c0_8], %24 {strides = array<i32>} : memref<290x8xf32, #tpu.memory_space<vmem>>, vector<256x8xf32>,
    %cst_9 = arith.constant 0.000000e+00 : f32
    %26 = vector.broadcast %cst_9 : f32 to vector<256x64xf32>
    %c0_10 = arith.constant 0 : index
    %c0_11 = arith.constant 0 : index
    %27 = vector.load %arg10[%c0_10, %c0_11] : memref<290x8xf32, #tpu.memory_space<vmem>>, vector<256x8xf32>
    %cst_12 = arith.constant 0.000000e+00 : f32
    %28 = vector.shape_cast %18 : vector<256x1xi1> to vector<256x1xi1>
    %29 = vector.broadcast %28 : vector<256x1xi1> to vector<256x8xi1>
    %30 = vector.broadcast %cst_12 : f32 to vector<256x8xf32>
    %31 = arith.select %29, %27, %30 : vector<256x8xi1>, vector<256x8xf32>
    %c0_13 = arith.constant 0 : index
    %c0_14 = arith.constant 0 : index
    %c0_15 = arith.constant 0 : index
    %32 = vector.load %arg2[%c0_13, %c0_14, %c0_15] : memref<9x8x64xf32, #tpu.memory_space<vmem>>, vector<1x8x64xf32>
    %33 = vector.shape_cast %32 : vector<1x8x64xf32> to vector<8x64xf32>
    %cst_16 = arith.constant dense<0.000000e+00> : vector<256x64xf32>
    %34 = tpu.matmul %31, %33, %cst_16 {dimension_numbers = #tpu.dot_dimension_numbers<[1], [0], [0], [1], [0, 0, 1, 1], [], []>} : vector<256x8xf32>, vector<8x64xf32>, vector<256x64xf32> -> vector<256x64xf32>
    %35 = arith.addf %26, %34 : vector<256x64xf32>
    %c1 = arith.constant 1 : index
    %c0_17 = arith.constant 0 : index
    %36 = vector.load %arg10[%c1, %c0_17] : memref<290x8xf32, #tpu.memory_space<vmem>>, vector<256x8xf32>
    %c1_18 = arith.constant 1 : index
    %c0_19 = arith.constant 0 : index
    %c0_20 = arith.constant 0 : index
    %37 = vector.load %arg2[%c1_18, %c0_19, %c0_20] : memref<9x8x64xf32, #tpu.memory_space<vmem>>, vector<1x8x64xf32>
    %38 = vector.shape_cast %37 : vector<1x8x64xf32> to vector<8x64xf32>
    %cst_21 = arith.constant dense<0.000000e+00> : vector<256x64xf32>
    %39 = tpu.matmul %36, %38, %cst_21 {dimension_numbers = #tpu.dot_dimension_numbers<[1], [0], [0], [1], [0, 0, 1, 1], [], []>} : vector<256x8xf32>, vector<8x64xf32>, vector<256x64xf32> -> vector<256x64xf32>
    %40 = arith.addf %35, %39 : vector<256x64xf32>
    %c2 = arith.constant 2 : index
    %c0_22 = arith.constant 0 : index
    %41 = vector.load %arg10[%c2, %c0_22] : memref<290x8xf32, #tpu.memory_space<vmem>>, vector<256x8xf32>
    %cst_23 = arith.constant 0.000000e+00 : f32
    %42 = vector.shape_cast %20 : vector<256x1xi1> to vector<256x1xi1>
    %43 = vector.broadcast %42 : vector<256x1xi1> to vector<256x8xi1>
    %44 = vector.broadcast %cst_23 : f32 to vector<256x8xf32>
    %45 = arith.select %43, %41, %44 : vector<256x8xi1>, vector<256x8xf32>
    %c2_24 = arith.constant 2 : index
    %c0_25 = arith.constant 0 : index
    %c0_26 = arith.constant 0 : index
    %46 = vector.load %arg2[%c2_24, %c0_25, %c0_26] : memref<9x8x64xf32, #tpu.memory_space<vmem>>, vector<1x8x64xf32>
    %47 = vector.shape_cast %46 : vector<1x8x64xf32> to vector<8x64xf32>
    %cst_27 = arith.constant dense<0.000000e+00> : vector<256x64xf32>
    %48 = tpu.matmul %45, %47, %cst_27 {dimension_numbers = #tpu.dot_dimension_numbers<[1], [0], [0], [1], [0, 0, 1, 1], [], []>} : vector<256x8xf32>, vector<8x64xf32>, vector<256x64xf32> -> vector<256x64xf32>
    %49 = arith.addf %40, %48 : vector<256x64xf32>
    %c16 = arith.constant 16 : index
    %c0_28 = arith.constant 0 : index
    %50 = vector.load %arg10[%c16, %c0_28] : memref<290x8xf32, #tpu.memory_space<vmem>>, vector<256x8xf32>
    %cst_29 = arith.constant 0.000000e+00 : f32
    %51 = vector.shape_cast %18 : vector<256x1xi1> to vector<256x1xi1>
    %52 = vector.broadcast %51 : vector<256x1xi1> to vector<256x8xi1>
    %53 = vector.broadcast %cst_29 : f32 to vector<256x8xf32>
    %54 = arith.select %52, %50, %53 : vector<256x8xi1>, vector<256x8xf32>
    %c3 = arith.constant 3 : index
    %c0_30 = arith.constant 0 : index
    %c0_31 = arith.constant 0 : index
    %55 = vector.load %arg2[%c3, %c0_30, %c0_31] : memref<9x8x64xf32, #tpu.memory_space<vmem>>, vector<1x8x64xf32>
    %56 = vector.shape_cast %55 : vector<1x8x64xf32> to vector<8x64xf32>
    %cst_32 = arith.constant dense<0.000000e+00> : vector<256x64xf32>
    %57 = tpu.matmul %54, %56, %cst_32 {dimension_numbers = #tpu.dot_dimension_numbers<[1], [0], [0], [1], [0, 0, 1, 1], [], []>} : vector<256x8xf32>, vector<8x64xf32>, vector<256x64xf32> -> vector<256x64xf32>
    %58 = arith.addf %49, %57 : vector<256x64xf32>
    %c17_33 = arith.constant 17 : index
    %c0_34 = arith.constant 0 : index
    %59 = vector.load %arg10[%c17_33, %c0_34] : memref<290x8xf32, #tpu.memory_space<vmem>>, vector<256x8xf32>
    %c4 = arith.constant 4 : index
    %c0_35 = arith.constant 0 : index
    %c0_36 = arith.constant 0 : index
    %60 = vector.load %arg2[%c4, %c0_35, %c0_36] : memref<9x8x64xf32, #tpu.memory_space<vmem>>, vector<1x8x64xf32>
    %61 = vector.shape_cast %60 : vector<1x8x64xf32> to vector<8x64xf32>
    %cst_37 = arith.constant dense<0.000000e+00> : vector<256x64xf32>
    %62 = tpu.matmul %59, %61, %cst_37 {dimension_numbers = #tpu.dot_dimension_numbers<[1], [0], [0], [1], [0, 0, 1, 1], [], []>} : vector<256x8xf32>, vector<8x64xf32>, vector<256x64xf32> -> vector<256x64xf32>
    %63 = arith.addf %58, %62 : vector<256x64xf32>
    %c18 = arith.constant 18 : index
    %c0_38 = arith.constant 0 : index
    %64 = vector.load %arg10[%c18, %c0_38] : memref<290x8xf32, #tpu.memory_space<vmem>>, vector<256x8xf32>
    %cst_39 = arith.constant 0.000000e+00 : f32
    %65 = vector.shape_cast %20 : vector<256x1xi1> to vector<256x1xi1>
    %66 = vector.broadcast %65 : vector<256x1xi1> to vector<256x8xi1>
    %67 = vector.broadcast %cst_39 : f32 to vector<256x8xf32>
    %68 = arith.select %66, %64, %67 : vector<256x8xi1>, vector<256x8xf32>
    %c5 = arith.constant 5 : index
    %c0_40 = arith.constant 0 : index
    %c0_41 = arith.constant 0 : index
    %69 = vector.load %arg2[%c5, %c0_40, %c0_41] : memref<9x8x64xf32, #tpu.memory_space<vmem>>, vector<1x8x64xf32>
    %70 = vector.shape_cast %69 : vector<1x8x64xf32> to vector<8x64xf32>
    %cst_42 = arith.constant dense<0.000000e+00> : vector<256x64xf32>
    %71 = tpu.matmul %68, %70, %cst_42 {dimension_numbers = #tpu.dot_dimension_numbers<[1], [0], [0], [1], [0, 0, 1, 1], [], []>} : vector<256x8xf32>, vector<8x64xf32>, vector<256x64xf32> -> vector<256x64xf32>
    %72 = arith.addf %63, %71 : vector<256x64xf32>
    %c32 = arith.constant 32 : index
    %c0_43 = arith.constant 0 : index
    %73 = vector.load %arg10[%c32, %c0_43] : memref<290x8xf32, #tpu.memory_space<vmem>>, vector<256x8xf32>
    %cst_44 = arith.constant 0.000000e+00 : f32
    %74 = vector.shape_cast %18 : vector<256x1xi1> to vector<256x1xi1>
    %75 = vector.broadcast %74 : vector<256x1xi1> to vector<256x8xi1>
    %76 = vector.broadcast %cst_44 : f32 to vector<256x8xf32>
    %77 = arith.select %75, %73, %76 : vector<256x8xi1>, vector<256x8xf32>
    %c6 = arith.constant 6 : index
    %c0_45 = arith.constant 0 : index
    %c0_46 = arith.constant 0 : index
    %78 = vector.load %arg2[%c6, %c0_45, %c0_46] : memref<9x8x64xf32, #tpu.memory_space<vmem>>, vector<1x8x64xf32>
    %79 = vector.shape_cast %78 : vector<1x8x64xf32> to vector<8x64xf32>
    %cst_47 = arith.constant dense<0.000000e+00> : vector<256x64xf32>
    %80 = tpu.matmul %77, %79, %cst_47 {dimension_numbers = #tpu.dot_dimension_numbers<[1], [0], [0], [1], [0, 0, 1, 1], [], []>} : vector<256x8xf32>, vector<8x64xf32>, vector<256x64xf32> -> vector<256x64xf32>
    %81 = arith.addf %72, %80 : vector<256x64xf32>
    %c33 = arith.constant 33 : index
    %c0_48 = arith.constant 0 : index
    %82 = vector.load %arg10[%c33, %c0_48] : memref<290x8xf32, #tpu.memory_space<vmem>>, vector<256x8xf32>
    %c7 = arith.constant 7 : index
    %c0_49 = arith.constant 0 : index
    %c0_50 = arith.constant 0 : index
    %83 = vector.load %arg2[%c7, %c0_49, %c0_50] : memref<9x8x64xf32, #tpu.memory_space<vmem>>, vector<1x8x64xf32>
    %84 = vector.shape_cast %83 : vector<1x8x64xf32> to vector<8x64xf32>
    %cst_51 = arith.constant dense<0.000000e+00> : vector<256x64xf32>
    %85 = tpu.matmul %82, %84, %cst_51 {dimension_numbers = #tpu.dot_dimension_numbers<[1], [0], [0], [1], [0, 0, 1, 1], [], []>} : vector<256x8xf32>, vector<8x64xf32>, vector<256x64xf32> -> vector<256x64xf32>
    %86 = arith.addf %81, %85 : vector<256x64xf32>
    %c34 = arith.constant 34 : index
    %c0_52 = arith.constant 0 : index
    %87 = vector.load %arg10[%c34, %c0_52] : memref<290x8xf32, #tpu.memory_space<vmem>>, vector<256x8xf32>
    %cst_53 = arith.constant 0.000000e+00 : f32
    %88 = vector.shape_cast %20 : vector<256x1xi1> to vector<256x1xi1>
    %89 = vector.broadcast %88 : vector<256x1xi1> to vector<256x8xi1>
    %90 = vector.broadcast %cst_53 : f32 to vector<256x8xf32>
    %91 = arith.select %89, %87, %90 : vector<256x8xi1>, vector<256x8xf32>
    %c8 = arith.constant 8 : index
    %c0_54 = arith.constant 0 : index
    %c0_55 = arith.constant 0 : index
    %92 = vector.load %arg2[%c8, %c0_54, %c0_55] : memref<9x8x64xf32, #tpu.memory_space<vmem>>, vector<1x8x64xf32>
    %93 = vector.shape_cast %92 : vector<1x8x64xf32> to vector<8x64xf32>
    %cst_56 = arith.constant dense<0.000000e+00> : vector<256x64xf32>
    %94 = tpu.matmul %91, %93, %cst_56 {dimension_numbers = #tpu.dot_dimension_numbers<[1], [0], [0], [1], [0, 0, 1, 1], [], []>} : vector<256x8xf32>, vector<8x64xf32>, vector<256x64xf32> -> vector<256x64xf32>
    %95 = arith.addf %86, %94 : vector<256x64xf32>
    %c0_57 = arith.constant 0 : index
    %c0_58 = arith.constant 0 : index
    %96 = vector.load %arg3[%c0_57, %c0_58] : memref<1x64xf32, #tpu.memory_space<vmem>>, vector<1x64xf32>
    %97 = vector.broadcast %96 : vector<1x64xf32> to vector<256x64xf32>
    %98 = arith.mulf %95, %97 : vector<256x64xf32>
    %c0_59 = arith.constant 0 : index
    %c0_60 = arith.constant 0 : index
    %99 = vector.load %arg4[%c0_59, %c0_60] : memref<1x64xf32, #tpu.memory_space<vmem>>, vector<1x64xf32>
    %100 = vector.broadcast %99 : vector<1x64xf32> to vector<256x64xf32>
    %101 = arith.addf %98, %100 : vector<256x64xf32>
    %cst_61 = arith.constant 0.000000e+00 : f32
    %102 = vector.broadcast %cst_61 : f32 to vector<256x64xf32>
    %103 = arith.maximumf %101, %102 : vector<256x64xf32>
    %c0_62 = arith.constant 0 : index
    %c0_63 = arith.constant 0 : index
    %c0_64 = arith.constant 0 : index
    %104 = vector.load %arg9[%c0_62, %c0_63, %c0_64] : memref<1x256x64xf32, #tpu.memory_space<vmem>>, vector<1x256x64xf32>
    %105 = vector.shape_cast %104 : vector<1x256x64xf32> to vector<256x64xf32>
    %106 = vector.shape_cast %103 : vector<256x64xf32> to vector<1x256x64xf32>
    tpu.vector_store %arg9[%c0_62, %c0_63, %c0_64], %106 {strides = array<i32>} : memref<1x256x64xf32, #tpu.memory_space<vmem>>, vector<1x256x64xf32>,
    %cst_65 = arith.constant 0.000000e+00 : f32
    %107 = vector.broadcast %cst_65 : f32 to vector<290x64xf32>
    %c0_66 = arith.constant 0 : index
    %c0_67 = arith.constant 0 : index
    %108 = vector.load %arg11[%c0_66, %c0_67] : memref<290x64xf32, #tpu.memory_space<vmem>>, vector<290x64xf32>
    tpu.vector_store %arg11[%c0_66, %c0_67], %107 {strides = array<i32>} : memref<290x64xf32, #tpu.memory_space<vmem>>, vector<290x64xf32>,
    %c17_68 = arith.constant 17 : index
    %c0_69 = arith.constant 0 : index
    %109 = vector.load %arg11[%c17_68, %c0_69] : memref<290x64xf32, #tpu.memory_space<vmem>>, vector<256x64xf32>
    tpu.vector_store %arg11[%c17_68, %c0_69], %103 {strides = array<i32>} : memref<290x64xf32, #tpu.memory_space<vmem>>, vector<256x64xf32>,
    %cst_70 = arith.constant 0.000000e+00 : f32
    %110 = vector.broadcast %cst_70 : f32 to vector<256x64xf32>
    %c0_71 = arith.constant 0 : index
    %c0_72 = arith.constant 0 : index
    %111 = vector.load %arg11[%c0_71, %c0_72] : memref<290x64xf32, #tpu.memory_space<vmem>>, vector<256x64xf32>
    %cst_73 = arith.constant 0.000000e+00 : f32
    %112 = vector.shape_cast %18 : vector<256x1xi1> to vector<256x1xi1>
    %113 = vector.broadcast %112 : vector<256x1xi1> to vector<256x64xi1>
    %114 = vector.broadcast %cst_73 : f32 to vector<256x64xf32>
    %115 = arith.select %113, %111, %114 : vector<256x64xi1>, vector<256x64xf32>
    %c0_74 = arith.constant 0 : index
    %c0_75 = arith.constant 0 : index
    %c0_76 = arith.constant 0 : index
    %116 = vector.load %arg5[%c0_74, %c0_75, %c0_76] : memref<9x64x64xf32, #tpu.memory_space<vmem>>, vector<1x64x64xf32>
    %117 = vector.shape_cast %116 : vector<1x64x64xf32> to vector<64x64xf32>
    %cst_77 = arith.constant dense<0.000000e+00> : vector<256x64xf32>
    %118 = tpu.matmul %115, %117, %cst_77 {dimension_numbers = #tpu.dot_dimension_numbers<[1], [0], [0], [1], [0, 0, 1, 1], [], []>} : vector<256x64xf32>, vector<64x64xf32>, vector<256x64xf32> -> vector<256x64xf32>
    %119 = arith.addf %110, %118 : vector<256x64xf32>
    %c1_78 = arith.constant 1 : index
    %c0_79 = arith.constant 0 : index
    %120 = vector.load %arg11[%c1_78, %c0_79] : memref<290x64xf32, #tpu.memory_space<vmem>>, vector<256x64xf32>
    %c1_80 = arith.constant 1 : index
    %c0_81 = arith.constant 0 : index
    %c0_82 = arith.constant 0 : index
    %121 = vector.load %arg5[%c1_80, %c0_81, %c0_82] : memref<9x64x64xf32, #tpu.memory_space<vmem>>, vector<1x64x64xf32>
    %122 = vector.shape_cast %121 : vector<1x64x64xf32> to vector<64x64xf32>
    %cst_83 = arith.constant dense<0.000000e+00> : vector<256x64xf32>
    %123 = tpu.matmul %120, %122, %cst_83 {dimension_numbers = #tpu.dot_dimension_numbers<[1], [0], [0], [1], [0, 0, 1, 1], [], []>} : vector<256x64xf32>, vector<64x64xf32>, vector<256x64xf32> -> vector<256x64xf32>
    %124 = arith.addf %119, %123 : vector<256x64xf32>
    %c2_84 = arith.constant 2 : index
    %c0_85 = arith.constant 0 : index
    %125 = vector.load %arg11[%c2_84, %c0_85] : memref<290x64xf32, #tpu.memory_space<vmem>>, vector<256x64xf32>
    %cst_86 = arith.constant 0.000000e+00 : f32
    %126 = vector.shape_cast %20 : vector<256x1xi1> to vector<256x1xi1>
    %127 = vector.broadcast %126 : vector<256x1xi1> to vector<256x64xi1>
    %128 = vector.broadcast %cst_86 : f32 to vector<256x64xf32>
    %129 = arith.select %127, %125, %128 : vector<256x64xi1>, vector<256x64xf32>
    %c2_87 = arith.constant 2 : index
    %c0_88 = arith.constant 0 : index
    %c0_89 = arith.constant 0 : index
    %130 = vector.load %arg5[%c2_87, %c0_88, %c0_89] : memref<9x64x64xf32, #tpu.memory_space<vmem>>, vector<1x64x64xf32>
    %131 = vector.shape_cast %130 : vector<1x64x64xf32> to vector<64x64xf32>
    %cst_90 = arith.constant dense<0.000000e+00> : vector<256x64xf32>
    %132 = tpu.matmul %129, %131, %cst_90 {dimension_numbers = #tpu.dot_dimension_numbers<[1], [0], [0], [1], [0, 0, 1, 1], [], []>} : vector<256x64xf32>, vector<64x64xf32>, vector<256x64xf32> -> vector<256x64xf32>
    %133 = arith.addf %124, %132 : vector<256x64xf32>
    %c16_91 = arith.constant 16 : index
    %c0_92 = arith.constant 0 : index
    %134 = vector.load %arg11[%c16_91, %c0_92] : memref<290x64xf32, #tpu.memory_space<vmem>>, vector<256x64xf32>
    %cst_93 = arith.constant 0.000000e+00 : f32
    %135 = vector.shape_cast %18 : vector<256x1xi1> to vector<256x1xi1>
    %136 = vector.broadcast %135 : vector<256x1xi1> to vector<256x64xi1>
    %137 = vector.broadcast %cst_93 : f32 to vector<256x64xf32>
    %138 = arith.select %136, %134, %137 : vector<256x64xi1>, vector<256x64xf32>
    %c3_94 = arith.constant 3 : index
    %c0_95 = arith.constant 0 : index
    %c0_96 = arith.constant 0 : index
    %139 = vector.load %arg5[%c3_94, %c0_95, %c0_96] : memref<9x64x64xf32, #tpu.memory_space<vmem>>, vector<1x64x64xf32>
    %140 = vector.shape_cast %139 : vector<1x64x64xf32> to vector<64x64xf32>
    %cst_97 = arith.constant dense<0.000000e+00> : vector<256x64xf32>
    %141 = tpu.matmul %138, %140, %cst_97 {dimension_numbers = #tpu.dot_dimension_numbers<[1], [0], [0], [1], [0, 0, 1, 1], [], []>} : vector<256x64xf32>, vector<64x64xf32>, vector<256x64xf32> -> vector<256x64xf32>
    %142 = arith.addf %133, %141 : vector<256x64xf32>
    %c17_98 = arith.constant 17 : index
    %c0_99 = arith.constant 0 : index
    %143 = vector.load %arg11[%c17_98, %c0_99] : memref<290x64xf32, #tpu.memory_space<vmem>>, vector<256x64xf32>
    %c4_100 = arith.constant 4 : index
    %c0_101 = arith.constant 0 : index
    %c0_102 = arith.constant 0 : index
    %144 = vector.load %arg5[%c4_100, %c0_101, %c0_102] : memref<9x64x64xf32, #tpu.memory_space<vmem>>, vector<1x64x64xf32>
    %145 = vector.shape_cast %144 : vector<1x64x64xf32> to vector<64x64xf32>
    %cst_103 = arith.constant dense<0.000000e+00> : vector<256x64xf32>
    %146 = tpu.matmul %143, %145, %cst_103 {dimension_numbers = #tpu.dot_dimension_numbers<[1], [0], [0], [1], [0, 0, 1, 1], [], []>} : vector<256x64xf32>, vector<64x64xf32>, vector<256x64xf32> -> vector<256x64xf32>
    %147 = arith.addf %142, %146 : vector<256x64xf32>
    %c18_104 = arith.constant 18 : index
    %c0_105 = arith.constant 0 : index
    %148 = vector.load %arg11[%c18_104, %c0_105] : memref<290x64xf32, #tpu.memory_space<vmem>>, vector<256x64xf32>
    %cst_106 = arith.constant 0.000000e+00 : f32
    %149 = vector.shape_cast %20 : vector<256x1xi1> to vector<256x1xi1>
    %150 = vector.broadcast %149 : vector<256x1xi1> to vector<256x64xi1>
    %151 = vector.broadcast %cst_106 : f32 to vector<256x64xf32>
    %152 = arith.select %150, %148, %151 : vector<256x64xi1>, vector<256x64xf32>
    %c5_107 = arith.constant 5 : index
    %c0_108 = arith.constant 0 : index
    %c0_109 = arith.constant 0 : index
    %153 = vector.load %arg5[%c5_107, %c0_108, %c0_109] : memref<9x64x64xf32, #tpu.memory_space<vmem>>, vector<1x64x64xf32>
    %154 = vector.shape_cast %153 : vector<1x64x64xf32> to vector<64x64xf32>
    %cst_110 = arith.constant dense<0.000000e+00> : vector<256x64xf32>
    %155 = tpu.matmul %152, %154, %cst_110 {dimension_numbers = #tpu.dot_dimension_numbers<[1], [0], [0], [1], [0, 0, 1, 1], [], []>} : vector<256x64xf32>, vector<64x64xf32>, vector<256x64xf32> -> vector<256x64xf32>
    %156 = arith.addf %147, %155 : vector<256x64xf32>
    %c32_111 = arith.constant 32 : index
    %c0_112 = arith.constant 0 : index
    %157 = vector.load %arg11[%c32_111, %c0_112] : memref<290x64xf32, #tpu.memory_space<vmem>>, vector<256x64xf32>
    %cst_113 = arith.constant 0.000000e+00 : f32
    %158 = vector.shape_cast %18 : vector<256x1xi1> to vector<256x1xi1>
    %159 = vector.broadcast %158 : vector<256x1xi1> to vector<256x64xi1>
    %160 = vector.broadcast %cst_113 : f32 to vector<256x64xf32>
    %161 = arith.select %159, %157, %160 : vector<256x64xi1>, vector<256x64xf32>
    %c6_114 = arith.constant 6 : index
    %c0_115 = arith.constant 0 : index
    %c0_116 = arith.constant 0 : index
    %162 = vector.load %arg5[%c6_114, %c0_115, %c0_116] : memref<9x64x64xf32, #tpu.memory_space<vmem>>, vector<1x64x64xf32>
    %163 = vector.shape_cast %162 : vector<1x64x64xf32> to vector<64x64xf32>
    %cst_117 = arith.constant dense<0.000000e+00> : vector<256x64xf32>
    %164 = tpu.matmul %161, %163, %cst_117 {dimension_numbers = #tpu.dot_dimension_numbers<[1], [0], [0], [1], [0, 0, 1, 1], [], []>} : vector<256x64xf32>, vector<64x64xf32>, vector<256x64xf32> -> vector<256x64xf32>
    %165 = arith.addf %156, %164 : vector<256x64xf32>
    %c33_118 = arith.constant 33 : index
    %c0_119 = arith.constant 0 : index
    %166 = vector.load %arg11[%c33_118, %c0_119] : memref<290x64xf32, #tpu.memory_space<vmem>>, vector<256x64xf32>
    %c7_120 = arith.constant 7 : index
    %c0_121 = arith.constant 0 : index
    %c0_122 = arith.constant 0 : index
    %167 = vector.load %arg5[%c7_120, %c0_121, %c0_122] : memref<9x64x64xf32, #tpu.memory_space<vmem>>, vector<1x64x64xf32>
    %168 = vector.shape_cast %167 : vector<1x64x64xf32> to vector<64x64xf32>
    %cst_123 = arith.constant dense<0.000000e+00> : vector<256x64xf32>
    %169 = tpu.matmul %166, %168, %cst_123 {dimension_numbers = #tpu.dot_dimension_numbers<[1], [0], [0], [1], [0, 0, 1, 1], [], []>} : vector<256x64xf32>, vector<64x64xf32>, vector<256x64xf32> -> vector<256x64xf32>
    %170 = arith.addf %165, %169 : vector<256x64xf32>
    %c34_124 = arith.constant 34 : index
    %c0_125 = arith.constant 0 : index
    %171 = vector.load %arg11[%c34_124, %c0_125] : memref<290x64xf32, #tpu.memory_space<vmem>>, vector<256x64xf32>
    %cst_126 = arith.constant 0.000000e+00 : f32
    %172 = vector.shape_cast %20 : vector<256x1xi1> to vector<256x1xi1>
    %173 = vector.broadcast %172 : vector<256x1xi1> to vector<256x64xi1>
    %174 = vector.broadcast %cst_126 : f32 to vector<256x64xf32>
    %175 = arith.select %173, %171, %174 : vector<256x64xi1>, vector<256x64xf32>
    %c8_127 = arith.constant 8 : index
    %c0_128 = arith.constant 0 : index
    %c0_129 = arith.constant 0 : index
    %176 = vector.load %arg5[%c8_127, %c0_128, %c0_129] : memref<9x64x64xf32, #tpu.memory_space<vmem>>, vector<1x64x64xf32>
    %177 = vector.shape_cast %176 : vector<1x64x64xf32> to vector<64x64xf32>
    %cst_130 = arith.constant dense<0.000000e+00> : vector<256x64xf32>
    %178 = tpu.matmul %175, %177, %cst_130 {dimension_numbers = #tpu.dot_dimension_numbers<[1], [0], [0], [1], [0, 0, 1, 1], [], []>} : vector<256x64xf32>, vector<64x64xf32>, vector<256x64xf32> -> vector<256x64xf32>
    %179 = arith.addf %170, %178 : vector<256x64xf32>
    %c0_131 = arith.constant 0 : index
    %c0_132 = arith.constant 0 : index
    %180 = vector.load %arg6[%c0_131, %c0_132] : memref<1x64xf32, #tpu.memory_space<vmem>>, vector<1x64xf32>
    %181 = vector.broadcast %180 : vector<1x64xf32> to vector<256x64xf32>
    %182 = arith.mulf %179, %181 : vector<256x64xf32>
    %c0_133 = arith.constant 0 : index
    %c0_134 = arith.constant 0 : index
    %183 = vector.load %arg7[%c0_133, %c0_134] : memref<1x64xf32, #tpu.memory_space<vmem>>, vector<1x64xf32>
    %184 = vector.broadcast %183 : vector<1x64xf32> to vector<256x64xf32>
    %185 = arith.addf %182, %184 : vector<256x64xf32>
    %cst_135 = arith.constant 0.000000e+00 : f32
    %186 = vector.broadcast %cst_135 : f32 to vector<256x64xf32>
    %187 = arith.maximumf %185, %186 : vector<256x64xf32>
    %c0_136 = arith.constant 0 : index
    %c0_137 = arith.constant 0 : index
    %c0_138 = arith.constant 0 : index
    %188 = vector.load %arg8[%c0_136, %c0_137, %c0_138] : memref<1x256x64xf32, #tpu.memory_space<vmem>>, vector<1x256x64xf32>
    %189 = vector.shape_cast %188 : vector<1x256x64xf32> to vector<256x64xf32>
    %190 = vector.shape_cast %187 : vector<256x64xf32> to vector<1x256x64xf32>
    tpu.vector_store %arg8[%c0_136, %c0_137, %c0_138], %190 {strides = array<i32>} : memref<1x256x64xf32, #tpu.memory_space<vmem>>, vector<1x256x64xf32>,
    return
  }
  func.func @transform_0(%arg0: i32) -> (i32, i32, i32) {
    %c0_i32 = arith.constant 0 : i32
    %c0_i32_0 = arith.constant 0 : i32
    %c0_i32_1 = arith.constant 0 : i32
    return %arg0, %c0_i32, %c0_i32_0 : i32, i32, i32
  }
  func.func @transform_1(%arg0: i32) -> (i32, i32, i32) {
    %c0_i32 = arith.constant 0 : i32
    %c0_i32_0 = arith.constant 0 : i32
    %c0_i32_1 = arith.constant 0 : i32
    %c0_i32_2 = arith.constant 0 : i32
    return %c0_i32, %c0_i32_0, %c0_i32_1 : i32, i32, i32
  }
  func.func @transform_2(%arg0: i32) -> (i32, i32) {
    %c0_i32 = arith.constant 0 : i32
    %c0_i32_0 = arith.constant 0 : i32
    %c0_i32_1 = arith.constant 0 : i32
    return %c0_i32, %c0_i32_0 : i32, i32
  }
  func.func @transform_3(%arg0: i32) -> (i32, i32) {
    %c0_i32 = arith.constant 0 : i32
    %c0_i32_0 = arith.constant 0 : i32
    %c0_i32_1 = arith.constant 0 : i32
    return %c0_i32, %c0_i32_0 : i32, i32
  }
  func.func @transform_4(%arg0: i32) -> (i32, i32, i32) {
    %c0_i32 = arith.constant 0 : i32
    %c0_i32_0 = arith.constant 0 : i32
    %c0_i32_1 = arith.constant 0 : i32
    %c0_i32_2 = arith.constant 0 : i32
    return %c0_i32, %c0_i32_0, %c0_i32_1 : i32, i32, i32
  }
  func.func @transform_5(%arg0: i32) -> (i32, i32) {
    %c0_i32 = arith.constant 0 : i32
    %c0_i32_0 = arith.constant 0 : i32
    %c0_i32_1 = arith.constant 0 : i32
    return %c0_i32, %c0_i32_0 : i32, i32
  }
  func.func @transform_6(%arg0: i32) -> (i32, i32) {
    %c0_i32 = arith.constant 0 : i32
    %c0_i32_0 = arith.constant 0 : i32
    %c0_i32_1 = arith.constant 0 : i32
    return %c0_i32, %c0_i32_0 : i32, i32
  }
  func.func @transform_7(%arg0: i32) -> (i32, i32, i32) {
    %c0_i32 = arith.constant 0 : i32
    %c0_i32_0 = arith.constant 0 : i32
    %c0_i32_1 = arith.constant 0 : i32
    return %arg0, %c0_i32, %c0_i32_0 : i32, i32, i32
  }
  func.func @transform_8(%arg0: i32) -> (i32, i32, i32) {
    %c0_i32 = arith.constant 0 : i32
    %c0_i32_0 = arith.constant 0 : i32
    %c0_i32_1 = arith.constant 0 : i32
    return %arg0, %c0_i32, %c0_i32_0 : i32, i32, i32
  }
}

</mosaic_0001>

<llo_original>
// kernel: tpu_custom_call.1
$region0: #{tpu_custom_call.1}
  #allocation0 [shape = 'u32[]', space=smem, size = 0x4, offset = 0x4, fixed_abs, tag = 'smem constant byte address 0x4 - core index']
  #allocation1 [shape = 'u32[144,128]{1,0:T(1,128)}', space=vmem, size = 0x12000, scoped, tag = 'internal scratch']
  #allocation2 [shape = 'f32[290,8]{1,0:T(8,128)}', space=vmem, size = 0x25000, scoped, tag = 'scratch operand']
  #allocation3 [shape = 'f32[290,64]{1,0:T(8,128)}', space=vmem, size = 0x25000, scoped, tag = 'scratch operand']
  %s0 = inlined_call_operand.vmem [shape: f32[2,256,8], index: 0, kind: input, shape index: {}]
  %s1 = inlined_call_operand.vmem [shape: f32[9,8,64], index: 1, kind: input, shape index: {}]
  %s2 = inlined_call_operand.vmem [shape: f32[1,64], index: 2, kind: input, shape index: {}]
  %s3 = inlined_call_operand.vmem [shape: f32[1,64], index: 3, kind: input, shape index: {}]
  %s4 = inlined_call_operand.hbm [shape: f32[9,64,64], index: 4, kind: input, shape index: {}]
  %s5 = inlined_call_operand.vmem [shape: f32[1,64], index: 5, kind: input, shape index: {}]
  %s6 = inlined_call_operand.vmem [shape: f32[1,64], index: 6, kind: input, shape index: {}]
  %s7 = inlined_call_operand.vmem [shape: f32[2,256,64], index: 7, kind: output, shape index: {0}]
  %s8 = inlined_call_operand.vmem [shape: f32[2,256,64], index: 8, kind: output, shape index: {1}]
  %9 = xla_tuple %s7, %s8
  %s10 = sld [smem:[#allocation0]]
  $region73: #{tpu_custom_call.1} parent=0
    _
  %s12 = ssub.s32 1, %s10
  %s13 = scalar_select 0, %s12, %s10
  $region1: #{tpu_custom_call.1} parent=0
    #allocation4 [shape = 'u8[294912]{0}', space=vmem, size = 0x48000, scoped, tag = 'input window, operand 4, single buffered']
    #allocation5 [shape = 's32[2]{0}', space=sflag, size = 0x8, scoped, tag = 'scoped memory for tpu_custom_call.1']
    %14 = vsyncpa [#allocation5], 0
    loop: start=0, step=1, limit=4
    $region2: #{tpu_custom_call.1} parent=1 // loop_pre_header
      _
    $region3: #{tpu_custom_call.1} parent=1 // loop_header
      %s16 = sphi 0, %s20
      %p17 = scmp.ge.s32.totalorder %s16, 4
      %s26 = sphi 0, %s28
      %s29 = sphi 0, %s26
      %s30 = sphi 0, %s29
      %s46 = sphi 0, %s30
      %s50 = sphi 0, %s50
      %s52 = sphi 0, %s50
      %s53 = sphi 0, %s52
      %s67 = sphi 0, %s53
      %s71 = sphi 0, %s71
      %s73 = sphi 0, %s71
      %s74 = sphi 0, %s73
      %s88 = sphi 0, %s74
      %s92 = sphi 0, %s92
      %s94 = sphi 0, %s92
      %s95 = sphi 0, %s94
      %s109 = sphi 0, %s95
      %s113 = sphi 0, %s113
      %s115 = sphi 0, %s113
      %s116 = sphi 0, %s115
      %s130 = sphi 0, %s116
      %s134 = sphi 0, %s134
      %s136 = sphi 0, %s134
      %s137 = sphi 0, %s136
      %s151 = sphi 0, %s137
      %s155 = sphi 0, %s155
      %s157 = sphi 0, %s155
      %s158 = sphi 0, %s157
      %s172 = sphi 0, %s158
      %s178 = sphi 0, %s180
      %s181 = sphi 0, %s178
      %s182 = sphi 0, %s181
      %s198 = sphi 0, %s182
      %s204 = sphi 0, %s206
      %s207 = sphi 0, %s204
      %s208 = sphi 0, %s207
      %s224 = sphi 0, %s208
    $region4: #{tpu_custom_call.1} parent=1 // loop_header_branch
      %19 = sbr.rel (%p17) target = $region8
    $region5: #{tpu_custom_call.1} parent=1 // loop_body
      %s21 = ssub.s32 %s16, 1
      %s22 = ssub.s32 %s16, 2
      %s23 = sadd.s32 %s16, 1
      %s24 = ssub.s32 %s16, %s23
      %p25 = scmp.eq.s32.totalorder %s24, 0
      %s27 = sadd.s32 %s26, 1
      %s28 = scalar_select %p25, %s26, %s27
      %p31 = pneg %p25
      %p32 = scmp.eq.s32.totalorder %s16, 1
      %p33 = por %p31, %p32
      %p34 = scmp.ne.s32.totalorder %s26, %s29
      %p35 = scmp.eq.s32.totalorder %s16, 0
      %p36 = por %p34, %p35
      %p37 = scmp.ne.s32.totalorder %s26, %s29
      %p38 = scmp.eq.s32.totalorder %s21, 1
      %p39 = por %p37, %p38
      %p40 = scmp.ne.s32.totalorder %s29, %s30
      %p41 = scmp.eq.s32.totalorder %s21, 0
      %p42 = por %p40, %p41
      %p43 = scmp.ne.s32.totalorder %s29, %s30
      %p44 = scmp.eq.s32.totalorder %s22, 1
      %p45 = por %p43, %p44
      %p47 = scmp.ne.s32.totalorder %s30, %s46
      %p48 = scmp.eq.s32.totalorder %s22, 0
      %p49 = por %p47, %p48
      %s51 = sadd.s32 %s50, 1
      %p54 = scmp.eq.s32.totalorder %s16, 1
      %p55 = scmp.ne.s32.totalorder %s50, %s52
      %p56 = scmp.eq.s32.totalorder %s16, 0
      %p57 = por %p55, %p56
      %p58 = scmp.ne.s32.totalorder %s50, %s52
      %p59 = scmp.eq.s32.totalorder %s21, 1
      %p60 = por %p58, %p59
      %p61 = scmp.ne.s32.totalorder %s52, %s53
      %p62 = scmp.eq.s32.totalorder %s21, 0
      %p63 = por %p61, %p62
      %p64 = scmp.ne.s32.totalorder %s52, %s53
      %p65 = scmp.eq.s32.totalorder %s22, 1
      %p66 = por %p64, %p65
      %p68 = scmp.ne.s32.totalorder %s53, %s67
      %p69 = scmp.eq.s32.totalorder %s22, 0
      %p70 = por %p68, %p69
      %s72 = sadd.s32 %s71, 1
      %p75 = scmp.eq.s32.totalorder %s16, 1
      %p76 = scmp.ne.s32.totalorder %s71, %s73
      %p77 = scmp.eq.s32.totalorder %s16, 0
      %p78 = por %p76, %p77
      %p79 = scmp.ne.s32.totalorder %s71, %s73
      %p80 = scmp.eq.s32.totalorder %s21, 1
      %p81 = por %p79, %p80
      %p82 = scmp.ne.s32.totalorder %s73, %s74
      %p83 = scmp.eq.s32.totalorder %s21, 0
      %p84 = por %p82, %p83
      %p85 = scmp.ne.s32.totalorder %s73, %s74
      %p86 = scmp.eq.s32.totalorder %s22, 1
      %p87 = por %p85, %p86
      %p89 = scmp.ne.s32.totalorder %s74, %s88
      %p90 = scmp.eq.s32.totalorder %s22, 0
      %p91 = por %p89, %p90
      %s93 = sadd.s32 %s92, 1
      %p96 = scmp.eq.s32.totalorder %s16, 1
      %p97 = scmp.ne.s32.totalorder %s92, %s94
      %p98 = scmp.eq.s32.totalorder %s16, 0
      %p99 = por %p97, %p98
      %p100 = scmp.ne.s32.totalorder %s92, %s94
      %p101 = scmp.eq.s32.totalorder %s21, 1
      %p102 = por %p100, %p101
      %p103 = scmp.ne.s32.totalorder %s94, %s95
      %p104 = scmp.eq.s32.totalorder %s21, 0
      %p105 = por %p103, %p104
      %p106 = scmp.ne.s32.totalorder %s94, %s95
      %p107 = scmp.eq.s32.totalorder %s22, 1
      %p108 = por %p106, %p107
      %p110 = scmp.ne.s32.totalorder %s95, %s109
      %p111 = scmp.eq.s32.totalorder %s22, 0
      %p112 = por %p110, %p111
      %s114 = sadd.s32 %s113, 1
      %p117 = scmp.eq.s32.totalorder %s16, 1
      %p118 = scmp.ne.s32.totalorder %s113, %s115
      %p119 = scmp.eq.s32.totalorder %s16, 0
      %p120 = por %p118, %p119
      %p121 = scmp.ne.s32.totalorder %s113, %s115
      %p122 = scmp.eq.s32.totalorder %s21, 1
      %p123 = por %p121, %p122
      %p124 = scmp.ne.s32.totalorder %s115, %s116
      %p125 = scmp.eq.s32.totalorder %s21, 0
      %p126 = por %p124, %p125
      %p127 = scmp.ne.s32.totalorder %s115, %s116
      %p128 = scmp.eq.s32.totalorder %s22, 1
      %p129 = por %p127, %p128
      %p131 = scmp.ne.s32.totalorder %s116, %s130
      %p132 = scmp.eq.s32.totalorder %s22, 0
      %p133 = por %p131, %p132
      %s135 = sadd.s32 %s134, 1
      %p138 = scmp.eq.s32.totalorder %s16, 1
      %p139 = scmp.ne.s32.totalorder %s134, %s136
      %p140 = scmp.eq.s32.totalorder %s16, 0
      %p141 = por %p139, %p140
      %p142 = scmp.ne.s32.totalorder %s134, %s136
      %p143 = scmp.eq.s32.totalorder %s21, 1
      %p144 = por %p142, %p143
      %p145 = scmp.ne.s32.totalorder %s136, %s137
      %p146 = scmp.eq.s32.totalorder %s21, 0
      %p147 = por %p145, %p146
      %p148 = scmp.ne.s32.totalorder %s136, %s137
      %p149 = scmp.eq.s32.totalorder %s22, 1
      %p150 = por %p148, %p149
      %p152 = scmp.ne.s32.totalorder %s137, %s151
      %p153 = scmp.eq.s32.totalorder %s22, 0
      %p154 = por %p152, %p153
      %s156 = sadd.s32 %s155, 1
      %p159 = scmp.eq.s32.totalorder %s16, 1
      %p160 = scmp.ne.s32.totalorder %s155, %s157
      %p161 = scmp.eq.s32.totalorder %s16, 0
      %p162 = por %p160, %p161
      %p163 = scmp.ne.s32.totalorder %s155, %s157
      %p164 = scmp.eq.s32.totalorder %s21, 1
      %p165 = por %p163, %p164
      %p166 = scmp.ne.s32.totalorder %s157, %s158
      %p167 = scmp.eq.s32.totalorder %s21, 0
      %p168 = por %p166, %p167
      %p169 = scmp.ne.s32.totalorder %s157, %s158
      %p170 = scmp.eq.s32.totalorder %s22, 1
      %p171 = por %p169, %p170
      %p173 = scmp.ne.s32.totalorder %s158, %s172
      %p174 = scmp.eq.s32.totalorder %s22, 0
      %p175 = por %p173, %p174
      %s176 = ssub.s32 %s16, %s23
      %p177 = scmp.eq.s32.totalorder %s176, 0
      %s179 = sadd.s32 %s178, 1
      %s180 = scalar_select %p177, %s178, %s179
      %p183 = pneg %p177
      %p184 = scmp.eq.s32.totalorder %s16, 1
      %p185 = por %p183, %p184
      %p186 = scmp.ne.s32.totalorder %s178, %s181
      %p187 = scmp.eq.s32.totalorder %s16, 0
      %p188 = por %p186, %p187
      %p189 = scmp.ne.s32.totalorder %s178, %s181
      %p190 = scmp.eq.s32.totalorder %s21, 1
      %p191 = por %p189, %p190
      %p192 = scmp.ne.s32.totalorder %s181, %s182
      %p193 = scmp.eq.s32.totalorder %s21, 0
      %p194 = por %p192, %p193
      %p195 = scmp.ne.s32.totalorder %s181, %s182
      %p196 = scmp.eq.s32.totalorder %s22, 1
      %p197 = por %p195, %p196
      %p199 = scmp.ne.s32.totalorder %s182, %s198
      %p200 = scmp.eq.s32.totalorder %s22, 0
      %p201 = por %p199, %p200
      %s202 = ssub.s32 %s16, %s23
      %p203 = scmp.eq.s32.totalorder %s202, 0
      %s205 = sadd.s32 %s204, 1
      %s206 = scalar_select %p203, %s204, %s205
      %p209 = pneg %p203
      %p210 = scmp.eq.s32.totalorder %s16, 1
      %p211 = por %p209, %p210
      %p212 = scmp.ne.s32.totalorder %s204, %s207
      %p213 = scmp.eq.s32.totalorder %s16, 0
      %p214 = por %p212, %p213
      %p215 = scmp.ne.s32.totalorder %s204, %s207
      %p216 = scmp.eq.s32.totalorder %s21, 1
      %p217 = por %p215, %p216
      %p218 = scmp.ne.s32.totalorder %s207, %s208
      %p219 = scmp.eq.s32.totalorder %s21, 0
      %p220 = por %p218, %p219
      %p221 = scmp.ne.s32.totalorder %s207, %s208
      %p222 = scmp.eq.s32.totalorder %s22, 1
      %p223 = por %p221, %p222
      %p225 = scmp.ne.s32.totalorder %s208, %s224
      %p226 = scmp.eq.s32.totalorder %s22, 0
      %p227 = por %p225, %p226
      %p228 = scmp.le.s32.totalorder 1, %s16
      %p229 = scmp.lt.s32.totalorder %s16, 3
      %p230 = pnand %p228, %p229
      %p231 = pneg %p230
      // Predicated region
      $region9: #{tpu_custom_call.1} parent=5 // pred_check
        _
      $region10: #{tpu_custom_call.1} parent=5 // pred_check_branch
        %233 = sbr.rel (%p230) target = $region12
      $region11: #{tpu_custom_call.1} parent=5 // pred_region
        %s234 = ssub.s32 %s16, 1
        // Predicated region
        $region13: #{tpu_custom_call.1} parent=11 // pred_check
          %p235 = pneg %p63
        $region14: #{tpu_custom_call.1} parent=11 // pred_check_branch
          %237 = sbr.rel (%p235) target = $region16
        $region15: #{tpu_custom_call.1} parent=11 // pred_region
          _
        $region16: #{tpu_custom_call.1} parent=11 // pred_fallthru
          _
        // Predicated region
        $region17: #{tpu_custom_call.1} parent=11 // pred_check
          %p238 = pneg %p84
        $region18: #{tpu_custom_call.1} parent=11 // pred_check_branch
          %240 = sbr.rel (%p238) target = $region20
        $region19: #{tpu_custom_call.1} parent=11 // pred_region
          _
        $region20: #{tpu_custom_call.1} parent=11 // pred_fallthru
          _
        // Predicated region
        $region21: #{tpu_custom_call.1} parent=11 // pred_check
          %p241 = pneg %p105
        $region22: #{tpu_custom_call.1} parent=11 // pred_check_branch
          %243 = sbr.rel (%p241) target = $region24
        $region23: #{tpu_custom_call.1} parent=11 // pred_region
          _
        $region24: #{tpu_custom_call.1} parent=11 // pred_fallthru
          _
        // Predicated region
        $region25: #{tpu_custom_call.1} parent=11 // pred_check
          %p244 = pneg %p126
        $region26: #{tpu_custom_call.1} parent=11 // pred_check_branch
          %246 = sbr.rel (%p244) target = $region28
        $region27: #{tpu_custom_call.1} parent=11 // pred_region
          %s248 = ssub.s32 9216, 9216
          %249 = vsyncadd [#allocation5], %s248
          %s250 = sshll.u32 [#allocation4], 4
          %s251 = int_to_ptr.vmem [resolvable:$true] %s250
          %256 = dma.hbm_to_vmem [thread:$0]  %s4, 9216, %s251, [#allocation5], 128, 128, 8
        $region28: #{tpu_custom_call.1} parent=11 // pred_fallthru
          _
        // Predicated region
        $region29: #{tpu_custom_call.1} parent=11 // pred_check
          %p257 = pneg %p147
        $region30: #{tpu_custom_call.1} parent=11 // pred_check_branch
          %259 = sbr.rel (%p257) target = $region32
        $region31: #{tpu_custom_call.1} parent=11 // pred_region
          _
        $region32: #{tpu_custom_call.1} parent=11 // pred_fallthru
          _
        // Predicated region
        $region33: #{tpu_custom_call.1} parent=11 // pred_check
          %p260 = pneg %p168
        $region34: #{tpu_custom_call.1} parent=11 // pred_check_branch
          %262 = sbr.rel (%p260) target = $region36
        $region35: #{tpu_custom_call.1} parent=11 // pred_region
          _
        $region36: #{tpu_custom_call.1} parent=11 // pred_fallthru
          _
      $region12: #{tpu_custom_call.1} parent=5 // pred_fallthru
        _
      %p263 = scmp.lt.s32.totalorder %s16, 2
      // Predicated region
      $region37: #{tpu_custom_call.1} parent=5 // pred_check
        %p264 = pneg %p263
      $region38: #{tpu_custom_call.1} parent=5 // pred_check_branch
        %266 = sbr.rel (%p264) target = $region40
      $region39: #{tpu_custom_call.1} parent=5 // pred_region
        // Predicated region
        $region41: #{tpu_custom_call.1} parent=39 // pred_check
          %p267 = pneg %p36
        $region42: #{tpu_custom_call.1} parent=39 // pred_check_branch
          %269 = sbr.rel (%p267) target = $region44
        $region43: #{tpu_custom_call.1} parent=39 // pred_region
          %p270 = scmp.lt.s32.totalorder %s16, 1
          %s271 = scalar_select %p270, %s16, 1
          %s272 = smul.addr %s271, 32
          %s273 = smul.addr %s272, 8
          %s274 = scalar_lea.vmem %s0, %s273
        $region44: #{tpu_custom_call.1} parent=39 // pred_fallthru
          _
      $region40: #{tpu_custom_call.1} parent=5 // pred_fallthru
        _
      %p275 = scmp.le.s32.totalorder 1, %s16
      %p276 = scmp.lt.s32.totalorder %s16, 3
      %p277 = pnand %p275, %p276
      %p278 = pneg %p277
      // Predicated region
      $region45: #{tpu_custom_call.1} parent=5 // pred_check
        _
      $region46: #{tpu_custom_call.1} parent=5 // pred_check_branch
        %280 = sbr.rel (%p277) target = $region48
      $region47: #{tpu_custom_call.1} parent=5 // pred_region
        %s281 = ssub.s32 %s16, 1
        // Predicated region
        $region49: #{tpu_custom_call.1} parent=47 // pred_check
          %p282 = pneg %p126
        $region50: #{tpu_custom_call.1} parent=47 // pred_check_branch
          %284 = sbr.rel (%p282) target = $region52
        $region51: #{tpu_custom_call.1} parent=47 // pred_region
          %285 = dma.done [#allocation5], 9216
        $region52: #{tpu_custom_call.1} parent=47 // pred_fallthru
          _
        %p286 = scmp.lt.s32.totalorder %s21, 1
        %s287 = scalar_select %p286, %s21, 1
        %s288 = smul.addr %s287, 32
        %s289 = smul.addr %s288, 8
        %s290 = scalar_lea.vmem %s0, %s289
        %p291 = pneg %p42
        %p292 = pneg %p39
        %p293 = pneg %p63
        %p294 = pneg %p60
        %p295 = pneg %p84
        %p296 = pneg %p81
        %p297 = pneg %p105
        %p298 = pneg %p102
        %p299 = pneg %p126
        %p300 = pneg %p123
        %p301 = pneg %p147
        %p302 = pneg %p144
        %p303 = pneg %p168
        %p304 = pneg %p165
        %p305 = pneg %p194
        %p306 = pneg %p191
        %p307 = scmp.lt.s32.totalorder %s21, 1
        %s308 = scalar_select %p307, %s21, 1
        %s309 = smul.addr %s308, 32
        %s310 = smul.addr %s309, 8
        %s311 = scalar_lea.vmem %s7, %s310
        %p312 = pneg %p220
        %p313 = pneg %p217
        %p314 = scmp.lt.s32.totalorder %s21, 1
        %s315 = scalar_select %p314, %s21, 1
        %s316 = smul.addr %s315, 32
        %s317 = smul.addr %s316, 8
        %s318 = scalar_lea.vmem %s8, %s317
        %p319 = scmp.lt.s32.totalorder %s21, 1
        %s320 = scalar_select %p319, %s21, 1
        %s321 = smul.addr %s320, 32
        %s322 = smul.addr %s321, 8
        %s323 = scalar_lea.vmem %s0, %s322
        %p324 = scmp.lt.s32.totalorder %s21, 1
        %s325 = scalar_select %p324, %s21, 1
        %s326 = smul.addr %s325, 32
        %s327 = smul.addr %s326, 8
        %s328 = scalar_lea.vmem %s7, %s327
        %p329 = scmp.lt.s32.totalorder %s21, 1
        %s330 = scalar_select %p329, %s21, 1
        %s331 = smul.addr %s330, 32
        %s332 = smul.addr %s331, 8
        %s333 = scalar_lea.vmem %s8, %s332
        %v334 = vlaneseq
        %v335 = vshrl.u32 %v334, 7
        %v336 = vadd.s32 %v335, 8
        %v337 = vadd.s32 %v335, 16
        %v338 = vadd.s32 %v335, 24
        %v339 = vadd.s32 %v335, 32
        %v340 = vadd.s32 %v335, 40
        %v341 = vadd.s32 %v335, 48
        %v342 = vadd.s32 %v335, 56
        %v343 = vadd.s32 %v335, 64
        %v344 = vadd.s32 %v335, 72
        %v345 = vadd.s32 %v335, 80
        %v346 = vadd.s32 %v335, 88
        %v347 = vadd.s32 %v335, 96
        %v348 = vadd.s32 %v335, 104
        %v349 = vadd.s32 %v335, 112
        %v350 = vadd.s32 %v335, 120
        %v351 = vadd.s32 %v335, 128
        %v352 = vadd.s32 %v335, 136
        %v353 = vadd.s32 %v335, 144
        %v354 = vadd.s32 %v335, 152
        %v355 = vadd.s32 %v335, 160
        %v356 = vadd.s32 %v335, 168
        %v357 = vadd.s32 %v335, 176
        %v358 = vadd.s32 %v335, 184
        %v359 = vadd.s32 %v335, 192
        %v360 = vadd.s32 %v335, 200
        %v361 = vadd.s32 %v335, 208
        %v362 = vadd.s32 %v335, 216
        %v363 = vadd.s32 %v335, 224
        %v364 = vadd.s32 %v335, 232
        %v365 = vadd.s32 %v335, 240
        %v366 = vadd.s32 %v335, 248
        %vm367 = vcmp.lt.s32.totalorder %v335, 0
        %v368 = vsub.s32 0, %v335
        %v369 = vsel %vm367, %v368, %v335
        %v370 = vshrl.u32 %v369, 4
        %v371 = vand.u32 %v369, 15
        %v372 = vsub.s32 0, %v371
        %v373 = vsel %vm367, %v372, %v371
        %vm374 = vcmp.lt.s32.totalorder %v336, 0
        %v375 = vsub.s32 0, %v336
        %v376 = vsel %vm374, %v375, %v336
        %v377 = vshrl.u32 %v376, 4
        %v378 = vand.u32 %v376, 15
        %v379 = vsub.s32 0, %v378
        %v380 = vsel %vm374, %v379, %v378
        %vm381 = vcmp.lt.s32.totalorder %v337, 0
        %v382 = vsub.s32 0, %v337
        %v383 = vsel %vm381, %v382, %v337
        %v384 = vshrl.u32 %v383, 4
        %v385 = vand.u32 %v383, 15
        %v386 = vsub.s32 0, %v385
        %v387 = vsel %vm381, %v386, %v385
        %vm388 = vcmp.lt.s32.totalorder %v338, 0
        %v389 = vsub.s32 0, %v338
        %v390 = vsel %vm388, %v389, %v338
        %v391 = vshrl.u32 %v390, 4
        %v392 = vand.u32 %v390, 15
        %v393 = vsub.s32 0, %v392
        %v394 = vsel %vm388, %v393, %v392
        %vm395 = vcmp.lt.s32.totalorder %v339, 0
        %v396 = vsub.s32 0, %v339
        %v397 = vsel %vm395, %v396, %v339
        %v398 = vshrl.u32 %v397, 4
        %v399 = vand.u32 %v397, 15
        %v400 = vsub.s32 0, %v399
        %v401 = vsel %vm395, %v400, %v399
        %vm402 = vcmp.lt.s32.totalorder %v340, 0
        %v403 = vsub.s32 0, %v340
        %v404 = vsel %vm402, %v403, %v340
        %v405 = vshrl.u32 %v404, 4
        %v406 = vand.u32 %v404, 15
        %v407 = vsub.s32 0, %v406
        %v408 = vsel %vm402, %v407, %v406
        %vm409 = vcmp.lt.s32.totalorder %v341, 0
        %v410 = vsub.s32 0, %v341
        %v411 = vsel %vm409, %v410, %v341
        %v412 = vshrl.u32 %v411, 4
        %v413 = vand.u32 %v411, 15
        %v414 = vsub.s32 0, %v413
        %v415 = vsel %vm409, %v414, %v413
        %vm416 = vcmp.lt.s32.totalorder %v342, 0
        %v417 = vsub.s32 0, %v342
        %v418 = vsel %vm416, %v417, %v342
        %v419 = vshrl.u32 %v418, 4
        %v420 = vand.u32 %v418, 15
        %v421 = vsub.s32 0, %v420
        %v422 = vsel %vm416, %v421, %v420
        %vm423 = vcmp.lt.s32.totalorder %v343, 0
        %v424 = vsub.s32 0, %v343
        %v425 = vsel %vm423, %v424, %v343
        %v426 = vshrl.u32 %v425, 4
        %v427 = vand.u32 %v425, 15
        %v428 = vsub.s32 0, %v427
        %v429 = vsel %vm423, %v428, %v427
        %vm430 = vcmp.lt.s32.totalorder %v344, 0
        %v431 = vsub.s32 0, %v344
        %v432 = vsel %vm430, %v431, %v344
        %v433 = vshrl.u32 %v432, 4
        %v434 = vand.u32 %v432, 15
        %v435 = vsub.s32 0, %v434
        %v436 = vsel %vm430, %v435, %v434
        %vm437 = vcmp.lt.s32.totalorder %v345, 0
        %v438 = vsub.s32 0, %v345
        %v439 = vsel %vm437, %v438, %v345
        %v440 = vshrl.u32 %v439, 4
        %v441 = vand.u32 %v439, 15
        %v442 = vsub.s32 0, %v441
        %v443 = vsel %vm437, %v442, %v441
        %vm444 = vcmp.lt.s32.totalorder %v346, 0
        %v445 = vsub.s32 0, %v346
        %v446 = vsel %vm444, %v445, %v346
        %v447 = vshrl.u32 %v446, 4
        %v448 = vand.u32 %v446, 15
        %v449 = vsub.s32 0, %v448
        %v450 = vsel %vm444, %v449, %v448
        %vm451 = vcmp.lt.s32.totalorder %v347, 0
        %v452 = vsub.s32 0, %v347
        %v453 = vsel %vm451, %v452, %v347
        %v454 = vshrl.u32 %v453, 4
        %v455 = vand.u32 %v453, 15
        %v456 = vsub.s32 0, %v455
        %v457 = vsel %vm451, %v456, %v455
        %vm458 = vcmp.lt.s32.totalorder %v348, 0
        %v459 = vsub.s32 0, %v348
        %v460 = vsel %vm458, %v459, %v348
        %v461 = vshrl.u32 %v460, 4
        %v462 = vand.u32 %v460, 15
        %v463 = vsub.s32 0, %v462
        %v464 = vsel %vm458, %v463, %v462
        %vm465 = vcmp.lt.s32.totalorder %v349, 0
        %v466 = vsub.s32 0, %v349
        %v467 = vsel %vm465, %v466, %v349
        %v468 = vshrl.u32 %v467, 4
        %v469 = vand.u32 %v467, 15
        %v470 = vsub.s32 0, %v469
        %v471 = vsel %vm465, %v470, %v469
        %vm472 = vcmp.lt.s32.totalorder %v350, 0
        %v473 = vsub.s32 0, %v350
        %v474 = vsel %vm472, %v473, %v350
        %v475 = vshrl.u32 %v474, 4
        %v476 = vand.u32 %v474, 15
        %v477 = vsub.s32 0, %v476
        %v478 = vsel %vm472, %v477, %v476
        %vm479 = vcmp.lt.s32.totalorder %v351, 0
        %v480 = vsub.s32 0, %v351
        %v481 = vsel %vm479, %v480, %v351
        %v482 = vshrl.u32 %v481, 4
        %v483 = vand.u32 %v481, 15
        %v484 = vsub.s32 0, %v483
        %v485 = vsel %vm479, %v484, %v483
        %vm486 = vcmp.lt.s32.totalorder %v352, 0
        %v487 = vsub.s32 0, %v352
        %v488 = vsel %vm486, %v487, %v352
        %v489 = vshrl.u32 %v488, 4
        %v490 = vand.u32 %v488, 15
        %v491 = vsub.s32 0, %v490
        %v492 = vsel %vm486, %v491, %v490
        %vm493 = vcmp.lt.s32.totalorder %v353, 0
        %v494 = vsub.s32 0, %v353
        %v495 = vsel %vm493, %v494, %v353
        %v496 = vshrl.u32 %v495, 4
        %v497 = vand.u32 %v495, 15
        %v498 = vsub.s32 0, %v497
        %v499 = vsel %vm493, %v498, %v497
        %vm500 = vcmp.lt.s32.totalorder %v354, 0
        %v501 = vsub.s32 0, %v354
        %v502 = vsel %vm500, %v501, %v354
        %v503 = vshrl.u32 %v502, 4
        %v504 = vand.u32 %v502, 15
        %v505 = vsub.s32 0, %v504
        %v506 = vsel %vm500, %v505, %v504
        %vm507 = vcmp.lt.s32.totalorder %v355, 0
        %v508 = vsub.s32 0, %v355
        %v509 = vsel %vm507, %v508, %v355
        %v510 = vshrl.u32 %v509, 4
        %v511 = vand.u32 %v509, 15
        %v512 = vsub.s32 0, %v511
        %v513 = vsel %vm507, %v512, %v511
        %vm514 = vcmp.lt.s32.totalorder %v356, 0
        %v515 = vsub.s32 0, %v356
        %v516 = vsel %vm514, %v515, %v356
        %v517 = vshrl.u32 %v516, 4
        %v518 = vand.u32 %v516, 15
        %v519 = vsub.s32 0, %v518
        %v520 = vsel %vm514, %v519, %v518
        %vm521 = vcmp.lt.s32.totalorder %v357, 0
        %v522 = vsub.s32 0, %v357
        %v523 = vsel %vm521, %v522, %v357
        %v524 = vshrl.u32 %v523, 4
        %v525 = vand.u32 %v523, 15
        %v526 = vsub.s32 0, %v525
        %v527 = vsel %vm521, %v526, %v525
        %vm528 = vcmp.lt.s32.totalorder %v358, 0
        %v529 = vsub.s32 0, %v358
        %v530 = vsel %vm528, %v529, %v358
        %v531 = vshrl.u32 %v530, 4
        %v532 = vand.u32 %v530, 15
        %v533 = vsub.s32 0, %v532
        %v534 = vsel %vm528, %v533, %v532
        %vm535 = vcmp.lt.s32.totalorder %v359, 0
        %v536 = vsub.s32 0, %v359
        %v537 = vsel %vm535, %v536, %v359
        %v538 = vshrl.u32 %v537, 4
        %v539 = vand.u32 %v537, 15
        %v540 = vsub.s32 0, %v539
        %v541 = vsel %vm535, %v540, %v539
        %vm542 = vcmp.lt.s32.totalorder %v360, 0
        %v543 = vsub.s32 0, %v360
        %v544 = vsel %vm542, %v543, %v360
        %v545 = vshrl.u32 %v544, 4
        %v546 = vand.u32 %v544, 15
        %v547 = vsub.s32 0, %v546
        %v548 = vsel %vm542, %v547, %v546
        %vm549 = vcmp.lt.s32.totalorder %v361, 0
        %v550 = vsub.s32 0, %v361
        %v551 = vsel %vm549, %v550, %v361
        %v552 = vshrl.u32 %v551, 4
        %v553 = vand.u32 %v551, 15
        %v554 = vsub.s32 0, %v553
        %v555 = vsel %vm549, %v554, %v553
        %vm556 = vcmp.lt.s32.totalorder %v362, 0
        %v557 = vsub.s32 0, %v362
        %v558 = vsel %vm556, %v557, %v362
        %v559 = vshrl.u32 %v558, 4
        %v560 = vand.u32 %v558, 15
        %v561 = vsub.s32 0, %v560
        %v562 = vsel %vm556, %v561, %v560
        %vm563 = vcmp.lt.s32.totalorder %v363, 0
        %v564 = vsub.s32 0, %v363
        %v565 = vsel %vm563, %v564, %v363
        %v566 = vshrl.u32 %v565, 4
        %v567 = vand.u32 %v565, 15
        %v568 = vsub.s32 0, %v567
        %v569 = vsel %vm563, %v568, %v567
        %vm570 = vcmp.lt.s32.totalorder %v364, 0
        %v571 = vsub.s32 0, %v364
        %v572 = vsel %vm570, %v571, %v364
        %v573 = vshrl.u32 %v572, 4
        %v574 = vand.u32 %v572, 15
        %v575 = vsub.s32 0, %v574
        %v576 = vsel %vm570, %v575, %v574
        %vm577 = vcmp.lt.s32.totalorder %v365, 0
        %v578 = vsub.s32 0, %v365
        %v579 = vsel %vm577, %v578, %v365
        %v580 = vshrl.u32 %v579, 4
        %v581 = vand.u32 %v579, 15
        %v582 = vsub.s32 0, %v581
        %v583 = vsel %vm577, %v582, %v581
        %vm584 = vcmp.lt.s32.totalorder %v366, 0
        %v585 = vsub.s32 0, %v366
        %v586 = vsel %vm584, %v585, %v366
        %v587 = vshrl.u32 %v586, 4
        %v588 = vand.u32 %v586, 15
        %v589 = vsub.s32 0, %v588
        %v590 = vsel %vm584, %v589, %v588
        %vm591 = vcmp.ne.s32.totalorder %v373, 0
        %vm592 = vcmp.ne.s32.totalorder %v380, 0
        %vm593 = vcmp.ne.s32.totalorder %v387, 0
        %vm594 = vcmp.ne.s32.totalorder %v394, 0
        %vm595 = vcmp.ne.s32.totalorder %v401, 0
        %vm596 = vcmp.ne.s32.totalorder %v408, 0
        %vm597 = vcmp.ne.s32.totalorder %v415, 0
        %vm598 = vcmp.ne.s32.totalorder %v422, 0
        %vm599 = vcmp.ne.s32.totalorder %v429, 0
        %vm600 = vcmp.ne.s32.totalorder %v436, 0
        %vm601 = vcmp.ne.s32.totalorder %v443, 0
        %vm602 = vcmp.ne.s32.totalorder %v450, 0
        %vm603 = vcmp.ne.s32.totalorder %v457, 0
        %vm604 = vcmp.ne.s32.totalorder %v464, 0
        %vm605 = vcmp.ne.s32.totalorder %v471, 0
        %vm606 = vcmp.ne.s32.totalorder %v478, 0
        %vm607 = vcmp.ne.s32.totalorder %v485, 0
        %vm608 = vcmp.ne.s32.totalorder %v492, 0
        %vm609 = vcmp.ne.s32.totalorder %v499, 0
        %vm610 = vcmp.ne.s32.totalorder %v506, 0
        %vm611 = vcmp.ne.s32.totalorder %v513, 0
        %vm612 = vcmp.ne.s32.totalorder %v520, 0
        %vm613 = vcmp.ne.s32.totalorder %v527, 0
        %vm614 = vcmp.ne.s32.totalorder %v534, 0
        %vm615 = vcmp.ne.s32.totalorder %v541, 0
        %vm616 = vcmp.ne.s32.totalorder %v548, 0
        %vm617 = vcmp.ne.s32.totalorder %v555, 0
        %vm618 = vcmp.ne.s32.totalorder %v562, 0
        %vm619 = vcmp.ne.s32.totalorder %v569, 0
        %vm620 = vcmp.ne.s32.totalorder %v576, 0
        %vm621 = vcmp.ne.s32.totalorder %v583, 0
        %vm622 = vcmp.ne.s32.totalorder %v590, 0
        %vm623 = vcmp.lt.s32.totalorder %v373, 0
        %vm624 = vcmp.lt.s32.totalorder %v380, 0
        %vm625 = vcmp.lt.s32.totalorder %v387, 0
        %vm626 = vcmp.lt.s32.totalorder %v394, 0
        %vm627 = vcmp.lt.s32.totalorder %v401, 0
        %vm628 = vcmp.lt.s32.totalorder %v408, 0
        %vm629 = vcmp.lt.s32.totalorder %v415, 0
        %vm630 = vcmp.lt.s32.totalorder %v422, 0
        %vm631 = vcmp.lt.s32.totalorder %v429, 0
        %vm632 = vcmp.lt.s32.totalorder %v436, 0
        %vm633 = vcmp.lt.s32.totalorder %v443, 0
        %vm634 = vcmp.lt.s32.totalorder %v450, 0
        %vm635 = vcmp.lt.s32.totalorder %v457, 0
        %vm636 = vcmp.lt.s32.totalorder %v464, 0
        %vm637 = vcmp.lt.s32.totalorder %v471, 0
        %vm638 = vcmp.lt.s32.totalorder %v478, 0
        %vm639 = vcmp.lt.s32.totalorder %v485, 0
        %vm640 = vcmp.lt.s32.totalorder %v492, 0
        %vm641 = vcmp.lt.s32.totalorder %v499, 0
        %vm642 = vcmp.lt.s32.totalorder %v506, 0
        %vm643 = vcmp.lt.s32.totalorder %v513, 0
        %vm644 = vcmp.lt.s32.totalorder %v520, 0
        %vm645 = vcmp.lt.s32.totalorder %v527, 0
        %vm646 = vcmp.lt.s32.totalorder %v534, 0
        %vm647 = vcmp.lt.s32.totalorder %v541, 0
        %vm648 = vcmp.lt.s32.totalorder %v548, 0
        %vm649 = vcmp.lt.s32.totalorder %v555, 0
        %vm650 = vcmp.lt.s32.totalorder %v562, 0
        %vm651 = vcmp.lt.s32.totalorder %v569, 0
        %vm652 = vcmp.lt.s32.totalorder %v576, 0
        %vm653 = vcmp.lt.s32.totalorder %v583, 0
        %vm654 = vcmp.lt.s32.totalorder %v590, 0
        %vm655 = vmand %vm623, %vm591
        %vm656 = vmand %vm624, %vm592
        %vm657 = vmand %vm625, %vm593
        %vm658 = vmand %vm626, %vm594
        %vm659 = vmand %vm627, %vm595
        %vm660 = vmand %vm628, %vm596
        %vm661 = vmand %vm629, %vm597
        %vm662 = vmand %vm630, %vm598
        %vm663 = vmand %vm631, %vm599
        %vm664 = vmand %vm632, %vm600
        %vm665 = vmand %vm633, %vm601
        %vm666 = vmand %vm634, %vm602
        %vm667 = vmand %vm635, %vm603
        %vm668 = vmand %vm636, %vm604
        %vm669 = vmand %vm637, %vm605
        %vm670 = vmand %vm638, %vm606
        %vm671 = vmand %vm639, %vm607
        %vm672 = vmand %vm640, %vm608
        %vm673 = vmand %vm641, %vm609
        %vm674 = vmand %vm642, %vm610
        %vm675 = vmand %vm643, %vm611
        %vm676 = vmand %vm644, %vm612
        %vm677 = vmand %vm645, %vm613
        %vm678 = vmand %vm646, %vm614
        %vm679 = vmand %vm647, %vm615
        %vm680 = vmand %vm648, %vm616
        %vm681 = vmand %vm649, %vm617
        %vm682 = vmand %vm650, %vm618
        %vm683 = vmand %vm651, %vm619
        %vm684 = vmand %vm652, %vm620
        %vm685 = vmand %vm653, %vm621
        %vm686 = vmand %vm654, %vm622
        %v687 = vadd.s32 %v373, 16
        %v688 = vadd.s32 %v380, 16
        %v689 = vadd.s32 %v387, 16
        %v690 = vadd.s32 %v394, 16
        %v691 = vadd.s32 %v401, 16
        %v692 = vadd.s32 %v408, 16
        %v693 = vadd.s32 %v415, 16
        %v694 = vadd.s32 %v422, 16
        %v695 = vadd.s32 %v429, 16
        %v696 = vadd.s32 %v436, 16
        %v697 = vadd.s32 %v443, 16
        %v698 = vadd.s32 %v450, 16
        %v699 = vadd.s32 %v457, 16
        %v700 = vadd.s32 %v464, 16
        %v701 = vadd.s32 %v471, 16
        %v702 = vadd.s32 %v478, 16
        %v703 = vadd.s32 %v485, 16
        %v704 = vadd.s32 %v492, 16
        %v705 = vadd.s32 %v499, 16
        %v706 = vadd.s32 %v506, 16
        %v707 = vadd.s32 %v513, 16
        %v708 = vadd.s32 %v520, 16
        %v709 = vadd.s32 %v527, 16
        %v710 = vadd.s32 %v534, 16
        %v711 = vadd.s32 %v541, 16
        %v712 = vadd.s32 %v548, 16
        %v713 = vadd.s32 %v555, 16
        %v714 = vadd.s32 %v562, 16
        %v715 = vadd.s32 %v569, 16
        %v716 = vadd.s32 %v576, 16
        %v717 = vadd.s32 %v583, 16
        %v718 = vadd.s32 %v590, 16
        %v719 = vsel %vm655, %v687, %v373
        %v720 = vsel %vm656, %v688, %v380
        %v721 = vsel %vm657, %v689, %v387
        %v722 = vsel %vm658, %v690, %v394
        %v723 = vsel %vm659, %v691, %v401
        %v724 = vsel %vm660, %v692, %v408
        %v725 = vsel %vm661, %v693, %v415
        %v726 = vsel %vm662, %v694, %v422
        %v727 = vsel %vm663, %v695, %v429
        %v728 = vsel %vm664, %v696, %v436
        %v729 = vsel %vm665, %v697, %v443
        %v730 = vsel %vm666, %v698, %v450
        %v731 = vsel %vm667, %v699, %v457
        %v732 = vsel %vm668, %v700, %v464
        %v733 = vsel %vm669, %v701, %v471
        %v734 = vsel %vm670, %v702, %v478
        %v735 = vsel %vm671, %v703, %v485
        %v736 = vsel %vm672, %v704, %v492
        %v737 = vsel %vm673, %v705, %v499
        %v738 = vsel %vm674, %v706, %v506
        %v739 = vsel %vm675, %v707, %v513
        %v740 = vsel %vm676, %v708, %v520
        %v741 = vsel %vm677, %v709, %v527
        %v742 = vsel %vm678, %v710, %v534
        %v743 = vsel %vm679, %v711, %v541
        %v744 = vsel %vm680, %v712, %v548
        %v745 = vsel %vm681, %v713, %v555
        %v746 = vsel %vm682, %v714, %v562
        %v747 = vsel %vm683, %v715, %v569
        %v748 = vsel %vm684, %v716, %v576
        %v749 = vsel %vm685, %v717, %v583
        %v750 = vsel %vm686, %v718, %v590
        %vm751 = vcmp.gt.s32.totalorder %v719, 0
        %vm752 = vcmp.gt.s32.totalorder %v720, 0
        %vm753 = vcmp.gt.s32.totalorder %v721, 0
        %vm754 = vcmp.gt.s32.totalorder %v722, 0
        %vm755 = vcmp.gt.s32.totalorder %v723, 0
        %vm756 = vcmp.gt.s32.totalorder %v724, 0
        %vm757 = vcmp.gt.s32.totalorder %v725, 0
        %vm758 = vcmp.gt.s32.totalorder %v726, 0
        %vm759 = vcmp.gt.s32.totalorder %v727, 0
        %vm760 = vcmp.gt.s32.totalorder %v728, 0
        %vm761 = vcmp.gt.s32.totalorder %v729, 0
        %vm762 = vcmp.gt.s32.totalorder %v730, 0
        %vm763 = vcmp.gt.s32.totalorder %v731, 0
        %vm764 = vcmp.gt.s32.totalorder %v732, 0
        %vm765 = vcmp.gt.s32.totalorder %v733, 0
        %vm766 = vcmp.gt.s32.totalorder %v734, 0
        %vm767 = vcmp.gt.s32.totalorder %v735, 0
        %vm768 = vcmp.gt.s32.totalorder %v736, 0
        %vm769 = vcmp.gt.s32.totalorder %v737, 0
        %vm770 = vcmp.gt.s32.totalorder %v738, 0
        %vm771 = vcmp.gt.s32.totalorder %v739, 0
        %vm772 = vcmp.gt.s32.totalorder %v740, 0
        %vm773 = vcmp.gt.s32.totalorder %v741, 0
        %vm774 = vcmp.gt.s32.totalorder %v742, 0
        %vm775 = vcmp.gt.s32.totalorder %v743, 0
        %vm776 = vcmp.gt.s32.totalorder %v744, 0
        %vm777 = vcmp.gt.s32.totalorder %v745, 0
        %vm778 = vcmp.gt.s32.totalorder %v746, 0
        %vm779 = vcmp.gt.s32.totalorder %v747, 0
        %vm780 = vcmp.gt.s32.totalorder %v748, 0
        %vm781 = vcmp.gt.s32.totalorder %v749, 0
        %vm782 = vcmp.gt.s32.totalorder %v750, 0
        %vm783 = vcmp.lt.s32.totalorder %v719, 15
        %vm784 = vcmp.lt.s32.totalorder %v720, 15
        %vm785 = vcmp.lt.s32.totalorder %v721, 15
        %vm786 = vcmp.lt.s32.totalorder %v722, 15
        %vm787 = vcmp.lt.s32.totalorder %v723, 15
        %vm788 = vcmp.lt.s32.totalorder %v724, 15
        %vm789 = vcmp.lt.s32.totalorder %v725, 15
        %vm790 = vcmp.lt.s32.totalorder %v726, 15
        %vm791 = vcmp.lt.s32.totalorder %v727, 15
        %vm792 = vcmp.lt.s32.totalorder %v728, 15
        %vm793 = vcmp.lt.s32.totalorder %v729, 15
        %vm794 = vcmp.lt.s32.totalorder %v730, 15
        %vm795 = vcmp.lt.s32.totalorder %v731, 15
        %vm796 = vcmp.lt.s32.totalorder %v732, 15
        %vm797 = vcmp.lt.s32.totalorder %v733, 15
        %vm798 = vcmp.lt.s32.totalorder %v734, 15
        %vm799 = vcmp.lt.s32.totalorder %v735, 15
        %vm800 = vcmp.lt.s32.totalorder %v736, 15
        %vm801 = vcmp.lt.s32.totalorder %v737, 15
        %vm802 = vcmp.lt.s32.totalorder %v738, 15
        %vm803 = vcmp.lt.s32.totalorder %v739, 15
        %vm804 = vcmp.lt.s32.totalorder %v740, 15
        %vm805 = vcmp.lt.s32.totalorder %v741, 15
        %vm806 = vcmp.lt.s32.totalorder %v742, 15
        %vm807 = vcmp.lt.s32.totalorder %v743, 15
        %vm808 = vcmp.lt.s32.totalorder %v744, 15
        %vm809 = vcmp.lt.s32.totalorder %v745, 15
        %vm810 = vcmp.lt.s32.totalorder %v746, 15
        %vm811 = vcmp.lt.s32.totalorder %v747, 15
        %vm812 = vcmp.lt.s32.totalorder %v748, 15
        %vm813 = vcmp.lt.s32.totalorder %v749, 15
        %vm814 = vcmp.lt.s32.totalorder %v750, 15
        %vm815 = vcmask 64512
        %816 = vst.msk [vmem:[#allocation2] sm:$0xff] %vm815, 0.0
        %817 = vst.msk [vmem:[#allocation2 + $0x8] sm:$0xff] %vm815, 0.0
        %818 = vst.msk [vmem:[#allocation2 + $0x10] sm:$0xff] %vm815, 0.0
        %819 = vst.msk [vmem:[#allocation2 + $0x18] sm:$0xff] %vm815, 0.0
        %820 = vst.msk [vmem:[#allocation2 + $0x20] sm:$0xff] %vm815, 0.0
        %821 = vst.msk [vmem:[#allocation2 + $0x28] sm:$0xff] %vm815, 0.0
        %822 = vst.msk [vmem:[#allocation2 + $0x30] sm:$0xff] %vm815, 0.0
        %823 = vst.msk [vmem:[#allocation2 + $0x38] sm:$0xff] %vm815, 0.0
        %824 = vst.msk [vmem:[#allocation2 + $0x40] sm:$0xff] %vm815, 0.0
        %825 = vst.msk [vmem:[#allocation2 + $0x48] sm:$0xff] %vm815, 0.0
        %826 = vst.msk [vmem:[#allocation2 + $0x50] sm:$0xff] %vm815, 0.0
        %827 = vst.msk [vmem:[#allocation2 + $0x58] sm:$0xff] %vm815, 0.0
        %828 = vst.msk [vmem:[#allocation2 + $0x60] sm:$0xff] %vm815, 0.0
        %829 = vst.msk [vmem:[#allocation2 + $0x68] sm:$0xff] %vm815, 0.0
        %830 = vst.msk [vmem:[#allocation2 + $0x70] sm:$0xff] %vm815, 0.0
        %831 = vst.msk [vmem:[#allocation2 + $0x78] sm:$0xff] %vm815, 0.0
        %832 = vst.msk [vmem:[#allocation2 + $0x80] sm:$0xff] %vm815, 0.0
        %833 = vst.msk [vmem:[#allocation2 + $0x88] sm:$0xff] %vm815, 0.0
        %834 = vst.msk [vmem:[#allocation2 + $0x90] sm:$0xff] %vm815, 0.0
        %835 = vst.msk [vmem:[#allocation2 + $0x98] sm:$0xff] %vm815, 0.0
        %836 = vst.msk [vmem:[#allocation2 + $0xa0] sm:$0xff] %vm815, 0.0
        %837 = vst.msk [vmem:[#allocation2 + $0xa8] sm:$0xff] %vm815, 0.0
        %838 = vst.msk [vmem:[#allocation2 + $0xb0] sm:$0xff] %vm815, 0.0
        %839 = vst.msk [vmem:[#allocation2 + $0xb8] sm:$0xff] %vm815, 0.0
        %840 = vst.msk [vmem:[#allocation2 + $0xc0] sm:$0xff] %vm815, 0.0
        %841 = vst.msk [vmem:[#allocation2 + $0xc8] sm:$0xff] %vm815, 0.0
        %842 = vst.msk [vmem:[#allocation2 + $0xd0] sm:$0xff] %vm815, 0.0
        %843 = vst.msk [vmem:[#allocation2 + $0xd8] sm:$0xff] %vm815, 0.0
        %844 = vst.msk [vmem:[#allocation2 + $0xe0] sm:$0xff] %vm815, 0.0
        %845 = vst.msk [vmem:[#allocation2 + $0xe8] sm:$0xff] %vm815, 0.0
        %846 = vst.msk [vmem:[#allocation2 + $0xf0] sm:$0xff] %vm815, 0.0
        %847 = vst.msk [vmem:[#allocation2 + $0xf8] sm:$0xff] %vm815, 0.0
        %848 = vst.msk [vmem:[#allocation2 + $0x100] sm:$0xff] %vm815, 0.0
        %849 = vst.msk [vmem:[#allocation2 + $0x108] sm:$0xff] %vm815, 0.0
        %850 = vst.msk [vmem:[#allocation2 + $0x110] sm:$0xff] %vm815, 0.0
        %851 = vst.msk [vmem:[#allocation2 + $0x118] sm:$0xff] %vm815, 0.0
        %vm852 = vcmask 58368
        %853 = vst.msk [vmem:[#allocation2 + $0x120] sm:$0x3] %vm852, 0.0
        %v854 = vld [vmem:[%s323] sm:$0xff]
        %v855 = vld [vmem:[%s323 + $0x8] sm:$0xff]
        %v856 = vld [vmem:[%s323 + $0x10] sm:$0xff]
        %v857 = vld [vmem:[%s323 + $0x18] sm:$0xff]
        %v858 = vld [vmem:[%s323 + $0x20] sm:$0xff]
        %v859 = vld [vmem:[%s323 + $0x28] sm:$0xff]
        %v860 = vld [vmem:[%s323 + $0x30] sm:$0xff]
        %v861 = vld [vmem:[%s323 + $0x38] sm:$0xff]
        %v862 = vld [vmem:[%s323 + $0x40] sm:$0xff]
        %v863 = vld [vmem:[%s323 + $0x48] sm:$0xff]
        %v864 = vld [vmem:[%s323 + $0x50] sm:$0xff]
        %v865 = vld [vmem:[%s323 + $0x58] sm:$0xff]
        %v866 = vld [vmem:[%s323 + $0x60] sm:$0xff]
        %v867 = vld [vmem:[%s323 + $0x68] sm:$0xff]
        %v868 = vld [vmem:[%s323 + $0x70] sm:$0xff]
        %v869 = vld [vmem:[%s323 + $0x78] sm:$0xff]
        %v870 = vld [vmem:[%s323 + $0x80] sm:$0xff]
        %v871 = vld [vmem:[%s323 + $0x88] sm:$0xff]
        %v872 = vld [vmem:[%s323 + $0x90] sm:$0xff]
        %v873 = vld [vmem:[%s323 + $0x98] sm:$0xff]
        %v874 = vld [vmem:[%s323 + $0xa0] sm:$0xff]
        %v875 = vld [vmem:[%s323 + $0xa8] sm:$0xff]
        %v876 = vld [vmem:[%s323 + $0xb0] sm:$0xff]
        %v877 = vld [vmem:[%s323 + $0xb8] sm:$0xff]
        %v878 = vld [vmem:[%s323 + $0xc0] sm:$0xff]
        %v879 = vld [vmem:[%s323 + $0xc8] sm:$0xff]
        %v880 = vld [vmem:[%s323 + $0xd0] sm:$0xff]
        %v881 = vld [vmem:[%s323 + $0xd8] sm:$0xff]
        %v882 = vld [vmem:[%s323 + $0xe0] sm:$0xff]
        %v883 = vld [vmem:[%s323 + $0xe8] sm:$0xff]
        %v884 = vld [vmem:[%s323 + $0xf0] sm:$0xff]
        %v885 = vld [vmem:[%s323 + $0xf8] sm:$0xff]
        %886 = vst.msk [vmem:[#allocation2 + $0x11] sm:$0xff] %vm815, %v854
        %887 = vst.msk [vmem:[#allocation2 + $0x19] sm:$0xff] %vm815, %v855
        %888 = vst.msk [vmem:[#allocation2 + $0x21] sm:$0xff] %vm815, %v856
        %889 = vst.msk [vmem:[#allocation2 + $0x29] sm:$0xff] %vm815, %v857
        %890 = vst.msk [vmem:[#allocation2 + $0x31] sm:$0xff] %vm815, %v858
        %891 = vst.msk [vmem:[#allocation2 + $0x39] sm:$0xff] %vm815, %v859
        %892 = vst.msk [vmem:[#allocation2 + $0x41] sm:$0xff] %vm815, %v860
        %893 = vst.msk [vmem:[#allocation2 + $0x49] sm:$0xff] %vm815, %v861
        %894 = vst.msk [vmem:[#allocation2 + $0x51] sm:$0xff] %vm815, %v862
        %895 = vst.msk [vmem:[#allocation2 + $0x59] sm:$0xff] %vm815, %v863
        %896 = vst.msk [vmem:[#allocation2 + $0x61] sm:$0xff] %vm815, %v864
        %897 = vst.msk [vmem:[#allocation2 + $0x69] sm:$0xff] %vm815, %v865
        %898 = vst.msk [vmem:[#allocation2 + $0x71] sm:$0xff] %vm815, %v866
        %899 = vst.msk [vmem:[#allocation2 + $0x79] sm:$0xff] %vm815, %v867
        %900 = vst.msk [vmem:[#allocation2 + $0x81] sm:$0xff] %vm815, %v868
        %901 = vst.msk [vmem:[#allocation2 + $0x89] sm:$0xff] %vm815, %v869
        %902 = vst.msk [vmem:[#allocation2 + $0x91] sm:$0xff] %vm815, %v870
        %903 = vst.msk [vmem:[#allocation2 + $0x99] sm:$0xff] %vm815, %v871
        %904 = vst.msk [vmem:[#allocation2 + $0xa1] sm:$0xff] %vm815, %v872
        %905 = vst.msk [vmem:[#allocation2 + $0xa9] sm:$0xff] %vm815, %v873
        %906 = vst.msk [vmem:[#allocation2 + $0xb1] sm:$0xff] %vm815, %v874
        %907 = vst.msk [vmem:[#allocation2 + $0xb9] sm:$0xff] %vm815, %v875
        %908 = vst.msk [vmem:[#allocation2 + $0xc1] sm:$0xff] %vm815, %v876
        %909 = vst.msk [vmem:[#allocation2 + $0xc9] sm:$0xff] %vm815, %v877
        %910 = vst.msk [vmem:[#allocation2 + $0xd1] sm:$0xff] %vm815, %v878
        %911 = vst.msk [vmem:[#allocation2 + $0xd9] sm:$0xff] %vm815, %v879
        %912 = vst.msk [vmem:[#allocation2 + $0xe1] sm:$0xff] %vm815, %v880
        %913 = vst.msk [vmem:[#allocation2 + $0xe9] sm:$0xff] %vm815, %v881
        %914 = vst.msk [vmem:[#allocation2 + $0xf1] sm:$0xff] %vm815, %v882
        %915 = vst.msk [vmem:[#allocation2 + $0xf9] sm:$0xff] %vm815, %v883
        %916 = vst.msk [vmem:[#allocation2 + $0x101] sm:$0xff] %vm815, %v884
        %917 = vst.msk [vmem:[#allocation2 + $0x109] sm:$0xff] %vm815, %v885
        %v918 = vld [vmem:[#allocation2] sm:$0xff]
        %v919 = vld [vmem:[#allocation2 + $0x8] sm:$0xff]
        %v920 = vld [vmem:[#allocation2 + $0x10] sm:$0xff]
        %v921 = vld [vmem:[#allocation2 + $0x18] sm:$0xff]
        %v922 = vld [vmem:[#allocation2 + $0x20] sm:$0xff]
        %v923 = vld [vmem:[#allocation2 + $0x28] sm:$0xff]
        %v924 = vld [vmem:[#allocation2 + $0x30] sm:$0xff]
        %v925 = vld [vmem:[#allocation2 + $0x38] sm:$0xff]
        %v926 = vld [vmem:[#allocation2 + $0x40] sm:$0xff]
        %v927 = vld [vmem:[#allocation2 + $0x48] sm:$0xff]
        %v928 = vld [vmem:[#allocation2 + $0x50] sm:$0xff]
        %v929 = vld [vmem:[#allocation2 + $0x58] sm:$0xff]
        %v930 = vld [vmem:[#allocation2 + $0x60] sm:$0xff]
        %v931 = vld [vmem:[#allocation2 + $0x68] sm:$0xff]
        %v932 = vld [vmem:[#allocation2 + $0x70] sm:$0xff]
        %v933 = vld [vmem:[#allocation2 + $0x78] sm:$0xff]
        %v934 = vld [vmem:[#allocation2 + $0x80] sm:$0xff]
        %v935 = vld [vmem:[#allocation2 + $0x88] sm:$0xff]
        %v936 = vld [vmem:[#allocation2 + $0x90] sm:$0xff]
        %v937 = vld [vmem:[#allocation2 + $0x98] sm:$0xff]
        %v938 = vld [vmem:[#allocation2 + $0xa0] sm:$0xff]
        %v939 = vld [vmem:[#allocation2 + $0xa8] sm:$0xff]
        %v940 = vld [vmem:[#allocation2 + $0xb0] sm:$0xff]
        %v941 = vld [vmem:[#allocation2 + $0xb8] sm:$0xff]
        %v942 = vld [vmem:[#allocation2 + $0xc0] sm:$0xff]
        %v943 = vld [vmem:[#allocation2 + $0xc8] sm:$0xff]
        %v944 = vld [vmem:[#allocation2 + $0xd0] sm:$0xff]
        %v945 = vld [vmem:[#allocation2 + $0xd8] sm:$0xff]
        %v946 = vld [vmem:[#allocation2 + $0xe0] sm:$0xff]
        %v947 = vld [vmem:[#allocation2 + $0xe8] sm:$0xff]
        %v948 = vld [vmem:[#allocation2 + $0xf0] sm:$0xff]
        %v949 = vld [vmem:[#allocation2 + $0xf8] sm:$0xff]
        %v950 = vsel %vm751, 1, 0
        %v951 = vsel %vm752, 1, 0
        %v952 = vsel %vm753, 1, 0
        %v953 = vsel %vm754, 1, 0
        %v954 = vsel %vm755, 1, 0
        %v955 = vsel %vm756, 1, 0
        %v956 = vsel %vm757, 1, 0
        %v957 = vsel %vm758, 1, 0
        %v958 = vsel %vm759, 1, 0
        %v959 = vsel %vm760, 1, 0
        %v960 = vsel %vm761, 1, 0
        %v961 = vsel %vm762, 1, 0
        %v962 = vsel %vm763, 1, 0
        %v963 = vsel %vm764, 1, 0
        %v964 = vsel %vm765, 1, 0
        %v965 = vsel %vm766, 1, 0
        %v966 = vsel %vm767, 1, 0
        %v967 = vsel %vm768, 1, 0
        %v968 = vsel %vm769, 1, 0
        %v969 = vsel %vm770, 1, 0
        %v970 = vsel %vm771, 1, 0
        %v971 = vsel %vm772, 1, 0
        %v972 = vsel %vm773, 1, 0
        %v973 = vsel %vm774, 1, 0
        %v974 = vsel %vm775, 1, 0
        %v975 = vsel %vm776, 1, 0
        %v976 = vsel %vm777, 1, 0
        %v977 = vsel %vm778, 1, 0
        %v978 = vsel %vm779, 1, 0
        %v979 = vsel %vm780, 1, 0
        %v980 = vsel %vm781, 1, 0
        %v981 = vsel %vm782, 1, 0
        %vm982 = vcmp.eq.s32.totalorder %v950, 1
        %vm983 = vcmp.eq.s32.totalorder %v951, 1
        %vm984 = vcmp.eq.s32.totalorder %v952, 1
        %vm985 = vcmp.eq.s32.totalorder %v953, 1
        %vm986 = vcmp.eq.s32.totalorder %v954, 1
        %vm987 = vcmp.eq.s32.totalorder %v955, 1
        %vm988 = vcmp.eq.s32.totalorder %v956, 1
        %vm989 = vcmp.eq.s32.totalorder %v957, 1
        %vm990 = vcmp.eq.s32.totalorder %v958, 1
        %vm991 = vcmp.eq.s32.totalorder %v959, 1
        %vm992 = vcmp.eq.s32.totalorder %v960, 1
        %vm993 = vcmp.eq.s32.totalorder %v961, 1
        %vm994 = vcmp.eq.s32.totalorder %v962, 1
        %vm995 = vcmp.eq.s32.totalorder %v963, 1
        %vm996 = vcmp.eq.s32.totalorder %v964, 1
        %vm997 = vcmp.eq.s32.totalorder %v965, 1
        %vm998 = vcmp.eq.s32.totalorder %v966, 1
        %vm999 = vcmp.eq.s32.totalorder %v967, 1
        %vm1000 = vcmp.eq.s32.totalorder %v968, 1
        %vm1001 = vcmp.eq.s32.totalorder %v969, 1
        %vm1002 = vcmp.eq.s32.totalorder %v970, 1
        %vm1003 = vcmp.eq.s32.totalorder %v971, 1
        %vm1004 = vcmp.eq.s32.totalorder %v972, 1
        %vm1005 = vcmp.eq.s32.totalorder %v973, 1
        %vm1006 = vcmp.eq.s32.totalorder %v974, 1
        %vm1007 = vcmp.eq.s32.totalorder %v975, 1
        %vm1008 = vcmp.eq.s32.totalorder %v976, 1
        %vm1009 = vcmp.eq.s32.totalorder %v977, 1
        %vm1010 = vcmp.eq.s32.totalorder %v978, 1
        %vm1011 = vcmp.eq.s32.totalorder %v979, 1
        %vm1012 = vcmp.eq.s32.totalorder %v980, 1
        %vm1013 = vcmp.eq.s32.totalorder %v981, 1
        %v1014 = vsel %vm982, %v918, 0.0
        %v1015 = vsel %vm983, %v919, 0.0
        %v1016 = vsel %vm984, %v920, 0.0
        %v1017 = vsel %vm985, %v921, 0.0
        %v1018 = vsel %vm986, %v922, 0.0
        %v1019 = vsel %vm987, %v923, 0.0
        %v1020 = vsel %vm988, %v924, 0.0
        %v1021 = vsel %vm989, %v925, 0.0
        %v1022 = vsel %vm990, %v926, 0.0
        %v1023 = vsel %vm991, %v927, 0.0
        %v1024 = vsel %vm992, %v928, 0.0
        %v1025 = vsel %vm993, %v929, 0.0
        %v1026 = vsel %vm994, %v930, 0.0
        %v1027 = vsel %vm995, %v931, 0.0
        %v1028 = vsel %vm996, %v932, 0.0
        %v1029 = vsel %vm997, %v933, 0.0
        %v1030 = vsel %vm998, %v934, 0.0
        %v1031 = vsel %vm999, %v935, 0.0
        %v1032 = vsel %vm1000, %v936, 0.0
        %v1033 = vsel %vm1001, %v937, 0.0
        %v1034 = vsel %vm1002, %v938, 0.0
        %v1035 = vsel %vm1003, %v939, 0.0
        %v1036 = vsel %vm1004, %v940, 0.0
        %v1037 = vsel %vm1005, %v941, 0.0
        %v1038 = vsel %vm1006, %v942, 0.0
        %v1039 = vsel %vm1007, %v943, 0.0
        %v1040 = vsel %vm1008, %v944, 0.0
        %v1041 = vsel %vm1009, %v945, 0.0
        %v1042 = vsel %vm1010, %v946, 0.0
        %v1043 = vsel %vm1011, %v947, 0.0
        %v1044 = vsel %vm1012, %v948, 0.0
        %v1045 = vsel %vm1013, %v949, 0.0
        %v1046 = vld [vmem:[%s1] sm:$0xff]
        %v1047 = vld [vmem:[#allocation2 + $0x1] sm:$0xff]
        %v1048 = vld [vmem:[#allocation2 + $0x9] sm:$0xff]
        %v1049 = vld [vmem:[#allocation2 + $0x11] sm:$0xff]
        %v1050 = vld [vmem:[#allocation2 + $0x19] sm:$0xff]
        %v1051 = vld [vmem:[#allocation2 + $0x21] sm:$0xff]
        %v1052 = vld [vmem:[#allocation2 + $0x29] sm:$0xff]
        %v1053 = vld [vmem:[#allocation2 + $0x31] sm:$0xff]
        %v1054 = vld [vmem:[#allocation2 + $0x39] sm:$0xff]
        %v1055 = vld [vmem:[#allocation2 + $0x41] sm:$0xff]
        %v1056 = vld [vmem:[#allocation2 + $0x49] sm:$0xff]
        %v1057 = vld [vmem:[#allocation2 + $0x51] sm:$0xff]
        %v1058 = vld [vmem:[#allocation2 + $0x59] sm:$0xff]
        %v1059 = vld [vmem:[#allocation2 + $0x61] sm:$0xff]
        %v1060 = vld [vmem:[#allocation2 + $0x69] sm:$0xff]
        %v1061 = vld [vmem:[#allocation2 + $0x71] sm:$0xff]
        %v1062 = vld [vmem:[#allocation2 + $0x79] sm:$0xff]
        %v1063 = vld [vmem:[#allocation2 + $0x81] sm:$0xff]
        %v1064 = vld [vmem:[#allocation2 + $0x89] sm:$0xff]
        %v1065 = vld [vmem:[#allocation2 + $0x91] sm:$0xff]
        %v1066 = vld [vmem:[#allocation2 + $0x99] sm:$0xff]
        %v1067 = vld [vmem:[#allocation2 + $0xa1] sm:$0xff]
        %v1068 = vld [vmem:[#allocation2 + $0xa9] sm:$0xff]
        %v1069 = vld [vmem:[#allocation2 + $0xb1] sm:$0xff]
        %v1070 = vld [vmem:[#allocation2 + $0xb9] sm:$0xff]
        %v1071 = vld [vmem:[#allocation2 + $0xc1] sm:$0xff]
        %v1072 = vld [vmem:[#allocation2 + $0xc9] sm:$0xff]
        %v1073 = vld [vmem:[#allocation2 + $0xd1] sm:$0xff]
        %v1074 = vld [vmem:[#allocation2 + $0xd9] sm:$0xff]
        %v1075 = vld [vmem:[#allocation2 + $0xe1] sm:$0xff]
        %v1076 = vld [vmem:[#allocation2 + $0xe9] sm:$0xff]
        %v1077 = vld [vmem:[#allocation2 + $0xf1] sm:$0xff]
        %v1078 = vld [vmem:[#allocation2 + $0xf9] sm:$0xff]
        %s1079 = scalar_lea.vmem %s1, 8
        %v1080 = vld [vmem:[%s1079] sm:$0xff]
        %v1082 = vsel %vm815, %v1047, 0
        %v1085 = vsel %vm815, %v1048, 0
        %v1088 = vsel %vm815, %v1049, 0
        %v1091 = vsel %vm815, %v1050, 0
        %v1094 = vsel %vm815, %v1051, 0
        %v1097 = vsel %vm815, %v1052, 0
        %v1100 = vsel %vm815, %v1053, 0
        %v1103 = vsel %vm815, %v1054, 0
        %v1106 = vsel %vm815, %v1055, 0
        %v1109 = vsel %vm815, %v1056, 0
        %v1112 = vsel %vm815, %v1057, 0
        %v1115 = vsel %vm815, %v1058, 0
        %v1118 = vsel %vm815, %v1059, 0
        %v1121 = vsel %vm815, %v1060, 0
        %v1124 = vsel %vm815, %v1061, 0
        %v1127 = vsel %vm815, %v1062, 0
        %v1130 = vsel %vm815, %v1063, 0
        %v1133 = vsel %vm815, %v1064, 0
        %v1136 = vsel %vm815, %v1065, 0
        %v1139 = vsel %vm815, %v1066, 0
        %v1142 = vsel %vm815, %v1067, 0
        %v1145 = vsel %vm815, %v1068, 0
        %v1148 = vsel %vm815, %v1069, 0
        %v1151 = vsel %vm815, %v1070, 0
        %v1154 = vsel %vm815, %v1071, 0
        %v1157 = vsel %vm815, %v1072, 0
        %v1160 = vsel %vm815, %v1073, 0
        %v1163 = vsel %vm815, %v1074, 0
        %v1166 = vsel %vm815, %v1075, 0
        %v1169 = vsel %vm815, %v1076, 0
        %v1172 = vsel %vm815, %v1077, 0
        %v1175 = vsel %vm815, %v1078, 0
        %1177 = vmatprep.subr.mxu0 0.0
        %1178 = vmatpush1.msra.mxu0 %v1080
        %1179 = vmatprep.subr.mxu0 0.0
        %1180 = vmatpush1.msra.mxu0 0.0
        %1181 = vmatprep.subr.mxu0 0.0
        %1182 = vmatpush1.msra.mxu0 0.0
        %1183 = vmatprep.subr.mxu0 0.0
        %1184 = vmatpush1.msra.mxu0 0.0
        %1185 = vmatprep.subr.mxu0 0.0
        %1186 = vmatpush1.msra.mxu0 0.0
        %1187 = vmatprep.subr.mxu0 0.0
        %1188 = vmatpush1.msra.mxu0 0.0
        %1189 = vmatprep.subr.mxu0 0.0
        %1190 = vmatpush1.msra.mxu0 0.0
        %1191 = vmatprep.subr.mxu0 0.0
        %1192 = vmatpush1.msra.mxu0 0.0
        %1193 = vmatprep.subr.mxu0 0.0
        %1194 = vmatpush1.msra.mxu0 0.0
        %1195 = vmatprep.subr.mxu0 0.0
        %1196 = vmatpush1.msra.mxu0 0.0
        %1197 = vmatprep.subr.mxu0 0.0
        %1198 = vmatpush1.msra.mxu0 0.0
        %1199 = vmatprep.subr.mxu0 0.0
        %1200 = vmatpush1.msra.mxu0 0.0
        %1201 = vmatprep.subr.mxu0 0.0
        %1202 = vmatpush1.msra.mxu0 0.0
        %1203 = vmatprep.subr.mxu0 0.0
        %1204 = vmatpush1.msra.mxu0 0.0
        %1205 = vmatprep.subr.mxu0 0.0
        %1206 = vmatpush1.msra.mxu0 0.0
        %1207 = vmatprep.subr.mxu0 0.0
        %1208 = vmatpush1.msra.mxu0 0.0
        %1209 = vmatprep.subr.mxu0 0.0
        %1210 = vmatpush1.msra.mxu0 0.0
        %1211 = vmatprep.subr.mxu0 0.0
        %1212 = vmatpush1.msra.mxu0 0.0
        %1213 = vmatprep.subr.mxu0 0.0
        %1214 = vmatpush1.msra.mxu0 0.0
        %1215 = vmatprep.subr.mxu0 0.0
        %1216 = vmatpush1.msra.mxu0 0.0
        %1217 = vmatprep.subr.mxu0 0.0
        %1218 = vmatpush1.msra.mxu0 0.0
        %1219 = vmatprep.subr.mxu0 0.0
        %1220 = vmatpush1.msra.mxu0 0.0
        %1221 = vmatprep.subr.mxu0 0.0
        %1222 = vmatpush1.msra.mxu0 0.0
        %1223 = vmatprep.subr.mxu0 0.0
        %1224 = vmatpush1.msra.mxu0 0.0
        %1225 = vmatprep.subr.mxu0 0.0
        %1226 = vmatpush1.msra.mxu0 0.0
        %1227 = vmatprep.subr.mxu0 0.0
        %1228 = vmatpush1.msra.mxu0 0.0
        %1229 = vmatprep.subr.mxu0 0.0
        %1230 = vmatpush1.msra.mxu0 0.0
        %1231 = vmatprep.subr.mxu0 0.0
        %1232 = vmatpush1.msra.mxu0 0.0
        %1233 = vmatprep.subr.mxu0 0.0
        %1234 = vmatpush1.msra.mxu0 0.0
        %1235 = vmatprep.subr.mxu0 0.0
        %1236 = vmatpush1.msra.mxu0 0.0
        %1237 = vmatprep.subr.mxu0 0.0
        %1238 = vmatpush1.msra.mxu0 0.0
        %1239 = vmatprep.subr.mxu0 0.0
        %1240 = vmatpush1.msra.mxu0 0.0
        %1241 = vmatprep.mubr.f32.mxu0 0.0
        %1242 = vmatmul.mubr.f32.gmra.mrb[0].mxu0 %v1082
        %v1243 = vpop.f32.mrb[0].mxu0
        %v1244 = vadd.f32 0.0, %v1243
        %v1245 = vpop.f32.mrb[0].mxu0
        %1246 = vmatprep.mubr.f32.mxu0 0.0
        %1247 = vmatmul.mubr.f32.gmra.mrb[0].mxu0 %v1085
        %v1248 = vpop.f32.mrb[0].mxu0
        %v1249 = vadd.f32 0.0, %v1248
        %v1250 = vpop.f32.mrb[0].mxu0
        %1251 = vmatprep.mubr.f32.mxu0 0.0
        %1252 = vmatmul.mubr.f32.gmra.mrb[0].mxu0 %v1088
        %v1253 = vpop.f32.mrb[0].mxu0
        %v1254 = vadd.f32 0.0, %v1253
        %v1255 = vpop.f32.mrb[0].mxu0
        %1256 = vmatprep.mubr.f32.mxu0 0.0
        %1257 = vmatmul.mubr.f32.gmra.mrb[0].mxu0 %v1091
        %v1258 = vpop.f32.mrb[0].mxu0
        %v1259 = vadd.f32 0.0, %v1258
        %v1260 = vpop.f32.mrb[0].mxu0
        %1261 = vmatprep.mubr.f32.mxu0 0.0
        %1262 = vmatmul.mubr.f32.gmra.mrb[0].mxu0 %v1094
        %v1263 = vpop.f32.mrb[0].mxu0
        %v1264 = vadd.f32 0.0, %v1263
        %v1265 = vpop.f32.mrb[0].mxu0
        %1266 = vmatprep.mubr.f32.mxu0 0.0
        %1267 = vmatmul.mubr.f32.gmra.mrb[0].mxu0 %v1097
        %v1268 = vpop.f32.mrb[0].mxu0
        %v1269 = vadd.f32 0.0, %v1268
        %v1270 = vpop.f32.mrb[0].mxu0
        %1271 = vmatprep.mubr.f32.mxu0 0.0
        %1272 = vmatmul.mubr.f32.gmra.mrb[0].mxu0 %v1100
        %v1273 = vpop.f32.mrb[0].mxu0
        %v1274 = vadd.f32 0.0, %v1273
        %v1275 = vpop.f32.mrb[0].mxu0
        %1276 = vmatprep.mubr.f32.mxu0 0.0
        %1277 = vmatmul.mubr.f32.gmra.mrb[0].mxu0 %v1103
        %v1278 = vpop.f32.mrb[0].mxu0
        %v1279 = vadd.f32 0.0, %v1278
        %v1280 = vpop.f32.mrb[0].mxu0
        %1281 = vmatprep.mubr.f32.mxu0 0.0
        %1282 = vmatmul.mubr.f32.gmra.mrb[0].mxu0 %v1106
        %v1283 = vpop.f32.mrb[0].mxu0
        %v1284 = vadd.f32 0.0, %v1283
        %v1285 = vpop.f32.mrb[0].mxu0
        %1286 = vmatprep.mubr.f32.mxu0 0.0
        %1287 = vmatmul.mubr.f32.gmra.mrb[0].mxu0 %v1109
        %v1288 = vpop.f32.mrb[0].mxu0
        %v1289 = vadd.f32 0.0, %v1288
        %v1290 = vpop.f32.mrb[0].mxu0
        %1291 = vmatprep.mubr.f32.mxu0 0.0
        %1292 = vmatmul.mubr.f32.gmra.mrb[0].mxu0 %v1112
        %v1293 = vpop.f32.mrb[0].mxu0
        %v1294 = vadd.f32 0.0, %v1293
        %v1295 = vpop.f32.mrb[0].mxu0
        %1296 = vmatprep.mubr.f32.mxu0 0.0
        %1297 = vmatmul.mubr.f32.gmra.mrb[0].mxu0 %v1115
        %v1298 = vpop.f32.mrb[0].mxu0
        %v1299 = vadd.f32 0.0, %v1298
        %v1300 = vpop.f32.mrb[0].mxu0
        %1301 = vmatprep.mubr.f32.mxu0 0.0
        %1302 = vmatmul.mubr.f32.gmra.mrb[0].mxu0 %v1118
        %v1303 = vpop.f32.mrb[0].mxu0
        %v1304 = vadd.f32 0.0, %v1303
        %v1305 = vpop.f32.mrb[0].mxu0
        %1306 = vmatprep.mubr.f32.mxu0 0.0
        %1307 = vmatmul.mubr.f32.gmra.mrb[0].mxu0 %v1121
        %v1308 = vpop.f32.mrb[0].mxu0
        %v1309 = vadd.f32 0.0, %v1308
        %v1310 = vpop.f32.mrb[0].mxu0
        %1311 = vmatprep.mubr.f32.mxu0 0.0
        %1312 = vmatmul.mubr.f32.gmra.mrb[0].mxu0 %v1124
        %v1313 = vpop.f32.mrb[0].mxu0
        %v1314 = vadd.f32 0.0, %v1313
        %v1315 = vpop.f32.mrb[0].mxu0
        %1316 = vmatprep.mubr.f32.mxu0 0.0
        %1317 = vmatmul.mubr.f32.gmra.mrb[0].mxu0 %v1127
        %v1318 = vpop.f32.mrb[0].mxu0
        %v1319 = vadd.f32 0.0, %v1318
        %v1320 = vpop.f32.mrb[0].mxu0
        %1321 = vmatprep.mubr.f32.mxu0 0.0
        %1322 = vmatmul.mubr.f32.gmra.mrb[0].mxu0 %v1130
        %v1323 = vpop.f32.mrb[0].mxu0
        %v1324 = vadd.f32 0.0, %v1323
        %v1325 = vpop.f32.mrb[0].mxu0
        %1326 = vmatprep.mubr.f32.mxu0 0.0
        %1327 = vmatmul.mubr.f32.gmra.mrb[0].mxu0 %v1133
        %v1328 = vpop.f32.mrb[0].mxu0
        %v1329 = vadd.f32 0.0, %v1328
        %v1330 = vpop.f32.mrb[0].mxu0
        %1331 = vmatprep.mubr.f32.mxu0 0.0
        %1332 = vmatmul.mubr.f32.gmra.mrb[0].mxu0 %v1136
        %v1333 = vpop.f32.mrb[0].mxu0
        %v1334 = vadd.f32 0.0, %v1333
        %v1335 = vpop.f32.mrb[0].mxu0
        %1336 = vmatprep.mubr.f32.mxu0 0.0
        %1337 = vmatmul.mubr.f32.gmra.mrb[0].mxu0 %v1139
        %v1338 = vpop.f32.mrb[0].mxu0
        %v1339 = vadd.f32 0.0, %v1338
        %v1340 = vpop.f32.mrb[0].mxu0
        %1341 = vmatprep.mubr.f32.mxu0 0.0
        %1342 = vmatmul.mubr.f32.gmra.mrb[0].mxu0 %v1142
        %v1343 = vpop.f32.mrb[0].mxu0
        %v1344 = vadd.f32 0.0, %v1343
        %v1345 = vpop.f32.mrb[0].mxu0
        %1346 = vmatprep.mubr.f32.mxu0 0.0
        %1347 = vmatmul.mubr.f32.gmra.mrb[0].mxu0 %v1145
        %v1348 = vpop.f32.mrb[0].mxu0
        %v1349 = vadd.f32 0.0, %v1348
        %v1350 = vpop.f32.mrb[0].mxu0
        %1351 = vmatprep.mubr.f32.mxu0 0.0
        %1352 = vmatmul.mubr.f32.gmra.mrb[0].mxu0 %v1148
        %v1353 = vpop.f32.mrb[0].mxu0
        %v1354 = vadd.f32 0.0, %v1353
        %v1355 = vpop.f32.mrb[0].mxu0
        %1356 = vmatprep.mubr.f32.mxu0 0.0
        %1357 = vmatmul.mubr.f32.gmra.mrb[0].mxu0 %v1151
        %v1358 = vpop.f32.mrb[0].mxu0
        %v1359 = vadd.f32 0.0, %v1358
        %v1360 = vpop.f32.mrb[0].mxu0
        %1361 = vmatprep.mubr.f32.mxu0 0.0
        %1362 = vmatmul.mubr.f32.gmra.mrb[0].mxu0 %v1154
        %v1363 = vpop.f32.mrb[0].mxu0
        %v1364 = vadd.f32 0.0, %v1363
        %v1365 = vpop.f32.mrb[0].mxu0
        %1366 = vmatprep.mubr.f32.mxu0 0.0
        %1367 = vmatmul.mubr.f32.gmra.mrb[0].mxu0 %v1157
        %v1368 = vpop.f32.mrb[0].mxu0
        %v1369 = vadd.f32 0.0, %v1368
        %v1370 = vpop.f32.mrb[0].mxu0
        %1371 = vmatprep.mubr.f32.mxu0 0.0
        %1372 = vmatmul.mubr.f32.gmra.mrb[0].mxu0 %v1160
        %v1373 = vpop.f32.mrb[0].mxu0
        %v1374 = vadd.f32 0.0, %v1373
        %v1375 = vpop.f32.mrb[0].mxu0
        %1376 = vmatprep.mubr.f32.mxu0 0.0
        %1377 = vmatmul.mubr.f32.gmra.mrb[0].mxu0 %v1163
        %v1378 = vpop.f32.mrb[0].mxu0
        %v1379 = vadd.f32 0.0, %v1378
        %v1380 = vpop.f32.mrb[0].mxu0
        %1381 = vmatprep.mubr.f32.mxu0 0.0
        %1382 = vmatmul.mubr.f32.gmra.mrb[0].mxu0 %v1166
        %v1383 = vpop.f32.mrb[0].mxu0
        %v1384 = vadd.f32 0.0, %v1383
        %v1385 = vpop.f32.mrb[0].mxu0
        %1386 = vmatprep.mubr.f32.mxu0 0.0
        %1387 = vmatmul.mubr.f32.gmra.mrb[0].mxu0 %v1169
        %v1388 = vpop.f32.mrb[0].mxu0
        %v1389 = vadd.f32 0.0, %v1388
        %v1390 = vpop.f32.mrb[0].mxu0
        %1391 = vmatprep.mubr.f32.mxu0 0.0
        %1392 = vmatmul.mubr.f32.gmra.mrb[0].mxu0 %v1172
        %v1393 = vpop.f32.mrb[0].mxu0
        %v1394 = vadd.f32 0.0, %v1393
        %v1395 = vpop.f32.mrb[0].mxu0
        %1396 = vmatprep.mubr.f32.mxu0 0.0
        %1397 = vmatmul.mubr.f32.gmra.mrb[0].mxu0 %v1175
        %v1398 = vpop.f32.mrb[0].mxu0
        %v1399 = vadd.f32 0.0, %v1398
        %v1400 = vpop.f32.mrb[0].mxu0
        %1401 = vdwg.mxu0
        %v1403 = vsel %vm815, %v1014, 0
        %v1406 = vsel %vm815, %v1015, 0
        %v1409 = vsel %vm815, %v1016, 0
        %v1412 = vsel %vm815, %v1017, 0
        %v1415 = vsel %vm815, %v1018, 0
        %v1418 = vsel %vm815, %v1019, 0
        %v1421 = vsel %vm815, %v1020, 0
        %v1424 = vsel %vm815, %v1021, 0
        %v1427 = vsel %vm815, %v1022, 0
        %v1430 = vsel %vm815, %v1023, 0
        %v1433 = vsel %vm815, %v1024, 0
        %v1436 = vsel %vm815, %v1025, 0
        %v1439 = vsel %vm815, %v1026, 0
        %v1442 = vsel %vm815, %v1027, 0
        %v1445 = vsel %vm815, %v1028, 0
        %v1448 = vsel %vm815, %v1029, 0
        %v1451 = vsel %vm815, %v1030, 0
        %v1454 = vsel %vm815, %v1031, 0
        %v1457 = vsel %vm815, %v1032, 0
        %v1460 = vsel %vm815, %v1033, 0
        %v1463 = vsel %vm815, %v1034, 0
        %v1466 = vsel %vm815, %v1035, 0
        %v1469 = vsel %vm815, %v1036, 0
        %v1472 = vsel %vm815, %v1037, 0
        %v1475 = vsel %vm815, %v1038, 0
        %v1478 = vsel %vm815, %v1039, 0
        %v1481 = vsel %vm815, %v1040, 0
        %v1484 = vsel %vm815, %v1041, 0
        %v1487 = vsel %vm815, %v1042, 0
        %v1490 = vsel %vm815, %v1043, 0
        %v1493 = vsel %vm815, %v1044, 0
        %v1496 = vsel %vm815, %v1045, 0
        %1498 = vmatprep.subr.mxu0 0.0
        %1499 = vmatpush1.msra.mxu0 %v1046
        %1500 = vmatprep.subr.mxu0 0.0
        %1501 = vmatpush1.msra.mxu0 0.0
        %1502 = vmatprep.subr.mxu0 0.0
        %1503 = vmatpush1.msra.mxu0 0.0
        %1504 = vmatprep.subr.mxu0 0.0
        %1505 = vmatpush1.msra.mxu0 0.0
        %1506 = vmatprep.subr.mxu0 0.0
        %1507 = vmatpush1.msra.mxu0 0.0
        %1508 = vmatprep.subr.mxu0 0.0
        %1509 = vmatpush1.msra.mxu0 0.0
        %1510 = vmatprep.subr.mxu0 0.0
        %1511 = vmatpush1.msra.mxu0 0.0
        %1512 = vmatprep.subr.mxu0 0.0
        %1513 = vmatpush1.msra.mxu0 0.0
        %1514 = vmatprep.subr.mxu0 0.0
        %1515 = vmatpush1.msra.mxu0 0.0
        %1516 = vmatprep.subr.mxu0 0.0
        %1517 = vmatpush1.msra.mxu0 0.0
        %1518 = vmatprep.subr.mxu0 0.0
        %1519 = vmatpush1.msra.mxu0 0.0
        %1520 = vmatprep.subr.mxu0 0.0
        %1521 = vmatpush1.msra.mxu0 0.0
        %1522 = vmatprep.subr.mxu0 0.0
        %1523 = vmatpush1.msra.mxu0 0.0
        %1524 = vmatprep.subr.mxu0 0.0
        %1525 = vmatpush1.msra.mxu0 0.0
        %1526 = vmatprep.subr.mxu0 0.0
        %1527 = vmatpush1.msra.mxu0 0.0
        %1528 = vmatprep.subr.mxu0 0.0
        %1529 = vmatpush1.msra.mxu0 0.0
        %1530 = vmatprep.subr.mxu0 0.0
        %1531 = vmatpush1.msra.mxu0 0.0
        %1532 = vmatprep.subr.mxu0 0.0
        %1533 = vmatpush1.msra.mxu0 0.0
        %1534 = vmatprep.subr.mxu0 0.0
        %1535 = vmatpush1.msra.mxu0 0.0
        %1536 = vmatprep.subr.mxu0 0.0
        %1537 = vmatpush1.msra.mxu0 0.0
        %1538 = vmatprep.subr.mxu0 0.0
        %1539 = vmatpush1.msra.mxu0 0.0
        %1540 = vmatprep.subr.mxu0 0.0
        %1541 = vmatpush1.msra.mxu0 0.0
        %1542 = vmatprep.subr.mxu0 0.0
        %1543 = vmatpush1.msra.mxu0 0.0
        %1544 = vmatprep.subr.mxu0 0.0
        %1545 = vmatpush1.msra.mxu0 0.0
        %1546 = vmatprep.subr.mxu0 0.0
        %1547 = vmatpush1.msra.mxu0 0.0
        %1548 = vmatprep.subr.mxu0 0.0
        %1549 = vmatpush1.msra.mxu0 0.0
        %1550 = vmatprep.subr.mxu0 0.0
        %1551 = vmatpush1.msra.mxu0 0.0
        %1552 = vmatprep.subr.mxu0 0.0
        %1553 = vmatpush1.msra.mxu0 0.0
        %1554 = vmatprep.subr.mxu0 0.0
        %1555 = vmatpush1.msra.mxu0 0.0
        %1556 = vmatprep.subr.mxu0 0.0
        %1557 = vmatpush1.msra.mxu0 0.0
        %1558 = vmatprep.subr.mxu0 0.0
        %1559 = vmatpush1.msra.mxu0 0.0
        %1560 = vmatprep.subr.mxu0 0.0
        %1561 = vmatpush1.msra.mxu0 0.0
        %1562 = vmatprep.mubr.f32.mxu0 0.0
        %1563 = vmatmul.mubr.f32.gmra.mrb[0].mxu0 %v1403
        %v1564 = vpop.f32.mrb[0].mxu0
        %v1565 = vadd.f32 %v1244, %v1564
        %v1566 = vpop.f32.mrb[0].mxu0
        %1567 = vmatprep.mubr.f32.mxu0 0.0
        %1568 = vmatmul.mubr.f32.gmra.mrb[0].mxu0 %v1406
        %v1569 = vpop.f32.mrb[0].mxu0
        %v1570 = vadd.f32 %v1249, %v1569
        %v1571 = vpop.f32.mrb[0].mxu0
        %1572 = vmatprep.mubr.f32.mxu0 0.0
        %1573 = vmatmul.mubr.f32.gmra.mrb[0].mxu0 %v1409
        %v1574 = vpop.f32.mrb[0].mxu0
        %v1575 = vadd.f32 %v1254, %v1574
        %v1576 = vpop.f32.mrb[0].mxu0
        %1577 = vmatprep.mubr.f32.mxu0 0.0
        %1578 = vmatmul.mubr.f32.gmra.mrb[0].mxu0 %v1412
        %v1579 = vpop.f32.mrb[0].mxu0
        %v1580 = vadd.f32 %v1259, %v1579
        %v1581 = vpop.f32.mrb[0].mxu0
        %1582 = vmatprep.mubr.f32.mxu0 0.0
        %1583 = vmatmul.mubr.f32.gmra.mrb[0].mxu0 %v1415
        %v1584 = vpop.f32.mrb[0].mxu0
        %v1585 = vadd.f32 %v1264, %v1584
        %v1586 = vpop.f32.mrb[0].mxu0
        %1587 = vmatprep.mubr.f32.mxu0 0.0
        %1588 = vmatmul.mubr.f32.gmra.mrb[0].mxu0 %v1418
        %v1589 = vpop.f32.mrb[0].mxu0
        %v1590 = vadd.f32 %v1269, %v1589
        %v1591 = vpop.f32.mrb[0].mxu0
        %1592 = vmatprep.mubr.f32.mxu0 0.0
        %1593 = vmatmul.mubr.f32.gmra.mrb[0].mxu0 %v1421
        %v1594 = vpop.f32.mrb[0].mxu0
        %v1595 = vadd.f32 %v1274, %v1594
        %v1596 = vpop.f32.mrb[0].mxu0
        %1597 = vmatprep.mubr.f32.mxu0 0.0
        %1598 = vmatmul.mubr.f32.gmra.mrb[0].mxu0 %v1424
        %v1599 = vpop.f32.mrb[0].mxu0
        %v1600 = vadd.f32 %v1279, %v1599
        %v1601 = vpop.f32.mrb[0].mxu0
        %1602 = vmatprep.mubr.f32.mxu0 0.0
        %1603 = vmatmul.mubr.f32.gmra.mrb[0].mxu0 %v1427
        %v1604 = vpop.f32.mrb[0].mxu0
        %v1605 = vadd.f32 %v1284, %v1604
        %v1606 = vpop.f32.mrb[0].mxu0
        %1607 = vmatprep.mubr.f32.mxu0 0.0
        %1608 = vmatmul.mubr.f32.gmra.mrb[0].mxu0 %v1430
        %v1609 = vpop.f32.mrb[0].mxu0
        %v1610 = vadd.f32 %v1289, %v1609
        %v1611 = vpop.f32.mrb[0].mxu0
        %1612 = vmatprep.mubr.f32.mxu0 0.0
        %1613 = vmatmul.mubr.f32.gmra.mrb[0].mxu0 %v1433
        %v1614 = vpop.f32.mrb[0].mxu0
        %v1615 = vadd.f32 %v1294, %v1614
        %v1616 = vpop.f32.mrb[0].mxu0
        %1617 = vmatprep.mubr.f32.mxu0 0.0
        %1618 = vmatmul.mubr.f32.gmra.mrb[0].mxu0 %v1436
        %v1619 = vpop.f32.mrb[0].mxu0
        %v1620 = vadd.f32 %v1299, %v1619
        %v1621 = vpop.f32.mrb[0].mxu0
        %1622 = vmatprep.mubr.f32.mxu0 0.0
        %1623 = vmatmul.mubr.f32.gmra.mrb[0].mxu0 %v1439
        %v1624 = vpop.f32.mrb[0].mxu0
        %v1625 = vadd.f32 %v1304, %v1624
        %v1626 = vpop.f32.mrb[0].mxu0
        %1627 = vmatprep.mubr.f32.mxu0 0.0
        %1628 = vmatmul.mubr.f32.gmra.mrb[0].mxu0 %v1442
        %v1629 = vpop.f32.mrb[0].mxu0
        %v1630 = vadd.f32 %v1309, %v1629
        %v1631 = vpop.f32.mrb[0].mxu0
        %1632 = vmatprep.mubr.f32.mxu0 0.0
        %1633 = vmatmul.mubr.f32.gmra.mrb[0].mxu0 %v1445
        %v1634 = vpop.f32.mrb[0].mxu0
        %v1635 = vadd.f32 %v1314, %v1634
        %v1636 = vpop.f32.mrb[0].mxu0
        %1637 = vmatprep.mubr.f32.mxu0 0.0
        %1638 = vmatmul.mubr.f32.gmra.mrb[0].mxu0 %v1448
        %v1639 = vpop.f32.mrb[0].mxu0
        %v1640 = vadd.f32 %v1319, %v1639
        %v1641 = vpop.f32.mrb[0].mxu0
        %1642 = vmatprep.mubr.f32.mxu0 0.0
        %1643 = vmatmul.mubr.f32.gmra.mrb[0].mxu0 %v1451
        %v1644 = vpop.f32.mrb[0].mxu0
        %v1645 = vadd.f32 %v1324, %v1644
        %v1646 = vpop.f32.mrb[0].mxu0
        %1647 = vmatprep.mubr.f32.mxu0 0.0
        %1648 = vmatmul.mubr.f32.gmra.mrb[0].mxu0 %v1454
        %v1649 = vpop.f32.mrb[0].mxu0
        %v1650 = vadd.f32 %v1329, %v1649
        %v1651 = vpop.f32.mrb[0].mxu0
        %1652 = vmatprep.mubr.f32.mxu0 0.0
        %1653 = vmatmul.mubr.f32.gmra.mrb[0].mxu0 %v1457
        %v1654 = vpop.f32.mrb[0].mxu0
        %v1655 = vadd.f32 %v1334, %v1654
        %v1656 = vpop.f32.mrb[0].mxu0
        %1657 = vmatprep.mubr.f32.mxu0 0.0
        %1658 = vmatmul.mubr.f32.gmra.mrb[0].mxu0 %v1460
        %v1659 = vpop.f32.mrb[0].mxu0
        %v1660 = vadd.f32 %v1339, %v1659
        %v1661 = vpop.f32.mrb[0].mxu0
        %1662 = vmatprep.mubr.f32.mxu0 0.0
        %1663 = vmatmul.mubr.f32.gmra.mrb[0].mxu0 %v1463
        %v1664 = vpop.f32.mrb[0].mxu0
        %v1665 = vadd.f32 %v1344, %v1664
        %v1666 = vpop.f32.mrb[0].mxu0
        %1667 = vmatprep.mubr.f32.mxu0 0.0
        %1668 = vmatmul.mubr.f32.gmra.mrb[0].mxu0 %v1466
        %v1669 = vpop.f32.mrb[0].mxu0
        %v1670 = vadd.f32 %v1349, %v1669
        %v1671 = vpop.f32.mrb[0].mxu0
        %1672 = vmatprep.mubr.f32.mxu0 0.0
        %1673 = vmatmul.mubr.f32.gmra.mrb[0].mxu0 %v1469
        %v1674 = vpop.f32.mrb[0].mxu0
        %v1675 = vadd.f32 %v1354, %v1674
        %v1676 = vpop.f32.mrb[0].mxu0
        %1677 = vmatprep.mubr.f32.mxu0 0.0
        %1678 = vmatmul.mubr.f32.gmra.mrb[0].mxu0 %v1472
        %v1679 = vpop.f32.mrb[0].mxu0
        %v1680 = vadd.f32 %v1359, %v1679
        %v1681 = vpop.f32.mrb[0].mxu0
        %1682 = vmatprep.mubr.f32.mxu0 0.0
        %1683 = vmatmul.mubr.f32.gmra.mrb[0].mxu0 %v1475
        %v1684 = vpop.f32.mrb[0].mxu0
        %v1685 = vadd.f32 %v1364, %v1684
        %v1686 = vpop.f32.mrb[0].mxu0
        %1687 = vmatprep.mubr.f32.mxu0 0.0
        %1688 = vmatmul.mubr.f32.gmra.mrb[0].mxu0 %v1478
        %v1689 = vpop.f32.mrb[0].mxu0
        %v1690 = vadd.f32 %v1369, %v1689
        %v1691 = vpop.f32.mrb[0].mxu0
        %1692 = vmatprep.mubr.f32.mxu0 0.0
        %1693 = vmatmul.mubr.f32.gmra.mrb[0].mxu0 %v1481
        %v1694 = vpop.f32.mrb[0].mxu0
        %v1695 = vadd.f32 %v1374, %v1694
        %v1696 = vpop.f32.mrb[0].mxu0
        %1697 = vmatprep.mubr.f32.mxu0 0.0
        %1698 = vmatmul.mubr.f32.gmra.mrb[0].mxu0 %v1484
        %v1699 = vpop.f32.mrb[0].mxu0
        %v1700 = vadd.f32 %v1379, %v1699
        %v1701 = vpop.f32.mrb[0].mxu0
        %1702 = vmatprep.mubr.f32.mxu0 0.0
        %1703 = vmatmul.mubr.f32.gmra.mrb[0].mxu0 %v1487
        %v1704 = vpop.f32.mrb[0].mxu0
        %v1705 = vadd.f32 %v1384, %v1704
        %v1706 = vpop.f32.mrb[0].mxu0
        %1707 = vmatprep.mubr.f32.mxu0 0.0
        %1708 = vmatmul.mubr.f32.gmra.mrb[0].mxu0 %v1490
        %v1709 = vpop.f32.mrb[0].mxu0
        %v1710 = vadd.f32 %v1389, %v1709
        %v1711 = vpop.f32.mrb[0].mxu0
        %1712 = vmatprep.mubr.f32.mxu0 0.0
        %1713 = vmatmul.mubr.f32.gmra.mrb[0].mxu0 %v1493
        %v1714 = vpop.f32.mrb[0].mxu0
        %v1715 = vadd.f32 %v1394, %v1714
        %v1716 = vpop.f32.mrb[0].mxu0
        %1717 = vmatprep.mubr.f32.mxu0 0.0
        %1718 = vmatmul.mubr.f32.gmra.mrb[0].mxu0 %v1496
        %v1719 = vpop.f32.mrb[0].mxu0
        %v1720 = vadd.f32 %v1399, %v1719
        %v1721 = vpop.f32.mrb[0].mxu0
        %1722 = vdwg.mxu0
        %v1723 = vld [vmem:[#allocation2 + $0x2] sm:$0xff]
        %v1724 = vld [vmem:[#allocation2 + $0xa] sm:$0xff]
        %v1725 = vld [vmem:[#allocation2 + $0x12] sm:$0xff]
        %v1726 = vld [vmem:[#allocation2 + $0x1a] sm:$0xff]
        %v1727 = vld [vmem:[#allocation2 + $0x22] sm:$0xff]
        %v1728 = vld [vmem:[#allocation2 + $0x2a] sm:$0xff]
        %v1729 = vld [vmem:[#allocation2 + $0x32] sm:$0xff]
        %v1730 = vld [vmem:[#allocation2 + $0x3a] sm:$0xff]
        %v1731 = vld [vmem:[#allocation2 + $0x42] sm:$0xff]
        %v1732 = vld [vmem:[#allocation2 + $0x4a] sm:$0xff]
        %v1733 = vld [vmem:[#allocation2 + $0x52] sm:$0xff]
        %v1734 = vld [vmem:[#allocation2 + $0x5a] sm:$0xff]
        %v1735 = vld [vmem:[#allocation2 + $0x62] sm:$0xff]
        %v1736 = vld [vmem:[#allocation2 + $0x6a] sm:$0xff]
        %v1737 = vld [vmem:[#allocation2 + $0x72] sm:$0xff]
        %v1738 = vld [vmem:[#allocation2 + $0x7a] sm:$0xff]
        %v1739 = vld [vmem:[#allocation2 + $0x82] sm:$0xff]
        %v1740 = vld [vmem:[#allocation2 + $0x8a] sm:$0xff]
        %v1741 = vld [vmem:[#allocation2 + $0x92] sm:$0xff]
        %v1742 = vld [vmem:[#allocation2 + $0x9a] sm:$0xff]
        %v1743 = vld [vmem:[#allocation2 + $0xa2] sm:$0xff]
        %v1744 = vld [vmem:[#allocation2 + $0xaa] sm:$0xff]
        %v1745 = vld [vmem:[#allocation2 + $0xb2] sm:$0xff]
        %v1746 = vld [vmem:[#allocation2 + $0xba] sm:$0xff]
        %v1747 = vld [vmem:[#allocation2 + $0xc2] sm:$0xff]
        %v1748 = vld [vmem:[#allocation2 + $0xca] sm:$0xff]
        %v1749 = vld [vmem:[#allocation2 + $0xd2] sm:$0xff]
        %v1750 = vld [vmem:[#allocation2 + $0xda] sm:$0xff]
        %v1751 = vld [vmem:[#allocation2 + $0xe2] sm:$0xff]
        %v1752 = vld [vmem:[#allocation2 + $0xea] sm:$0xff]
        %v1753 = vld [vmem:[#allocation2 + $0xf2] sm:$0xff]
        %v1754 = vld [vmem:[#allocation2 + $0xfa] sm:$0xff]
        %v1755 = vsel %vm783, 1, 0
        %v1756 = vsel %vm784, 1, 0
        %v1757 = vsel %vm785, 1, 0
        %v1758 = vsel %vm786, 1, 0
        %v1759 = vsel %vm787, 1, 0
        %v1760 = vsel %vm788, 1, 0
        %v1761 = vsel %vm789, 1, 0
        %v1762 = vsel %vm790, 1, 0
        %v1763 = vsel %vm791, 1, 0
        %v1764 = vsel %vm792, 1, 0
        %v1765 = vsel %vm793, 1, 0
        %v1766 = vsel %vm794, 1, 0
        %v1767 = vsel %vm795, 1, 0
        %v1768 = vsel %vm796, 1, 0
        %v1769 = vsel %vm797, 1, 0
        %v1770 = vsel %vm798, 1, 0
        %v1771 = vsel %vm799, 1, 0
        %v1772 = vsel %vm800, 1, 0
        %v1773 = vsel %vm801, 1, 0
        %v1774 = vsel %vm802, 1, 0
        %v1775 = vsel %vm803, 1, 0
        %v1776 = vsel %vm804, 1, 0
        %v1777 = vsel %vm805, 1, 0
        %v1778 = vsel %vm806, 1, 0
        %v1779 = vsel %vm807, 1, 0
        %v1780 = vsel %vm808, 1, 0
        %v1781 = vsel %vm809, 1, 0
        %v1782 = vsel %vm810, 1, 0
        %v1783 = vsel %vm811, 1, 0
        %v1784 = vsel %vm812, 1, 0
        %v1785 = vsel %vm813, 1, 0
        %v1786 = vsel %vm814, 1, 0
        %vm1787 = vcmp.eq.s32.totalorder %v1755, 1
        %vm1788 = vcmp.eq.s32.totalorder %v1756, 1
        %vm1789 = vcmp.eq.s32.totalorder %v1757, 1
        %vm1790 = vcmp.eq.s32.totalorder %v1758, 1
        %vm1791 = vcmp.eq.s32.totalorder %v1759, 1
        %vm1792 = vcmp.eq.s32.totalorder %v1760, 1
        %vm1793 = vcmp.eq.s32.totalorder %v1761, 1
        %vm1794 = vcmp.eq.s32.totalorder %v1762, 1
        %vm1795 = vcmp.eq.s32.totalorder %v1763, 1
        %vm1796 = vcmp.eq.s32.totalorder %v1764, 1
        %vm1797 = vcmp.eq.s32.totalorder %v1765, 1
        %vm1798 = vcmp.eq.s32.totalorder %v1766, 1
        %vm1799 = vcmp.eq.s32.totalorder %v1767, 1
        %vm1800 = vcmp.eq.s32.totalorder %v1768, 1
        %vm1801 = vcmp.eq.s32.totalorder %v1769, 1
        %vm1802 = vcmp.eq.s32.totalorder %v1770, 1
        %vm1803 = vcmp.eq.s32.totalorder %v1771, 1
        %vm1804 = vcmp.eq.s32.totalorder %v1772, 1
        %vm1805 = vcmp.eq.s32.totalorder %v1773, 1
        %vm1806 = vcmp.eq.s32.totalorder %v1774, 1
        %vm1807 = vcmp.eq.s32.totalorder %v1775, 1
        %vm1808 = vcmp.eq.s32.totalorder %v1776, 1
        %vm1809 = vcmp.eq.s32.totalorder %v1777, 1
        %vm1810 = vcmp.eq.s32.totalorder %v1778, 1
        %vm1811 = vcmp.eq.s32.totalorder %v1779, 1
        %vm1812 = vcmp.eq.s32.totalorder %v1780, 1
        %vm1813 = vcmp.eq.s32.totalorder %v1781, 1
        %vm1814 = vcmp.eq.s32.totalorder %v1782, 1
        %vm1815 = vcmp.eq.s32.totalorder %v1783, 1
        %vm1816 = vcmp.eq.s32.totalorder %v1784, 1
        %vm1817 = vcmp.eq.s32.totalorder %v1785, 1
        %vm1818 = vcmp.eq.s32.totalorder %v1786, 1
        %v1819 = vsel %vm1787, %v1723, 0.0
        %v1820 = vsel %vm1788, %v1724, 0.0
        %v1821 = vsel %vm1789, %v1725, 0.0
        %v1822 = vsel %vm1790, %v1726, 0.0
        %v1823 = vsel %vm1791, %v1727, 0.0
        %v1824 = vsel %vm1792, %v1728, 0.0
        %v1825 = vsel %vm1793, %v1729, 0.0
        %v1826 = vsel %vm1794, %v1730, 0.0
        %v1827 = vsel %vm1795, %v1731, 0.0
        %v1828 = vsel %vm1796, %v1732, 0.0
        %v1829 = vsel %vm1797, %v1733, 0.0
        %v1830 = vsel %vm1798, %v1734, 0.0
        %v1831 = vsel %vm1799, %v1735, 0.0
        %v1832 = vsel %vm1800, %v1736, 0.0
        %v1833 = vsel %vm1801, %v1737, 0.0
        %v1834 = vsel %vm1802, %v1738, 0.0
        %v1835 = vsel %vm1803, %v1739, 0.0
        %v1836 = vsel %vm1804, %v1740, 0.0
        %v1837 = vsel %vm1805, %v1741, 0.0
        %v1838 = vsel %vm1806, %v1742, 0.0
        %v1839 = vsel %vm1807, %v1743, 0.0
        %v1840 = vsel %vm1808, %v1744, 0.0
        %v1841 = vsel %vm1809, %v1745, 0.0
        %v1842 = vsel %vm1810, %v1746, 0.0
        %v1843 = vsel %vm1811, %v1747, 0.0
        %v1844 = vsel %vm1812, %v1748, 0.0
        %v1845 = vsel %vm1813, %v1749, 0.0
        %v1846 = vsel %vm1814, %v1750, 0.0
        %v1847 = vsel %vm1815, %v1751, 0.0
        %v1848 = vsel %vm1816, %v1752, 0.0
        %v1849 = vsel %vm1817, %v1753, 0.0
        %v1850 = vsel %vm1818, %v1754, 0.0
        %s1851 = scalar_lea.vmem %s1, 16
        %v1852 = vld [vmem:[%s1851] sm:$0xff]
        %v1854 = vsel %vm815, %v1819, 0
        %v1857 = vsel %vm815, %v1820, 0
        %v1860 = vsel %vm815, %v1821, 0
        %v1863 = vsel %vm815, %v1822, 0
        %v1866 = vsel %vm815, %v1823, 0
        %v1869 = vsel %vm815, %v1824, 0
        %v1872 = vsel %vm815, %v1825, 0
        %v1875 = vsel %vm815, %v1826, 0
        %v1878 = vsel %vm815, %v1827, 0
        %v1881 = vsel %vm815, %v1828, 0
        %v1884 = vsel %vm815, %v1829, 0
        %v1887 = vsel %vm815, %v1830, 0
        %v1890 = vsel %vm815, %v1831, 0
        %v1893 = vsel %vm815, %v1832, 0
        %v1896 = vsel %vm815, %v1833, 0
        %v1899 = vsel %vm815, %v1834, 0
        %v1902 = vsel %vm815, %v1835, 0
        %v1905 = vsel %vm815, %v1836, 0
        %v1908 = vsel %vm815, %v1837, 0
        %v1911 = vsel %vm815, %v1838, 0
        %v1914 = vsel %vm815, %v1839, 0
        %v1917 = vsel %vm815, %v1840, 0
        %v1920 = vsel %vm815, %v1841, 0
        %v1923 = vsel %vm815, %v1842, 0
        %v1926 = vsel %vm815, %v1843, 0
        %v1929 = vsel %vm815, %v1844, 0
        %v1932 = vsel %vm815, %v1845, 0
        %v1935 = vsel %vm815, %v1846, 0
        %v1938 = vsel %vm815, %v1847, 0
        %v1941 = vsel %vm815, %v1848, 0
        %v1944 = vsel %vm815, %v1849, 0
        %v1947 = vsel %vm815, %v1850, 0
        %1949 = vmatprep.subr.mxu0 0.0
        %1950 = vmatpush1.msra.mxu0 %v1852
        %1951 = vmatprep.subr.mxu0 0.0
        %1952 = vmatpush1.msra.mxu0 0.0
        %1953 = vmatprep.subr.mxu0 0.0
        %1954 = vmatpush1.msra.mxu0 0.0
        %1955 = vmatprep.subr.mxu0 0.0
        %1956 = vmatpush1.msra.mxu0 0.0
        %1957 = vmatprep.subr.mxu0 0.0
        %1958 = vmatpush1.msra.mxu0 0.0
        %1959 = vmatprep.subr.mxu0 0.0
        %1960 = vmatpush1.msra.mxu0 0.0
        %1961 = vmatprep.subr.mxu0 0.0
        %1962 = vmatpush1.msra.mxu0 0.0
        %1963 = vmatprep.subr.mxu0 0.0
        %1964 = vmatpush1.msra.mxu0 0.0
        %1965 = vmatprep.subr.mxu0 0.0
        %1966 = vmatpush1.msra.mxu0 0.0
        %1967 = vmatprep.subr.mxu0 0.0
        %1968 = vmatpush1.msra.mxu0 0.0
        %1969 = vmatprep.subr.mxu0 0.0
        %1970 = vmatpush1.msra.mxu0 0.0
        %1971 = vmatprep.subr.mxu0 0.0
        %1972 = vmatpush1.msra.mxu0 0.0
        %1973 = vmatprep.subr.mxu0 0.0
        %1974 = vmatpush1.msra.mxu0 0.0
        %1975 = vmatprep.subr.mxu0 0.0
        %1976 = vmatpush1.msra.mxu0 0.0
        %1977 = vmatprep.subr.mxu0 0.0
        %1978 = vmatpush1.msra.mxu0 0.0
        %1979 = vmatprep.subr.mxu0 0.0
        %1980 = vmatpush1.msra.mxu0 0.0
        %1981 = vmatprep.subr.mxu0 0.0
        %1982 = vmatpush1.msra.mxu0 0.0
        %1983 = vmatprep.subr.mxu0 0.0
        %1984 = vmatpush1.msra.mxu0 0.0
        %1985 = vmatprep.subr.mxu0 0.0
        %1986 = vmatpush1.msra.mxu0 0.0
        %1987 = vmatprep.subr.mxu0 0.0
        %1988 = vmatpush1.msra.mxu0 0.0
        %1989 = vmatprep.subr.mxu0 0.0
        %1990 = vmatpush1.msra.mxu0 0.0
        %1991 = vmatprep.subr.mxu0 0.0
        %1992 = vmatpush1.msra.mxu0 0.0
        %1993 = vmatprep.subr.mxu0 0.0
        %1994 = vmatpush1.msra.mxu0 0.0
        %1995 = vmatprep.subr.mxu0 0.0
        %1996 = vmatpush1.msra.mxu0 0.0
        %1997 = vmatprep.subr.mxu0 0.0
        %1998 = vmatpush1.msra.mxu0 0.0
        %1999 = vmatprep.subr.mxu0 0.0
        %2000 = vmatpush1.msra.mxu0 0.0
        %2001 = vmatprep.subr.mxu0 0.0
        %2002 = vmatpush1.msra.mxu0 0.0
        %2003 = vmatprep.subr.mxu0 0.0
        %2004 = vmatpush1.msra.mxu0 0.0
        %2005 = vmatprep.subr.mxu0 0.0
        %2006 = vmatpush1.msra.mxu0 0.0
        %2007 = vmatprep.subr.mxu0 0.0
        %2008 = vmatpush1.msra.mxu0 0.0
        %2009 = vmatprep.subr.mxu0 0.0
        %2010 = vmatpush1.msra.mxu0 0.0
        %2011 = vmatprep.subr.mxu0 0.0
        %2012 = vmatpush1.msra.mxu0 0.0
        %2013 = vmatprep.mubr.f32.mxu0 0.0
        %2014 = vmatmul.mubr.f32.gmra.mrb[0].mxu0 %v1854
        %v2015 = vpop.f32.mrb[0].mxu0
        %v2016 = vadd.f32 0.0, %v2015
        %v2017 = vpop.f32.mrb[0].mxu0
        %2018 = vmatprep.mubr.f32.mxu0 0.0
        %2019 = vmatmul.mubr.f32.gmra.mrb[0].mxu0 %v1857
        %v2020 = vpop.f32.mrb[0].mxu0
        %v2021 = vadd.f32 0.0, %v2020
        %v2022 = vpop.f32.mrb[0].mxu0
        %2023 = vmatprep.mubr.f32.mxu0 0.0
        %2024 = vmatmul.mubr.f32.gmra.mrb[0].mxu0 %v1860
        %v2025 = vpop.f32.mrb[0].mxu0
        %v2026 = vadd.f32 0.0, %v2025
        %v2027 = vpop.f32.mrb[0].mxu0
        %2028 = vmatprep.mubr.f32.mxu0 0.0
        %2029 = vmatmul.mubr.f32.gmra.mrb[0].mxu0 %v1863
        %v2030 = vpop.f32.mrb[0].mxu0
        %v2031 = vadd.f32 0.0, %v2030
        %v2032 = vpop.f32.mrb[0].mxu0
        %2033 = vmatprep.mubr.f32.mxu0 0.0
        %2034 = vmatmul.mubr.f32.gmra.mrb[0].mxu0 %v1866
        %v2035 = vpop.f32.mrb[0].mxu0
        %v2036 = vadd.f32 0.0, %v2035
        %v2037 = vpop.f32.mrb[0].mxu0
        %2038 = vmatprep.mubr.f32.mxu0 0.0
        %2039 = vmatmul.mubr.f32.gmra.mrb[0].mxu0 %v1869
        %v2040 = vpop.f32.mrb[0].mxu0
        %v2041 = vadd.f32 0.0, %v2040
        %v2042 = vpop.f32.mrb[0].mxu0
        %2043 = vmatprep.mubr.f32.mxu0 0.0
        %2044 = vmatmul.mubr.f32.gmra.mrb[0].mxu0 %v1872
        %v2045 = vpop.f32.mrb[0].mxu0
        %v2046 = vadd.f32 0.0, %v2045
        %v2047 = vpop.f32.mrb[0].mxu0
        %2048 = vmatprep.mubr.f32.mxu0 0.0
        %2049 = vmatmul.mubr.f32.gmra.mrb[0].mxu0 %v1875
        %v2050 = vpop.f32.mrb[0].mxu0
        %v2051 = vadd.f32 0.0, %v2050
        %v2052 = vpop.f32.mrb[0].mxu0
        %2053 = vmatprep.mubr.f32.mxu0 0.0
        %2054 = vmatmul.mubr.f32.gmra.mrb[0].mxu0 %v1878
        %v2055 = vpop.f32.mrb[0].mxu0
        %v2056 = vadd.f32 0.0, %v2055
        %v2057 = vpop.f32.mrb[0].mxu0
        %2058 = vmatprep.mubr.f32.mxu0 0.0
        %2059 = vmatmul.mubr.f32.gmra.mrb[0].mxu0 %v1881
        %v2060 = vpop.f32.mrb[0].mxu0
        %v2061 = vadd.f32 0.0, %v2060
        %v2062 = vpop.f32.mrb[0].mxu0
        %2063 = vmatprep.mubr.f32.mxu0 0.0
        %2064 = vmatmul.mubr.f32.gmra.mrb[0].mxu0 %v1884
        %v2065 = vpop.f32.mrb[0].mxu0
        %v2066 = vadd.f32 0.0, %v2065
        %v2067 = vpop.f32.mrb[0].mxu0
        %2068 = vmatprep.mubr.f32.mxu0 0.0
        %2069 = vmatmul.mubr.f32.gmra.mrb[0].mxu0 %v1887
        %v2070 = vpop.f32.mrb[0].mxu0
        %v2071 = vadd.f32 0.0, %v2070
        %v2072 = vpop.f32.mrb[0].mxu0
        %2073 = vmatprep.mubr.f32.mxu0 0.0
        %2074 = vmatmul.mubr.f32.gmra.mrb[0].mxu0 %v1890
        %v2075 = vpop.f32.mrb[0].mxu0
        %v2076 = vadd.f32 0.0, %v2075
        %v2077 = vpop.f32.mrb[0].mxu0
        %2078 = vmatprep.mubr.f32.mxu0 0.0
        %2079 = vmatmul.mubr.f32.gmra.mrb[0].mxu0 %v1893
        %v2080 = vpop.f32.mrb[0].mxu0
        %v2081 = vadd.f32 0.0, %v2080
        %v2082 = vpop.f32.mrb[0].mxu0
        %2083 = vmatprep.mubr.f32.mxu0 0.0
        %2084 = vmatmul.mubr.f32.gmra.mrb[0].mxu0 %v1896
        %v2085 = vpop.f32.mrb[0].mxu0
        %v2086 = vadd.f32 0.0, %v2085
        %v2087 = vpop.f32.mrb[0].mxu0
        %2088 = vmatprep.mubr.f32.mxu0 0.0
        %2089 = vmatmul.mubr.f32.gmra.mrb[0].mxu0 %v1899
        %v2090 = vpop.f32.mrb[0].mxu0
        %v2091 = vadd.f32 0.0, %v2090
        %v2092 = vpop.f32.mrb[0].mxu0
        %2093 = vmatprep.mubr.f32.mxu0 0.0
        %2094 = vmatmul.mubr.f32.gmra.mrb[0].mxu0 %v1902
        %v2095 = vpop.f32.mrb[0].mxu0
        %v2096 = vadd.f32 0.0, %v2095
        %v2097 = vpop.f32.mrb[0].mxu0
        %2098 = vmatprep.mubr.f32.mxu0 0.0
        %2099 = vmatmul.mubr.f32.gmra.mrb[0].mxu0 %v1905
        %v2100 = vpop.f32.mrb[0].mxu0
        %v2101 = vadd.f32 0.0, %v2100
        %v2102 = vpop.f32.mrb[0].mxu0
        %2103 = vmatprep.mubr.f32.mxu0 0.0
        %2104 = vmatmul.mubr.f32.gmra.mrb[0].mxu0 %v1908
        %v2105 = vpop.f32.mrb[0].mxu0
        %v2106 = vadd.f32 0.0, %v2105
        %v2107 = vpop.f32.mrb[0].mxu0
        %2108 = vmatprep.mubr.f32.mxu0 0.0
        %2109 = vmatmul.mubr.f32.gmra.mrb[0].mxu0 %v1911
        %v2110 = vpop.f32.mrb[0].mxu0
        %v2111 = vadd.f32 0.0, %v2110
        %v2112 = vpop.f32.mrb[0].mxu0
        %2113 = vmatprep.mubr.f32.mxu0 0.0
        %2114 = vmatmul.mubr.f32.gmra.mrb[0].mxu0 %v1914
        %v2115 = vpop.f32.mrb[0].mxu0
        %v2116 = vadd.f32 0.0, %v2115
        %v2117 = vpop.f32.mrb[0].mxu0
        %2118 = vmatprep.mubr.f32.mxu0 0.0
        %2119 = vmatmul.mubr.f32.gmra.mrb[0].mxu0 %v1917
        %v2120 = vpop.f32.mrb[0].mxu0
        %v2121 = vadd.f32 0.0, %v2120
        %v2122 = vpop.f32.mrb[0].mxu0
        %2123 = vmatprep.mubr.f32.mxu0 0.0
        %2124 = vmatmul.mubr.f32.gmra.mrb[0].mxu0 %v1920
        %v2125 = vpop.f32.mrb[0].mxu0
        %v2126 = vadd.f32 0.0, %v2125
        %v2127 = vpop.f32.mrb[0].mxu0
        %2128 = vmatprep.mubr.f32.mxu0 0.0
        %2129 = vmatmul.mubr.f32.gmra.mrb[0].mxu0 %v1923
        %v2130 = vpop.f32.mrb[0].mxu0
        %v2131 = vadd.f32 0.0, %v2130
        %v2132 = vpop.f32.mrb[0].mxu0
        %2133 = vmatprep.mubr.f32.mxu0 0.0
        %2134 = vmatmul.mubr.f32.gmra.mrb[0].mxu0 %v1926
        %v2135 = vpop.f32.mrb[0].mxu0
        %v2136 = vadd.f32 0.0, %v2135
        %v2137 = vpop.f32.mrb[0].mxu0
        %2138 = vmatprep.mubr.f32.mxu0 0.0
        %2139 = vmatmul.mubr.f32.gmra.mrb[0].mxu0 %v1929
        %v2140 = vpop.f32.mrb[0].mxu0
        %v2141 = vadd.f32 0.0, %v2140
        %v2142 = vpop.f32.mrb[0].mxu0
        %2143 = vmatprep.mubr.f32.mxu0 0.0
        %2144 = vmatmul.mubr.f32.gmra.mrb[0].mxu0 %v1932
        %v2145 = vpop.f32.mrb[0].mxu0
        %v2146 = vadd.f32 0.0, %v2145
        %v2147 = vpop.f32.mrb[0].mxu0
        %2148 = vmatprep.mubr.f32.mxu0 0.0
        %2149 = vmatmul.mubr.f32.gmra.mrb[0].mxu0 %v1935
        %v2150 = vpop.f32.mrb[0].mxu0
        %v2151 = vadd.f32 0.0, %v2150
        %v2152 = vpop.f32.mrb[0].mxu0
        %2153 = vmatprep.mubr.f32.mxu0 0.0
        %2154 = vmatmul.mubr.f32.gmra.mrb[0].mxu0 %v1938
        %v2155 = vpop.f32.mrb[0].mxu0
        %v2156 = vadd.f32 0.0, %v2155
        %v2157 = vpop.f32.mrb[0].mxu0
        %2158 = vmatprep.mubr.f32.mxu0 0.0
        %2159 = vmatmul.mubr.f32.gmra.mrb[0].mxu0 %v1941
        %v2160 = vpop.f32.mrb[0].mxu0
        %v2161 = vadd.f32 0.0, %v2160
        %v2162 = vpop.f32.mrb[0].mxu0
        %2163 = vmatprep.mubr.f32.mxu0 0.0
        %2164 = vmatmul.mubr.f32.gmra.mrb[0].mxu0 %v1944
        %v2165 = vpop.f32.mrb[0].mxu0
        %v2166 = vadd.f32 0.0, %v2165
        %v2167 = vpop.f32.mrb[0].mxu0
        %2168 = vmatprep.mubr.f32.mxu0 0.0
        %2169 = vmatmul.mubr.f32.gmra.mrb[0].mxu0 %v1947
        %v2170 = vpop.f32.mrb[0].mxu0
        %v2171 = vadd.f32 0.0, %v2170
        %v2172 = vpop.f32.mrb[0].mxu0
        %2173 = vdwg.mxu0
        %v2174 = vadd.f32 %v1565, %v2016
        %v2175 = vadd.f32 %v1570, %v2021
        %v2176 = vadd.f32 %v1575, %v2026
        %v2177 = vadd.f32 %v1580, %v2031
        %v2178 = vadd.f32 %v1585, %v2036
        %v2179 = vadd.f32 %v1590, %v2041
        %v2180 = vadd.f32 %v1595, %v2046
        %v2181 = vadd.f32 %v1600, %v2051
        %v2182 = vadd.f32 %v1605, %v2056
        %v2183 = vadd.f32 %v1610, %v2061
        %v2184 = vadd.f32 %v1615, %v2066
        %v2185 = vadd.f32 %v1620, %v2071
        %v2186 = vadd.f32 %v1625, %v2076
        %v2187 = vadd.f32 %v1630, %v2081
        %v2188 = vadd.f32 %v1635, %v2086
        %v2189 = vadd.f32 %v1640, %v2091
        %v2190 = vadd.f32 %v1645, %v2096
        %v2191 = vadd.f32 %v1650, %v2101
        %v2192 = vadd.f32 %v1655, %v2106
        %v2193 = vadd.f32 %v1660, %v2111
        %v2194 = vadd.f32 %v1665, %v2116
        %v2195 = vadd.f32 %v1670, %v2121
        %v2196 = vadd.f32 %v1675, %v2126
        %v2197 = vadd.f32 %v1680, %v2131
        %v2198 = vadd.f32 %v1685, %v2136
        %v2199 = vadd.f32 %v1690, %v2141
        %v2200 = vadd.f32 %v1695, %v2146
        %v2201 = vadd.f32 %v1700, %v2151
        %v2202 = vadd.f32 %v1705, %v2156
        %v2203 = vadd.f32 %v1710, %v2161
        %v2204 = vadd.f32 %v1715, %v2166
        %v2205 = vadd.f32 %v1720, %v2171
        %v2206 = vld [vmem:[#allocation2 + $0x10] sm:$0xff]
        %v2207 = vld [vmem:[#allocation2 + $0x18] sm:$0xff]
        %v2208 = vld [vmem:[#allocation2 + $0x20] sm:$0xff]
        %v2209 = vld [vmem:[#allocation2 + $0x28] sm:$0xff]
        %v2210 = vld [vmem:[#allocation2 + $0x30] sm:$0xff]
        %v2211 = vld [vmem:[#allocation2 + $0x38] sm:$0xff]
        %v2212 = vld [vmem:[#allocation2 + $0x40] sm:$0xff]
        %v2213 = vld [vmem:[#allocation2 + $0x48] sm:$0xff]
        %v2214 = vld [vmem:[#allocation2 + $0x50] sm:$0xff]
        %v2215 = vld [vmem:[#allocation2 + $0x58] sm:$0xff]
        %v2216 = vld [vmem:[#allocation2 + $0x60] sm:$0xff]
        %v2217 = vld [vmem:[#allocation2 + $0x68] sm:$0xff]
        %v2218 = vld [vmem:[#allocation2 + $0x70] sm:$0xff]
        %v2219 = vld [vmem:[#allocation2 + $0x78] sm:$0xff]
        %v2220 = vld [vmem:[#allocation2 + $0x80] sm:$0xff]
        %v2221 = vld [vmem:[#allocation2 + $0x88] sm:$0xff]
        %v2222 = vld [vmem:[#allocation2 + $0x90] sm:$0xff]
        %v2223 = vld [vmem:[#allocation2 + $0x98] sm:$0xff]
        %v2224 = vld [vmem:[#allocation2 + $0xa0] sm:$0xff]
        %v2225 = vld [vmem:[#allocation2 + $0xa8] sm:$0xff]
        %v2226 = vld [vmem:[#allocation2 + $0xb0] sm:$0xff]
        %v2227 = vld [vmem:[#allocation2 + $0xb8] sm:$0xff]
        %v2228 = vld [vmem:[#allocation2 + $0xc0] sm:$0xff]
        %v2229 = vld [vmem:[#allocation2 + $0xc8] sm:$0xff]
        %v2230 = vld [vmem:[#allocation2 + $0xd0] sm:$0xff]
        %v2231 = vld [vmem:[#allocation2 + $0xd8] sm:$0xff]
        %v2232 = vld [vmem:[#allocation2 + $0xe0] sm:$0xff]
        %v2233 = vld [vmem:[#allocation2 + $0xe8] sm:$0xff]
        %v2234 = vld [vmem:[#allocation2 + $0xf0] sm:$0xff]
        %v2235 = vld [vmem:[#allocation2 + $0xf8] sm:$0xff]
        %v2236 = vld [vmem:[#allocation2 + $0x100] sm:$0xff]
        %v2237 = vld [vmem:[#allocation2 + $0x108] sm:$0xff]
        %v2238 = vsel %vm982, %v2206, 0.0
        %v2239 = vsel %vm983, %v2207, 0.0
        %v2240 = vsel %vm984, %v2208, 0.0
        %v2241 = vsel %vm985, %v2209, 0.0
        %v2242 = vsel %vm986, %v2210, 0.0
        %v2243 = vsel %vm987, %v2211, 0.0
        %v2244 = vsel %vm988, %v2212, 0.0
        %v2245 = vsel %vm989, %v2213, 0.0
        %v2246 = vsel %vm990, %v2214, 0.0
        %v2247 = vsel %vm991, %v2215, 0.0
        %v2248 = vsel %vm992, %v2216, 0.0
        %v2249 = vsel %vm993, %v2217, 0.0
        %v2250 = vsel %vm994, %v2218, 0.0
        %v2251 = vsel %vm995, %v2219, 0.0
        %v2252 = vsel %vm996, %v2220, 0.0
        %v2253 = vsel %vm997, %v2221, 0.0
        %v2254 = vsel %vm998, %v2222, 0.0
        %v2255 = vsel %vm999, %v2223, 0.0
        %v2256 = vsel %vm1000, %v2224, 0.0
        %v2257 = vsel %vm1001, %v2225, 0.0
        %v2258 = vsel %vm1002, %v2226, 0.0
        %v2259 = vsel %vm1003, %v2227, 0.0
        %v2260 = vsel %vm1004, %v2228, 0.0
        %v2261 = vsel %vm1005, %v2229, 0.0
        %v2262 = vsel %vm1006, %v2230, 0.0
        %v2263 = vsel %vm1007, %v2231, 0.0
        %v2264 = vsel %vm1008, %v2232, 0.0
        %v2265 = vsel %vm1009, %v2233, 0.0
        %v2266 = vsel %vm1010, %v2234, 0.0
        %v2267 = vsel %vm1011, %v2235, 0.0
        %v2268 = vsel %vm1012, %v2236, 0.0
        %v2269 = vsel %vm1013, %v2237, 0.0
        %s2270 = scalar_lea.vmem %s1, 24
        %v2271 = vld [vmem:[%s2270] sm:$0xff]
        %v2273 = vsel %vm815, %v2238, 0
        %v2276 = vsel %vm815, %v2239, 0
        %v2279 = vsel %vm815, %v2240, 0
        %v2282 = vsel %vm815, %v2241, 0
        %v2285 = vsel %vm815, %v2242, 0
        %v2288 = vsel %vm815, %v2243, 0
        %v2291 = vsel %vm815, %v2244, 0
        %v2294 = vsel %vm815, %v2245, 0
        %v2297 = vsel %vm815, %v2246, 0
        %v2300 = vsel %vm815, %v2247, 0
        %v2303 = vsel %vm815, %v2248, 0
        %v2306 = vsel %vm815, %v2249, 0
        %v2309 = vsel %vm815, %v2250, 0
        %v2312 = vsel %vm815, %v2251, 0
        %v2315 = vsel %vm815, %v2252, 0
        %v2318 = vsel %vm815, %v2253, 0
        %v2321 = vsel %vm815, %v2254, 0
        %v2324 = vsel %vm815, %v2255, 0
        %v2327 = vsel %vm815, %v2256, 0
        %v2330 = vsel %vm815, %v2257, 0
        %v2333 = vsel %vm815, %v2258, 0
        %v2336 = vsel %vm815, %v2259, 0
        %v2339 = vsel %vm815, %v2260, 0
        %v2342 = vsel %vm815, %v2261, 0
        %v2345 = vsel %vm815, %v2262, 0
        %v2348 = vsel %vm815, %v2263, 0
        %v2351 = vsel %vm815, %v2264, 0
        %v2354 = vsel %vm815, %v2265, 0
        %v2357 = vsel %vm815, %v2266, 0
        %v2360 = vsel %vm815, %v2267, 0
        %v2363 = vsel %vm815, %v2268, 0
        %v2366 = vsel %vm815, %v2269, 0
        %2368 = vmatprep.subr.mxu0 0.0
        %2369 = vmatpush1.msra.mxu0 %v2271
        %2370 = vmatprep.subr.mxu0 0.0
        %2371 = vmatpush1.msra.mxu0 0.0
        %2372 = vmatprep.subr.mxu0 0.0
        %2373 = vmatpush1.msra.mxu0 0.0
        %2374 = vmatprep.subr.mxu0 0.0
        %2375 = vmatpush1.msra.mxu0 0.0
        %2376 = vmatprep.subr.mxu0 0.0
        %2377 = vmatpush1.msra.mxu0 0.0
        %2378 = vmatprep.subr.mxu0 0.0
        %2379 = vmatpush1.msra.mxu0 0.0
        %2380 = vmatprep.subr.mxu0 0.0
        %2381 = vmatpush1.msra.mxu0 0.0
        %2382 = vmatprep.subr.mxu0 0.0
        %2383 = vmatpush1.msra.mxu0 0.0
        %2384 = vmatprep.subr.mxu0 0.0
        %2385 = vmatpush1.msra.mxu0 0.0
        %2386 = vmatprep.subr.mxu0 0.0
        %2387 = vmatpush1.msra.mxu0 0.0
        %2388 = vmatprep.subr.mxu0 0.0
        %2389 = vmatpush1.msra.mxu0 0.0
        %2390 = vmatprep.subr.mxu0 0.0
        %2391 = vmatpush1.msra.mxu0 0.0
        %2392 = vmatprep.subr.mxu0 0.0
        %2393 = vmatpush1.msra.mxu0 0.0
        %2394 = vmatprep.subr.mxu0 0.0
        %2395 = vmatpush1.msra.mxu0 0.0
        %2396 = vmatprep.subr.mxu0 0.0
        %2397 = vmatpush1.msra.mxu0 0.0
        %2398 = vmatprep.subr.mxu0 0.0
        %2399 = vmatpush1.msra.mxu0 0.0
        %2400 = vmatprep.subr.mxu0 0.0
        %2401 = vmatpush1.msra.mxu0 0.0
        %2402 = vmatprep.subr.mxu0 0.0
        %2403 = vmatpush1.msra.mxu0 0.0
        %2404 = vmatprep.subr.mxu0 0.0
        %2405 = vmatpush1.msra.mxu0 0.0
        %2406 = vmatprep.subr.mxu0 0.0
        %2407 = vmatpush1.msra.mxu0 0.0
        %2408 = vmatprep.subr.mxu0 0.0
        %2409 = vmatpush1.msra.mxu0 0.0
        %2410 = vmatprep.subr.mxu0 0.0
        %2411 = vmatpush1.msra.mxu0 0.0
        %2412 = vmatprep.subr.mxu0 0.0
        %2413 = vmatpush1.msra.mxu0 0.0
        %2414 = vmatprep.subr.mxu0 0.0
        %2415 = vmatpush1.msra.mxu0 0.0
        %2416 = vmatprep.subr.mxu0 0.0
        %2417 = vmatpush1.msra.mxu0 0.0
        %2418 = vmatprep.subr.mxu0 0.0
        %2419 = vmatpush1.msra.mxu0 0.0
        %2420 = vmatprep.subr.mxu0 0.0
        %2421 = vmatpush1.msra.mxu0 0.0
        %2422 = vmatprep.subr.mxu0 0.0
        %2423 = vmatpush1.msra.mxu0 0.0
        %2424 = vmatprep.subr.mxu0 0.0
        %2425 = vmatpush1.msra.mxu0 0.0
        %2426 = vmatprep.subr.mxu0 0.0
        %2427 = vmatpush1.msra.mxu0 0.0
        %2428 = vmatprep.subr.mxu0 0.0
        %2429 = vmatpush1.msra.mxu0 0.0
        %2430 = vmatprep.subr.mxu0 0.0
        %2431 = vmatpush1.msra.mxu0 0.0
        %2432 = vmatprep.mubr.f32.mxu0 0.0
        %2433 = vmatmul.mubr.f32.gmra.mrb[0].mxu0 %v2273
        %v2434 = vpop.f32.mrb[0].mxu0
        %v2435 = vadd.f32 0.0, %v2434
        %v2436 = vpop.f32.mrb[0].mxu0
        %2437 = vmatprep.mubr.f32.mxu0 0.0
        %2438 = vmatmul.mubr.f32.gmra.mrb[0].mxu0 %v2276
        %v2439 = vpop.f32.mrb[0].mxu0
        %v2440 = vadd.f32 0.0, %v2439
        %v2441 = vpop.f32.mrb[0].mxu0
        %2442 = vmatprep.mubr.f32.mxu0 0.0
        %2443 = vmatmul.mubr.f32.gmra.mrb[0].mxu0 %v2279
        %v2444 = vpop.f32.mrb[0].mxu0
        %v2445 = vadd.f32 0.0, %v2444
        %v2446 = vpop.f32.mrb[0].mxu0
        %2447 = vmatprep.mubr.f32.mxu0 0.0
        %2448 = vmatmul.mubr.f32.gmra.mrb[0].mxu0 %v2282
        %v2449 = vpop.f32.mrb[0].mxu0
        %v2450 = vadd.f32 0.0, %v2449
        %v2451 = vpop.f32.mrb[0].mxu0
        %2452 = vmatprep.mubr.f32.mxu0 0.0
        %2453 = vmatmul.mubr.f32.gmra.mrb[0].mxu0 %v2285
        %v2454 = vpop.f32.mrb[0].mxu0
        %v2455 = vadd.f32 0.0, %v2454
        %v2456 = vpop.f32.mrb[0].mxu0
        %2457 = vmatprep.mubr.f32.mxu0 0.0
        %2458 = vmatmul.mubr.f32.gmra.mrb[0].mxu0 %v2288
        %v2459 = vpop.f32.mrb[0].mxu0
        %v2460 = vadd.f32 0.0, %v2459
        %v2461 = vpop.f32.mrb[0].mxu0
        %2462 = vmatprep.mubr.f32.mxu0 0.0
        %2463 = vmatmul.mubr.f32.gmra.mrb[0].mxu0 %v2291
        %v2464 = vpop.f32.mrb[0].mxu0
        %v2465 = vadd.f32 0.0, %v2464
        %v2466 = vpop.f32.mrb[0].mxu0
        %2467 = vmatprep.mubr.f32.mxu0 0.0
        %2468 = vmatmul.mubr.f32.gmra.mrb[0].mxu0 %v2294
        %v2469 = vpop.f32.mrb[0].mxu0
        %v2470 = vadd.f32 0.0, %v2469
        %v2471 = vpop.f32.mrb[0].mxu0
        %2472 = vmatprep.mubr.f32.mxu0 0.0
        %2473 = vmatmul.mubr.f32.gmra.mrb[0].mxu0 %v2297
        %v2474 = vpop.f32.mrb[0].mxu0
        %v2475 = vadd.f32 0.0, %v2474
        %v2476 = vpop.f32.mrb[0].mxu0
        %2477 = vmatprep.mubr.f32.mxu0 0.0
        %2478 = vmatmul.mubr.f32.gmra.mrb[0].mxu0 %v2300
        %v2479 = vpop.f32.mrb[0].mxu0
        %v2480 = vadd.f32 0.0, %v2479
        %v2481 = vpop.f32.mrb[0].mxu0
        %2482 = vmatprep.mubr.f32.mxu0 0.0
        %2483 = vmatmul.mubr.f32.gmra.mrb[0].mxu0 %v2303
        %v2484 = vpop.f32.mrb[0].mxu0
        %v2485 = vadd.f32 0.0, %v2484
        %v2486 = vpop.f32.mrb[0].mxu0
        %2487 = vmatprep.mubr.f32.mxu0 0.0
        %2488 = vmatmul.mubr.f32.gmra.mrb[0].mxu0 %v2306
        %v2489 = vpop.f32.mrb[0].mxu0
        %v2490 = vadd.f32 0.0, %v2489
        %v2491 = vpop.f32.mrb[0].mxu0
        %2492 = vmatprep.mubr.f32.mxu0 0.0
        %2493 = vmatmul.mubr.f32.gmra.mrb[0].mxu0 %v2309
        %v2494 = vpop.f32.mrb[0].mxu0
        %v2495 = vadd.f32 0.0, %v2494
        %v2496 = vpop.f32.mrb[0].mxu0
        %2497 = vmatprep.mubr.f32.mxu0 0.0
        %2498 = vmatmul.mubr.f32.gmra.mrb[0].mxu0 %v2312
        %v2499 = vpop.f32.mrb[0].mxu0
        %v2500 = vadd.f32 0.0, %v2499
        %v2501 = vpop.f32.mrb[0].mxu0
        %2502 = vmatprep.mubr.f32.mxu0 0.0
        %2503 = vmatmul.mubr.f32.gmra.mrb[0].mxu0 %v2315
        %v2504 = vpop.f32.mrb[0].mxu0
        %v2505 = vadd.f32 0.0, %v2504
        %v2506 = vpop.f32.mrb[0].mxu0
        %2507 = vmatprep.mubr.f32.mxu0 0.0
        %2508 = vmatmul.mubr.f32.gmra.mrb[0].mxu0 %v2318
        %v2509 = vpop.f32.mrb[0].mxu0
        %v2510 = vadd.f32 0.0, %v2509
        %v2511 = vpop.f32.mrb[0].mxu0
        %2512 = vmatprep.mubr.f32.mxu0 0.0
        %2513 = vmatmul.mubr.f32.gmra.mrb[0].mxu0 %v2321
        %v2514 = vpop.f32.mrb[0].mxu0
        %v2515 = vadd.f32 0.0, %v2514
        %v2516 = vpop.f32.mrb[0].mxu0
        %2517 = vmatprep.mubr.f32.mxu0 0.0
        %2518 = vmatmul.mubr.f32.gmra.mrb[0].mxu0 %v2324
        %v2519 = vpop.f32.mrb[0].mxu0
        %v2520 = vadd.f32 0.0, %v2519
        %v2521 = vpop.f32.mrb[0].mxu0
        %2522 = vmatprep.mubr.f32.mxu0 0.0
        %2523 = vmatmul.mubr.f32.gmra.mrb[0].mxu0 %v2327
        %v2524 = vpop.f32.mrb[0].mxu0
        %v2525 = vadd.f32 0.0, %v2524
        %v2526 = vpop.f32.mrb[0].mxu0
        %2527 = vmatprep.mubr.f32.mxu0 0.0
        %2528 = vmatmul.mubr.f32.gmra.mrb[0].mxu0 %v2330
        %v2529 = vpop.f32.mrb[0].mxu0
        %v2530 = vadd.f32 0.0, %v2529
        %v2531 = vpop.f32.mrb[0].mxu0
        %2532 = vmatprep.mubr.f32.mxu0 0.0
        %2533 = vmatmul.mubr.f32.gmra.mrb[0].mxu0 %v2333
        %v2534 = vpop.f32.mrb[0].mxu0
        %v2535 = vadd.f32 0.0, %v2534
        %v2536 = vpop.f32.mrb[0].mxu0
        %2537 = vmatprep.mubr.f32.mxu0 0.0
        %2538 = vmatmul.mubr.f32.gmra.mrb[0].mxu0 %v2336
        %v2539 = vpop.f32.mrb[0].mxu0
        %v2540 = vadd.f32 0.0, %v2539
        %v2541 = vpop.f32.mrb[0].mxu0
        %2542 = vmatprep.mubr.f32.mxu0 0.0
        %2543 = vmatmul.mubr.f32.gmra.mrb[0].mxu0 %v2339
        %v2544 = vpop.f32.mrb[0].mxu0
        %v2545 = vadd.f32 0.0, %v2544
        %v2546 = vpop.f32.mrb[0].mxu0
        %2547 = vmatprep.mubr.f32.mxu0 0.0
        %2548 = vmatmul.mubr.f32.gmra.mrb[0].mxu0 %v2342
        %v2549 = vpop.f32.mrb[0].mxu0
        %v2550 = vadd.f32 0.0, %v2549
        %v2551 = vpop.f32.mrb[0].mxu0
        %2552 = vmatprep.mubr.f32.mxu0 0.0
        %2553 = vmatmul.mubr.f32.gmra.mrb[0].mxu0 %v2345
        %v2554 = vpop.f32.mrb[0].mxu0
        %v2555 = vadd.f32 0.0, %v2554
        %v2556 = vpop.f32.mrb[0].mxu0
        %2557 = vmatprep.mubr.f32.mxu0 0.0
        %2558 = vmatmul.mubr.f32.gmra.mrb[0].mxu0 %v2348
        %v2559 = vpop.f32.mrb[0].mxu0
        %v2560 = vadd.f32 0.0, %v2559
        %v2561 = vpop.f32.mrb[0].mxu0
        %2562 = vmatprep.mubr.f32.mxu0 0.0
        %2563 = vmatmul.mubr.f32.gmra.mrb[0].mxu0 %v2351
        %v2564 = vpop.f32.mrb[0].mxu0
        %v2565 = vadd.f32 0.0, %v2564
        %v2566 = vpop.f32.mrb[0].mxu0
        %2567 = vmatprep.mubr.f32.mxu0 0.0
        %2568 = vmatmul.mubr.f32.gmra.mrb[0].mxu0 %v2354
        %v2569 = vpop.f32.mrb[0].mxu0
        %v2570 = vadd.f32 0.0, %v2569
        %v2571 = vpop.f32.mrb[0].mxu0
        %2572 = vmatprep.mubr.f32.mxu0 0.0
        %2573 = vmatmul.mubr.f32.gmra.mrb[0].mxu0 %v2357
        %v2574 = vpop.f32.mrb[0].mxu0
        %v2575 = vadd.f32 0.0, %v2574
        %v2576 = vpop.f32.mrb[0].mxu0
        %2577 = vmatprep.mubr.f32.mxu0 0.0
        %2578 = vmatmul.mubr.f32.gmra.mrb[0].mxu0 %v2360
        %v2579 = vpop.f32.mrb[0].mxu0
        %v2580 = vadd.f32 0.0, %v2579
        %v2581 = vpop.f32.mrb[0].mxu0
        %2582 = vmatprep.mubr.f32.mxu0 0.0
        %2583 = vmatmul.mubr.f32.gmra.mrb[0].mxu0 %v2363
        %v2584 = vpop.f32.mrb[0].mxu0
        %v2585 = vadd.f32 0.0, %v2584
        %v2586 = vpop.f32.mrb[0].mxu0
        %2587 = vmatprep.mubr.f32.mxu0 0.0
        %2588 = vmatmul.mubr.f32.gmra.mrb[0].mxu0 %v2366
        %v2589 = vpop.f32.mrb[0].mxu0
        %v2590 = vadd.f32 0.0, %v2589
        %v2591 = vpop.f32.mrb[0].mxu0
        %2592 = vdwg.mxu0
        %v2593 = vadd.f32 %v2174, %v2435
        %v2594 = vadd.f32 %v2175, %v2440
        %v2595 = vadd.f32 %v2176, %v2445
        %v2596 = vadd.f32 %v2177, %v2450
        %v2597 = vadd.f32 %v2178, %v2455
        %v2598 = vadd.f32 %v2179, %v2460
        %v2599 = vadd.f32 %v2180, %v2465
        %v2600 = vadd.f32 %v2181, %v2470
        %v2601 = vadd.f32 %v2182, %v2475
        %v2602 = vadd.f32 %v2183, %v2480
        %v2603 = vadd.f32 %v2184, %v2485
        %v2604 = vadd.f32 %v2185, %v2490
        %v2605 = vadd.f32 %v2186, %v2495
        %v2606 = vadd.f32 %v2187, %v2500
        %v2607 = vadd.f32 %v2188, %v2505
        %v2608 = vadd.f32 %v2189, %v2510
        %v2609 = vadd.f32 %v2190, %v2515
        %v2610 = vadd.f32 %v2191, %v2520
        %v2611 = vadd.f32 %v2192, %v2525
        %v2612 = vadd.f32 %v2193, %v2530
        %v2613 = vadd.f32 %v2194, %v2535
        %v2614 = vadd.f32 %v2195, %v2540
        %v2615 = vadd.f32 %v2196, %v2545
        %v2616 = vadd.f32 %v2197, %v2550
        %v2617 = vadd.f32 %v2198, %v2555
        %v2618 = vadd.f32 %v2199, %v2560
        %v2619 = vadd.f32 %v2200, %v2565
        %v2620 = vadd.f32 %v2201, %v2570
        %v2621 = vadd.f32 %v2202, %v2575
        %v2622 = vadd.f32 %v2203, %v2580
        %v2623 = vadd.f32 %v2204, %v2585
        %v2624 = vadd.f32 %v2205, %v2590
        %v2625 = vld [vmem:[#allocation2 + $0x11] sm:$0xff]
        %v2626 = vld [vmem:[#allocation2 + $0x19] sm:$0xff]
        %v2627 = vld [vmem:[#allocation2 + $0x21] sm:$0xff]
        %v2628 = vld [vmem:[#allocation2 + $0x29] sm:$0xff]
        %v2629 = vld [vmem:[#allocation2 + $0x31] sm:$0xff]
        %v2630 = vld [vmem:[#allocation2 + $0x39] sm:$0xff]
        %v2631 = vld [vmem:[#allocation2 + $0x41] sm:$0xff]
        %v2632 = vld [vmem:[#allocation2 + $0x49] sm:$0xff]
        %v2633 = vld [vmem:[#allocation2 + $0x51] sm:$0xff]
        %v2634 = vld [vmem:[#allocation2 + $0x59] sm:$0xff]
        %v2635 = vld [vmem:[#allocation2 + $0x61] sm:$0xff]
        %v2636 = vld [vmem:[#allocation2 + $0x69] sm:$0xff]
        %v2637 = vld [vmem:[#allocation2 + $0x71] sm:$0xff]
        %v2638 = vld [vmem:[#allocation2 + $0x79] sm:$0xff]
        %v2639 = vld [vmem:[#allocation2 + $0x81] sm:$0xff]
        %v2640 = vld [vmem:[#allocation2 + $0x89] sm:$0xff]
        %v2641 = vld [vmem:[#allocation2 + $0x91] sm:$0xff]
        %v2642 = vld [vmem:[#allocation2 + $0x99] sm:$0xff]
        %v2643 = vld [vmem:[#allocation2 + $0xa1] sm:$0xff]
        %v2644 = vld [vmem:[#allocation2 + $0xa9] sm:$0xff]
        %v2645 = vld [vmem:[#allocation2 + $0xb1] sm:$0xff]
        %v2646 = vld [vmem:[#allocation2 + $0xb9] sm:$0xff]
        %v2647 = vld [vmem:[#allocation2 + $0xc1] sm:$0xff]
        %v2648 = vld [vmem:[#allocation2 + $0xc9] sm:$0xff]
        %v2649 = vld [vmem:[#allocation2 + $0xd1] sm:$0xff]
        %v2650 = vld [vmem:[#allocation2 + $0xd9] sm:$0xff]
        %v2651 = vld [vmem:[#allocation2 + $0xe1] sm:$0xff]
        %v2652 = vld [vmem:[#allocation2 + $0xe9] sm:$0xff]
        %v2653 = vld [vmem:[#allocation2 + $0xf1] sm:$0xff]
        %v2654 = vld [vmem:[#allocation2 + $0xf9] sm:$0xff]
        %v2655 = vld [vmem:[#allocation2 + $0x101] sm:$0xff]
        %v2656 = vld [vmem:[#allocation2 + $0x109] sm:$0xff]
        %s2657 = scalar_lea.vmem %s1, 32
        %v2658 = vld [vmem:[%s2657] sm:$0xff]
        %v2660 = vsel %vm815, %v2625, 0
        %v2663 = vsel %vm815, %v2626, 0
        %v2666 = vsel %vm815, %v2627, 0
        %v2669 = vsel %vm815, %v2628, 0
        %v2672 = vsel %vm815, %v2629, 0
        %v2675 = vsel %vm815, %v2630, 0
        %v2678 = vsel %vm815, %v2631, 0
        %v2681 = vsel %vm815, %v2632, 0
        %v2684 = vsel %vm815, %v2633, 0
        %v2687 = vsel %vm815, %v2634, 0
        %v2690 = vsel %vm815, %v2635, 0
        %v2693 = vsel %vm815, %v2636, 0
        %v2696 = vsel %vm815, %v2637, 0
        %v2699 = vsel %vm815, %v2638, 0
        %v2702 = vsel %vm815, %v2639, 0
        %v2705 = vsel %vm815, %v2640, 0
        %v2708 = vsel %vm815, %v2641, 0
        %v2711 = vsel %vm815, %v2642, 0
        %v2714 = vsel %vm815, %v2643, 0
        %v2717 = vsel %vm815, %v2644, 0
        %v2720 = vsel %vm815, %v2645, 0
        %v2723 = vsel %vm815, %v2646, 0
        %v2726 = vsel %vm815, %v2647, 0
        %v2729 = vsel %vm815, %v2648, 0
        %v2732 = vsel %vm815, %v2649, 0
        %v2735 = vsel %vm815, %v2650, 0
        %v2738 = vsel %vm815, %v2651, 0
        %v2741 = vsel %vm815, %v2652, 0
        %v2744 = vsel %vm815, %v2653, 0
        %v2747 = vsel %vm815, %v2654, 0
        %v2750 = vsel %vm815, %v2655, 0
        %v2753 = vsel %vm815, %v2656, 0
        %2755 = vmatprep.subr.mxu0 0.0
        %2756 = vmatpush1.msra.mxu0 %v2658
        %2757 = vmatprep.subr.mxu0 0.0
        %2758 = vmatpush1.msra.mxu0 0.0
        %2759 = vmatprep.subr.mxu0 0.0
        %2760 = vmatpush1.msra.mxu0 0.0
        %2761 = vmatprep.subr.mxu0 0.0
        %2762 = vmatpush1.msra.mxu0 0.0
        %2763 = vmatprep.subr.mxu0 0.0
        %2764 = vmatpush1.msra.mxu0 0.0
        %2765 = vmatprep.subr.mxu0 0.0
        %2766 = vmatpush1.msra.mxu0 0.0
        %2767 = vmatprep.subr.mxu0 0.0
        %2768 = vmatpush1.msra.mxu0 0.0
        %2769 = vmatprep.subr.mxu0 0.0
        %2770 = vmatpush1.msra.mxu0 0.0
        %2771 = vmatprep.subr.mxu0 0.0
        %2772 = vmatpush1.msra.mxu0 0.0
        %2773 = vmatprep.subr.mxu0 0.0
        %2774 = vmatpush1.msra.mxu0 0.0
        %2775 = vmatprep.subr.mxu0 0.0
        %2776 = vmatpush1.msra.mxu0 0.0
        %2777 = vmatprep.subr.mxu0 0.0
        %2778 = vmatpush1.msra.mxu0 0.0
        %2779 = vmatprep.subr.mxu0 0.0
        %2780 = vmatpush1.msra.mxu0 0.0
        %2781 = vmatprep.subr.mxu0 0.0
        %2782 = vmatpush1.msra.mxu0 0.0
        %2783 = vmatprep.subr.mxu0 0.0
        %2784 = vmatpush1.msra.mxu0 0.0
        %2785 = vmatprep.subr.mxu0 0.0
        %2786 = vmatpush1.msra.mxu0 0.0
        %2787 = vmatprep.subr.mxu0 0.0
        %2788 = vmatpush1.msra.mxu0 0.0
        %2789 = vmatprep.subr.mxu0 0.0
        %2790 = vmatpush1.msra.mxu0 0.0
        %2791 = vmatprep.subr.mxu0 0.0
        %2792 = vmatpush1.msra.mxu0 0.0
        %2793 = vmatprep.subr.mxu0 0.0
        %2794 = vmatpush1.msra.mxu0 0.0
        %2795 = vmatprep.subr.mxu0 0.0
        %2796 = vmatpush1.msra.mxu0 0.0
        %2797 = vmatprep.subr.mxu0 0.0
        %2798 = vmatpush1.msra.mxu0 0.0
        %2799 = vmatprep.subr.mxu0 0.0
        %2800 = vmatpush1.msra.mxu0 0.0
        %2801 = vmatprep.subr.mxu0 0.0
        %2802 = vmatpush1.msra.mxu0 0.0
        %2803 = vmatprep.subr.mxu0 0.0
        %2804 = vmatpush1.msra.mxu0 0.0
        %2805 = vmatprep.subr.mxu0 0.0
        %2806 = vmatpush1.msra.mxu0 0.0
        %2807 = vmatprep.subr.mxu0 0.0
        %2808 = vmatpush1.msra.mxu0 0.0
        %2809 = vmatprep.subr.mxu0 0.0
        %2810 = vmatpush1.msra.mxu0 0.0
        %2811 = vmatprep.subr.mxu0 0.0
        %2812 = vmatpush1.msra.mxu0 0.0
        %2813 = vmatprep.subr.mxu0 0.0
        %2814 = vmatpush1.msra.mxu0 0.0
        %2815 = vmatprep.subr.mxu0 0.0
        %2816 = vmatpush1.msra.mxu0 0.0
        %2817 = vmatprep.subr.mxu0 0.0
        %2818 = vmatpush1.msra.mxu0 0.0
        %2819 = vmatprep.mubr.f32.mxu0 0.0
        %2820 = vmatmul.mubr.f32.gmra.mrb[0].mxu0 %v2660
        %v2821 = vpop.f32.mrb[0].mxu0
        %v2822 = vadd.f32 0.0, %v2821
        %v2823 = vpop.f32.mrb[0].mxu0
        %2824 = vmatprep.mubr.f32.mxu0 0.0
        %2825 = vmatmul.mubr.f32.gmra.mrb[0].mxu0 %v2663
        %v2826 = vpop.f32.mrb[0].mxu0
        %v2827 = vadd.f32 0.0, %v2826
        %v2828 = vpop.f32.mrb[0].mxu0
        %2829 = vmatprep.mubr.f32.mxu0 0.0
        %2830 = vmatmul.mubr.f32.gmra.mrb[0].mxu0 %v2666
        %v2831 = vpop.f32.mrb[0].mxu0
        %v2832 = vadd.f32 0.0, %v2831
        %v2833 = vpop.f32.mrb[0].mxu0
        %2834 = vmatprep.mubr.f32.mxu0 0.0
        %2835 = vmatmul.mubr.f32.gmra.mrb[0].mxu0 %v2669
        %v2836 = vpop.f32.mrb[0].mxu0
        %v2837 = vadd.f32 0.0, %v2836
        %v2838 = vpop.f32.mrb[0].mxu0
        %2839 = vmatprep.mubr.f32.mxu0 0.0
        %2840 = vmatmul.mubr.f32.gmra.mrb[0].mxu0 %v2672
        %v2841 = vpop.f32.mrb[0].mxu0
        %v2842 = vadd.f32 0.0, %v2841
        %v2843 = vpop.f32.mrb[0].mxu0
        %2844 = vmatprep.mubr.f32.mxu0 0.0
        %2845 = vmatmul.mubr.f32.gmra.mrb[0].mxu0 %v2675
        %v2846 = vpop.f32.mrb[0].mxu0
        %v2847 = vadd.f32 0.0, %v2846
        %v2848 = vpop.f32.mrb[0].mxu0
        %2849 = vmatprep.mubr.f32.mxu0 0.0
        %2850 = vmatmul.mubr.f32.gmra.mrb[0].mxu0 %v2678
        %v2851 = vpop.f32.mrb[0].mxu0
        %v2852 = vadd.f32 0.0, %v2851
        %v2853 = vpop.f32.mrb[0].mxu0
        %2854 = vmatprep.mubr.f32.mxu0 0.0
        %2855 = vmatmul.mubr.f32.gmra.mrb[0].mxu0 %v2681
        %v2856 = vpop.f32.mrb[0].mxu0
        %v2857 = vadd.f32 0.0, %v2856
        %v2858 = vpop.f32.mrb[0].mxu0
        %2859 = vmatprep.mubr.f32.mxu0 0.0
        %2860 = vmatmul.mubr.f32.gmra.mrb[0].mxu0 %v2684
        %v2861 = vpop.f32.mrb[0].mxu0
        %v2862 = vadd.f32 0.0, %v2861
        %v2863 = vpop.f32.mrb[0].mxu0
        %2864 = vmatprep.mubr.f32.mxu0 0.0
        %2865 = vmatmul.mubr.f32.gmra.mrb[0].mxu0 %v2687
        %v2866 = vpop.f32.mrb[0].mxu0
        %v2867 = vadd.f32 0.0, %v2866
        %v2868 = vpop.f32.mrb[0].mxu0
        %2869 = vmatprep.mubr.f32.mxu0 0.0
        %2870 = vmatmul.mubr.f32.gmra.mrb[0].mxu0 %v2690
        %v2871 = vpop.f32.mrb[0].mxu0
        %v2872 = vadd.f32 0.0, %v2871
        %v2873 = vpop.f32.mrb[0].mxu0
        %2874 = vmatprep.mubr.f32.mxu0 0.0
        %2875 = vmatmul.mubr.f32.gmra.mrb[0].mxu0 %v2693
        %v2876 = vpop.f32.mrb[0].mxu0
        %v2877 = vadd.f32 0.0, %v2876
        %v2878 = vpop.f32.mrb[0].mxu0
        %2879 = vmatprep.mubr.f32.mxu0 0.0
        %2880 = vmatmul.mubr.f32.gmra.mrb[0].mxu0 %v2696
        %v2881 = vpop.f32.mrb[0].mxu0
        %v2882 = vadd.f32 0.0, %v2881
        %v2883 = vpop.f32.mrb[0].mxu0
        %2884 = vmatprep.mubr.f32.mxu0 0.0
        %2885 = vmatmul.mubr.f32.gmra.mrb[0].mxu0 %v2699
        %v2886 = vpop.f32.mrb[0].mxu0
        %v2887 = vadd.f32 0.0, %v2886
        %v2888 = vpop.f32.mrb[0].mxu0
        %2889 = vmatprep.mubr.f32.mxu0 0.0
        %2890 = vmatmul.mubr.f32.gmra.mrb[0].mxu0 %v2702
        %v2891 = vpop.f32.mrb[0].mxu0
        %v2892 = vadd.f32 0.0, %v2891
        %v2893 = vpop.f32.mrb[0].mxu0
        %2894 = vmatprep.mubr.f32.mxu0 0.0
        %2895 = vmatmul.mubr.f32.gmra.mrb[0].mxu0 %v2705
        %v2896 = vpop.f32.mrb[0].mxu0
        %v2897 = vadd.f32 0.0, %v2896
        %v2898 = vpop.f32.mrb[0].mxu0
        %2899 = vmatprep.mubr.f32.mxu0 0.0
        %2900 = vmatmul.mubr.f32.gmra.mrb[0].mxu0 %v2708
        %v2901 = vpop.f32.mrb[0].mxu0
        %v2902 = vadd.f32 0.0, %v2901
        %v2903 = vpop.f32.mrb[0].mxu0
        %2904 = vmatprep.mubr.f32.mxu0 0.0
        %2905 = vmatmul.mubr.f32.gmra.mrb[0].mxu0 %v2711
        %v2906 = vpop.f32.mrb[0].mxu0
        %v2907 = vadd.f32 0.0, %v2906
        %v2908 = vpop.f32.mrb[0].mxu0
        %2909 = vmatprep.mubr.f32.mxu0 0.0
        %2910 = vmatmul.mubr.f32.gmra.mrb[0].mxu0 %v2714
        %v2911 = vpop.f32.mrb[0].mxu0
        %v2912 = vadd.f32 0.0, %v2911
        %v2913 = vpop.f32.mrb[0].mxu0
        %2914 = vmatprep.mubr.f32.mxu0 0.0
        %2915 = vmatmul.mubr.f32.gmra.mrb[0].mxu0 %v2717
        %v2916 = vpop.f32.mrb[0].mxu0
        %v2917 = vadd.f32 0.0, %v2916
        %v2918 = vpop.f32.mrb[0].mxu0
        %2919 = vmatprep.mubr.f32.mxu0 0.0
        %2920 = vmatmul.mubr.f32.gmra.mrb[0].mxu0 %v2720
        %v2921 = vpop.f32.mrb[0].mxu0
        %v2922 = vadd.f32 0.0, %v2921
        %v2923 = vpop.f32.mrb[0].mxu0
        %2924 = vmatprep.mubr.f32.mxu0 0.0
        %2925 = vmatmul.mubr.f32.gmra.mrb[0].mxu0 %v2723
        %v2926 = vpop.f32.mrb[0].mxu0
        %v2927 = vadd.f32 0.0, %v2926
        %v2928 = vpop.f32.mrb[0].mxu0
        %2929 = vmatprep.mubr.f32.mxu0 0.0
        %2930 = vmatmul.mubr.f32.gmra.mrb[0].mxu0 %v2726
        %v2931 = vpop.f32.mrb[0].mxu0
        %v2932 = vadd.f32 0.0, %v2931
        %v2933 = vpop.f32.mrb[0].mxu0
        %2934 = vmatprep.mubr.f32.mxu0 0.0
        %2935 = vmatmul.mubr.f32.gmra.mrb[0].mxu0 %v2729
        %v2936 = vpop.f32.mrb[0].mxu0
        %v2937 = vadd.f32 0.0, %v2936
        %v2938 = vpop.f32.mrb[0].mxu0
        %2939 = vmatprep.mubr.f32.mxu0 0.0
        %2940 = vmatmul.mubr.f32.gmra.mrb[0].mxu0 %v2732
        %v2941 = vpop.f32.mrb[0].mxu0
        %v2942 = vadd.f32 0.0, %v2941
        %v2943 = vpop.f32.mrb[0].mxu0
        %2944 = vmatprep.mubr.f32.mxu0 0.0
        %2945 = vmatmul.mubr.f32.gmra.mrb[0].mxu0 %v2735
        %v2946 = vpop.f32.mrb[0].mxu0
        %v2947 = vadd.f32 0.0, %v2946
        %v2948 = vpop.f32.mrb[0].mxu0
        %2949 = vmatprep.mubr.f32.mxu0 0.0
        %2950 = vmatmul.mubr.f32.gmra.mrb[0].mxu0 %v2738
        %v2951 = vpop.f32.mrb[0].mxu0
        %v2952 = vadd.f32 0.0, %v2951
        %v2953 = vpop.f32.mrb[0].mxu0
        %2954 = vmatprep.mubr.f32.mxu0 0.0
        %2955 = vmatmul.mubr.f32.gmra.mrb[0].mxu0 %v2741
        %v2956 = vpop.f32.mrb[0].mxu0
        %v2957 = vadd.f32 0.0, %v2956
        %v2958 = vpop.f32.mrb[0].mxu0
        %2959 = vmatprep.mubr.f32.mxu0 0.0
        %2960 = vmatmul.mubr.f32.gmra.mrb[0].mxu0 %v2744
        %v2961 = vpop.f32.mrb[0].mxu0
        %v2962 = vadd.f32 0.0, %v2961
        %v2963 = vpop.f32.mrb[0].mxu0
        %2964 = vmatprep.mubr.f32.mxu0 0.0
        %2965 = vmatmul.mubr.f32.gmra.mrb[0].mxu0 %v2747
        %v2966 = vpop.f32.mrb[0].mxu0
        %v2967 = vadd.f32 0.0, %v2966
        %v2968 = vpop.f32.mrb[0].mxu0
        %2969 = vmatprep.mubr.f32.mxu0 0.0
        %2970 = vmatmul.mubr.f32.gmra.mrb[0].mxu0 %v2750
        %v2971 = vpop.f32.mrb[0].mxu0
        %v2972 = vadd.f32 0.0, %v2971
        %v2973 = vpop.f32.mrb[0].mxu0
        %2974 = vmatprep.mubr.f32.mxu0 0.0
        %2975 = vmatmul.mubr.f32.gmra.mrb[0].mxu0 %v2753
        %v2976 = vpop.f32.mrb[0].mxu0
        %v2977 = vadd.f32 0.0, %v2976
        %v2978 = vpop.f32.mrb[0].mxu0
        %2979 = vdwg.mxu0
        %v2980 = vadd.f32 %v2593, %v2822
        %v2981 = vadd.f32 %v2594, %v2827
        %v2982 = vadd.f32 %v2595, %v2832
        %v2983 = vadd.f32 %v2596, %v2837
        %v2984 = vadd.f32 %v2597, %v2842
        %v2985 = vadd.f32 %v2598, %v2847
        %v2986 = vadd.f32 %v2599, %v2852
        %v2987 = vadd.f32 %v2600, %v2857
        %v2988 = vadd.f32 %v2601, %v2862
        %v2989 = vadd.f32 %v2602, %v2867
        %v2990 = vadd.f32 %v2603, %v2872
        %v2991 = vadd.f32 %v2604, %v2877
        %v2992 = vadd.f32 %v2605, %v2882
        %v2993 = vadd.f32 %v2606, %v2887
        %v2994 = vadd.f32 %v2607, %v2892
        %v2995 = vadd.f32 %v2608, %v2897
        %v2996 = vadd.f32 %v2609, %v2902
        %v2997 = vadd.f32 %v2610, %v2907
        %v2998 = vadd.f32 %v2611, %v2912
        %v2999 = vadd.f32 %v2612, %v2917
        %v3000 = vadd.f32 %v2613, %v2922
        %v3001 = vadd.f32 %v2614, %v2927
        %v3002 = vadd.f32 %v2615, %v2932
        %v3003 = vadd.f32 %v2616, %v2937
        %v3004 = vadd.f32 %v2617, %v2942
        %v3005 = vadd.f32 %v2618, %v2947
        %v3006 = vadd.f32 %v2619, %v2952
        %v3007 = vadd.f32 %v2620, %v2957
        %v3008 = vadd.f32 %v2621, %v2962
        %v3009 = vadd.f32 %v2622, %v2967
        %v3010 = vadd.f32 %v2623, %v2972
        %v3011 = vadd.f32 %v2624, %v2977
        %v3012 = vld [vmem:[#allocation2 + $0x12] sm:$0xff]
        %v3013 = vld [vmem:[#allocation2 + $0x1a] sm:$0xff]
        %v3014 = vld [vmem:[#allocation2 + $0x22] sm:$0xff]
        %v3015 = vld [vmem:[#allocation2 + $0x2a] sm:$0xff]
        %v3016 = vld [vmem:[#allocation2 + $0x32] sm:$0xff]
        %v3017 = vld [vmem:[#allocation2 + $0x3a] sm:$0xff]
        %v3018 = vld [vmem:[#allocation2 + $0x42] sm:$0xff]
        %v3019 = vld [vmem:[#allocation2 + $0x4a] sm:$0xff]
        %v3020 = vld [vmem:[#allocation2 + $0x52] sm:$0xff]
        %v3021 = vld [vmem:[#allocation2 + $0x5a] sm:$0xff]
        %v3022 = vld [vmem:[#allocation2 + $0x62] sm:$0xff]
        %v3023 = vld [vmem:[#allocation2 + $0x6a] sm:$0xff]
        %v3024 = vld [vmem:[#allocation2 + $0x72] sm:$0xff]
        %v3025 = vld [vmem:[#allocation2 + $0x7a] sm:$0xff]
        %v3026 = vld [vmem:[#allocation2 + $0x82] sm:$0xff]
        %v3027 = vld [vmem:[#allocation2 + $0x8a] sm:$0xff]
        %v3028 = vld [vmem:[#allocation2 + $0x92] sm:$0xff]
        %v3029 = vld [vmem:[#allocation2 + $0x9a] sm:$0xff]
        %v3030 = vld [vmem:[#allocation2 + $0xa2] sm:$0xff]
        %v3031 = vld [vmem:[#allocation2 + $0xaa] sm:$0xff]
        %v3032 = vld [vmem:[#allocation2 + $0xb2] sm:$0xff]
        %v3033 = vld [vmem:[#allocation2 + $0xba] sm:$0xff]
        %v3034 = vld [vmem:[#allocation2 + $0xc2] sm:$0xff]
        %v3035 = vld [vmem:[#allocation2 + $0xca] sm:$0xff]
        %v3036 = vld [vmem:[#allocation2 + $0xd2] sm:$0xff]
        %v3037 = vld [vmem:[#allocation2 + $0xda] sm:$0xff]
        %v3038 = vld [vmem:[#allocation2 + $0xe2] sm:$0xff]
        %v3039 = vld [vmem:[#allocation2 + $0xea] sm:$0xff]
        %v3040 = vld [vmem:[#allocation2 + $0xf2] sm:$0xff]
        %v3041 = vld [vmem:[#allocation2 + $0xfa] sm:$0xff]
        %v3042 = vld [vmem:[#allocation2 + $0x102] sm:$0xff]
        %v3043 = vld [vmem:[#allocation2 + $0x10a] sm:$0xff]
        %v3044 = vsel %vm1787, %v3012, 0.0
        %v3045 = vsel %vm1788, %v3013, 0.0
        %v3046 = vsel %vm1789, %v3014, 0.0
        %v3047 = vsel %vm1790, %v3015, 0.0
        %v3048 = vsel %vm1791, %v3016, 0.0
        %v3049 = vsel %vm1792, %v3017, 0.0
        %v3050 = vsel %vm1793, %v3018, 0.0
        %v3051 = vsel %vm1794, %v3019, 0.0
        %v3052 = vsel %vm1795, %v3020, 0.0
        %v3053 = vsel %vm1796, %v3021, 0.0
        %v3054 = vsel %vm1797, %v3022, 0.0
        %v3055 = vsel %vm1798, %v3023, 0.0
        %v3056 = vsel %vm1799, %v3024, 0.0
        %v3057 = vsel %vm1800, %v3025, 0.0
        %v3058 = vsel %vm1801, %v3026, 0.0
        %v3059 = vsel %vm1802, %v3027, 0.0
        %v3060 = vsel %vm1803, %v3028, 0.0
        %v3061 = vsel %vm1804, %v3029, 0.0
        %v3062 = vsel %vm1805, %v3030, 0.0
        %v3063 = vsel %vm1806, %v3031, 0.0
        %v3064 = vsel %vm1807, %v3032, 0.0
        %v3065 = vsel %vm1808, %v3033, 0.0
        %v3066 = vsel %vm1809, %v3034, 0.0
        %v3067 = vsel %vm1810, %v3035, 0.0
        %v3068 = vsel %vm1811, %v3036, 0.0
        %v3069 = vsel %vm1812, %v3037, 0.0
        %v3070 = vsel %vm1813, %v3038, 0.0
        %v3071 = vsel %vm1814, %v3039, 0.0
        %v3072 = vsel %vm1815, %v3040, 0.0
        %v3073 = vsel %vm1816, %v3041, 0.0
        %v3074 = vsel %vm1817, %v3042, 0.0
        %v3075 = vsel %vm1818, %v3043, 0.0
        %s3076 = scalar_lea.vmem %s1, 40
        %v3077 = vld [vmem:[%s3076] sm:$0xff]
        %v3079 = vsel %vm815, %v3044, 0
        %v3082 = vsel %vm815, %v3045, 0
        %v3085 = vsel %vm815, %v3046, 0
        %v3088 = vsel %vm815, %v3047, 0
        %v3091 = vsel %vm815, %v3048, 0
        %v3094 = vsel %vm815, %v3049, 0
        %v3097 = vsel %vm815, %v3050, 0
        %v3100 = vsel %vm815, %v3051, 0
        %v3103 = vsel %vm815, %v3052, 0
        %v3106 = vsel %vm815, %v3053, 0
        %v3109 = vsel %vm815, %v3054, 0
        %v3112 = vsel %vm815, %v3055, 0
        %v3115 = vsel %vm815, %v3056, 0
        %v3118 = vsel %vm815, %v3057, 0
        %v3121 = vsel %vm815, %v3058, 0
        %v3124 = vsel %vm815, %v3059, 0
        %v3127 = vsel %vm815, %v3060, 0
        %v3130 = vsel %vm815, %v3061, 0
        %v3133 = vsel %vm815, %v3062, 0
        %v3136 = vsel %vm815, %v3063, 0
        %v3139 = vsel %vm815, %v3064, 0
        %v3142 = vsel %vm815, %v3065, 0
        %v3145 = vsel %vm815, %v3066, 0
        %v3148 = vsel %vm815, %v3067, 0
        %v3151 = vsel %vm815, %v3068, 0
        %v3154 = vsel %vm815, %v3069, 0
        %v3157 = vsel %vm815, %v3070, 0
        %v3160 = vsel %vm815, %v3071, 0
        %v3163 = vsel %vm815, %v3072, 0
        %v3166 = vsel %vm815, %v3073, 0
        %v3169 = vsel %vm815, %v3074, 0
        %v3172 = vsel %vm815, %v3075, 0
        %3174 = vmatprep.subr.mxu0 0.0
        %3175 = vmatpush1.msra.mxu0 %v3077
        %3176 = vmatprep.subr.mxu0 0.0
        %3177 = vmatpush1.msra.mxu0 0.0
        %3178 = vmatprep.subr.mxu0 0.0
        %3179 = vmatpush1.msra.mxu0 0.0
        %3180 = vmatprep.subr.mxu0 0.0
        %3181 = vmatpush1.msra.mxu0 0.0
        %3182 = vmatprep.subr.mxu0 0.0
        %3183 = vmatpush1.msra.mxu0 0.0
        %3184 = vmatprep.subr.mxu0 0.0
        %3185 = vmatpush1.msra.mxu0 0.0
        %3186 = vmatprep.subr.mxu0 0.0
        %3187 = vmatpush1.msra.mxu0 0.0
        %3188 = vmatprep.subr.mxu0 0.0
        %3189 = vmatpush1.msra.mxu0 0.0
        %3190 = vmatprep.subr.mxu0 0.0
        %3191 = vmatpush1.msra.mxu0 0.0
        %3192 = vmatprep.subr.mxu0 0.0
        %3193 = vmatpush1.msra.mxu0 0.0
        %3194 = vmatprep.subr.mxu0 0.0
        %3195 = vmatpush1.msra.mxu0 0.0
        %3196 = vmatprep.subr.mxu0 0.0
        %3197 = vmatpush1.msra.mxu0 0.0
        %3198 = vmatprep.subr.mxu0 0.0
        %3199 = vmatpush1.msra.mxu0 0.0
        %3200 = vmatprep.subr.mxu0 0.0
        %3201 = vmatpush1.msra.mxu0 0.0
        %3202 = vmatprep.subr.mxu0 0.0
        %3203 = vmatpush1.msra.mxu0 0.0
        %3204 = vmatprep.subr.mxu0 0.0
        %3205 = vmatpush1.msra.mxu0 0.0
        %3206 = vmatprep.subr.mxu0 0.0
        %3207 = vmatpush1.msra.mxu0 0.0
        %3208 = vmatprep.subr.mxu0 0.0
        %3209 = vmatpush1.msra.mxu0 0.0
        %3210 = vmatprep.subr.mxu0 0.0
        %3211 = vmatpush1.msra.mxu0 0.0
        %3212 = vmatprep.subr.mxu0 0.0
        %3213 = vmatpush1.msra.mxu0 0.0
        %3214 = vmatprep.subr.mxu0 0.0
        %3215 = vmatpush1.msra.mxu0 0.0
        %3216 = vmatprep.subr.mxu0 0.0
        %3217 = vmatpush1.msra.mxu0 0.0
        %3218 = vmatprep.subr.mxu0 0.0
        %3219 = vmatpush1.msra.mxu0 0.0
        %3220 = vmatprep.subr.mxu0 0.0
        %3221 = vmatpush1.msra.mxu0 0.0
        %3222 = vmatprep.subr.mxu0 0.0
        %3223 = vmatpush1.msra.mxu0 0.0
        %3224 = vmatprep.subr.mxu0 0.0
        %3225 = vmatpush1.msra.mxu0 0.0
        %3226 = vmatprep.subr.mxu0 0.0
        %3227 = vmatpush1.msra.mxu0 0.0
        %3228 = vmatprep.subr.mxu0 0.0
        %3229 = vmatpush1.msra.mxu0 0.0
        %3230 = vmatprep.subr.mxu0 0.0
        %3231 = vmatpush1.msra.mxu0 0.0
        %3232 = vmatprep.subr.mxu0 0.0
        %3233 = vmatpush1.msra.mxu0 0.0
        %3234 = vmatprep.subr.mxu0 0.0
        %3235 = vmatpush1.msra.mxu0 0.0
        %3236 = vmatprep.subr.mxu0 0.0
        %3237 = vmatpush1.msra.mxu0 0.0
        %3238 = vmatprep.mubr.f32.mxu0 0.0
        %3239 = vmatmul.mubr.f32.gmra.mrb[0].mxu0 %v3079
        %v3240 = vpop.f32.mrb[0].mxu0
        %v3241 = vadd.f32 0.0, %v3240
        %v3242 = vpop.f32.mrb[0].mxu0
        %3243 = vmatprep.mubr.f32.mxu0 0.0
        %3244 = vmatmul.mubr.f32.gmra.mrb[0].mxu0 %v3082
        %v3245 = vpop.f32.mrb[0].mxu0
        %v3246 = vadd.f32 0.0, %v3245
        %v3247 = vpop.f32.mrb[0].mxu0
        %3248 = vmatprep.mubr.f32.mxu0 0.0
        %3249 = vmatmul.mubr.f32.gmra.mrb[0].mxu0 %v3085
        %v3250 = vpop.f32.mrb[0].mxu0
        %v3251 = vadd.f32 0.0, %v3250
        %v3252 = vpop.f32.mrb[0].mxu0
        %3253 = vmatprep.mubr.f32.mxu0 0.0
        %3254 = vmatmul.mubr.f32.gmra.mrb[0].mxu0 %v3088
        %v3255 = vpop.f32.mrb[0].mxu0
        %v3256 = vadd.f32 0.0, %v3255
        %v3257 = vpop.f32.mrb[0].mxu0
        %3258 = vmatprep.mubr.f32.mxu0 0.0
        %3259 = vmatmul.mubr.f32.gmra.mrb[0].mxu0 %v3091
        %v3260 = vpop.f32.mrb[0].mxu0
        %v3261 = vadd.f32 0.0, %v3260
        %v3262 = vpop.f32.mrb[0].mxu0
        %3263 = vmatprep.mubr.f32.mxu0 0.0
        %3264 = vmatmul.mubr.f32.gmra.mrb[0].mxu0 %v3094
        %v3265 = vpop.f32.mrb[0].mxu0
        %v3266 = vadd.f32 0.0, %v3265
        %v3267 = vpop.f32.mrb[0].mxu0
        %3268 = vmatprep.mubr.f32.mxu0 0.0
        %3269 = vmatmul.mubr.f32.gmra.mrb[0].mxu0 %v3097
        %v3270 = vpop.f32.mrb[0].mxu0
        %v3271 = vadd.f32 0.0, %v3270
        %v3272 = vpop.f32.mrb[0].mxu0
        %3273 = vmatprep.mubr.f32.mxu0 0.0
        %3274 = vmatmul.mubr.f32.gmra.mrb[0].mxu0 %v3100
        %v3275 = vpop.f32.mrb[0].mxu0
        %v3276 = vadd.f32 0.0, %v3275
        %v3277 = vpop.f32.mrb[0].mxu0
        %3278 = vmatprep.mubr.f32.mxu0 0.0
        %3279 = vmatmul.mubr.f32.gmra.mrb[0].mxu0 %v3103
        %v3280 = vpop.f32.mrb[0].mxu0
        %v3281 = vadd.f32 0.0, %v3280
        %v3282 = vpop.f32.mrb[0].mxu0
        %3283 = vmatprep.mubr.f32.mxu0 0.0
        %3284 = vmatmul.mubr.f32.gmra.mrb[0].mxu0 %v3106
        %v3285 = vpop.f32.mrb[0].mxu0
        %v3286 = vadd.f32 0.0, %v3285
        %v3287 = vpop.f32.mrb[0].mxu0
        %3288 = vmatprep.mubr.f32.mxu0 0.0
        %3289 = vmatmul.mubr.f32.gmra.mrb[0].mxu0 %v3109
        %v3290 = vpop.f32.mrb[0].mxu0
        %v3291 = vadd.f32 0.0, %v3290
        %v3292 = vpop.f32.mrb[0].mxu0
        %3293 = vmatprep.mubr.f32.mxu0 0.0
        %3294 = vmatmul.mubr.f32.gmra.mrb[0].mxu0 %v3112
        %v3295 = vpop.f32.mrb[0].mxu0
        %v3296 = vadd.f32 0.0, %v3295
        %v3297 = vpop.f32.mrb[0].mxu0
        %3298 = vmatprep.mubr.f32.mxu0 0.0
        %3299 = vmatmul.mubr.f32.gmra.mrb[0].mxu0 %v3115
        %v3300 = vpop.f32.mrb[0].mxu0
        %v3301 = vadd.f32 0.0, %v3300
        %v3302 = vpop.f32.mrb[0].mxu0
        %3303 = vmatprep.mubr.f32.mxu0 0.0
        %3304 = vmatmul.mubr.f32.gmra.mrb[0].mxu0 %v3118
        %v3305 = vpop.f32.mrb[0].mxu0
        %v3306 = vadd.f32 0.0, %v3305
        %v3307 = vpop.f32.mrb[0].mxu0
        %3308 = vmatprep.mubr.f32.mxu0 0.0
        %3309 = vmatmul.mubr.f32.gmra.mrb[0].mxu0 %v3121
        %v3310 = vpop.f32.mrb[0].mxu0
        %v3311 = vadd.f32 0.0, %v3310
        %v3312 = vpop.f32.mrb[0].mxu0
        %3313 = vmatprep.mubr.f32.mxu0 0.0
        %3314 = vmatmul.mubr.f32.gmra.mrb[0].mxu0 %v3124
        %v3315 = vpop.f32.mrb[0].mxu0
        %v3316 = vadd.f32 0.0, %v3315
        %v3317 = vpop.f32.mrb[0].mxu0
        %3318 = vmatprep.mubr.f32.mxu0 0.0
        %3319 = vmatmul.mubr.f32.gmra.mrb[0].mxu0 %v3127
        %v3320 = vpop.f32.mrb[0].mxu0
        %v3321 = vadd.f32 0.0, %v3320
        %v3322 = vpop.f32.mrb[0].mxu0
        %3323 = vmatprep.mubr.f32.mxu0 0.0
        %3324 = vmatmul.mubr.f32.gmra.mrb[0].mxu0 %v3130
        %v3325 = vpop.f32.mrb[0].mxu0
        %v3326 = vadd.f32 0.0, %v3325
        %v3327 = vpop.f32.mrb[0].mxu0
        %3328 = vmatprep.mubr.f32.mxu0 0.0
        %3329 = vmatmul.mubr.f32.gmra.mrb[0].mxu0 %v3133
        %v3330 = vpop.f32.mrb[0].mxu0
        %v3331 = vadd.f32 0.0, %v3330
        %v3332 = vpop.f32.mrb[0].mxu0
        %3333 = vmatprep.mubr.f32.mxu0 0.0
        %3334 = vmatmul.mubr.f32.gmra.mrb[0].mxu0 %v3136
        %v3335 = vpop.f32.mrb[0].mxu0
        %v3336 = vadd.f32 0.0, %v3335
        %v3337 = vpop.f32.mrb[0].mxu0
        %3338 = vmatprep.mubr.f32.mxu0 0.0
        %3339 = vmatmul.mubr.f32.gmra.mrb[0].mxu0 %v3139
        %v3340 = vpop.f32.mrb[0].mxu0
        %v3341 = vadd.f32 0.0, %v3340
        %v3342 = vpop.f32.mrb[0].mxu0
        %3343 = vmatprep.mubr.f32.mxu0 0.0
        %3344 = vmatmul.mubr.f32.gmra.mrb[0].mxu0 %v3142
        %v3345 = vpop.f32.mrb[0].mxu0
        %v3346 = vadd.f32 0.0, %v3345
        %v3347 = vpop.f32.mrb[0].mxu0
        %3348 = vmatprep.mubr.f32.mxu0 0.0
        %3349 = vmatmul.mubr.f32.gmra.mrb[0].mxu0 %v3145
        %v3350 = vpop.f32.mrb[0].mxu0
        %v3351 = vadd.f32 0.0, %v3350
        %v3352 = vpop.f32.mrb[0].mxu0
        %3353 = vmatprep.mubr.f32.mxu0 0.0
        %3354 = vmatmul.mubr.f32.gmra.mrb[0].mxu0 %v3148
        %v3355 = vpop.f32.mrb[0].mxu0
        %v3356 = vadd.f32 0.0, %v3355
        %v3357 = vpop.f32.mrb[0].mxu0
        %3358 = vmatprep.mubr.f32.mxu0 0.0
        %3359 = vmatmul.mubr.f32.gmra.mrb[0].mxu0 %v3151
        %v3360 = vpop.f32.mrb[0].mxu0
        %v3361 = vadd.f32 0.0, %v3360
        %v3362 = vpop.f32.mrb[0].mxu0
        %3363 = vmatprep.mubr.f32.mxu0 0.0
        %3364 = vmatmul.mubr.f32.gmra.mrb[0].mxu0 %v3154
        %v3365 = vpop.f32.mrb[0].mxu0
        %v3366 = vadd.f32 0.0, %v3365
        %v3367 = vpop.f32.mrb[0].mxu0
        %3368 = vmatprep.mubr.f32.mxu0 0.0
        %3369 = vmatmul.mubr.f32.gmra.mrb[0].mxu0 %v3157
        %v3370 = vpop.f32.mrb[0].mxu0
        %v3371 = vadd.f32 0.0, %v3370
        %v3372 = vpop.f32.mrb[0].mxu0
        %3373 = vmatprep.mubr.f32.mxu0 0.0
        %3374 = vmatmul.mubr.f32.gmra.mrb[0].mxu0 %v3160
        %v3375 = vpop.f32.mrb[0].mxu0
        %v3376 = vadd.f32 0.0, %v3375
        %v3377 = vpop.f32.mrb[0].mxu0
        %3378 = vmatprep.mubr.f32.mxu0 0.0
        %3379 = vmatmul.mubr.f32.gmra.mrb[0].mxu0 %v3163
        %v3380 = vpop.f32.mrb[0].mxu0
        %v3381 = vadd.f32 0.0, %v3380
        %v3382 = vpop.f32.mrb[0].mxu0
        %3383 = vmatprep.mubr.f32.mxu0 0.0
        %3384 = vmatmul.mubr.f32.gmra.mrb[0].mxu0 %v3166
        %v3385 = vpop.f32.mrb[0].mxu0
        %v3386 = vadd.f32 0.0, %v3385
        %v3387 = vpop.f32.mrb[0].mxu0
        %3388 = vmatprep.mubr.f32.mxu0 0.0
        %3389 = vmatmul.mubr.f32.gmra.mrb[0].mxu0 %v3169
        %v3390 = vpop.f32.mrb[0].mxu0
        %v3391 = vadd.f32 0.0, %v3390
        %v3392 = vpop.f32.mrb[0].mxu0
        %3393 = vmatprep.mubr.f32.mxu0 0.0
        %3394 = vmatmul.mubr.f32.gmra.mrb[0].mxu0 %v3172
        %v3395 = vpop.f32.mrb[0].mxu0
        %v3396 = vadd.f32 0.0, %v3395
        %v3397 = vpop.f32.mrb[0].mxu0
        %3398 = vdwg.mxu0
        %v3399 = vadd.f32 %v2980, %v3241
        %v3400 = vadd.f32 %v2981, %v3246
        %v3401 = vadd.f32 %v2982, %v3251
        %v3402 = vadd.f32 %v2983, %v3256
        %v3403 = vadd.f32 %v2984, %v3261
        %v3404 = vadd.f32 %v2985, %v3266
        %v3405 = vadd.f32 %v2986, %v3271
        %v3406 = vadd.f32 %v2987, %v3276
        %v3407 = vadd.f32 %v2988, %v3281
        %v3408 = vadd.f32 %v2989, %v3286
        %v3409 = vadd.f32 %v2990, %v3291
        %v3410 = vadd.f32 %v2991, %v3296
        %v3411 = vadd.f32 %v2992, %v3301
        %v3412 = vadd.f32 %v2993, %v3306
        %v3413 = vadd.f32 %v2994, %v3311
        %v3414 = vadd.f32 %v2995, %v3316
        %v3415 = vadd.f32 %v2996, %v3321
        %v3416 = vadd.f32 %v2997, %v3326
        %v3417 = vadd.f32 %v2998, %v3331
        %v3418 = vadd.f32 %v2999, %v3336
        %v3419 = vadd.f32 %v3000, %v3341
        %v3420 = vadd.f32 %v3001, %v3346
        %v3421 = vadd.f32 %v3002, %v3351
        %v3422 = vadd.f32 %v3003, %v3356
        %v3423 = vadd.f32 %v3004, %v3361
        %v3424 = vadd.f32 %v3005, %v3366
        %v3425 = vadd.f32 %v3006, %v3371
        %v3426 = vadd.f32 %v3007, %v3376
        %v3427 = vadd.f32 %v3008, %v3381
        %v3428 = vadd.f32 %v3009, %v3386
        %v3429 = vadd.f32 %v3010, %v3391
        %v3430 = vadd.f32 %v3011, %v3396
        %v3431 = vld [vmem:[#allocation2 + $0x20] sm:$0xff]
        %v3432 = vld [vmem:[#allocation2 + $0x28] sm:$0xff]
        %v3433 = vld [vmem:[#allocation2 + $0x30] sm:$0xff]
        %v3434 = vld [vmem:[#allocation2 + $0x38] sm:$0xff]
        %v3435 = vld [vmem:[#allocation2 + $0x40] sm:$0xff]
        %v3436 = vld [vmem:[#allocation2 + $0x48] sm:$0xff]
        %v3437 = vld [vmem:[#allocation2 + $0x50] sm:$0xff]
        %v3438 = vld [vmem:[#allocation2 + $0x58] sm:$0xff]
        %v3439 = vld [vmem:[#allocation2 + $0x60] sm:$0xff]
        %v3440 = vld [vmem:[#allocation2 + $0x68] sm:$0xff]
        %v3441 = vld [vmem:[#allocation2 + $0x70] sm:$0xff]
        %v3442 = vld [vmem:[#allocation2 + $0x78] sm:$0xff]
        %v3443 = vld [vmem:[#allocation2 + $0x80] sm:$0xff]
        %v3444 = vld [vmem:[#allocation2 + $0x88] sm:$0xff]
        %v3445 = vld [vmem:[#allocation2 + $0x90] sm:$0xff]
        %v3446 = vld [vmem:[#allocation2 + $0x98] sm:$0xff]
        %v3447 = vld [vmem:[#allocation2 + $0xa0] sm:$0xff]
        %v3448 = vld [vmem:[#allocation2 + $0xa8] sm:$0xff]
        %v3449 = vld [vmem:[#allocation2 + $0xb0] sm:$0xff]
        %v3450 = vld [vmem:[#allocation2 + $0xb8] sm:$0xff]
        %v3451 = vld [vmem:[#allocation2 + $0xc0] sm:$0xff]
        %v3452 = vld [vmem:[#allocation2 + $0xc8] sm:$0xff]
        %v3453 = vld [vmem:[#allocation2 + $0xd0] sm:$0xff]
        %v3454 = vld [vmem:[#allocation2 + $0xd8] sm:$0xff]
        %v3455 = vld [vmem:[#allocation2 + $0xe0] sm:$0xff]
        %v3456 = vld [vmem:[#allocation2 + $0xe8] sm:$0xff]
        %v3457 = vld [vmem:[#allocation2 + $0xf0] sm:$0xff]
        %v3458 = vld [vmem:[#allocation2 + $0xf8] sm:$0xff]
        %v3459 = vld [vmem:[#allocation2 + $0x100] sm:$0xff]
        %v3460 = vld [vmem:[#allocation2 + $0x108] sm:$0xff]
        %v3461 = vld [vmem:[#allocation2 + $0x110] sm:$0xff]
        %v3462 = vld [vmem:[#allocation2 + $0x118] sm:$0xff]
        %v3463 = vsel %vm982, %v3431, 0.0
        %v3464 = vsel %vm983, %v3432, 0.0
        %v3465 = vsel %vm984, %v3433, 0.0
        %v3466 = vsel %vm985, %v3434, 0.0
        %v3467 = vsel %vm986, %v3435, 0.0
        %v3468 = vsel %vm987, %v3436, 0.0
        %v3469 = vsel %vm988, %v3437, 0.0
        %v3470 = vsel %vm989, %v3438, 0.0
        %v3471 = vsel %vm990, %v3439, 0.0
        %v3472 = vsel %vm991, %v3440, 0.0
        %v3473 = vsel %vm992, %v3441, 0.0
        %v3474 = vsel %vm993, %v3442, 0.0
        %v3475 = vsel %vm994, %v3443, 0.0
        %v3476 = vsel %vm995, %v3444, 0.0
        %v3477 = vsel %vm996, %v3445, 0.0
        %v3478 = vsel %vm997, %v3446, 0.0
        %v3479 = vsel %vm998, %v3447, 0.0
        %v3480 = vsel %vm999, %v3448, 0.0
        %v3481 = vsel %vm1000, %v3449, 0.0
        %v3482 = vsel %vm1001, %v3450, 0.0
        %v3483 = vsel %vm1002, %v3451, 0.0
        %v3484 = vsel %vm1003, %v3452, 0.0
        %v3485 = vsel %vm1004, %v3453, 0.0
        %v3486 = vsel %vm1005, %v3454, 0.0
        %v3487 = vsel %vm1006, %v3455, 0.0
        %v3488 = vsel %vm1007, %v3456, 0.0
        %v3489 = vsel %vm1008, %v3457, 0.0
        %v3490 = vsel %vm1009, %v3458, 0.0
        %v3491 = vsel %vm1010, %v3459, 0.0
        %v3492 = vsel %vm1011, %v3460, 0.0
        %v3493 = vsel %vm1012, %v3461, 0.0
        %v3494 = vsel %vm1013, %v3462, 0.0
        %s3495 = scalar_lea.vmem %s1, 48
        %v3496 = vld [vmem:[%s3495] sm:$0xff]
        %v3498 = vsel %vm815, %v3463, 0
        %v3501 = vsel %vm815, %v3464, 0
        %v3504 = vsel %vm815, %v3465, 0
        %v3507 = vsel %vm815, %v3466, 0
        %v3510 = vsel %vm815, %v3467, 0
        %v3513 = vsel %vm815, %v3468, 0
        %v3516 = vsel %vm815, %v3469, 0
        %v3519 = vsel %vm815, %v3470, 0
        %v3522 = vsel %vm815, %v3471, 0
        %v3525 = vsel %vm815, %v3472, 0
        %v3528 = vsel %vm815, %v3473, 0
        %v3531 = vsel %vm815, %v3474, 0
        %v3534 = vsel %vm815, %v3475, 0
        %v3537 = vsel %vm815, %v3476, 0
        %v3540 = vsel %vm815, %v3477, 0
        %v3543 = vsel %vm815, %v3478, 0
        %v3546 = vsel %vm815, %v3479, 0
        %v3549 = vsel %vm815, %v3480, 0
        %v3552 = vsel %vm815, %v3481, 0
        %v3555 = vsel %vm815, %v3482, 0
        %v3558 = vsel %vm815, %v3483, 0
        %v3561 = vsel %vm815, %v3484, 0
        %v3564 = vsel %vm815, %v3485, 0
        %v3567 = vsel %vm815, %v3486, 0
        %v3570 = vsel %vm815, %v3487, 0
        %v3573 = vsel %vm815, %v3488, 0
        %v3576 = vsel %vm815, %v3489, 0
        %v3579 = vsel %vm815, %v3490, 0
        %v3582 = vsel %vm815, %v3491, 0
        %v3585 = vsel %vm815, %v3492, 0
        %v3588 = vsel %vm815, %v3493, 0
        %v3591 = vsel %vm815, %v3494, 0
        %3593 = vmatprep.subr.mxu0 0.0
        %3594 = vmatpush1.msra.mxu0 %v3496
        %3595 = vmatprep.subr.mxu0 0.0
        %3596 = vmatpush1.msra.mxu0 0.0
        %3597 = vmatprep.subr.mxu0 0.0
        %3598 = vmatpush1.msra.mxu0 0.0
        %3599 = vmatprep.subr.mxu0 0.0
        %3600 = vmatpush1.msra.mxu0 0.0
        %3601 = vmatprep.subr.mxu0 0.0
        %3602 = vmatpush1.msra.mxu0 0.0
        %3603 = vmatprep.subr.mxu0 0.0
        %3604 = vmatpush1.msra.mxu0 0.0
        %3605 = vmatprep.subr.mxu0 0.0
        %3606 = vmatpush1.msra.mxu0 0.0
        %3607 = vmatprep.subr.mxu0 0.0
        %3608 = vmatpush1.msra.mxu0 0.0
        %3609 = vmatprep.subr.mxu0 0.0
        %3610 = vmatpush1.msra.mxu0 0.0
        %3611 = vmatprep.subr.mxu0 0.0
        %3612 = vmatpush1.msra.mxu0 0.0
        %3613 = vmatprep.subr.mxu0 0.0
        %3614 = vmatpush1.msra.mxu0 0.0
        %3615 = vmatprep.subr.mxu0 0.0
        %3616 = vmatpush1.msra.mxu0 0.0
        %3617 = vmatprep.subr.mxu0 0.0
        %3618 = vmatpush1.msra.mxu0 0.0
        %3619 = vmatprep.subr.mxu0 0.0
        %3620 = vmatpush1.msra.mxu0 0.0
        %3621 = vmatprep.subr.mxu0 0.0
        %3622 = vmatpush1.msra.mxu0 0.0
        %3623 = vmatprep.subr.mxu0 0.0
        %3624 = vmatpush1.msra.mxu0 0.0
        %3625 = vmatprep.subr.mxu0 0.0
        %3626 = vmatpush1.msra.mxu0 0.0
        %3627 = vmatprep.subr.mxu0 0.0
        %3628 = vmatpush1.msra.mxu0 0.0
        %3629 = vmatprep.subr.mxu0 0.0
        %3630 = vmatpush1.msra.mxu0 0.0
        %3631 = vmatprep.subr.mxu0 0.0
        %3632 = vmatpush1.msra.mxu0 0.0
        %3633 = vmatprep.subr.mxu0 0.0
        %3634 = vmatpush1.msra.mxu0 0.0
        %3635 = vmatprep.subr.mxu0 0.0
        %3636 = vmatpush1.msra.mxu0 0.0
        %3637 = vmatprep.subr.mxu0 0.0
        %3638 = vmatpush1.msra.mxu0 0.0
        %3639 = vmatprep.subr.mxu0 0.0
        %3640 = vmatpush1.msra.mxu0 0.0
        %3641 = vmatprep.subr.mxu0 0.0
        %3642 = vmatpush1.msra.mxu0 0.0
        %3643 = vmatprep.subr.mxu0 0.0
        %3644 = vmatpush1.msra.mxu0 0.0
        %3645 = vmatprep.subr.mxu0 0.0
        %3646 = vmatpush1.msra.mxu0 0.0
        %3647 = vmatprep.subr.mxu0 0.0
        %3648 = vmatpush1.msra.mxu0 0.0
        %3649 = vmatprep.subr.mxu0 0.0
        %3650 = vmatpush1.msra.mxu0 0.0
        %3651 = vmatprep.subr.mxu0 0.0
        %3652 = vmatpush1.msra.mxu0 0.0
        %3653 = vmatprep.subr.mxu0 0.0
        %3654 = vmatpush1.msra.mxu0 0.0
        %3655 = vmatprep.subr.mxu0 0.0
        %3656 = vmatpush1.msra.mxu0 0.0
        %3657 = vmatprep.mubr.f32.mxu0 0.0
        %3658 = vmatmul.mubr.f32.gmra.mrb[0].mxu0 %v3498
        %v3659 = vpop.f32.mrb[0].mxu0
        %v3660 = vadd.f32 0.0, %v3659
        %v3661 = vpop.f32.mrb[0].mxu0
        %3662 = vmatprep.mubr.f32.mxu0 0.0
        %3663 = vmatmul.mubr.f32.gmra.mrb[0].mxu0 %v3501
        %v3664 = vpop.f32.mrb[0].mxu0
        %v3665 = vadd.f32 0.0, %v3664
        %v3666 = vpop.f32.mrb[0].mxu0
        %3667 = vmatprep.mubr.f32.mxu0 0.0
        %3668 = vmatmul.mubr.f32.gmra.mrb[0].mxu0 %v3504
        %v3669 = vpop.f32.mrb[0].mxu0
        %v3670 = vadd.f32 0.0, %v3669
        %v3671 = vpop.f32.mrb[0].mxu0
        %3672 = vmatprep.mubr.f32.mxu0 0.0
        %3673 = vmatmul.mubr.f32.gmra.mrb[0].mxu0 %v3507
        %v3674 = vpop.f32.mrb[0].mxu0
        %v3675 = vadd.f32 0.0, %v3674
        %v3676 = vpop.f32.mrb[0].mxu0
        %3677 = vmatprep.mubr.f32.mxu0 0.0
        %3678 = vmatmul.mubr.f32.gmra.mrb[0].mxu0 %v3510
        %v3679 = vpop.f32.mrb[0].mxu0
        %v3680 = vadd.f32 0.0, %v3679
        %v3681 = vpop.f32.mrb[0].mxu0
        %3682 = vmatprep.mubr.f32.mxu0 0.0
        %3683 = vmatmul.mubr.f32.gmra.mrb[0].mxu0 %v3513
        %v3684 = vpop.f32.mrb[0].mxu0
        %v3685 = vadd.f32 0.0, %v3684
        %v3686 = vpop.f32.mrb[0].mxu0
        %3687 = vmatprep.mubr.f32.mxu0 0.0
        %3688 = vmatmul.mubr.f32.gmra.mrb[0].mxu0 %v3516
        %v3689 = vpop.f32.mrb[0].mxu0
        %v3690 = vadd.f32 0.0, %v3689
        %v3691 = vpop.f32.mrb[0].mxu0
        %3692 = vmatprep.mubr.f32.mxu0 0.0
        %3693 = vmatmul.mubr.f32.gmra.mrb[0].mxu0 %v3519
        %v3694 = vpop.f32.mrb[0].mxu0
        %v3695 = vadd.f32 0.0, %v3694
        %v3696 = vpop.f32.mrb[0].mxu0
        %3697 = vmatprep.mubr.f32.mxu0 0.0
        %3698 = vmatmul.mubr.f32.gmra.mrb[0].mxu0 %v3522
        %v3699 = vpop.f32.mrb[0].mxu0
        %v3700 = vadd.f32 0.0, %v3699
        %v3701 = vpop.f32.mrb[0].mxu0
        %3702 = vmatprep.mubr.f32.mxu0 0.0
        %3703 = vmatmul.mubr.f32.gmra.mrb[0].mxu0 %v3525
        %v3704 = vpop.f32.mrb[0].mxu0
        %v3705 = vadd.f32 0.0, %v3704
        %v3706 = vpop.f32.mrb[0].mxu0
        %3707 = vmatprep.mubr.f32.mxu0 0.0
        %3708 = vmatmul.mubr.f32.gmra.mrb[0].mxu0 %v3528
        %v3709 = vpop.f32.mrb[0].mxu0
        %v3710 = vadd.f32 0.0, %v3709
        %v3711 = vpop.f32.mrb[0].mxu0
        %3712 = vmatprep.mubr.f32.mxu0 0.0
        %3713 = vmatmul.mubr.f32.gmra.mrb[0].mxu0 %v3531
        %v3714 = vpop.f32.mrb[0].mxu0
        %v3715 = vadd.f32 0.0, %v3714
        %v3716 = vpop.f32.mrb[0].mxu0
        %3717 = vmatprep.mubr.f32.mxu0 0.0
        %3718 = vmatmul.mubr.f32.gmra.mrb[0].mxu0 %v3534
        %v3719 = vpop.f32.mrb[0].mxu0
        %v3720 = vadd.f32 0.0, %v3719
        %v3721 = vpop.f32.mrb[0].mxu0
        %3722 = vmatprep.mubr.f32.mxu0 0.0
        %3723 = vmatmul.mubr.f32.gmra.mrb[0].mxu0 %v3537
        %v3724 = vpop.f32.mrb[0].mxu0
        %v3725 = vadd.f32 0.0, %v3724
        %v3726 = vpop.f32.mrb[0].mxu0
        %3727 = vmatprep.mubr.f32.mxu0 0.0
        %3728 = vmatmul.mubr.f32.gmra.mrb[0].mxu0 %v3540
        %v3729 = vpop.f32.mrb[0].mxu0
        %v3730 = vadd.f32 0.0, %v3729
        %v3731 = vpop.f32.mrb[0].mxu0
        %3732 = vmatprep.mubr.f32.mxu0 0.0
        %3733 = vmatmul.mubr.f32.gmra.mrb[0].mxu0 %v3543
        %v3734 = vpop.f32.mrb[0].mxu0
        %v3735 = vadd.f32 0.0, %v3734
        %v3736 = vpop.f32.mrb[0].mxu0
        %3737 = vmatprep.mubr.f32.mxu0 0.0
        %3738 = vmatmul.mubr.f32.gmra.mrb[0].mxu0 %v3546
        %v3739 = vpop.f32.mrb[0].mxu0
        %v3740 = vadd.f32 0.0, %v3739
        %v3741 = vpop.f32.mrb[0].mxu0
        %3742 = vmatprep.mubr.f32.mxu0 0.0
        %3743 = vmatmul.mubr.f32.gmra.mrb[0].mxu0 %v3549
        %v3744 = vpop.f32.mrb[0].mxu0
        %v3745 = vadd.f32 0.0, %v3744
        %v3746 = vpop.f32.mrb[0].mxu0
        %3747 = vmatprep.mubr.f32.mxu0 0.0
        %3748 = vmatmul.mubr.f32.gmra.mrb[0].mxu0 %v3552
        %v3749 = vpop.f32.mrb[0].mxu0
        %v3750 = vadd.f32 0.0, %v3749
        %v3751 = vpop.f32.mrb[0].mxu0
        %3752 = vmatprep.mubr.f32.mxu0 0.0
        %3753 = vmatmul.mubr.f32.gmra.mrb[0].mxu0 %v3555
        %v3754 = vpop.f32.mrb[0].mxu0
        %v3755 = vadd.f32 0.0, %v3754
        %v3756 = vpop.f32.mrb[0].mxu0
        %3757 = vmatprep.mubr.f32.mxu0 0.0
        %3758 = vmatmul.mubr.f32.gmra.mrb[0].mxu0 %v3558
        %v3759 = vpop.f32.mrb[0].mxu0
        %v3760 = vadd.f32 0.0, %v3759
        %v3761 = vpop.f32.mrb[0].mxu0
        %3762 = vmatprep.mubr.f32.mxu0 0.0
        %3763 = vmatmul.mubr.f32.gmra.mrb[0].mxu0 %v3561
        %v3764 = vpop.f32.mrb[0].mxu0
        %v3765 = vadd.f32 0.0, %v3764
        %v3766 = vpop.f32.mrb[0].mxu0
        %3767 = vmatprep.mubr.f32.mxu0 0.0
        %3768 = vmatmul.mubr.f32.gmra.mrb[0].mxu0 %v3564
        %v3769 = vpop.f32.mrb[0].mxu0
        %v3770 = vadd.f32 0.0, %v3769
        %v3771 = vpop.f32.mrb[0].mxu0
        %3772 = vmatprep.mubr.f32.mxu0 0.0
        %3773 = vmatmul.mubr.f32.gmra.mrb[0].mxu0 %v3567
        %v3774 = vpop.f32.mrb[0].mxu0
        %v3775 = vadd.f32 0.0, %v3774
        %v3776 = vpop.f32.mrb[0].mxu0
        %3777 = vmatprep.mubr.f32.mxu0 0.0
        %3778 = vmatmul.mubr.f32.gmra.mrb[0].mxu0 %v3570
        %v3779 = vpop.f32.mrb[0].mxu0
        %v3780 = vadd.f32 0.0, %v3779
        %v3781 = vpop.f32.mrb[0].mxu0
        %3782 = vmatprep.mubr.f32.mxu0 0.0
        %3783 = vmatmul.mubr.f32.gmra.mrb[0].mxu0 %v3573
        %v3784 = vpop.f32.mrb[0].mxu0
        %v3785 = vadd.f32 0.0, %v3784
        %v3786 = vpop.f32.mrb[0].mxu0
        %3787 = vmatprep.mubr.f32.mxu0 0.0
        %3788 = vmatmul.mubr.f32.gmra.mrb[0].mxu0 %v3576
        %v3789 = vpop.f32.mrb[0].mxu0
        %v3790 = vadd.f32 0.0, %v3789
        %v3791 = vpop.f32.mrb[0].mxu0
        %3792 = vmatprep.mubr.f32.mxu0 0.0
        %3793 = vmatmul.mubr.f32.gmra.mrb[0].mxu0 %v3579
        %v3794 = vpop.f32.mrb[0].mxu0
        %v3795 = vadd.f32 0.0, %v3794
        %v3796 = vpop.f32.mrb[0].mxu0
        %3797 = vmatprep.mubr.f32.mxu0 0.0
        %3798 = vmatmul.mubr.f32.gmra.mrb[0].mxu0 %v3582
        %v3799 = vpop.f32.mrb[0].mxu0
        %v3800 = vadd.f32 0.0, %v3799
        %v3801 = vpop.f32.mrb[0].mxu0
        %3802 = vmatprep.mubr.f32.mxu0 0.0
        %3803 = vmatmul.mubr.f32.gmra.mrb[0].mxu0 %v3585
        %v3804 = vpop.f32.mrb[0].mxu0
        %v3805 = vadd.f32 0.0, %v3804
        %v3806 = vpop.f32.mrb[0].mxu0
        %3807 = vmatprep.mubr.f32.mxu0 0.0
        %3808 = vmatmul.mubr.f32.gmra.mrb[0].mxu0 %v3588
        %v3809 = vpop.f32.mrb[0].mxu0
        %v3810 = vadd.f32 0.0, %v3809
        %v3811 = vpop.f32.mrb[0].mxu0
        %3812 = vmatprep.mubr.f32.mxu0 0.0
        %3813 = vmatmul.mubr.f32.gmra.mrb[0].mxu0 %v3591
        %v3814 = vpop.f32.mrb[0].mxu0
        %v3815 = vadd.f32 0.0, %v3814
        %v3816 = vpop.f32.mrb[0].mxu0
        %3817 = vdwg.mxu0
        %v3818 = vadd.f32 %v3399, %v3660
        %v3819 = vadd.f32 %v3400, %v3665
        %v3820 = vadd.f32 %v3401, %v3670
        %v3821 = vadd.f32 %v3402, %v3675
        %v3822 = vadd.f32 %v3403, %v3680
        %v3823 = vadd.f32 %v3404, %v3685
        %v3824 = vadd.f32 %v3405, %v3690
        %v3825 = vadd.f32 %v3406, %v3695
        %v3826 = vadd.f32 %v3407, %v3700
        %v3827 = vadd.f32 %v3408, %v3705
        %v3828 = vadd.f32 %v3409, %v3710
        %v3829 = vadd.f32 %v3410, %v3715
        %v3830 = vadd.f32 %v3411, %v3720
        %v3831 = vadd.f32 %v3412, %v3725
        %v3832 = vadd.f32 %v3413, %v3730
        %v3833 = vadd.f32 %v3414, %v3735
        %v3834 = vadd.f32 %v3415, %v3740
        %v3835 = vadd.f32 %v3416, %v3745
        %v3836 = vadd.f32 %v3417, %v3750
        %v3837 = vadd.f32 %v3418, %v3755
        %v3838 = vadd.f32 %v3419, %v3760
        %v3839 = vadd.f32 %v3420, %v3765
        %v3840 = vadd.f32 %v3421, %v3770
        %v3841 = vadd.f32 %v3422, %v3775
        %v3842 = vadd.f32 %v3423, %v3780
        %v3843 = vadd.f32 %v3424, %v3785
        %v3844 = vadd.f32 %v3425, %v3790
        %v3845 = vadd.f32 %v3426, %v3795
        %v3846 = vadd.f32 %v3427, %v3800
        %v3847 = vadd.f32 %v3428, %v3805
        %v3848 = vadd.f32 %v3429, %v3810
        %v3849 = vadd.f32 %v3430, %v3815
        %v3850 = vld [vmem:[#allocation2 + $0x21] sm:$0xff]
        %v3851 = vld [vmem:[#allocation2 + $0x29] sm:$0xff]
        %v3852 = vld [vmem:[#allocation2 + $0x31] sm:$0xff]
        %v3853 = vld [vmem:[#allocation2 + $0x39] sm:$0xff]
        %v3854 = vld [vmem:[#allocation2 + $0x41] sm:$0xff]
        %v3855 = vld [vmem:[#allocation2 + $0x49] sm:$0xff]
        %v3856 = vld [vmem:[#allocation2 + $0x51] sm:$0xff]
        %v3857 = vld [vmem:[#allocation2 + $0x59] sm:$0xff]
        %v3858 = vld [vmem:[#allocation2 + $0x61] sm:$0xff]
        %v3859 = vld [vmem:[#allocation2 + $0x69] sm:$0xff]
        %v3860 = vld [vmem:[#allocation2 + $0x71] sm:$0xff]
        %v3861 = vld [vmem:[#allocation2 + $0x79] sm:$0xff]
        %v3862 = vld [vmem:[#allocation2 + $0x81] sm:$0xff]
        %v3863 = vld [vmem:[#allocation2 + $0x89] sm:$0xff]
        %v3864 = vld [vmem:[#allocation2 + $0x91] sm:$0xff]
        %v3865 = vld [vmem:[#allocation2 + $0x99] sm:$0xff]
        %v3866 = vld [vmem:[#allocation2 + $0xa1] sm:$0xff]
        %v3867 = vld [vmem:[#allocation2 + $0xa9] sm:$0xff]
        %v3868 = vld [vmem:[#allocation2 + $0xb1] sm:$0xff]
        %v3869 = vld [vmem:[#allocation2 + $0xb9] sm:$0xff]
        %v3870 = vld [vmem:[#allocation2 + $0xc1] sm:$0xff]
        %v3871 = vld [vmem:[#allocation2 + $0xc9] sm:$0xff]
        %v3872 = vld [vmem:[#allocation2 + $0xd1] sm:$0xff]
        %v3873 = vld [vmem:[#allocation2 + $0xd9] sm:$0xff]
        %v3874 = vld [vmem:[#allocation2 + $0xe1] sm:$0xff]
        %v3875 = vld [vmem:[#allocation2 + $0xe9] sm:$0xff]
        %v3876 = vld [vmem:[#allocation2 + $0xf1] sm:$0xff]
        %v3877 = vld [vmem:[#allocation2 + $0xf9] sm:$0xff]
        %v3878 = vld [vmem:[#allocation2 + $0x101] sm:$0xff]
        %v3879 = vld [vmem:[#allocation2 + $0x109] sm:$0xff]
        %v3880 = vld [vmem:[#allocation2 + $0x111] sm:$0xff]
        %v3881 = vld [vmem:[#allocation2 + $0x119] sm:$0xff]
        %s3882 = scalar_lea.vmem %s1, 56
        %v3883 = vld [vmem:[%s3882] sm:$0xff]
        %v3885 = vsel %vm815, %v3850, 0
        %v3888 = vsel %vm815, %v3851, 0
        %v3891 = vsel %vm815, %v3852, 0
        %v3894 = vsel %vm815, %v3853, 0
        %v3897 = vsel %vm815, %v3854, 0
        %v3900 = vsel %vm815, %v3855, 0
        %v3903 = vsel %vm815, %v3856, 0
        %v3906 = vsel %vm815, %v3857, 0
        %v3909 = vsel %vm815, %v3858, 0
        %v3912 = vsel %vm815, %v3859, 0
        %v3915 = vsel %vm815, %v3860, 0
        %v3918 = vsel %vm815, %v3861, 0
        %v3921 = vsel %vm815, %v3862, 0
        %v3924 = vsel %vm815, %v3863, 0
        %v3927 = vsel %vm815, %v3864, 0
        %v3930 = vsel %vm815, %v3865, 0
        %v3933 = vsel %vm815, %v3866, 0
        %v3936 = vsel %vm815, %v3867, 0
        %v3939 = vsel %vm815, %v3868, 0
        %v3942 = vsel %vm815, %v3869, 0
        %v3945 = vsel %vm815, %v3870, 0
        %v3948 = vsel %vm815, %v3871, 0
        %v3951 = vsel %vm815, %v3872, 0
        %v3954 = vsel %vm815, %v3873, 0
        %v3957 = vsel %vm815, %v3874, 0
        %v3960 = vsel %vm815, %v3875, 0
        %v3963 = vsel %vm815, %v3876, 0
        %v3966 = vsel %vm815, %v3877, 0
        %v3969 = vsel %vm815, %v3878, 0
        %v3972 = vsel %vm815, %v3879, 0
        %v3975 = vsel %vm815, %v3880, 0
        %v3978 = vsel %vm815, %v3881, 0
        %3980 = vmatprep.subr.mxu0 0.0
        %3981 = vmatpush1.msra.mxu0 %v3883
        %3982 = vmatprep.subr.mxu0 0.0
        %3983 = vmatpush1.msra.mxu0 0.0
        %3984 = vmatprep.subr.mxu0 0.0
        %3985 = vmatpush1.msra.mxu0 0.0
        %3986 = vmatprep.subr.mxu0 0.0
        %3987 = vmatpush1.msra.mxu0 0.0
        %3988 = vmatprep.subr.mxu0 0.0
        %3989 = vmatpush1.msra.mxu0 0.0
        %3990 = vmatprep.subr.mxu0 0.0
        %3991 = vmatpush1.msra.mxu0 0.0
        %3992 = vmatprep.subr.mxu0 0.0
        %3993 = vmatpush1.msra.mxu0 0.0
        %3994 = vmatprep.subr.mxu0 0.0
        %3995 = vmatpush1.msra.mxu0 0.0
        %3996 = vmatprep.subr.mxu0 0.0
        %3997 = vmatpush1.msra.mxu0 0.0
        %3998 = vmatprep.subr.mxu0 0.0
        %3999 = vmatpush1.msra.mxu0 0.0
        %4000 = vmatprep.subr.mxu0 0.0
        %4001 = vmatpush1.msra.mxu0 0.0
        %4002 = vmatprep.subr.mxu0 0.0
        %4003 = vmatpush1.msra.mxu0 0.0
        %4004 = vmatprep.subr.mxu0 0.0
        %4005 = vmatpush1.msra.mxu0 0.0
        %4006 = vmatprep.subr.mxu0 0.0
        %4007 = vmatpush1.msra.mxu0 0.0
        %4008 = vmatprep.subr.mxu0 0.0
        %4009 = vmatpush1.msra.mxu0 0.0
        %4010 = vmatprep.subr.mxu0 0.0
        %4011 = vmatpush1.msra.mxu0 0.0
        %4012 = vmatprep.subr.mxu0 0.0
        %4013 = vmatpush1.msra.mxu0 0.0
        %4014 = vmatprep.subr.mxu0 0.0
        %4015 = vmatpush1.msra.mxu0 0.0
        %4016 = vmatprep.subr.mxu0 0.0
        %4017 = vmatpush1.msra.mxu0 0.0
        %4018 = vmatprep.subr.mxu0 0.0
        %4019 = vmatpush1.msra.mxu0 0.0
        %4020 = vmatprep.subr.mxu0 0.0
        %4021 = vmatpush1.msra.mxu0 0.0
        %4022 = vmatprep.subr.mxu0 0.0
        %4023 = vmatpush1.msra.mxu0 0.0
        %4024 = vmatprep.subr.mxu0 0.0
        %4025 = vmatpush1.msra.mxu0 0.0
        %4026 = vmatprep.subr.mxu0 0.0
        %4027 = vmatpush1.msra.mxu0 0.0
        %4028 = vmatprep.subr.mxu0 0.0
        %4029 = vmatpush1.msra.mxu0 0.0
        %4030 = vmatprep.subr.mxu0 0.0
        %4031 = vmatpush1.msra.mxu0 0.0
        %4032 = vmatprep.subr.mxu0 0.0
        %4033 = vmatpush1.msra.mxu0 0.0
        %4034 = vmatprep.subr.mxu0 0.0
        %4035 = vmatpush1.msra.mxu0 0.0
        %4036 = vmatprep.subr.mxu0 0.0
        %4037 = vmatpush1.msra.mxu0 0.0
        %4038 = vmatprep.subr.mxu0 0.0
        %4039 = vmatpush1.msra.mxu0 0.0
        %4040 = vmatprep.subr.mxu0 0.0
        %4041 = vmatpush1.msra.mxu0 0.0
        %4042 = vmatprep.subr.mxu0 0.0
        %4043 = vmatpush1.msra.mxu0 0.0
        %4044 = vmatprep.mubr.f32.mxu0 0.0
        %4045 = vmatmul.mubr.f32.gmra.mrb[0].mxu0 %v3885
        %v4046 = vpop.f32.mrb[0].mxu0
        %v4047 = vadd.f32 0.0, %v4046
        %v4048 = vpop.f32.mrb[0].mxu0
        %4049 = vmatprep.mubr.f32.mxu0 0.0
        %4050 = vmatmul.mubr.f32.gmra.mrb[0].mxu0 %v3888
        %v4051 = vpop.f32.mrb[0].mxu0
        %v4052 = vadd.f32 0.0, %v4051
        %v4053 = vpop.f32.mrb[0].mxu0
        %4054 = vmatprep.mubr.f32.mxu0 0.0
        %4055 = vmatmul.mubr.f32.gmra.mrb[0].mxu0 %v3891
        %v4056 = vpop.f32.mrb[0].mxu0
        %v4057 = vadd.f32 0.0, %v4056
        %v4058 = vpop.f32.mrb[0].mxu0
        %4059 = vmatprep.mubr.f32.mxu0 0.0
        %4060 = vmatmul.mubr.f32.gmra.mrb[0].mxu0 %v3894
        %v4061 = vpop.f32.mrb[0].mxu0
        %v4062 = vadd.f32 0.0, %v4061
        %v4063 = vpop.f32.mrb[0].mxu0
        %4064 = vmatprep.mubr.f32.mxu0 0.0
        %4065 = vmatmul.mubr.f32.gmra.mrb[0].mxu0 %v3897
        %v4066 = vpop.f32.mrb[0].mxu0
        %v4067 = vadd.f32 0.0, %v4066
        %v4068 = vpop.f32.mrb[0].mxu0
        %4069 = vmatprep.mubr.f32.mxu0 0.0
        %4070 = vmatmul.mubr.f32.gmra.mrb[0].mxu0 %v3900
        %v4071 = vpop.f32.mrb[0].mxu0
        %v4072 = vadd.f32 0.0, %v4071
        %v4073 = vpop.f32.mrb[0].mxu0
        %4074 = vmatprep.mubr.f32.mxu0 0.0
        %4075 = vmatmul.mubr.f32.gmra.mrb[0].mxu0 %v3903
        %v4076 = vpop.f32.mrb[0].mxu0
        %v4077 = vadd.f32 0.0, %v4076
        %v4078 = vpop.f32.mrb[0].mxu0
        %4079 = vmatprep.mubr.f32.mxu0 0.0
        %4080 = vmatmul.mubr.f32.gmra.mrb[0].mxu0 %v3906
        %v4081 = vpop.f32.mrb[0].mxu0
        %v4082 = vadd.f32 0.0, %v4081
        %v4083 = vpop.f32.mrb[0].mxu0
        %4084 = vmatprep.mubr.f32.mxu0 0.0
        %4085 = vmatmul.mubr.f32.gmra.mrb[0].mxu0 %v3909
        %v4086 = vpop.f32.mrb[0].mxu0
        %v4087 = vadd.f32 0.0, %v4086
        %v4088 = vpop.f32.mrb[0].mxu0
        %4089 = vmatprep.mubr.f32.mxu0 0.0
        %4090 = vmatmul.mubr.f32.gmra.mrb[0].mxu0 %v3912
        %v4091 = vpop.f32.mrb[0].mxu0
        %v4092 = vadd.f32 0.0, %v4091
        %v4093 = vpop.f32.mrb[0].mxu0
        %4094 = vmatprep.mubr.f32.mxu0 0.0
        %4095 = vmatmul.mubr.f32.gmra.mrb[0].mxu0 %v3915
        %v4096 = vpop.f32.mrb[0].mxu0
        %v4097 = vadd.f32 0.0, %v4096
        %v4098 = vpop.f32.mrb[0].mxu0
        %4099 = vmatprep.mubr.f32.mxu0 0.0
        %4100 = vmatmul.mubr.f32.gmra.mrb[0].mxu0 %v3918
        %v4101 = vpop.f32.mrb[0].mxu0
        %v4102 = vadd.f32 0.0, %v4101
        %v4103 = vpop.f32.mrb[0].mxu0
        %4104 = vmatprep.mubr.f32.mxu0 0.0
        %4105 = vmatmul.mubr.f32.gmra.mrb[0].mxu0 %v3921
        %v4106 = vpop.f32.mrb[0].mxu0
        %v4107 = vadd.f32 0.0, %v4106
        %v4108 = vpop.f32.mrb[0].mxu0
        %4109 = vmatprep.mubr.f32.mxu0 0.0
        %4110 = vmatmul.mubr.f32.gmra.mrb[0].mxu0 %v3924
        %v4111 = vpop.f32.mrb[0].mxu0
        %v4112 = vadd.f32 0.0, %v4111
        %v4113 = vpop.f32.mrb[0].mxu0
        %4114 = vmatprep.mubr.f32.mxu0 0.0
        %4115 = vmatmul.mubr.f32.gmra.mrb[0].mxu0 %v3927
        %v4116 = vpop.f32.mrb[0].mxu0
        %v4117 = vadd.f32 0.0, %v4116
        %v4118 = vpop.f32.mrb[0].mxu0
        %4119 = vmatprep.mubr.f32.mxu0 0.0
        %4120 = vmatmul.mubr.f32.gmra.mrb[0].mxu0 %v3930
        %v4121 = vpop.f32.mrb[0].mxu0
        %v4122 = vadd.f32 0.0, %v4121
        %v4123 = vpop.f32.mrb[0].mxu0
        %4124 = vmatprep.mubr.f32.mxu0 0.0
        %4125 = vmatmul.mubr.f32.gmra.mrb[0].mxu0 %v3933
        %v4126 = vpop.f32.mrb[0].mxu0
        %v4127 = vadd.f32 0.0, %v4126
        %v4128 = vpop.f32.mrb[0].mxu0
        %4129 = vmatprep.mubr.f32.mxu0 0.0
        %4130 = vmatmul.mubr.f32.gmra.mrb[0].mxu0 %v3936
        %v4131 = vpop.f32.mrb[0].mxu0
        %v4132 = vadd.f32 0.0, %v4131
        %v4133 = vpop.f32.mrb[0].mxu0
        %4134 = vmatprep.mubr.f32.mxu0 0.0
        %4135 = vmatmul.mubr.f32.gmra.mrb[0].mxu0 %v3939
        %v4136 = vpop.f32.mrb[0].mxu0
        %v4137 = vadd.f32 0.0, %v4136
        %v4138 = vpop.f32.mrb[0].mxu0
        %4139 = vmatprep.mubr.f32.mxu0 0.0
        %4140 = vmatmul.mubr.f32.gmra.mrb[0].mxu0 %v3942
        %v4141 = vpop.f32.mrb[0].mxu0
        %v4142 = vadd.f32 0.0, %v4141
        %v4143 = vpop.f32.mrb[0].mxu0
        %4144 = vmatprep.mubr.f32.mxu0 0.0
        %4145 = vmatmul.mubr.f32.gmra.mrb[0].mxu0 %v3945
        %v4146 = vpop.f32.mrb[0].mxu0
        %v4147 = vadd.f32 0.0, %v4146
        %v4148 = vpop.f32.mrb[0].mxu0
        %4149 = vmatprep.mubr.f32.mxu0 0.0
        %4150 = vmatmul.mubr.f32.gmra.mrb[0].mxu0 %v3948
        %v4151 = vpop.f32.mrb[0].mxu0
        %v4152 = vadd.f32 0.0, %v4151
        %v4153 = vpop.f32.mrb[0].mxu0
        %4154 = vmatprep.mubr.f32.mxu0 0.0
        %4155 = vmatmul.mubr.f32.gmra.mrb[0].mxu0 %v3951
        %v4156 = vpop.f32.mrb[0].mxu0
        %v4157 = vadd.f32 0.0, %v4156
        %v4158 = vpop.f32.mrb[0].mxu0
        %4159 = vmatprep.mubr.f32.mxu0 0.0
        %4160 = vmatmul.mubr.f32.gmra.mrb[0].mxu0 %v3954
        %v4161 = vpop.f32.mrb[0].mxu0
        %v4162 = vadd.f32 0.0, %v4161
        %v4163 = vpop.f32.mrb[0].mxu0
        %4164 = vmatprep.mubr.f32.mxu0 0.0
        %4165 = vmatmul.mubr.f32.gmra.mrb[0].mxu0 %v3957
        %v4166 = vpop.f32.mrb[0].mxu0
        %v4167 = vadd.f32 0.0, %v4166
        %v4168 = vpop.f32.mrb[0].mxu0
        %4169 = vmatprep.mubr.f32.mxu0 0.0
        %4170 = vmatmul.mubr.f32.gmra.mrb[0].mxu0 %v3960
        %v4171 = vpop.f32.mrb[0].mxu0
        %v4172 = vadd.f32 0.0, %v4171
        %v4173 = vpop.f32.mrb[0].mxu0
        %4174 = vmatprep.mubr.f32.mxu0 0.0
        %4175 = vmatmul.mubr.f32.gmra.mrb[0].mxu0 %v3963
        %v4176 = vpop.f32.mrb[0].mxu0
        %v4177 = vadd.f32 0.0, %v4176
        %v4178 = vpop.f32.mrb[0].mxu0
        %4179 = vmatprep.mubr.f32.mxu0 0.0
        %4180 = vmatmul.mubr.f32.gmra.mrb[0].mxu0 %v3966
        %v4181 = vpop.f32.mrb[0].mxu0
        %v4182 = vadd.f32 0.0, %v4181
        %v4183 = vpop.f32.mrb[0].mxu0
        %4184 = vmatprep.mubr.f32.mxu0 0.0
        %4185 = vmatmul.mubr.f32.gmra.mrb[0].mxu0 %v3969
        %v4186 = vpop.f32.mrb[0].mxu0
        %v4187 = vadd.f32 0.0, %v4186
        %v4188 = vpop.f32.mrb[0].mxu0
        %4189 = vmatprep.mubr.f32.mxu0 0.0
        %4190 = vmatmul.mubr.f32.gmra.mrb[0].mxu0 %v3972
        %v4191 = vpop.f32.mrb[0].mxu0
        %v4192 = vadd.f32 0.0, %v4191
        %v4193 = vpop.f32.mrb[0].mxu0
        %4194 = vmatprep.mubr.f32.mxu0 0.0
        %4195 = vmatmul.mubr.f32.gmra.mrb[0].mxu0 %v3975
        %v4196 = vpop.f32.mrb[0].mxu0
        %v4197 = vadd.f32 0.0, %v4196
        %v4198 = vpop.f32.mrb[0].mxu0
        %4199 = vmatprep.mubr.f32.mxu0 0.0
        %4200 = vmatmul.mubr.f32.gmra.mrb[0].mxu0 %v3978
        %v4201 = vpop.f32.mrb[0].mxu0
        %v4202 = vadd.f32 0.0, %v4201
        %v4203 = vpop.f32.mrb[0].mxu0
        %4204 = vdwg.mxu0
        %v4205 = vadd.f32 %v3818, %v4047
        %v4206 = vadd.f32 %v3819, %v4052
        %v4207 = vadd.f32 %v3820, %v4057
        %v4208 = vadd.f32 %v3821, %v4062
        %v4209 = vadd.f32 %v3822, %v4067
        %v4210 = vadd.f32 %v3823, %v4072
        %v4211 = vadd.f32 %v3824, %v4077
        %v4212 = vadd.f32 %v3825, %v4082
        %v4213 = vadd.f32 %v3826, %v4087
        %v4214 = vadd.f32 %v3827, %v4092
        %v4215 = vadd.f32 %v3828, %v4097
        %v4216 = vadd.f32 %v3829, %v4102
        %v4217 = vadd.f32 %v3830, %v4107
        %v4218 = vadd.f32 %v3831, %v4112
        %v4219 = vadd.f32 %v3832, %v4117
        %v4220 = vadd.f32 %v3833, %v4122
        %v4221 = vadd.f32 %v3834, %v4127
        %v4222 = vadd.f32 %v3835, %v4132
        %v4223 = vadd.f32 %v3836, %v4137
        %v4224 = vadd.f32 %v3837, %v4142
        %v4225 = vadd.f32 %v3838, %v4147
        %v4226 = vadd.f32 %v3839, %v4152
        %v4227 = vadd.f32 %v3840, %v4157
        %v4228 = vadd.f32 %v3841, %v4162
        %v4229 = vadd.f32 %v3842, %v4167
        %v4230 = vadd.f32 %v3843, %v4172
        %v4231 = vadd.f32 %v3844, %v4177
        %v4232 = vadd.f32 %v3845, %v4182
        %v4233 = vadd.f32 %v3846, %v4187
        %v4234 = vadd.f32 %v3847, %v4192
        %v4235 = vadd.f32 %v3848, %v4197
        %v4236 = vadd.f32 %v3849, %v4202
        %v4237 = vld [vmem:[#allocation2 + $0x22] sm:$0xff]
        %v4238 = vld [vmem:[#allocation2 + $0x2a] sm:$0xff]
        %v4239 = vld [vmem:[#allocation2 + $0x32] sm:$0xff]
        %v4240 = vld [vmem:[#allocation2 + $0x3a] sm:$0xff]
        %v4241 = vld [vmem:[#allocation2 + $0x42] sm:$0xff]
        %v4242 = vld [vmem:[#allocation2 + $0x4a] sm:$0xff]
        %v4243 = vld [vmem:[#allocation2 + $0x52] sm:$0xff]
        %v4244 = vld [vmem:[#allocation2 + $0x5a] sm:$0xff]
        %v4245 = vld [vmem:[#allocation2 + $0x62] sm:$0xff]
        %v4246 = vld [vmem:[#allocation2 + $0x6a] sm:$0xff]
        %v4247 = vld [vmem:[#allocation2 + $0x72] sm:$0xff]
        %v4248 = vld [vmem:[#allocation2 + $0x7a] sm:$0xff]
        %v4249 = vld [vmem:[#allocation2 + $0x82] sm:$0xff]
        %v4250 = vld [vmem:[#allocation2 + $0x8a] sm:$0xff]
        %v4251 = vld [vmem:[#allocation2 + $0x92] sm:$0xff]
        %v4252 = vld [vmem:[#allocation2 + $0x9a] sm:$0xff]
        %v4253 = vld [vmem:[#allocation2 + $0xa2] sm:$0xff]
        %v4254 = vld [vmem:[#allocation2 + $0xaa] sm:$0xff]
        %v4255 = vld [vmem:[#allocation2 + $0xb2] sm:$0xff]
        %v4256 = vld [vmem:[#allocation2 + $0xba] sm:$0xff]
        %v4257 = vld [vmem:[#allocation2 + $0xc2] sm:$0xff]
        %v4258 = vld [vmem:[#allocation2 + $0xca] sm:$0xff]
        %v4259 = vld [vmem:[#allocation2 + $0xd2] sm:$0xff]
        %v4260 = vld [vmem:[#allocation2 + $0xda] sm:$0xff]
        %v4261 = vld [vmem:[#allocation2 + $0xe2] sm:$0xff]
        %v4262 = vld [vmem:[#allocation2 + $0xea] sm:$0xff]
        %v4263 = vld [vmem:[#allocation2 + $0xf2] sm:$0xff]
        %v4264 = vld [vmem:[#allocation2 + $0xfa] sm:$0xff]
        %v4265 = vld [vmem:[#allocation2 + $0x102] sm:$0xff]
        %v4266 = vld [vmem:[#allocation2 + $0x10a] sm:$0xff]
        %v4267 = vld [vmem:[#allocation2 + $0x112] sm:$0xff]
        %v4268 = vld [vmem:[#allocation2 + $0x11a] sm:$0xff]
        %v4269 = vsel %vm1787, %v4237, 0.0
        %v4270 = vsel %vm1788, %v4238, 0.0
        %v4271 = vsel %vm1789, %v4239, 0.0
        %v4272 = vsel %vm1790, %v4240, 0.0
        %v4273 = vsel %vm1791, %v4241, 0.0
        %v4274 = vsel %vm1792, %v4242, 0.0
        %v4275 = vsel %vm1793, %v4243, 0.0
        %v4276 = vsel %vm1794, %v4244, 0.0
        %v4277 = vsel %vm1795, %v4245, 0.0
        %v4278 = vsel %vm1796, %v4246, 0.0
        %v4279 = vsel %vm1797, %v4247, 0.0
        %v4280 = vsel %vm1798, %v4248, 0.0
        %v4281 = vsel %vm1799, %v4249, 0.0
        %v4282 = vsel %vm1800, %v4250, 0.0
        %v4283 = vsel %vm1801, %v4251, 0.0
        %v4284 = vsel %vm1802, %v4252, 0.0
        %v4285 = vsel %vm1803, %v4253, 0.0
        %v4286 = vsel %vm1804, %v4254, 0.0
        %v4287 = vsel %vm1805, %v4255, 0.0
        %v4288 = vsel %vm1806, %v4256, 0.0
        %v4289 = vsel %vm1807, %v4257, 0.0
        %v4290 = vsel %vm1808, %v4258, 0.0
        %v4291 = vsel %vm1809, %v4259, 0.0
        %v4292 = vsel %vm1810, %v4260, 0.0
        %v4293 = vsel %vm1811, %v4261, 0.0
        %v4294 = vsel %vm1812, %v4262, 0.0
        %v4295 = vsel %vm1813, %v4263, 0.0
        %v4296 = vsel %vm1814, %v4264, 0.0
        %v4297 = vsel %vm1815, %v4265, 0.0
        %v4298 = vsel %vm1816, %v4266, 0.0
        %v4299 = vsel %vm1817, %v4267, 0.0
        %v4300 = vsel %vm1818, %v4268, 0.0
        %s4301 = scalar_lea.vmem %s1, 64
        %v4302 = vld [vmem:[%s4301] sm:$0xff]
        %v4304 = vsel %vm815, %v4269, 0
        %v4307 = vsel %vm815, %v4270, 0
        %v4310 = vsel %vm815, %v4271, 0
        %v4313 = vsel %vm815, %v4272, 0
        %v4316 = vsel %vm815, %v4273, 0
        %v4319 = vsel %vm815, %v4274, 0
        %v4322 = vsel %vm815, %v4275, 0
        %v4325 = vsel %vm815, %v4276, 0
        %v4328 = vsel %vm815, %v4277, 0
        %v4331 = vsel %vm815, %v4278, 0
        %v4334 = vsel %vm815, %v4279, 0
        %v4337 = vsel %vm815, %v4280, 0
        %v4340 = vsel %vm815, %v4281, 0
        %v4343 = vsel %vm815, %v4282, 0
        %v4346 = vsel %vm815, %v4283, 0
        %v4349 = vsel %vm815, %v4284, 0
        %v4352 = vsel %vm815, %v4285, 0
        %v4355 = vsel %vm815, %v4286, 0
        %v4358 = vsel %vm815, %v4287, 0
        %v4361 = vsel %vm815, %v4288, 0
        %v4364 = vsel %vm815, %v4289, 0
        %v4367 = vsel %vm815, %v4290, 0
        %v4370 = vsel %vm815, %v4291, 0
        %v4373 = vsel %vm815, %v4292, 0
        %v4376 = vsel %vm815, %v4293, 0
        %v4379 = vsel %vm815, %v4294, 0
        %v4382 = vsel %vm815, %v4295, 0
        %v4385 = vsel %vm815, %v4296, 0
        %v4388 = vsel %vm815, %v4297, 0
        %v4391 = vsel %vm815, %v4298, 0
        %v4394 = vsel %vm815, %v4299, 0
        %v4397 = vsel %vm815, %v4300, 0
        %4399 = vmatprep.subr.mxu0 0.0
        %4400 = vmatpush1.msra.mxu0 %v4302
        %4401 = vmatprep.subr.mxu0 0.0
        %4402 = vmatpush1.msra.mxu0 0.0
        %4403 = vmatprep.subr.mxu0 0.0
        %4404 = vmatpush1.msra.mxu0 0.0
        %4405 = vmatprep.subr.mxu0 0.0
        %4406 = vmatpush1.msra.mxu0 0.0
        %4407 = vmatprep.subr.mxu0 0.0
        %4408 = vmatpush1.msra.mxu0 0.0
        %4409 = vmatprep.subr.mxu0 0.0
        %4410 = vmatpush1.msra.mxu0 0.0
        %4411 = vmatprep.subr.mxu0 0.0
        %4412 = vmatpush1.msra.mxu0 0.0
        %4413 = vmatprep.subr.mxu0 0.0
        %4414 = vmatpush1.msra.mxu0 0.0
        %4415 = vmatprep.subr.mxu0 0.0
        %4416 = vmatpush1.msra.mxu0 0.0
        %4417 = vmatprep.subr.mxu0 0.0
        %4418 = vmatpush1.msra.mxu0 0.0
        %4419 = vmatprep.subr.mxu0 0.0
        %4420 = vmatpush1.msra.mxu0 0.0
        %4421 = vmatprep.subr.mxu0 0.0
        %4422 = vmatpush1.msra.mxu0 0.0
        %4423 = vmatprep.subr.mxu0 0.0
        %4424 = vmatpush1.msra.mxu0 0.0
        %4425 = vmatprep.subr.mxu0 0.0
        %4426 = vmatpush1.msra.mxu0 0.0
        %4427 = vmatprep.subr.mxu0 0.0
        %4428 = vmatpush1.msra.mxu0 0.0
        %4429 = vmatprep.subr.mxu0 0.0
        %4430 = vmatpush1.msra.mxu0 0.0
        %4431 = vmatprep.subr.mxu0 0.0
        %4432 = vmatpush1.msra.mxu0 0.0
        %4433 = vmatprep.subr.mxu0 0.0
        %4434 = vmatpush1.msra.mxu0 0.0
        %4435 = vmatprep.subr.mxu0 0.0
        %4436 = vmatpush1.msra.mxu0 0.0
        %4437 = vmatprep.subr.mxu0 0.0
        %4438 = vmatpush1.msra.mxu0 0.0
        %4439 = vmatprep.subr.mxu0 0.0
        %4440 = vmatpush1.msra.mxu0 0.0
        %4441 = vmatprep.subr.mxu0 0.0
        %4442 = vmatpush1.msra.mxu0 0.0
        %4443 = vmatprep.subr.mxu0 0.0
        %4444 = vmatpush1.msra.mxu0 0.0
        %4445 = vmatprep.subr.mxu0 0.0
        %4446 = vmatpush1.msra.mxu0 0.0
        %4447 = vmatprep.subr.mxu0 0.0
        %4448 = vmatpush1.msra.mxu0 0.0
        %4449 = vmatprep.subr.mxu0 0.0
        %4450 = vmatpush1.msra.mxu0 0.0
        %4451 = vmatprep.subr.mxu0 0.0
        %4452 = vmatpush1.msra.mxu0 0.0
        %4453 = vmatprep.subr.mxu0 0.0
        %4454 = vmatpush1.msra.mxu0 0.0
        %4455 = vmatprep.subr.mxu0 0.0
        %4456 = vmatpush1.msra.mxu0 0.0
        %4457 = vmatprep.subr.mxu0 0.0
        %4458 = vmatpush1.msra.mxu0 0.0
        %4459 = vmatprep.subr.mxu0 0.0
        %4460 = vmatpush1.msra.mxu0 0.0
        %4461 = vmatprep.subr.mxu0 0.0
        %4462 = vmatpush1.msra.mxu0 0.0
        %4463 = vmatprep.mubr.f32.mxu0 0.0
        %4464 = vmatmul.mubr.f32.gmra.mrb[0].mxu0 %v4304
        %v4465 = vpop.f32.mrb[0].mxu0
        %v4466 = vadd.f32 0.0, %v4465
        %v4467 = vpop.f32.mrb[0].mxu0
        %4468 = vmatprep.mubr.f32.mxu0 0.0
        %4469 = vmatmul.mubr.f32.gmra.mrb[0].mxu0 %v4307
        %v4470 = vpop.f32.mrb[0].mxu0
        %v4471 = vadd.f32 0.0, %v4470
        %v4472 = vpop.f32.mrb[0].mxu0
        %4473 = vmatprep.mubr.f32.mxu0 0.0
        %4474 = vmatmul.mubr.f32.gmra.mrb[0].mxu0 %v4310
        %v4475 = vpop.f32.mrb[0].mxu0
        %v4476 = vadd.f32 0.0, %v4475
        %v4477 = vpop.f32.mrb[0].mxu0
        %4478 = vmatprep.mubr.f32.mxu0 0.0
        %4479 = vmatmul.mubr.f32.gmra.mrb[0].mxu0 %v4313
        %v4480 = vpop.f32.mrb[0].mxu0
        %v4481 = vadd.f32 0.0, %v4480
        %v4482 = vpop.f32.mrb[0].mxu0
        %4483 = vmatprep.mubr.f32.mxu0 0.0
        %4484 = vmatmul.mubr.f32.gmra.mrb[0].mxu0 %v4316
        %v4485 = vpop.f32.mrb[0].mxu0
        %v4486 = vadd.f32 0.0, %v4485
        %v4487 = vpop.f32.mrb[0].mxu0
        %4488 = vmatprep.mubr.f32.mxu0 0.0
        %4489 = vmatmul.mubr.f32.gmra.mrb[0].mxu0 %v4319
        %v4490 = vpop.f32.mrb[0].mxu0
        %v4491 = vadd.f32 0.0, %v4490
        %v4492 = vpop.f32.mrb[0].mxu0
        %4493 = vmatprep.mubr.f32.mxu0 0.0
        %4494 = vmatmul.mubr.f32.gmra.mrb[0].mxu0 %v4322
        %v4495 = vpop.f32.mrb[0].mxu0
        %v4496 = vadd.f32 0.0, %v4495
        %v4497 = vpop.f32.mrb[0].mxu0
        %4498 = vmatprep.mubr.f32.mxu0 0.0
        %4499 = vmatmul.mubr.f32.gmra.mrb[0].mxu0 %v4325
        %v4500 = vpop.f32.mrb[0].mxu0
        %v4501 = vadd.f32 0.0, %v4500
        %v4502 = vpop.f32.mrb[0].mxu0
        %4503 = vmatprep.mubr.f32.mxu0 0.0
        %4504 = vmatmul.mubr.f32.gmra.mrb[0].mxu0 %v4328
        %v4505 = vpop.f32.mrb[0].mxu0
        %v4506 = vadd.f32 0.0, %v4505
        %v4507 = vpop.f32.mrb[0].mxu0
        %4508 = vmatprep.mubr.f32.mxu0 0.0
        %4509 = vmatmul.mubr.f32.gmra.mrb[0].mxu0 %v4331
        %v4510 = vpop.f32.mrb[0].mxu0
        %v4511 = vadd.f32 0.0, %v4510
        %v4512 = vpop.f32.mrb[0].mxu0
        %4513 = vmatprep.mubr.f32.mxu0 0.0
        %4514 = vmatmul.mubr.f32.gmra.mrb[0].mxu0 %v4334
        %v4515 = vpop.f32.mrb[0].mxu0
        %v4516 = vadd.f32 0.0, %v4515
        %v4517 = vpop.f32.mrb[0].mxu0
        %4518 = vmatprep.mubr.f32.mxu0 0.0
        %4519 = vmatmul.mubr.f32.gmra.mrb[0].mxu0 %v4337
        %v4520 = vpop.f32.mrb[0].mxu0
        %v4521 = vadd.f32 0.0, %v4520
        %v4522 = vpop.f32.mrb[0].mxu0
        %4523 = vmatprep.mubr.f32.mxu0 0.0
        %4524 = vmatmul.mubr.f32.gmra.mrb[0].mxu0 %v4340
        %v4525 = vpop.f32.mrb[0].mxu0
        %v4526 = vadd.f32 0.0, %v4525
        %v4527 = vpop.f32.mrb[0].mxu0
        %4528 = vmatprep.mubr.f32.mxu0 0.0
        %4529 = vmatmul.mubr.f32.gmra.mrb[0].mxu0 %v4343
        %v4530 = vpop.f32.mrb[0].mxu0
        %v4531 = vadd.f32 0.0, %v4530
        %v4532 = vpop.f32.mrb[0].mxu0
        %4533 = vmatprep.mubr.f32.mxu0 0.0
        %4534 = vmatmul.mubr.f32.gmra.mrb[0].mxu0 %v4346
        %v4535 = vpop.f32.mrb[0].mxu0
        %v4536 = vadd.f32 0.0, %v4535
        %v4537 = vpop.f32.mrb[0].mxu0
        %4538 = vmatprep.mubr.f32.mxu0 0.0
        %4539 = vmatmul.mubr.f32.gmra.mrb[0].mxu0 %v4349
        %v4540 = vpop.f32.mrb[0].mxu0
        %v4541 = vadd.f32 0.0, %v4540
        %v4542 = vpop.f32.mrb[0].mxu0
        %4543 = vmatprep.mubr.f32.mxu0 0.0
        %4544 = vmatmul.mubr.f32.gmra.mrb[0].mxu0 %v4352
        %v4545 = vpop.f32.mrb[0].mxu0
        %v4546 = vadd.f32 0.0, %v4545
        %v4547 = vpop.f32.mrb[0].mxu0
        %4548 = vmatprep.mubr.f32.mxu0 0.0
        %4549 = vmatmul.mubr.f32.gmra.mrb[0].mxu0 %v4355
        %v4550 = vpop.f32.mrb[0].mxu0
        %v4551 = vadd.f32 0.0, %v4550
        %v4552 = vpop.f32.mrb[0].mxu0
        %4553 = vmatprep.mubr.f32.mxu0 0.0
        %4554 = vmatmul.mubr.f32.gmra.mrb[0].mxu0 %v4358
        %v4555 = vpop.f32.mrb[0].mxu0
        %v4556 = vadd.f32 0.0, %v4555
        %v4557 = vpop.f32.mrb[0].mxu0
        %4558 = vmatprep.mubr.f32.mxu0 0.0
        %4559 = vmatmul.mubr.f32.gmra.mrb[0].mxu0 %v4361
        %v4560 = vpop.f32.mrb[0].mxu0
        %v4561 = vadd.f32 0.0, %v4560
        %v4562 = vpop.f32.mrb[0].mxu0
        %4563 = vmatprep.mubr.f32.mxu0 0.0
        %4564 = vmatmul.mubr.f32.gmra.mrb[0].mxu0 %v4364
        %v4565 = vpop.f32.mrb[0].mxu0
        %v4566 = vadd.f32 0.0, %v4565
        %v4567 = vpop.f32.mrb[0].mxu0
        %4568 = vmatprep.mubr.f32.mxu0 0.0
        %4569 = vmatmul.mubr.f32.gmra.mrb[0].mxu0 %v4367
        %v4570 = vpop.f32.mrb[0].mxu0
        %v4571 = vadd.f32 0.0, %v4570
        %v4572 = vpop.f32.mrb[0].mxu0
        %4573 = vmatprep.mubr.f32.mxu0 0.0
        %4574 = vmatmul.mubr.f32.gmra.mrb[0].mxu0 %v4370
        %v4575 = vpop.f32.mrb[0].mxu0
        %v4576 = vadd.f32 0.0, %v4575
        %v4577 = vpop.f32.mrb[0].mxu0
        %4578 = vmatprep.mubr.f32.mxu0 0.0
        %4579 = vmatmul.mubr.f32.gmra.mrb[0].mxu0 %v4373
        %v4580 = vpop.f32.mrb[0].mxu0
        %v4581 = vadd.f32 0.0, %v4580
        %v4582 = vpop.f32.mrb[0].mxu0
        %4583 = vmatprep.mubr.f32.mxu0 0.0
        %4584 = vmatmul.mubr.f32.gmra.mrb[0].mxu0 %v4376
        %v4585 = vpop.f32.mrb[0].mxu0
        %v4586 = vadd.f32 0.0, %v4585
        %v4587 = vpop.f32.mrb[0].mxu0
        %4588 = vmatprep.mubr.f32.mxu0 0.0
        %4589 = vmatmul.mubr.f32.gmra.mrb[0].mxu0 %v4379
        %v4590 = vpop.f32.mrb[0].mxu0
        %v4591 = vadd.f32 0.0, %v4590
        %v4592 = vpop.f32.mrb[0].mxu0
        %4593 = vmatprep.mubr.f32.mxu0 0.0
        %4594 = vmatmul.mubr.f32.gmra.mrb[0].mxu0 %v4382
        %v4595 = vpop.f32.mrb[0].mxu0
        %v4596 = vadd.f32 0.0, %v4595
        %v4597 = vpop.f32.mrb[0].mxu0
        %4598 = vmatprep.mubr.f32.mxu0 0.0
        %4599 = vmatmul.mubr.f32.gmra.mrb[0].mxu0 %v4385
        %v4600 = vpop.f32.mrb[0].mxu0
        %v4601 = vadd.f32 0.0, %v4600
        %v4602 = vpop.f32.mrb[0].mxu0
        %4603 = vmatprep.mubr.f32.mxu0 0.0
        %4604 = vmatmul.mubr.f32.gmra.mrb[0].mxu0 %v4388
        %v4605 = vpop.f32.mrb[0].mxu0
        %v4606 = vadd.f32 0.0, %v4605
        %v4607 = vpop.f32.mrb[0].mxu0
        %4608 = vmatprep.mubr.f32.mxu0 0.0
        %4609 = vmatmul.mubr.f32.gmra.mrb[0].mxu0 %v4391
        %v4610 = vpop.f32.mrb[0].mxu0
        %v4611 = vadd.f32 0.0, %v4610
        %v4612 = vpop.f32.mrb[0].mxu0
        %4613 = vmatprep.mubr.f32.mxu0 0.0
        %4614 = vmatmul.mubr.f32.gmra.mrb[0].mxu0 %v4394
        %v4615 = vpop.f32.mrb[0].mxu0
        %v4616 = vadd.f32 0.0, %v4615
        %v4617 = vpop.f32.mrb[0].mxu0
        %4618 = vmatprep.mubr.f32.mxu0 0.0
        %4619 = vmatmul.mubr.f32.gmra.mrb[0].mxu0 %v4397
        %v4620 = vpop.f32.mrb[0].mxu0
        %v4621 = vadd.f32 0.0, %v4620
        %v4622 = vpop.f32.mrb[0].mxu0
        %4623 = vdwg.mxu0
        %v4624 = vadd.f32 %v4205, %v4466
        %v4625 = vadd.f32 %v4206, %v4471
        %v4626 = vadd.f32 %v4207, %v4476
        %v4627 = vadd.f32 %v4208, %v4481
        %v4628 = vadd.f32 %v4209, %v4486
        %v4629 = vadd.f32 %v4210, %v4491
        %v4630 = vadd.f32 %v4211, %v4496
        %v4631 = vadd.f32 %v4212, %v4501
        %v4632 = vadd.f32 %v4213, %v4506
        %v4633 = vadd.f32 %v4214, %v4511
        %v4634 = vadd.f32 %v4215, %v4516
        %v4635 = vadd.f32 %v4216, %v4521
        %v4636 = vadd.f32 %v4217, %v4526
        %v4637 = vadd.f32 %v4218, %v4531
        %v4638 = vadd.f32 %v4219, %v4536
        %v4639 = vadd.f32 %v4220, %v4541
        %v4640 = vadd.f32 %v4221, %v4546
        %v4641 = vadd.f32 %v4222, %v4551
        %v4642 = vadd.f32 %v4223, %v4556
        %v4643 = vadd.f32 %v4224, %v4561
        %v4644 = vadd.f32 %v4225, %v4566
        %v4645 = vadd.f32 %v4226, %v4571
        %v4646 = vadd.f32 %v4227, %v4576
        %v4647 = vadd.f32 %v4228, %v4581
        %v4648 = vadd.f32 %v4229, %v4586
        %v4649 = vadd.f32 %v4230, %v4591
        %v4650 = vadd.f32 %v4231, %v4596
        %v4651 = vadd.f32 %v4232, %v4601
        %v4652 = vadd.f32 %v4233, %v4606
        %v4653 = vadd.f32 %v4234, %v4611
        %v4654 = vadd.f32 %v4235, %v4616
        %v4655 = vadd.f32 %v4236, %v4621
        %v4656 = vld [vmem:[%s2] sm:$0x1]
        %v4658 = vlaneseq
        %v4659 = vshrl.u32 %v4658, 7
        %v4660 = vsub.s32 0, %v4659
        %v4661 = vrot.slane %v4656, %v4660
        %v4663 = vmul.f32 %v4624, %v4661
        %v4664 = vmul.f32 %v4625, %v4661
        %v4665 = vmul.f32 %v4626, %v4661
        %v4666 = vmul.f32 %v4627, %v4661
        %v4667 = vmul.f32 %v4628, %v4661
        %v4668 = vmul.f32 %v4629, %v4661
        %v4669 = vmul.f32 %v4630, %v4661
        %v4670 = vmul.f32 %v4631, %v4661
        %v4671 = vmul.f32 %v4632, %v4661
        %v4672 = vmul.f32 %v4633, %v4661
        %v4673 = vmul.f32 %v4634, %v4661
        %v4674 = vmul.f32 %v4635, %v4661
        %v4675 = vmul.f32 %v4636, %v4661
        %v4676 = vmul.f32 %v4637, %v4661
        %v4677 = vmul.f32 %v4638, %v4661
        %v4678 = vmul.f32 %v4639, %v4661
        %v4679 = vmul.f32 %v4640, %v4661
        %v4680 = vmul.f32 %v4641, %v4661
        %v4681 = vmul.f32 %v4642, %v4661
        %v4682 = vmul.f32 %v4643, %v4661
        %v4683 = vmul.f32 %v4644, %v4661
        %v4684 = vmul.f32 %v4645, %v4661
        %v4685 = vmul.f32 %v4646, %v4661
        %v4686 = vmul.f32 %v4647, %v4661
        %v4687 = vmul.f32 %v4648, %v4661
        %v4688 = vmul.f32 %v4649, %v4661
        %v4689 = vmul.f32 %v4650, %v4661
        %v4690 = vmul.f32 %v4651, %v4661
        %v4691 = vmul.f32 %v4652, %v4661
        %v4692 = vmul.f32 %v4653, %v4661
        %v4693 = vmul.f32 %v4654, %v4661
        %v4694 = vmul.f32 %v4655, %v4661
        %v4695 = vld [vmem:[%s3] sm:$0x1]
        %v4697 = vlaneseq
        %v4698 = vshrl.u32 %v4697, 7
        %v4699 = vsub.s32 0, %v4698
        %v4700 = vrot.slane %v4695, %v4699
        %v4702 = vadd.f32 %v4663, %v4700
        %v4703 = vadd.f32 %v4664, %v4700
        %v4704 = vadd.f32 %v4665, %v4700
        %v4705 = vadd.f32 %v4666, %v4700
        %v4706 = vadd.f32 %v4667, %v4700
        %v4707 = vadd.f32 %v4668, %v4700
        %v4708 = vadd.f32 %v4669, %v4700
        %v4709 = vadd.f32 %v4670, %v4700
        %v4710 = vadd.f32 %v4671, %v4700
        %v4711 = vadd.f32 %v4672, %v4700
        %v4712 = vadd.f32 %v4673, %v4700
        %v4713 = vadd.f32 %v4674, %v4700
        %v4714 = vadd.f32 %v4675, %v4700
        %v4715 = vadd.f32 %v4676, %v4700
        %v4716 = vadd.f32 %v4677, %v4700
        %v4717 = vadd.f32 %v4678, %v4700
        %v4718 = vadd.f32 %v4679, %v4700
        %v4719 = vadd.f32 %v4680, %v4700
        %v4720 = vadd.f32 %v4681, %v4700
        %v4721 = vadd.f32 %v4682, %v4700
        %v4722 = vadd.f32 %v4683, %v4700
        %v4723 = vadd.f32 %v4684, %v4700
        %v4724 = vadd.f32 %v4685, %v4700
        %v4725 = vadd.f32 %v4686, %v4700
        %v4726 = vadd.f32 %v4687, %v4700
        %v4727 = vadd.f32 %v4688, %v4700
        %v4728 = vadd.f32 %v4689, %v4700
        %v4729 = vadd.f32 %v4690, %v4700
        %v4730 = vadd.f32 %v4691, %v4700
        %v4731 = vadd.f32 %v4692, %v4700
        %v4732 = vadd.f32 %v4693, %v4700
        %v4733 = vadd.f32 %v4694, %v4700
        %v4734 = vmax.f32 %v4702, 0.0
        %v4735 = vmax.f32 %v4703, 0.0
        %v4736 = vmax.f32 %v4704, 0.0
        %v4737 = vmax.f32 %v4705, 0.0
        %v4738 = vmax.f32 %v4706, 0.0
        %v4739 = vmax.f32 %v4707, 0.0
        %v4740 = vmax.f32 %v4708, 0.0
        %v4741 = vmax.f32 %v4709, 0.0
        %v4742 = vmax.f32 %v4710, 0.0
        %v4743 = vmax.f32 %v4711, 0.0
        %v4744 = vmax.f32 %v4712, 0.0
        %v4745 = vmax.f32 %v4713, 0.0
        %v4746 = vmax.f32 %v4714, 0.0
        %v4747 = vmax.f32 %v4715, 0.0
        %v4748 = vmax.f32 %v4716, 0.0
        %v4749 = vmax.f32 %v4717, 0.0
        %v4750 = vmax.f32 %v4718, 0.0
        %v4751 = vmax.f32 %v4719, 0.0
        %v4752 = vmax.f32 %v4720, 0.0
        %v4753 = vmax.f32 %v4721, 0.0
        %v4754 = vmax.f32 %v4722, 0.0
        %v4755 = vmax.f32 %v4723, 0.0
        %v4756 = vmax.f32 %v4724, 0.0
        %v4757 = vmax.f32 %v4725, 0.0
        %v4758 = vmax.f32 %v4726, 0.0
        %v4759 = vmax.f32 %v4727, 0.0
        %v4760 = vmax.f32 %v4728, 0.0
        %v4761 = vmax.f32 %v4729, 0.0
        %v4762 = vmax.f32 %v4730, 0.0
        %v4763 = vmax.f32 %v4731, 0.0
        %v4764 = vmax.f32 %v4732, 0.0
        %v4765 = vmax.f32 %v4733, 0.0
        %vm4766 = vcmask 523264
        %4767 = vst.msk [vmem:[%s333] sm:$0xff] %vm4766, %v4734
        %4768 = vst.msk [vmem:[%s333 + $0x8] sm:$0xff] %vm4766, %v4735
        %4769 = vst.msk [vmem:[%s333 + $0x10] sm:$0xff] %vm4766, %v4736
        %4770 = vst.msk [vmem:[%s333 + $0x18] sm:$0xff] %vm4766, %v4737
        %4771 = vst.msk [vmem:[%s333 + $0x20] sm:$0xff] %vm4766, %v4738
        %4772 = vst.msk [vmem:[%s333 + $0x28] sm:$0xff] %vm4766, %v4739
        %4773 = vst.msk [vmem:[%s333 + $0x30] sm:$0xff] %vm4766, %v4740
        %4774 = vst.msk [vmem:[%s333 + $0x38] sm:$0xff] %vm4766, %v4741
        %4775 = vst.msk [vmem:[%s333 + $0x40] sm:$0xff] %vm4766, %v4742
        %4776 = vst.msk [vmem:[%s333 + $0x48] sm:$0xff] %vm4766, %v4743
        %4777 = vst.msk [vmem:[%s333 + $0x50] sm:$0xff] %vm4766, %v4744
        %4778 = vst.msk [vmem:[%s333 + $0x58] sm:$0xff] %vm4766, %v4745
        %4779 = vst.msk [vmem:[%s333 + $0x60] sm:$0xff] %vm4766, %v4746
        %4780 = vst.msk [vmem:[%s333 + $0x68] sm:$0xff] %vm4766, %v4747
        %4781 = vst.msk [vmem:[%s333 + $0x70] sm:$0xff] %vm4766, %v4748
        %4782 = vst.msk [vmem:[%s333 + $0x78] sm:$0xff] %vm4766, %v4749
        %4783 = vst.msk [vmem:[%s333 + $0x80] sm:$0xff] %vm4766, %v4750
        %4784 = vst.msk [vmem:[%s333 + $0x88] sm:$0xff] %vm4766, %v4751
        %4785 = vst.msk [vmem:[%s333 + $0x90] sm:$0xff] %vm4766, %v4752
        %4786 = vst.msk [vmem:[%s333 + $0x98] sm:$0xff] %vm4766, %v4753
        %4787 = vst.msk [vmem:[%s333 + $0xa0] sm:$0xff] %vm4766, %v4754
        %4788 = vst.msk [vmem:[%s333 + $0xa8] sm:$0xff] %vm4766, %v4755
        %4789 = vst.msk [vmem:[%s333 + $0xb0] sm:$0xff] %vm4766, %v4756
        %4790 = vst.msk [vmem:[%s333 + $0xb8] sm:$0xff] %vm4766, %v4757
        %4791 = vst.msk [vmem:[%s333 + $0xc0] sm:$0xff] %vm4766, %v4758
        %4792 = vst.msk [vmem:[%s333 + $0xc8] sm:$0xff] %vm4766, %v4759
        %4793 = vst.msk [vmem:[%s333 + $0xd0] sm:$0xff] %vm4766, %v4760
        %4794 = vst.msk [vmem:[%s333 + $0xd8] sm:$0xff] %vm4766, %v4761
        %4795 = vst.msk [vmem:[%s333 + $0xe0] sm:$0xff] %vm4766, %v4762
        %4796 = vst.msk [vmem:[%s333 + $0xe8] sm:$0xff] %vm4766, %v4763
        %4797 = vst.msk [vmem:[%s333 + $0xf0] sm:$0xff] %vm4766, %v4764
        %4798 = vst.msk [vmem:[%s333 + $0xf8] sm:$0xff] %vm4766, %v4765
        %4799 = vst.msk [vmem:[#allocation3] sm:$0xff] %vm4766, 0.0
        %4800 = vst.msk [vmem:[#allocation3 + $0x8] sm:$0xff] %vm4766, 0.0
        %4801 = vst.msk [vmem:[#allocation3 + $0x10] sm:$0xff] %vm4766, 0.0
        %4802 = vst.msk [vmem:[#allocation3 + $0x18] sm:$0xff] %vm4766, 0.0
        %4803 = vst.msk [vmem:[#allocation3 + $0x20] sm:$0xff] %vm4766, 0.0
        %4804 = vst.msk [vmem:[#allocation3 + $0x28] sm:$0xff] %vm4766, 0.0
        %4805 = vst.msk [vmem:[#allocation3 + $0x30] sm:$0xff] %vm4766, 0.0
        %4806 = vst.msk [vmem:[#allocation3 + $0x38] sm:$0xff] %vm4766, 0.0
        %4807 = vst.msk [vmem:[#allocation3 + $0x40] sm:$0xff] %vm4766, 0.0
        %4808 = vst.msk [vmem:[#allocation3 + $0x48] sm:$0xff] %vm4766, 0.0
        %4809 = vst.msk [vmem:[#allocation3 + $0x50] sm:$0xff] %vm4766, 0.0
        %4810 = vst.msk [vmem:[#allocation3 + $0x58] sm:$0xff] %vm4766, 0.0
        %4811 = vst.msk [vmem:[#allocation3 + $0x60] sm:$0xff] %vm4766, 0.0
        %4812 = vst.msk [vmem:[#allocation3 + $0x68] sm:$0xff] %vm4766, 0.0
        %4813 = vst.msk [vmem:[#allocation3 + $0x70] sm:$0xff] %vm4766, 0.0
        %4814 = vst.msk [vmem:[#allocation3 + $0x78] sm:$0xff] %vm4766, 0.0
        %4815 = vst.msk [vmem:[#allocation3 + $0x80] sm:$0xff] %vm4766, 0.0
        %4816 = vst.msk [vmem:[#allocation3 + $0x88] sm:$0xff] %vm4766, 0.0
        %4817 = vst.msk [vmem:[#allocation3 + $0x90] sm:$0xff] %vm4766, 0.0
        %4818 = vst.msk [vmem:[#allocation3 + $0x98] sm:$0xff] %vm4766, 0.0
        %4819 = vst.msk [vmem:[#allocation3 + $0xa0] sm:$0xff] %vm4766, 0.0
        %4820 = vst.msk [vmem:[#allocation3 + $0xa8] sm:$0xff] %vm4766, 0.0
        %4821 = vst.msk [vmem:[#allocation3 + $0xb0] sm:$0xff] %vm4766, 0.0
        %4822 = vst.msk [vmem:[#allocation3 + $0xb8] sm:$0xff] %vm4766, 0.0
        %4823 = vst.msk [vmem:[#allocation3 + $0xc0] sm:$0xff] %vm4766, 0.0
        %4824 = vst.msk [vmem:[#allocation3 + $0xc8] sm:$0xff] %vm4766, 0.0
        %4825 = vst.msk [vmem:[#allocation3 + $0xd0] sm:$0xff] %vm4766, 0.0
        %4826 = vst.msk [vmem:[#allocation3 + $0xd8] sm:$0xff] %vm4766, 0.0
        %4827 = vst.msk [vmem:[#allocation3 + $0xe0] sm:$0xff] %vm4766, 0.0
        %4828 = vst.msk [vmem:[#allocation3 + $0xe8] sm:$0xff] %vm4766, 0.0
        %4829 = vst.msk [vmem:[#allocation3 + $0xf0] sm:$0xff] %vm4766, 0.0
        %4830 = vst.msk [vmem:[#allocation3 + $0xf8] sm:$0xff] %vm4766, 0.0
        %4831 = vst.msk [vmem:[#allocation3 + $0x100] sm:$0xff] %vm4766, 0.0
        %4832 = vst.msk [vmem:[#allocation3 + $0x108] sm:$0xff] %vm4766, 0.0
        %4833 = vst.msk [vmem:[#allocation3 + $0x110] sm:$0xff] %vm4766, 0.0
        %4834 = vst.msk [vmem:[#allocation3 + $0x118] sm:$0xff] %vm4766, 0.0
        %vm4835 = vcmask 517120
        %4836 = vst.msk [vmem:[#allocation3 + $0x120] sm:$0x3] %vm4835, 0.0
        %4837 = vst.msk [vmem:[#allocation3 + $0x11] sm:$0xff] %vm4766, %v4734
        %4838 = vst.msk [vmem:[#allocation3 + $0x19] sm:$0xff] %vm4766, %v4735
        %4839 = vst.msk [vmem:[#allocation3 + $0x21] sm:$0xff] %vm4766, %v4736
        %4840 = vst.msk [vmem:[#allocation3 + $0x29] sm:$0xff] %vm4766, %v4737
        %4841 = vst.msk [vmem:[#allocation3 + $0x31] sm:$0xff] %vm4766, %v4738
        %4842 = vst.msk [vmem:[#allocation3 + $0x39] sm:$0xff] %vm4766, %v4739
        %4843 = vst.msk [vmem:[#allocation3 + $0x41] sm:$0xff] %vm4766, %v4740
        %4844 = vst.msk [vmem:[#allocation3 + $0x49] sm:$0xff] %vm4766, %v4741
        %4845 = vst.msk [vmem:[#allocation3 + $0x51] sm:$0xff] %vm4766, %v4742
        %4846 = vst.msk [vmem:[#allocation3 + $0x59] sm:$0xff] %vm4766, %v4743
        %4847 = vst.msk [vmem:[#allocation3 + $0x61] sm:$0xff] %vm4766, %v4744
        %4848 = vst.msk [vmem:[#allocation3 + $0x69] sm:$0xff] %vm4766, %v4745
        %4849 = vst.msk [vmem:[#allocation3 + $0x71] sm:$0xff] %vm4766, %v4746
        %4850 = vst.msk [vmem:[#allocation3 + $0x79] sm:$0xff] %vm4766, %v4747
        %4851 = vst.msk [vmem:[#allocation3 + $0x81] sm:$0xff] %vm4766, %v4748
        %4852 = vst.msk [vmem:[#allocation3 + $0x89] sm:$0xff] %vm4766, %v4749
        %4853 = vst.msk [vmem:[#allocation3 + $0x91] sm:$0xff] %vm4766, %v4750
        %4854 = vst.msk [vmem:[#allocation3 + $0x99] sm:$0xff] %vm4766, %v4751
        %4855 = vst.msk [vmem:[#allocation3 + $0xa1] sm:$0xff] %vm4766, %v4752
        %4856 = vst.msk [vmem:[#allocation3 + $0xa9] sm:$0xff] %vm4766, %v4753
        %4857 = vst.msk [vmem:[#allocation3 + $0xb1] sm:$0xff] %vm4766, %v4754
        %4858 = vst.msk [vmem:[#allocation3 + $0xb9] sm:$0xff] %vm4766, %v4755
        %4859 = vst.msk [vmem:[#allocation3 + $0xc1] sm:$0xff] %vm4766, %v4756
        %4860 = vst.msk [vmem:[#allocation3 + $0xc9] sm:$0xff] %vm4766, %v4757
        %4861 = vst.msk [vmem:[#allocation3 + $0xd1] sm:$0xff] %vm4766, %v4758
        %4862 = vst.msk [vmem:[#allocation3 + $0xd9] sm:$0xff] %vm4766, %v4759
        %4863 = vst.msk [vmem:[#allocation3 + $0xe1] sm:$0xff] %vm4766, %v4760
        %4864 = vst.msk [vmem:[#allocation3 + $0xe9] sm:$0xff] %vm4766, %v4761
        %4865 = vst.msk [vmem:[#allocation3 + $0xf1] sm:$0xff] %vm4766, %v4762
        %4866 = vst.msk [vmem:[#allocation3 + $0xf9] sm:$0xff] %vm4766, %v4763
        %4867 = vst.msk [vmem:[#allocation3 + $0x101] sm:$0xff] %vm4766, %v4764
        %4868 = vst.msk [vmem:[#allocation3 + $0x109] sm:$0xff] %vm4766, %v4765
        %v4869 = vld [vmem:[#allocation3] sm:$0xff]
        %v4870 = vld [vmem:[#allocation3 + $0x8] sm:$0xff]
        %v4871 = vld [vmem:[#allocation3 + $0x10] sm:$0xff]
        %v4872 = vld [vmem:[#allocation3 + $0x18] sm:$0xff]
        %v4873 = vld [vmem:[#allocation3 + $0x20] sm:$0xff]
        %v4874 = vld [vmem:[#allocation3 + $0x28] sm:$0xff]
        %v4875 = vld [vmem:[#allocation3 + $0x30] sm:$0xff]
        %v4876 = vld [vmem:[#allocation3 + $0x38] sm:$0xff]
        %v4877 = vld [vmem:[#allocation3 + $0x40] sm:$0xff]
        %v4878 = vld [vmem:[#allocation3 + $0x48] sm:$0xff]
        %v4879 = vld [vmem:[#allocation3 + $0x50] sm:$0xff]
        %v4880 = vld [vmem:[#allocation3 + $0x58] sm:$0xff]
        %v4881 = vld [vmem:[#allocation3 + $0x60] sm:$0xff]
        %v4882 = vld [vmem:[#allocation3 + $0x68] sm:$0xff]
        %v4883 = vld [vmem:[#allocation3 + $0x70] sm:$0xff]
        %v4884 = vld [vmem:[#allocation3 + $0x78] sm:$0xff]
        %v4885 = vld [vmem:[#allocation3 + $0x80] sm:$0xff]
        %v4886 = vld [vmem:[#allocation3 + $0x88] sm:$0xff]
        %v4887 = vld [vmem:[#allocation3 + $0x90] sm:$0xff]
        %v4888 = vld [vmem:[#allocation3 + $0x98] sm:$0xff]
        %v4889 = vld [vmem:[#allocation3 + $0xa0] sm:$0xff]
        %v4890 = vld [vmem:[#allocation3 + $0xa8] sm:$0xff]
        %v4891 = vld [vmem:[#allocation3 + $0xb0] sm:$0xff]
        %v4892 = vld [vmem:[#allocation3 + $0xb8] sm:$0xff]
        %v4893 = vld [vmem:[#allocation3 + $0xc0] sm:$0xff]
        %v4894 = vld [vmem:[#allocation3 + $0xc8] sm:$0xff]
        %v4895 = vld [vmem:[#allocation3 + $0xd0] sm:$0xff]
        %v4896 = vld [vmem:[#allocation3 + $0xd8] sm:$0xff]
        %v4897 = vld [vmem:[#allocation3 + $0xe0] sm:$0xff]
        %v4898 = vld [vmem:[#allocation3 + $0xe8] sm:$0xff]
        %v4899 = vld [vmem:[#allocation3 + $0xf0] sm:$0xff]
        %v4900 = vld [vmem:[#allocation3 + $0xf8] sm:$0xff]
        %v4901 = vsel %vm982, %v4869, 0.0
        %v4902 = vsel %vm983, %v4870, 0.0
        %v4903 = vsel %vm984, %v4871, 0.0
        %v4904 = vsel %vm985, %v4872, 0.0
        %v4905 = vsel %vm986, %v4873, 0.0
        %v4906 = vsel %vm987, %v4874, 0.0
        %v4907 = vsel %vm988, %v4875, 0.0
        %v4908 = vsel %vm989, %v4876, 0.0
        %v4909 = vsel %vm990, %v4877, 0.0
        %v4910 = vsel %vm991, %v4878, 0.0
        %v4911 = vsel %vm992, %v4879, 0.0
        %v4912 = vsel %vm993, %v4880, 0.0
        %v4913 = vsel %vm994, %v4881, 0.0
        %v4914 = vsel %vm995, %v4882, 0.0
        %v4915 = vsel %vm996, %v4883, 0.0
        %v4916 = vsel %vm997, %v4884, 0.0
        %v4917 = vsel %vm998, %v4885, 0.0
        %v4918 = vsel %vm999, %v4886, 0.0
        %v4919 = vsel %vm1000, %v4887, 0.0
        %v4920 = vsel %vm1001, %v4888, 0.0
        %v4921 = vsel %vm1002, %v4889, 0.0
        %v4922 = vsel %vm1003, %v4890, 0.0
        %v4923 = vsel %vm1004, %v4891, 0.0
        %v4924 = vsel %vm1005, %v4892, 0.0
        %v4925 = vsel %vm1006, %v4893, 0.0
        %v4926 = vsel %vm1007, %v4894, 0.0
        %v4927 = vsel %vm1008, %v4895, 0.0
        %v4928 = vsel %vm1009, %v4896, 0.0
        %v4929 = vsel %vm1010, %v4897, 0.0
        %v4930 = vsel %vm1011, %v4898, 0.0
        %v4931 = vsel %vm1012, %v4899, 0.0
        %v4932 = vsel %vm1013, %v4900, 0.0
        %v4933 = vld [vmem:[#allocation4] sm:$0xff]
        %v4934 = vld [vmem:[#allocation4 + $0x8] sm:$0xff]
        %v4935 = vld [vmem:[#allocation4 + $0x10] sm:$0xff]
        %v4936 = vld [vmem:[#allocation4 + $0x18] sm:$0xff]
        %v4937 = vld [vmem:[#allocation4 + $0x20] sm:$0xff]
        %v4938 = vld [vmem:[#allocation4 + $0x28] sm:$0xff]
        %v4939 = vld [vmem:[#allocation4 + $0x30] sm:$0xff]
        %v4940 = vld [vmem:[#allocation4 + $0x38] sm:$0xff]
        %v4941 = vld [vmem:[#allocation3 + $0x1] sm:$0xff]
        %v4942 = vld [vmem:[#allocation3 + $0x9] sm:$0xff]
        %v4943 = vld [vmem:[#allocation3 + $0x11] sm:$0xff]
        %v4944 = vld [vmem:[#allocation3 + $0x19] sm:$0xff]
        %v4945 = vld [vmem:[#allocation3 + $0x21] sm:$0xff]
        %v4946 = vld [vmem:[#allocation3 + $0x29] sm:$0xff]
        %v4947 = vld [vmem:[#allocation3 + $0x31] sm:$0xff]
        %v4948 = vld [vmem:[#allocation3 + $0x39] sm:$0xff]
        %v4949 = vld [vmem:[#allocation3 + $0x41] sm:$0xff]
        %v4950 = vld [vmem:[#allocation3 + $0x49] sm:$0xff]
        %v4951 = vld [vmem:[#allocation3 + $0x51] sm:$0xff]
        %v4952 = vld [vmem:[#allocation3 + $0x59] sm:$0xff]
        %v4953 = vld [vmem:[#allocation3 + $0x61] sm:$0xff]
        %v4954 = vld [vmem:[#allocation3 + $0x69] sm:$0xff]
        %v4955 = vld [vmem:[#allocation3 + $0x71] sm:$0xff]
        %v4956 = vld [vmem:[#allocation3 + $0x79] sm:$0xff]
        %v4957 = vld [vmem:[#allocation3 + $0x81] sm:$0xff]
        %v4958 = vld [vmem:[#allocation3 + $0x89] sm:$0xff]
        %v4959 = vld [vmem:[#allocation3 + $0x91] sm:$0xff]
        %v4960 = vld [vmem:[#allocation3 + $0x99] sm:$0xff]
        %v4961 = vld [vmem:[#allocation3 + $0xa1] sm:$0xff]
        %v4962 = vld [vmem:[#allocation3 + $0xa9] sm:$0xff]
        %v4963 = vld [vmem:[#allocation3 + $0xb1] sm:$0xff]
        %v4964 = vld [vmem:[#allocation3 + $0xb9] sm:$0xff]
        %v4965 = vld [vmem:[#allocation3 + $0xc1] sm:$0xff]
        %v4966 = vld [vmem:[#allocation3 + $0xc9] sm:$0xff]
        %v4967 = vld [vmem:[#allocation3 + $0xd1] sm:$0xff]
        %v4968 = vld [vmem:[#allocation3 + $0xd9] sm:$0xff]
        %v4969 = vld [vmem:[#allocation3 + $0xe1] sm:$0xff]
        %v4970 = vld [vmem:[#allocation3 + $0xe9] sm:$0xff]
        %v4971 = vld [vmem:[#allocation3 + $0xf1] sm:$0xff]
        %v4972 = vld [vmem:[#allocation3 + $0xf9] sm:$0xff]
        %s4973 = scalar_lea.vmem [#allocation4], 64
        %v4974 = vld [vmem:[%s4973] sm:$0xff]
        %v4975 = vld [vmem:[%s4973 + $0x8] sm:$0xff]
        %v4976 = vld [vmem:[%s4973 + $0x10] sm:$0xff]
        %v4977 = vld [vmem:[%s4973 + $0x18] sm:$0xff]
        %v4978 = vld [vmem:[%s4973 + $0x20] sm:$0xff]
        %v4979 = vld [vmem:[%s4973 + $0x28] sm:$0xff]
        %v4980 = vld [vmem:[%s4973 + $0x30] sm:$0xff]
        %v4981 = vld [vmem:[%s4973 + $0x38] sm:$0xff]
        %v4983 = vsel %vm4766, %v4941, 0
        %v4986 = vsel %vm4766, %v4942, 0
        %v4989 = vsel %vm4766, %v4943, 0
        %v4992 = vsel %vm4766, %v4944, 0
        %v4995 = vsel %vm4766, %v4945, 0
        %v4998 = vsel %vm4766, %v4946, 0
        %v5001 = vsel %vm4766, %v4947, 0
        %v5004 = vsel %vm4766, %v4948, 0
        %v5007 = vsel %vm4766, %v4949, 0
        %v5010 = vsel %vm4766, %v4950, 0
        %v5013 = vsel %vm4766, %v4951, 0
        %v5016 = vsel %vm4766, %v4952, 0
        %v5019 = vsel %vm4766, %v4953, 0
        %v5022 = vsel %vm4766, %v4954, 0
        %v5025 = vsel %vm4766, %v4955, 0
        %v5028 = vsel %vm4766, %v4956, 0
        %v5031 = vsel %vm4766, %v4957, 0
        %v5034 = vsel %vm4766, %v4958, 0
        %v5037 = vsel %vm4766, %v4959, 0
        %v5040 = vsel %vm4766, %v4960, 0
        %v5043 = vsel %vm4766, %v4961, 0
        %v5046 = vsel %vm4766, %v4962, 0
        %v5049 = vsel %vm4766, %v4963, 0
        %v5052 = vsel %vm4766, %v4964, 0
        %v5055 = vsel %vm4766, %v4965, 0
        %v5058 = vsel %vm4766, %v4966, 0
        %v5061 = vsel %vm4766, %v4967, 0
        %v5064 = vsel %vm4766, %v4968, 0
        %v5067 = vsel %vm4766, %v4969, 0
        %v5070 = vsel %vm4766, %v4970, 0
        %v5073 = vsel %vm4766, %v4971, 0
        %v5076 = vsel %vm4766, %v4972, 0
        %5078 = vmatprep.subr.mxu0 0.0
        %5079 = vmatpush1.msra.mxu0 %v4974
        %5080 = vmatprep.subr.mxu0 0.0
        %5081 = vmatpush1.msra.mxu0 %v4975
        %5082 = vmatprep.subr.mxu0 0.0
        %5083 = vmatpush1.msra.mxu0 %v4976
        %5084 = vmatprep.subr.mxu0 0.0
        %5085 = vmatpush1.msra.mxu0 %v4977
        %5086 = vmatprep.subr.mxu0 0.0
        %5087 = vmatpush1.msra.mxu0 %v4978
        %5088 = vmatprep.subr.mxu0 0.0
        %5089 = vmatpush1.msra.mxu0 %v4979
        %5090 = vmatprep.subr.mxu0 0.0
        %5091 = vmatpush1.msra.mxu0 %v4980
        %5092 = vmatprep.subr.mxu0 0.0
        %5093 = vmatpush1.msra.mxu0 %v4981
        %5094 = vmatprep.subr.mxu0 0.0
        %5095 = vmatpush1.msra.mxu0 0.0
        %5096 = vmatprep.subr.mxu0 0.0
        %5097 = vmatpush1.msra.mxu0 0.0
        %5098 = vmatprep.subr.mxu0 0.0
        %5099 = vmatpush1.msra.mxu0 0.0
        %5100 = vmatprep.subr.mxu0 0.0
        %5101 = vmatpush1.msra.mxu0 0.0
        %5102 = vmatprep.subr.mxu0 0.0
        %5103 = vmatpush1.msra.mxu0 0.0
        %5104 = vmatprep.subr.mxu0 0.0
        %5105 = vmatpush1.msra.mxu0 0.0
        %5106 = vmatprep.subr.mxu0 0.0
        %5107 = vmatpush1.msra.mxu0 0.0
        %5108 = vmatprep.subr.mxu0 0.0
        %5109 = vmatpush1.msra.mxu0 0.0
        %5110 = vmatprep.subr.mxu0 0.0
        %5111 = vmatpush1.msra.mxu0 0.0
        %5112 = vmatprep.subr.mxu0 0.0
        %5113 = vmatpush1.msra.mxu0 0.0
        %5114 = vmatprep.subr.mxu0 0.0
        %5115 = vmatpush1.msra.mxu0 0.0
        %5116 = vmatprep.subr.mxu0 0.0
        %5117 = vmatpush1.msra.mxu0 0.0
        %5118 = vmatprep.subr.mxu0 0.0
        %5119 = vmatpush1.msra.mxu0 0.0
        %5120 = vmatprep.subr.mxu0 0.0
        %5121 = vmatpush1.msra.mxu0 0.0
        %5122 = vmatprep.subr.mxu0 0.0
        %5123 = vmatpush1.msra.mxu0 0.0
        %5124 = vmatprep.subr.mxu0 0.0
        %5125 = vmatpush1.msra.mxu0 0.0
        %5126 = vmatprep.subr.mxu0 0.0
        %5127 = vmatpush1.msra.mxu0 0.0
        %5128 = vmatprep.subr.mxu0 0.0
        %5129 = vmatpush1.msra.mxu0 0.0
        %5130 = vmatprep.subr.mxu0 0.0
        %5131 = vmatpush1.msra.mxu0 0.0
        %5132 = vmatprep.subr.mxu0 0.0
        %5133 = vmatpush1.msra.mxu0 0.0
        %5134 = vmatprep.subr.mxu0 0.0
        %5135 = vmatpush1.msra.mxu0 0.0
        %5136 = vmatprep.subr.mxu0 0.0
        %5137 = vmatpush1.msra.mxu0 0.0
        %5138 = vmatprep.subr.mxu0 0.0
        %5139 = vmatpush1.msra.mxu0 0.0
        %5140 = vmatprep.subr.mxu0 0.0
        %5141 = vmatpush1.msra.mxu0 0.0
        %5142 = vmatprep.mubr.f32.mxu0 0.0
        %5143 = vmatmul.mubr.f32.gmra.mrb[0].mxu0 %v4983
        %v5144 = vpop.f32.mrb[0].mxu0
        %v5145 = vadd.f32 0.0, %v5144
        %v5146 = vpop.f32.mrb[0].mxu0
        %5147 = vmatprep.mubr.f32.mxu0 0.0
        %5148 = vmatmul.mubr.f32.gmra.mrb[0].mxu0 %v4986
        %v5149 = vpop.f32.mrb[0].mxu0
        %v5150 = vadd.f32 0.0, %v5149
        %v5151 = vpop.f32.mrb[0].mxu0
        %5152 = vmatprep.mubr.f32.mxu0 0.0
        %5153 = vmatmul.mubr.f32.gmra.mrb[0].mxu0 %v4989
        %v5154 = vpop.f32.mrb[0].mxu0
        %v5155 = vadd.f32 0.0, %v5154
        %v5156 = vpop.f32.mrb[0].mxu0
        %5157 = vmatprep.mubr.f32.mxu0 0.0
        %5158 = vmatmul.mubr.f32.gmra.mrb[0].mxu0 %v4992
        %v5159 = vpop.f32.mrb[0].mxu0
        %v5160 = vadd.f32 0.0, %v5159
        %v5161 = vpop.f32.mrb[0].mxu0
        %5162 = vmatprep.mubr.f32.mxu0 0.0
        %5163 = vmatmul.mubr.f32.gmra.mrb[0].mxu0 %v4995
        %v5164 = vpop.f32.mrb[0].mxu0
        %v5165 = vadd.f32 0.0, %v5164
        %v5166 = vpop.f32.mrb[0].mxu0
        %5167 = vmatprep.mubr.f32.mxu0 0.0
        %5168 = vmatmul.mubr.f32.gmra.mrb[0].mxu0 %v4998
        %v5169 = vpop.f32.mrb[0].mxu0
        %v5170 = vadd.f32 0.0, %v5169
        %v5171 = vpop.f32.mrb[0].mxu0
        %5172 = vmatprep.mubr.f32.mxu0 0.0
        %5173 = vmatmul.mubr.f32.gmra.mrb[0].mxu0 %v5001
        %v5174 = vpop.f32.mrb[0].mxu0
        %v5175 = vadd.f32 0.0, %v5174
        %v5176 = vpop.f32.mrb[0].mxu0
        %5177 = vmatprep.mubr.f32.mxu0 0.0
        %5178 = vmatmul.mubr.f32.gmra.mrb[0].mxu0 %v5004
        %v5179 = vpop.f32.mrb[0].mxu0
        %v5180 = vadd.f32 0.0, %v5179
        %v5181 = vpop.f32.mrb[0].mxu0
        %5182 = vmatprep.mubr.f32.mxu0 0.0
        %5183 = vmatmul.mubr.f32.gmra.mrb[0].mxu0 %v5007
        %v5184 = vpop.f32.mrb[0].mxu0
        %v5185 = vadd.f32 0.0, %v5184
        %v5186 = vpop.f32.mrb[0].mxu0
        %5187 = vmatprep.mubr.f32.mxu0 0.0
        %5188 = vmatmul.mubr.f32.gmra.mrb[0].mxu0 %v5010
        %v5189 = vpop.f32.mrb[0].mxu0
        %v5190 = vadd.f32 0.0, %v5189
        %v5191 = vpop.f32.mrb[0].mxu0
        %5192 = vmatprep.mubr.f32.mxu0 0.0
        %5193 = vmatmul.mubr.f32.gmra.mrb[0].mxu0 %v5013
        %v5194 = vpop.f32.mrb[0].mxu0
        %v5195 = vadd.f32 0.0, %v5194
        %v5196 = vpop.f32.mrb[0].mxu0
        %5197 = vmatprep.mubr.f32.mxu0 0.0
        %5198 = vmatmul.mubr.f32.gmra.mrb[0].mxu0 %v5016
        %v5199 = vpop.f32.mrb[0].mxu0
        %v5200 = vadd.f32 0.0, %v5199
        %v5201 = vpop.f32.mrb[0].mxu0
        %5202 = vmatprep.mubr.f32.mxu0 0.0
        %5203 = vmatmul.mubr.f32.gmra.mrb[0].mxu0 %v5019
        %v5204 = vpop.f32.mrb[0].mxu0
        %v5205 = vadd.f32 0.0, %v5204
        %v5206 = vpop.f32.mrb[0].mxu0
        %5207 = vmatprep.mubr.f32.mxu0 0.0
        %5208 = vmatmul.mubr.f32.gmra.mrb[0].mxu0 %v5022
        %v5209 = vpop.f32.mrb[0].mxu0
        %v5210 = vadd.f32 0.0, %v5209
        %v5211 = vpop.f32.mrb[0].mxu0
        %5212 = vmatprep.mubr.f32.mxu0 0.0
        %5213 = vmatmul.mubr.f32.gmra.mrb[0].mxu0 %v5025
        %v5214 = vpop.f32.mrb[0].mxu0
        %v5215 = vadd.f32 0.0, %v5214
        %v5216 = vpop.f32.mrb[0].mxu0
        %5217 = vmatprep.mubr.f32.mxu0 0.0
        %5218 = vmatmul.mubr.f32.gmra.mrb[0].mxu0 %v5028
        %v5219 = vpop.f32.mrb[0].mxu0
        %v5220 = vadd.f32 0.0, %v5219
        %v5221 = vpop.f32.mrb[0].mxu0
        %5222 = vmatprep.mubr.f32.mxu0 0.0
        %5223 = vmatmul.mubr.f32.gmra.mrb[0].mxu0 %v5031
        %v5224 = vpop.f32.mrb[0].mxu0
        %v5225 = vadd.f32 0.0, %v5224
        %v5226 = vpop.f32.mrb[0].mxu0
        %5227 = vmatprep.mubr.f32.mxu0 0.0
        %5228 = vmatmul.mubr.f32.gmra.mrb[0].mxu0 %v5034
        %v5229 = vpop.f32.mrb[0].mxu0
        %v5230 = vadd.f32 0.0, %v5229
        %v5231 = vpop.f32.mrb[0].mxu0
        %5232 = vmatprep.mubr.f32.mxu0 0.0
        %5233 = vmatmul.mubr.f32.gmra.mrb[0].mxu0 %v5037
        %v5234 = vpop.f32.mrb[0].mxu0
        %v5235 = vadd.f32 0.0, %v5234
        %v5236 = vpop.f32.mrb[0].mxu0
        %5237 = vmatprep.mubr.f32.mxu0 0.0
        %5238 = vmatmul.mubr.f32.gmra.mrb[0].mxu0 %v5040
        %v5239 = vpop.f32.mrb[0].mxu0
        %v5240 = vadd.f32 0.0, %v5239
        %v5241 = vpop.f32.mrb[0].mxu0
        %5242 = vmatprep.mubr.f32.mxu0 0.0
        %5243 = vmatmul.mubr.f32.gmra.mrb[0].mxu0 %v5043
        %v5244 = vpop.f32.mrb[0].mxu0
        %v5245 = vadd.f32 0.0, %v5244
        %v5246 = vpop.f32.mrb[0].mxu0
        %5247 = vmatprep.mubr.f32.mxu0 0.0
        %5248 = vmatmul.mubr.f32.gmra.mrb[0].mxu0 %v5046
        %v5249 = vpop.f32.mrb[0].mxu0
        %v5250 = vadd.f32 0.0, %v5249
        %v5251 = vpop.f32.mrb[0].mxu0
        %5252 = vmatprep.mubr.f32.mxu0 0.0
        %5253 = vmatmul.mubr.f32.gmra.mrb[0].mxu0 %v5049
        %v5254 = vpop.f32.mrb[0].mxu0
        %v5255 = vadd.f32 0.0, %v5254
        %v5256 = vpop.f32.mrb[0].mxu0
        %5257 = vmatprep.mubr.f32.mxu0 0.0
        %5258 = vmatmul.mubr.f32.gmra.mrb[0].mxu0 %v5052
        %v5259 = vpop.f32.mrb[0].mxu0
        %v5260 = vadd.f32 0.0, %v5259
        %v5261 = vpop.f32.mrb[0].mxu0
        %5262 = vmatprep.mubr.f32.mxu0 0.0
        %5263 = vmatmul.mubr.f32.gmra.mrb[0].mxu0 %v5055
        %v5264 = vpop.f32.mrb[0].mxu0
        %v5265 = vadd.f32 0.0, %v5264
        %v5266 = vpop.f32.mrb[0].mxu0
        %5267 = vmatprep.mubr.f32.mxu0 0.0
        %5268 = vmatmul.mubr.f32.gmra.mrb[0].mxu0 %v5058
        %v5269 = vpop.f32.mrb[0].mxu0
        %v5270 = vadd.f32 0.0, %v5269
        %v5271 = vpop.f32.mrb[0].mxu0
        %5272 = vmatprep.mubr.f32.mxu0 0.0
        %5273 = vmatmul.mubr.f32.gmra.mrb[0].mxu0 %v5061
        %v5274 = vpop.f32.mrb[0].mxu0
        %v5275 = vadd.f32 0.0, %v5274
        %v5276 = vpop.f32.mrb[0].mxu0
        %5277 = vmatprep.mubr.f32.mxu0 0.0
        %5278 = vmatmul.mubr.f32.gmra.mrb[0].mxu0 %v5064
        %v5279 = vpop.f32.mrb[0].mxu0
        %v5280 = vadd.f32 0.0, %v5279
        %v5281 = vpop.f32.mrb[0].mxu0
        %5282 = vmatprep.mubr.f32.mxu0 0.0
        %5283 = vmatmul.mubr.f32.gmra.mrb[0].mxu0 %v5067
        %v5284 = vpop.f32.mrb[0].mxu0
        %v5285 = vadd.f32 0.0, %v5284
        %v5286 = vpop.f32.mrb[0].mxu0
        %5287 = vmatprep.mubr.f32.mxu0 0.0
        %5288 = vmatmul.mubr.f32.gmra.mrb[0].mxu0 %v5070
        %v5289 = vpop.f32.mrb[0].mxu0
        %v5290 = vadd.f32 0.0, %v5289
        %v5291 = vpop.f32.mrb[0].mxu0
        %5292 = vmatprep.mubr.f32.mxu0 0.0
        %5293 = vmatmul.mubr.f32.gmra.mrb[0].mxu0 %v5073
        %v5294 = vpop.f32.mrb[0].mxu0
        %v5295 = vadd.f32 0.0, %v5294
        %v5296 = vpop.f32.mrb[0].mxu0
        %5297 = vmatprep.mubr.f32.mxu0 0.0
        %5298 = vmatmul.mubr.f32.gmra.mrb[0].mxu0 %v5076
        %v5299 = vpop.f32.mrb[0].mxu0
        %v5300 = vadd.f32 0.0, %v5299
        %v5301 = vpop.f32.mrb[0].mxu0
        %5302 = vdwg.mxu0
        %v5304 = vsel %vm4766, %v4901, 0
        %v5307 = vsel %vm4766, %v4902, 0
        %v5310 = vsel %vm4766, %v4903, 0
        %v5313 = vsel %vm4766, %v4904, 0
        %v5316 = vsel %vm4766, %v4905, 0
        %v5319 = vsel %vm4766, %v4906, 0
        %v5322 = vsel %vm4766, %v4907, 0
        %v5325 = vsel %vm4766, %v4908, 0
        %v5328 = vsel %vm4766, %v4909, 0
        %v5331 = vsel %vm4766, %v4910, 0
        %v5334 = vsel %vm4766, %v4911, 0
        %v5337 = vsel %vm4766, %v4912, 0
        %v5340 = vsel %vm4766, %v4913, 0
        %v5343 = vsel %vm4766, %v4914, 0
        %v5346 = vsel %vm4766, %v4915, 0
        %v5349 = vsel %vm4766, %v4916, 0
        %v5352 = vsel %vm4766, %v4917, 0
        %v5355 = vsel %vm4766, %v4918, 0
        %v5358 = vsel %vm4766, %v4919, 0
        %v5361 = vsel %vm4766, %v4920, 0
        %v5364 = vsel %vm4766, %v4921, 0
        %v5367 = vsel %vm4766, %v4922, 0
        %v5370 = vsel %vm4766, %v4923, 0
        %v5373 = vsel %vm4766, %v4924, 0
        %v5376 = vsel %vm4766, %v4925, 0
        %v5379 = vsel %vm4766, %v4926, 0
        %v5382 = vsel %vm4766, %v4927, 0
        %v5385 = vsel %vm4766, %v4928, 0
        %v5388 = vsel %vm4766, %v4929, 0
        %v5391 = vsel %vm4766, %v4930, 0
        %v5394 = vsel %vm4766, %v4931, 0
        %v5397 = vsel %vm4766, %v4932, 0
        %5399 = vmatprep.subr.mxu0 0.0
        %5400 = vmatpush1.msra.mxu0 %v4933
        %5401 = vmatprep.subr.mxu0 0.0
        %5402 = vmatpush1.msra.mxu0 %v4934
        %5403 = vmatprep.subr.mxu0 0.0
        %5404 = vmatpush1.msra.mxu0 %v4935
        %5405 = vmatprep.subr.mxu0 0.0
        %5406 = vmatpush1.msra.mxu0 %v4936
        %5407 = vmatprep.subr.mxu0 0.0
        %5408 = vmatpush1.msra.mxu0 %v4937
        %5409 = vmatprep.subr.mxu0 0.0
        %5410 = vmatpush1.msra.mxu0 %v4938
        %5411 = vmatprep.subr.mxu0 0.0
        %5412 = vmatpush1.msra.mxu0 %v4939
        %5413 = vmatprep.subr.mxu0 0.0
        %5414 = vmatpush1.msra.mxu0 %v4940
        %5415 = vmatprep.subr.mxu0 0.0
        %5416 = vmatpush1.msra.mxu0 0.0
        %5417 = vmatprep.subr.mxu0 0.0
        %5418 = vmatpush1.msra.mxu0 0.0
        %5419 = vmatprep.subr.mxu0 0.0
        %5420 = vmatpush1.msra.mxu0 0.0
        %5421 = vmatprep.subr.mxu0 0.0
        %5422 = vmatpush1.msra.mxu0 0.0
        %5423 = vmatprep.subr.mxu0 0.0
        %5424 = vmatpush1.msra.mxu0 0.0
        %5425 = vmatprep.subr.mxu0 0.0
        %5426 = vmatpush1.msra.mxu0 0.0
        %5427 = vmatprep.subr.mxu0 0.0
        %5428 = vmatpush1.msra.mxu0 0.0
        %5429 = vmatprep.subr.mxu0 0.0
        %5430 = vmatpush1.msra.mxu0 0.0
        %5431 = vmatprep.subr.mxu0 0.0
        %5432 = vmatpush1.msra.mxu0 0.0
        %5433 = vmatprep.subr.mxu0 0.0
        %5434 = vmatpush1.msra.mxu0 0.0
        %5435 = vmatprep.subr.mxu0 0.0
        %5436 = vmatpush1.msra.mxu0 0.0
        %5437 = vmatprep.subr.mxu0 0.0
        %5438 = vmatpush1.msra.mxu0 0.0
        %5439 = vmatprep.subr.mxu0 0.0
        %5440 = vmatpush1.msra.mxu0 0.0
        %5441 = vmatprep.subr.mxu0 0.0
        %5442 = vmatpush1.msra.mxu0 0.0
        %5443 = vmatprep.subr.mxu0 0.0
        %5444 = vmatpush1.msra.mxu0 0.0
        %5445 = vmatprep.subr.mxu0 0.0
        %5446 = vmatpush1.msra.mxu0 0.0
        %5447 = vmatprep.subr.mxu0 0.0
        %5448 = vmatpush1.msra.mxu0 0.0
        %5449 = vmatprep.subr.mxu0 0.0
        %5450 = vmatpush1.msra.mxu0 0.0
        %5451 = vmatprep.subr.mxu0 0.0
        %5452 = vmatpush1.msra.mxu0 0.0
        %5453 = vmatprep.subr.mxu0 0.0
        %5454 = vmatpush1.msra.mxu0 0.0
        %5455 = vmatprep.subr.mxu0 0.0
        %5456 = vmatpush1.msra.mxu0 0.0
        %5457 = vmatprep.subr.mxu0 0.0
        %5458 = vmatpush1.msra.mxu0 0.0
        %5459 = vmatprep.subr.mxu0 0.0
        %5460 = vmatpush1.msra.mxu0 0.0
        %5461 = vmatprep.subr.mxu0 0.0
        %5462 = vmatpush1.msra.mxu0 0.0
        %5463 = vmatprep.mubr.f32.mxu0 0.0
        %5464 = vmatmul.mubr.f32.gmra.mrb[0].mxu0 %v5304
        %v5465 = vpop.f32.mrb[0].mxu0
        %v5466 = vadd.f32 %v5145, %v5465
        %v5467 = vpop.f32.mrb[0].mxu0
        %5468 = vmatprep.mubr.f32.mxu0 0.0
        %5469 = vmatmul.mubr.f32.gmra.mrb[0].mxu0 %v5307
        %v5470 = vpop.f32.mrb[0].mxu0
        %v5471 = vadd.f32 %v5150, %v5470
        %v5472 = vpop.f32.mrb[0].mxu0
        %5473 = vmatprep.mubr.f32.mxu0 0.0
        %5474 = vmatmul.mubr.f32.gmra.mrb[0].mxu0 %v5310
        %v5475 = vpop.f32.mrb[0].mxu0
        %v5476 = vadd.f32 %v5155, %v5475
        %v5477 = vpop.f32.mrb[0].mxu0
        %5478 = vmatprep.mubr.f32.mxu0 0.0
        %5479 = vmatmul.mubr.f32.gmra.mrb[0].mxu0 %v5313
        %v5480 = vpop.f32.mrb[0].mxu0
        %v5481 = vadd.f32 %v5160, %v5480
        %v5482 = vpop.f32.mrb[0].mxu0
        %5483 = vmatprep.mubr.f32.mxu0 0.0
        %5484 = vmatmul.mubr.f32.gmra.mrb[0].mxu0 %v5316
        %v5485 = vpop.f32.mrb[0].mxu0
        %v5486 = vadd.f32 %v5165, %v5485
        %v5487 = vpop.f32.mrb[0].mxu0
        %5488 = vmatprep.mubr.f32.mxu0 0.0
        %5489 = vmatmul.mubr.f32.gmra.mrb[0].mxu0 %v5319
        %v5490 = vpop.f32.mrb[0].mxu0
        %v5491 = vadd.f32 %v5170, %v5490
        %v5492 = vpop.f32.mrb[0].mxu0
        %5493 = vmatprep.mubr.f32.mxu0 0.0
        %5494 = vmatmul.mubr.f32.gmra.mrb[0].mxu0 %v5322
        %v5495 = vpop.f32.mrb[0].mxu0
        %v5496 = vadd.f32 %v5175, %v5495
        %v5497 = vpop.f32.mrb[0].mxu0
        %5498 = vmatprep.mubr.f32.mxu0 0.0
        %5499 = vmatmul.mubr.f32.gmra.mrb[0].mxu0 %v5325
        %v5500 = vpop.f32.mrb[0].mxu0
        %v5501 = vadd.f32 %v5180, %v5500
        %v5502 = vpop.f32.mrb[0].mxu0
        %5503 = vmatprep.mubr.f32.mxu0 0.0
        %5504 = vmatmul.mubr.f32.gmra.mrb[0].mxu0 %v5328
        %v5505 = vpop.f32.mrb[0].mxu0
        %v5506 = vadd.f32 %v5185, %v5505
        %v5507 = vpop.f32.mrb[0].mxu0
        %5508 = vmatprep.mubr.f32.mxu0 0.0
        %5509 = vmatmul.mubr.f32.gmra.mrb[0].mxu0 %v5331
        %v5510 = vpop.f32.mrb[0].mxu0
        %v5511 = vadd.f32 %v5190, %v5510
        %v5512 = vpop.f32.mrb[0].mxu0
        %5513 = vmatprep.mubr.f32.mxu0 0.0
        %5514 = vmatmul.mubr.f32.gmra.mrb[0].mxu0 %v5334
        %v5515 = vpop.f32.mrb[0].mxu0
        %v5516 = vadd.f32 %v5195, %v5515
        %v5517 = vpop.f32.mrb[0].mxu0
        %5518 = vmatprep.mubr.f32.mxu0 0.0
        %5519 = vmatmul.mubr.f32.gmra.mrb[0].mxu0 %v5337
        %v5520 = vpop.f32.mrb[0].mxu0
        %v5521 = vadd.f32 %v5200, %v5520
        %v5522 = vpop.f32.mrb[0].mxu0
        %5523 = vmatprep.mubr.f32.mxu0 0.0
        %5524 = vmatmul.mubr.f32.gmra.mrb[0].mxu0 %v5340
        %v5525 = vpop.f32.mrb[0].mxu0
        %v5526 = vadd.f32 %v5205, %v5525
        %v5527 = vpop.f32.mrb[0].mxu0
        %5528 = vmatprep.mubr.f32.mxu0 0.0
        %5529 = vmatmul.mubr.f32.gmra.mrb[0].mxu0 %v5343
        %v5530 = vpop.f32.mrb[0].mxu0
        %v5531 = vadd.f32 %v5210, %v5530
        %v5532 = vpop.f32.mrb[0].mxu0
        %5533 = vmatprep.mubr.f32.mxu0 0.0
        %5534 = vmatmul.mubr.f32.gmra.mrb[0].mxu0 %v5346
        %v5535 = vpop.f32.mrb[0].mxu0
        %v5536 = vadd.f32 %v5215, %v5535
        %v5537 = vpop.f32.mrb[0].mxu0
        %5538 = vmatprep.mubr.f32.mxu0 0.0
        %5539 = vmatmul.mubr.f32.gmra.mrb[0].mxu0 %v5349
        %v5540 = vpop.f32.mrb[0].mxu0
        %v5541 = vadd.f32 %v5220, %v5540
        %v5542 = vpop.f32.mrb[0].mxu0
        %5543 = vmatprep.mubr.f32.mxu0 0.0
        %5544 = vmatmul.mubr.f32.gmra.mrb[0].mxu0 %v5352
        %v5545 = vpop.f32.mrb[0].mxu0
        %v5546 = vadd.f32 %v5225, %v5545
        %v5547 = vpop.f32.mrb[0].mxu0
        %5548 = vmatprep.mubr.f32.mxu0 0.0
        %5549 = vmatmul.mubr.f32.gmra.mrb[0].mxu0 %v5355
        %v5550 = vpop.f32.mrb[0].mxu0
        %v5551 = vadd.f32 %v5230, %v5550
        %v5552 = vpop.f32.mrb[0].mxu0
        %5553 = vmatprep.mubr.f32.mxu0 0.0
        %5554 = vmatmul.mubr.f32.gmra.mrb[0].mxu0 %v5358
        %v5555 = vpop.f32.mrb[0].mxu0
        %v5556 = vadd.f32 %v5235, %v5555
        %v5557 = vpop.f32.mrb[0].mxu0
        %5558 = vmatprep.mubr.f32.mxu0 0.0
        %5559 = vmatmul.mubr.f32.gmra.mrb[0].mxu0 %v5361
        %v5560 = vpop.f32.mrb[0].mxu0
        %v5561 = vadd.f32 %v5240, %v5560
        %v5562 = vpop.f32.mrb[0].mxu0
        %5563 = vmatprep.mubr.f32.mxu0 0.0
        %5564 = vmatmul.mubr.f32.gmra.mrb[0].mxu0 %v5364
        %v5565 = vpop.f32.mrb[0].mxu0
        %v5566 = vadd.f32 %v5245, %v5565
        %v5567 = vpop.f32.mrb[0].mxu0
        %5568 = vmatprep.mubr.f32.mxu0 0.0
        %5569 = vmatmul.mubr.f32.gmra.mrb[0].mxu0 %v5367
        %v5570 = vpop.f32.mrb[0].mxu0
        %v5571 = vadd.f32 %v5250, %v5570
        %v5572 = vpop.f32.mrb[0].mxu0
        %5573 = vmatprep.mubr.f32.mxu0 0.0
        %5574 = vmatmul.mubr.f32.gmra.mrb[0].mxu0 %v5370
        %v5575 = vpop.f32.mrb[0].mxu0
        %v5576 = vadd.f32 %v5255, %v5575
        %v5577 = vpop.f32.mrb[0].mxu0
        %5578 = vmatprep.mubr.f32.mxu0 0.0
        %5579 = vmatmul.mubr.f32.gmra.mrb[0].mxu0 %v5373
        %v5580 = vpop.f32.mrb[0].mxu0
        %v5581 = vadd.f32 %v5260, %v5580
        %v5582 = vpop.f32.mrb[0].mxu0
        %5583 = vmatprep.mubr.f32.mxu0 0.0
        %5584 = vmatmul.mubr.f32.gmra.mrb[0].mxu0 %v5376
        %v5585 = vpop.f32.mrb[0].mxu0
        %v5586 = vadd.f32 %v5265, %v5585
        %v5587 = vpop.f32.mrb[0].mxu0
        %5588 = vmatprep.mubr.f32.mxu0 0.0
        %5589 = vmatmul.mubr.f32.gmra.mrb[0].mxu0 %v5379
        %v5590 = vpop.f32.mrb[0].mxu0
        %v5591 = vadd.f32 %v5270, %v5590
        %v5592 = vpop.f32.mrb[0].mxu0
        %5593 = vmatprep.mubr.f32.mxu0 0.0
        %5594 = vmatmul.mubr.f32.gmra.mrb[0].mxu0 %v5382
        %v5595 = vpop.f32.mrb[0].mxu0
        %v5596 = vadd.f32 %v5275, %v5595
        %v5597 = vpop.f32.mrb[0].mxu0
        %5598 = vmatprep.mubr.f32.mxu0 0.0
        %5599 = vmatmul.mubr.f32.gmra.mrb[0].mxu0 %v5385
        %v5600 = vpop.f32.mrb[0].mxu0
        %v5601 = vadd.f32 %v5280, %v5600
        %v5602 = vpop.f32.mrb[0].mxu0
        %5603 = vmatprep.mubr.f32.mxu0 0.0
        %5604 = vmatmul.mubr.f32.gmra.mrb[0].mxu0 %v5388
        %v5605 = vpop.f32.mrb[0].mxu0
        %v5606 = vadd.f32 %v5285, %v5605
        %v5607 = vpop.f32.mrb[0].mxu0
        %5608 = vmatprep.mubr.f32.mxu0 0.0
        %5609 = vmatmul.mubr.f32.gmra.mrb[0].mxu0 %v5391
        %v5610 = vpop.f32.mrb[0].mxu0
        %v5611 = vadd.f32 %v5290, %v5610
        %v5612 = vpop.f32.mrb[0].mxu0
        %5613 = vmatprep.mubr.f32.mxu0 0.0
        %5614 = vmatmul.mubr.f32.gmra.mrb[0].mxu0 %v5394
        %v5615 = vpop.f32.mrb[0].mxu0
        %v5616 = vadd.f32 %v5295, %v5615
        %v5617 = vpop.f32.mrb[0].mxu0
        %5618 = vmatprep.mubr.f32.mxu0 0.0
        %5619 = vmatmul.mubr.f32.gmra.mrb[0].mxu0 %v5397
        %v5620 = vpop.f32.mrb[0].mxu0
        %v5621 = vadd.f32 %v5300, %v5620
        %v5622 = vpop.f32.mrb[0].mxu0
        %5623 = vdwg.mxu0
        %v5624 = vld [vmem:[#allocation3 + $0x2] sm:$0xff]
        %v5625 = vld [vmem:[#allocation3 + $0xa] sm:$0xff]
        %v5626 = vld [vmem:[#allocation3 + $0x12] sm:$0xff]
        %v5627 = vld [vmem:[#allocation3 + $0x1a] sm:$0xff]
        %v5628 = vld [vmem:[#allocation3 + $0x22] sm:$0xff]
        %v5629 = vld [vmem:[#allocation3 + $0x2a] sm:$0xff]
        %v5630 = vld [vmem:[#allocation3 + $0x32] sm:$0xff]
        %v5631 = vld [vmem:[#allocation3 + $0x3a] sm:$0xff]
        %v5632 = vld [vmem:[#allocation3 + $0x42] sm:$0xff]
        %v5633 = vld [vmem:[#allocation3 + $0x4a] sm:$0xff]
        %v5634 = vld [vmem:[#allocation3 + $0x52] sm:$0xff]
        %v5635 = vld [vmem:[#allocation3 + $0x5a] sm:$0xff]
        %v5636 = vld [vmem:[#allocation3 + $0x62] sm:$0xff]
        %v5637 = vld [vmem:[#allocation3 + $0x6a] sm:$0xff]
        %v5638 = vld [vmem:[#allocation3 + $0x72] sm:$0xff]
        %v5639 = vld [vmem:[#allocation3 + $0x7a] sm:$0xff]
        %v5640 = vld [vmem:[#allocation3 + $0x82] sm:$0xff]
        %v5641 = vld [vmem:[#allocation3 + $0x8a] sm:$0xff]
        %v5642 = vld [vmem:[#allocation3 + $0x92] sm:$0xff]
        %v5643 = vld [vmem:[#allocation3 + $0x9a] sm:$0xff]
        %v5644 = vld [vmem:[#allocation3 + $0xa2] sm:$0xff]
        %v5645 = vld [vmem:[#allocation3 + $0xaa] sm:$0xff]
        %v5646 = vld [vmem:[#allocation3 + $0xb2] sm:$0xff]
        %v5647 = vld [vmem:[#allocation3 + $0xba] sm:$0xff]
        %v5648 = vld [vmem:[#allocation3 + $0xc2] sm:$0xff]
        %v5649 = vld [vmem:[#allocation3 + $0xca] sm:$0xff]
        %v5650 = vld [vmem:[#allocation3 + $0xd2] sm:$0xff]
        %v5651 = vld [vmem:[#allocation3 + $0xda] sm:$0xff]
        %v5652 = vld [vmem:[#allocation3 + $0xe2] sm:$0xff]
        %v5653 = vld [vmem:[#allocation3 + $0xea] sm:$0xff]
        %v5654 = vld [vmem:[#allocation3 + $0xf2] sm:$0xff]
        %v5655 = vld [vmem:[#allocation3 + $0xfa] sm:$0xff]
        %v5656 = vsel %vm1787, %v5624, 0.0
        %v5657 = vsel %vm1788, %v5625, 0.0
        %v5658 = vsel %vm1789, %v5626, 0.0
        %v5659 = vsel %vm1790, %v5627, 0.0
        %v5660 = vsel %vm1791, %v5628, 0.0
        %v5661 = vsel %vm1792, %v5629, 0.0
        %v5662 = vsel %vm1793, %v5630, 0.0
        %v5663 = vsel %vm1794, %v5631, 0.0
        %v5664 = vsel %vm1795, %v5632, 0.0
        %v5665 = vsel %vm1796, %v5633, 0.0
        %v5666 = vsel %vm1797, %v5634, 0.0
        %v5667 = vsel %vm1798, %v5635, 0.0
        %v5668 = vsel %vm1799, %v5636, 0.0
        %v5669 = vsel %vm1800, %v5637, 0.0
        %v5670 = vsel %vm1801, %v5638, 0.0
        %v5671 = vsel %vm1802, %v5639, 0.0
        %v5672 = vsel %vm1803, %v5640, 0.0
        %v5673 = vsel %vm1804, %v5641, 0.0
        %v5674 = vsel %vm1805, %v5642, 0.0
        %v5675 = vsel %vm1806, %v5643, 0.0
        %v5676 = vsel %vm1807, %v5644, 0.0
        %v5677 = vsel %vm1808, %v5645, 0.0
        %v5678 = vsel %vm1809, %v5646, 0.0
        %v5679 = vsel %vm1810, %v5647, 0.0
        %v5680 = vsel %vm1811, %v5648, 0.0
        %v5681 = vsel %vm1812, %v5649, 0.0
        %v5682 = vsel %vm1813, %v5650, 0.0
        %v5683 = vsel %vm1814, %v5651, 0.0
        %v5684 = vsel %vm1815, %v5652, 0.0
        %v5685 = vsel %vm1816, %v5653, 0.0
        %v5686 = vsel %vm1817, %v5654, 0.0
        %v5687 = vsel %vm1818, %v5655, 0.0
        %s5688 = scalar_lea.vmem [#allocation4], 128
        %v5689 = vld [vmem:[%s5688] sm:$0xff]
        %v5690 = vld [vmem:[%s5688 + $0x8] sm:$0xff]
        %v5691 = vld [vmem:[%s5688 + $0x10] sm:$0xff]
        %v5692 = vld [vmem:[%s5688 + $0x18] sm:$0xff]
        %v5693 = vld [vmem:[%s5688 + $0x20] sm:$0xff]
        %v5694 = vld [vmem:[%s5688 + $0x28] sm:$0xff]
        %v5695 = vld [vmem:[%s5688 + $0x30] sm:$0xff]
        %v5696 = vld [vmem:[%s5688 + $0x38] sm:$0xff]
        %v5698 = vsel %vm4766, %v5656, 0
        %v5701 = vsel %vm4766, %v5657, 0
        %v5704 = vsel %vm4766, %v5658, 0
        %v5707 = vsel %vm4766, %v5659, 0
        %v5710 = vsel %vm4766, %v5660, 0
        %v5713 = vsel %vm4766, %v5661, 0
        %v5716 = vsel %vm4766, %v5662, 0
        %v5719 = vsel %vm4766, %v5663, 0
        %v5722 = vsel %vm4766, %v5664, 0
        %v5725 = vsel %vm4766, %v5665, 0
        %v5728 = vsel %vm4766, %v5666, 0
        %v5731 = vsel %vm4766, %v5667, 0
        %v5734 = vsel %vm4766, %v5668, 0
        %v5737 = vsel %vm4766, %v5669, 0
        %v5740 = vsel %vm4766, %v5670, 0
        %v5743 = vsel %vm4766, %v5671, 0
        %v5746 = vsel %vm4766, %v5672, 0
        %v5749 = vsel %vm4766, %v5673, 0
        %v5752 = vsel %vm4766, %v5674, 0
        %v5755 = vsel %vm4766, %v5675, 0
        %v5758 = vsel %vm4766, %v5676, 0
        %v5761 = vsel %vm4766, %v5677, 0
        %v5764 = vsel %vm4766, %v5678, 0
        %v5767 = vsel %vm4766, %v5679, 0
        %v5770 = vsel %vm4766, %v5680, 0
        %v5773 = vsel %vm4766, %v5681, 0
        %v5776 = vsel %vm4766, %v5682, 0
        %v5779 = vsel %vm4766, %v5683, 0
        %v5782 = vsel %vm4766, %v5684, 0
        %v5785 = vsel %vm4766, %v5685, 0
        %v5788 = vsel %vm4766, %v5686, 0
        %v5791 = vsel %vm4766, %v5687, 0
        %5793 = vmatprep.subr.mxu0 0.0
        %5794 = vmatpush1.msra.mxu0 %v5689
        %5795 = vmatprep.subr.mxu0 0.0
        %5796 = vmatpush1.msra.mxu0 %v5690
        %5797 = vmatprep.subr.mxu0 0.0
        %5798 = vmatpush1.msra.mxu0 %v5691
        %5799 = vmatprep.subr.mxu0 0.0
        %5800 = vmatpush1.msra.mxu0 %v5692
        %5801 = vmatprep.subr.mxu0 0.0
        %5802 = vmatpush1.msra.mxu0 %v5693
        %5803 = vmatprep.subr.mxu0 0.0
        %5804 = vmatpush1.msra.mxu0 %v5694
        %5805 = vmatprep.subr.mxu0 0.0
        %5806 = vmatpush1.msra.mxu0 %v5695
        %5807 = vmatprep.subr.mxu0 0.0
        %5808 = vmatpush1.msra.mxu0 %v5696
        %5809 = vmatprep.subr.mxu0 0.0
        %5810 = vmatpush1.msra.mxu0 0.0
        %5811 = vmatprep.subr.mxu0 0.0
        %5812 = vmatpush1.msra.mxu0 0.0
        %5813 = vmatprep.subr.mxu0 0.0
        %5814 = vmatpush1.msra.mxu0 0.0
        %5815 = vmatprep.subr.mxu0 0.0
        %5816 = vmatpush1.msra.mxu0 0.0
        %5817 = vmatprep.subr.mxu0 0.0
        %5818 = vmatpush1.msra.mxu0 0.0
        %5819 = vmatprep.subr.mxu0 0.0
        %5820 = vmatpush1.msra.mxu0 0.0
        %5821 = vmatprep.subr.mxu0 0.0
        %5822 = vmatpush1.msra.mxu0 0.0
        %5823 = vmatprep.subr.mxu0 0.0
        %5824 = vmatpush1.msra.mxu0 0.0
        %5825 = vmatprep.subr.mxu0 0.0
        %5826 = vmatpush1.msra.mxu0 0.0
        %5827 = vmatprep.subr.mxu0 0.0
        %5828 = vmatpush1.msra.mxu0 0.0
        %5829 = vmatprep.subr.mxu0 0.0
        %5830 = vmatpush1.msra.mxu0 0.0
        %5831 = vmatprep.subr.mxu0 0.0
        %5832 = vmatpush1.msra.mxu0 0.0
        %5833 = vmatprep.subr.mxu0 0.0
        %5834 = vmatpush1.msra.mxu0 0.0
        %5835 = vmatprep.subr.mxu0 0.0
        %5836 = vmatpush1.msra.mxu0 0.0
        %5837 = vmatprep.subr.mxu0 0.0
        %5838 = vmatpush1.msra.mxu0 0.0
        %5839 = vmatprep.subr.mxu0 0.0
        %5840 = vmatpush1.msra.mxu0 0.0
        %5841 = vmatprep.subr.mxu0 0.0
        %5842 = vmatpush1.msra.mxu0 0.0
        %5843 = vmatprep.subr.mxu0 0.0
        %5844 = vmatpush1.msra.mxu0 0.0
        %5845 = vmatprep.subr.mxu0 0.0
        %5846 = vmatpush1.msra.mxu0 0.0
        %5847 = vmatprep.subr.mxu0 0.0
        %5848 = vmatpush1.msra.mxu0 0.0
        %5849 = vmatprep.subr.mxu0 0.0
        %5850 = vmatpush1.msra.mxu0 0.0
        %5851 = vmatprep.subr.mxu0 0.0
        %5852 = vmatpush1.msra.mxu0 0.0
        %5853 = vmatprep.subr.mxu0 0.0
        %5854 = vmatpush1.msra.mxu0 0.0
        %5855 = vmatprep.subr.mxu0 0.0
        %5856 = vmatpush1.msra.mxu0 0.0
        %5857 = vmatprep.mubr.f32.mxu0 0.0
        %5858 = vmatmul.mubr.f32.gmra.mrb[0].mxu0 %v5698
        %v5859 = vpop.f32.mrb[0].mxu0
        %v5860 = vadd.f32 0.0, %v5859
        %v5861 = vpop.f32.mrb[0].mxu0
        %5862 = vmatprep.mubr.f32.mxu0 0.0
        %5863 = vmatmul.mubr.f32.gmra.mrb[0].mxu0 %v5701
        %v5864 = vpop.f32.mrb[0].mxu0
        %v5865 = vadd.f32 0.0, %v5864
        %v5866 = vpop.f32.mrb[0].mxu0
        %5867 = vmatprep.mubr.f32.mxu0 0.0
        %5868 = vmatmul.mubr.f32.gmra.mrb[0].mxu0 %v5704
        %v5869 = vpop.f32.mrb[0].mxu0
        %v5870 = vadd.f32 0.0, %v5869
        %v5871 = vpop.f32.mrb[0].mxu0
        %5872 = vmatprep.mubr.f32.mxu0 0.0
        %5873 = vmatmul.mubr.f32.gmra.mrb[0].mxu0 %v5707
        %v5874 = vpop.f32.mrb[0].mxu0
        %v5875 = vadd.f32 0.0, %v5874
        %v5876 = vpop.f32.mrb[0].mxu0
        %5877 = vmatprep.mubr.f32.mxu0 0.0
        %5878 = vmatmul.mubr.f32.gmra.mrb[0].mxu0 %v5710
        %v5879 = vpop.f32.mrb[0].mxu0
        %v5880 = vadd.f32 0.0, %v5879
        %v5881 = vpop.f32.mrb[0].mxu0
        %5882 = vmatprep.mubr.f32.mxu0 0.0
        %5883 = vmatmul.mubr.f32.gmra.mrb[0].mxu0 %v5713
        %v5884 = vpop.f32.mrb[0].mxu0
        %v5885 = vadd.f32 0.0, %v5884
        %v5886 = vpop.f32.mrb[0].mxu0
        %5887 = vmatprep.mubr.f32.mxu0 0.0
        %5888 = vmatmul.mubr.f32.gmra.mrb[0].mxu0 %v5716
        %v5889 = vpop.f32.mrb[0].mxu0
        %v5890 = vadd.f32 0.0, %v5889
        %v5891 = vpop.f32.mrb[0].mxu0
        %5892 = vmatprep.mubr.f32.mxu0 0.0
        %5893 = vmatmul.mubr.f32.gmra.mrb[0].mxu0 %v5719
        %v5894 = vpop.f32.mrb[0].mxu0
        %v5895 = vadd.f32 0.0, %v5894
        %v5896 = vpop.f32.mrb[0].mxu0
        %5897 = vmatprep.mubr.f32.mxu0 0.0
        %5898 = vmatmul.mubr.f32.gmra.mrb[0].mxu0 %v5722
        %v5899 = vpop.f32.mrb[0].mxu0
        %v5900 = vadd.f32 0.0, %v5899
        %v5901 = vpop.f32.mrb[0].mxu0
        %5902 = vmatprep.mubr.f32.mxu0 0.0
        %5903 = vmatmul.mubr.f32.gmra.mrb[0].mxu0 %v5725
        %v5904 = vpop.f32.mrb[0].mxu0
        %v5905 = vadd.f32 0.0, %v5904
        %v5906 = vpop.f32.mrb[0].mxu0
        %5907 = vmatprep.mubr.f32.mxu0 0.0
        %5908 = vmatmul.mubr.f32.gmra.mrb[0].mxu0 %v5728
        %v5909 = vpop.f32.mrb[0].mxu0
        %v5910 = vadd.f32 0.0, %v5909
        %v5911 = vpop.f32.mrb[0].mxu0
        %5912 = vmatprep.mubr.f32.mxu0 0.0
        %5913 = vmatmul.mubr.f32.gmra.mrb[0].mxu0 %v5731
        %v5914 = vpop.f32.mrb[0].mxu0
        %v5915 = vadd.f32 0.0, %v5914
        %v5916 = vpop.f32.mrb[0].mxu0
        %5917 = vmatprep.mubr.f32.mxu0 0.0
        %5918 = vmatmul.mubr.f32.gmra.mrb[0].mxu0 %v5734
        %v5919 = vpop.f32.mrb[0].mxu0
        %v5920 = vadd.f32 0.0, %v5919
        %v5921 = vpop.f32.mrb[0].mxu0
        %5922 = vmatprep.mubr.f32.mxu0 0.0
        %5923 = vmatmul.mubr.f32.gmra.mrb[0].mxu0 %v5737
        %v5924 = vpop.f32.mrb[0].mxu0
        %v5925 = vadd.f32 0.0, %v5924
        %v5926 = vpop.f32.mrb[0].mxu0
        %5927 = vmatprep.mubr.f32.mxu0 0.0
        %5928 = vmatmul.mubr.f32.gmra.mrb[0].mxu0 %v5740
        %v5929 = vpop.f32.mrb[0].mxu0
        %v5930 = vadd.f32 0.0, %v5929
        %v5931 = vpop.f32.mrb[0].mxu0
        %5932 = vmatprep.mubr.f32.mxu0 0.0
        %5933 = vmatmul.mubr.f32.gmra.mrb[0].mxu0 %v5743
        %v5934 = vpop.f32.mrb[0].mxu0
        %v5935 = vadd.f32 0.0, %v5934
        %v5936 = vpop.f32.mrb[0].mxu0
        %5937 = vmatprep.mubr.f32.mxu0 0.0
        %5938 = vmatmul.mubr.f32.gmra.mrb[0].mxu0 %v5746
        %v5939 = vpop.f32.mrb[0].mxu0
        %v5940 = vadd.f32 0.0, %v5939
        %v5941 = vpop.f32.mrb[0].mxu0
        %5942 = vmatprep.mubr.f32.mxu0 0.0
        %5943 = vmatmul.mubr.f32.gmra.mrb[0].mxu0 %v5749
        %v5944 = vpop.f32.mrb[0].mxu0
        %v5945 = vadd.f32 0.0, %v5944
        %v5946 = vpop.f32.mrb[0].mxu0
        %5947 = vmatprep.mubr.f32.mxu0 0.0
        %5948 = vmatmul.mubr.f32.gmra.mrb[0].mxu0 %v5752
        %v5949 = vpop.f32.mrb[0].mxu0
        %v5950 = vadd.f32 0.0, %v5949
        %v5951 = vpop.f32.mrb[0].mxu0
        %5952 = vmatprep.mubr.f32.mxu0 0.0
        %5953 = vmatmul.mubr.f32.gmra.mrb[0].mxu0 %v5755
        %v5954 = vpop.f32.mrb[0].mxu0
        %v5955 = vadd.f32 0.0, %v5954
        %v5956 = vpop.f32.mrb[0].mxu0
        %5957 = vmatprep.mubr.f32.mxu0 0.0
        %5958 = vmatmul.mubr.f32.gmra.mrb[0].mxu0 %v5758
        %v5959 = vpop.f32.mrb[0].mxu0
        %v5960 = vadd.f32 0.0, %v5959
        %v5961 = vpop.f32.mrb[0].mxu0
        %5962 = vmatprep.mubr.f32.mxu0 0.0
        %5963 = vmatmul.mubr.f32.gmra.mrb[0].mxu0 %v5761
        %v5964 = vpop.f32.mrb[0].mxu0
        %v5965 = vadd.f32 0.0, %v5964
        %v5966 = vpop.f32.mrb[0].mxu0
        %5967 = vmatprep.mubr.f32.mxu0 0.0
        %5968 = vmatmul.mubr.f32.gmra.mrb[0].mxu0 %v5764
        %v5969 = vpop.f32.mrb[0].mxu0
        %v5970 = vadd.f32 0.0, %v5969
        %v5971 = vpop.f32.mrb[0].mxu0
        %5972 = vmatprep.mubr.f32.mxu0 0.0
        %5973 = vmatmul.mubr.f32.gmra.mrb[0].mxu0 %v5767
        %v5974 = vpop.f32.mrb[0].mxu0
        %v5975 = vadd.f32 0.0, %v5974
        %v5976 = vpop.f32.mrb[0].mxu0
        %5977 = vmatprep.mubr.f32.mxu0 0.0
        %5978 = vmatmul.mubr.f32.gmra.mrb[0].mxu0 %v5770
        %v5979 = vpop.f32.mrb[0].mxu0
        %v5980 = vadd.f32 0.0, %v5979
        %v5981 = vpop.f32.mrb[0].mxu0
        %5982 = vmatprep.mubr.f32.mxu0 0.0
        %5983 = vmatmul.mubr.f32.gmra.mrb[0].mxu0 %v5773
        %v5984 = vpop.f32.mrb[0].mxu0
        %v5985 = vadd.f32 0.0, %v5984
        %v5986 = vpop.f32.mrb[0].mxu0
        %5987 = vmatprep.mubr.f32.mxu0 0.0
        %5988 = vmatmul.mubr.f32.gmra.mrb[0].mxu0 %v5776
        %v5989 = vpop.f32.mrb[0].mxu0
        %v5990 = vadd.f32 0.0, %v5989
        %v5991 = vpop.f32.mrb[0].mxu0
        %5992 = vmatprep.mubr.f32.mxu0 0.0
        %5993 = vmatmul.mubr.f32.gmra.mrb[0].mxu0 %v5779
        %v5994 = vpop.f32.mrb[0].mxu0
        %v5995 = vadd.f32 0.0, %v5994
        %v5996 = vpop.f32.mrb[0].mxu0
        %5997 = vmatprep.mubr.f32.mxu0 0.0
        %5998 = vmatmul.mubr.f32.gmra.mrb[0].mxu0 %v5782
        %v5999 = vpop.f32.mrb[0].mxu0
        %v6000 = vadd.f32 0.0, %v5999
        %v6001 = vpop.f32.mrb[0].mxu0
        %6002 = vmatprep.mubr.f32.mxu0 0.0
        %6003 = vmatmul.mubr.f32.gmra.mrb[0].mxu0 %v5785
        %v6004 = vpop.f32.mrb[0].mxu0
        %v6005 = vadd.f32 0.0, %v6004
        %v6006 = vpop.f32.mrb[0].mxu0
        %6007 = vmatprep.mubr.f32.mxu0 0.0
        %6008 = vmatmul.mubr.f32.gmra.mrb[0].mxu0 %v5788
        %v6009 = vpop.f32.mrb[0].mxu0
        %v6010 = vadd.f32 0.0, %v6009
        %v6011 = vpop.f32.mrb[0].mxu0
        %6012 = vmatprep.mubr.f32.mxu0 0.0
        %6013 = vmatmul.mubr.f32.gmra.mrb[0].mxu0 %v5791
        %v6014 = vpop.f32.mrb[0].mxu0
        %v6015 = vadd.f32 0.0, %v6014
        %v6016 = vpop.f32.mrb[0].mxu0
        %6017 = vdwg.mxu0
        %v6018 = vadd.f32 %v5466, %v5860
        %v6019 = vadd.f32 %v5471, %v5865
        %v6020 = vadd.f32 %v5476, %v5870
        %v6021 = vadd.f32 %v5481, %v5875
        %v6022 = vadd.f32 %v5486, %v5880
        %v6023 = vadd.f32 %v5491, %v5885
        %v6024 = vadd.f32 %v5496, %v5890
        %v6025 = vadd.f32 %v5501, %v5895
        %v6026 = vadd.f32 %v5506, %v5900
        %v6027 = vadd.f32 %v5511, %v5905
        %v6028 = vadd.f32 %v5516, %v5910
        %v6029 = vadd.f32 %v5521, %v5915
        %v6030 = vadd.f32 %v5526, %v5920
        %v6031 = vadd.f32 %v5531, %v5925
        %v6032 = vadd.f32 %v5536, %v5930
        %v6033 = vadd.f32 %v5541, %v5935
        %v6034 = vadd.f32 %v5546, %v5940
        %v6035 = vadd.f32 %v5551, %v5945
        %v6036 = vadd.f32 %v5556, %v5950
        %v6037 = vadd.f32 %v5561, %v5955
        %v6038 = vadd.f32 %v5566, %v5960
        %v6039 = vadd.f32 %v5571, %v5965
        %v6040 = vadd.f32 %v5576, %v5970
        %v6041 = vadd.f32 %v5581, %v5975
        %v6042 = vadd.f32 %v5586, %v5980
        %v6043 = vadd.f32 %v5591, %v5985
        %v6044 = vadd.f32 %v5596, %v5990
        %v6045 = vadd.f32 %v5601, %v5995
        %v6046 = vadd.f32 %v5606, %v6000
        %v6047 = vadd.f32 %v5611, %v6005
        %v6048 = vadd.f32 %v5616, %v6010
        %v6049 = vadd.f32 %v5621, %v6015
        %v6050 = vld [vmem:[#allocation3 + $0x10] sm:$0xff]
        %v6051 = vld [vmem:[#allocation3 + $0x18] sm:$0xff]
        %v6052 = vld [vmem:[#allocation3 + $0x20] sm:$0xff]
        %v6053 = vld [vmem:[#allocation3 + $0x28] sm:$0xff]
        %v6054 = vld [vmem:[#allocation3 + $0x30] sm:$0xff]
        %v6055 = vld [vmem:[#allocation3 + $0x38] sm:$0xff]
        %v6056 = vld [vmem:[#allocation3 + $0x40] sm:$0xff]
        %v6057 = vld [vmem:[#allocation3 + $0x48] sm:$0xff]
        %v6058 = vld [vmem:[#allocation3 + $0x50] sm:$0xff]
        %v6059 = vld [vmem:[#allocation3 + $0x58] sm:$0xff]
        %v6060 = vld [vmem:[#allocation3 + $0x60] sm:$0xff]
        %v6061 = vld [vmem:[#allocation3 + $0x68] sm:$0xff]
        %v6062 = vld [vmem:[#allocation3 + $0x70] sm:$0xff]
        %v6063 = vld [vmem:[#allocation3 + $0x78] sm:$0xff]
        %v6064 = vld [vmem:[#allocation3 + $0x80] sm:$0xff]
        %v6065 = vld [vmem:[#allocation3 + $0x88] sm:$0xff]
        %v6066 = vld [vmem:[#allocation3 + $0x90] sm:$0xff]
        %v6067 = vld [vmem:[#allocation3 + $0x98] sm:$0xff]
        %v6068 = vld [vmem:[#allocation3 + $0xa0] sm:$0xff]
        %v6069 = vld [vmem:[#allocation3 + $0xa8] sm:$0xff]
        %v6070 = vld [vmem:[#allocation3 + $0xb0] sm:$0xff]
        %v6071 = vld [vmem:[#allocation3 + $0xb8] sm:$0xff]
        %v6072 = vld [vmem:[#allocation3 + $0xc0] sm:$0xff]
        %v6073 = vld [vmem:[#allocation3 + $0xc8] sm:$0xff]
        %v6074 = vld [vmem:[#allocation3 + $0xd0] sm:$0xff]
        %v6075 = vld [vmem:[#allocation3 + $0xd8] sm:$0xff]
        %v6076 = vld [vmem:[#allocation3 + $0xe0] sm:$0xff]
        %v6077 = vld [vmem:[#allocation3 + $0xe8] sm:$0xff]
        %v6078 = vld [vmem:[#allocation3 + $0xf0] sm:$0xff]
        %v6079 = vld [vmem:[#allocation3 + $0xf8] sm:$0xff]
        %v6080 = vld [vmem:[#allocation3 + $0x100] sm:$0xff]
        %v6081 = vld [vmem:[#allocation3 + $0x108] sm:$0xff]
        %v6082 = vsel %vm982, %v6050, 0.0
        %v6083 = vsel %vm983, %v6051, 0.0
        %v6084 = vsel %vm984, %v6052, 0.0
        %v6085 = vsel %vm985, %v6053, 0.0
        %v6086 = vsel %vm986, %v6054, 0.0
        %v6087 = vsel %vm987, %v6055, 0.0
        %v6088 = vsel %vm988, %v6056, 0.0
        %v6089 = vsel %vm989, %v6057, 0.0
        %v6090 = vsel %vm990, %v6058, 0.0
        %v6091 = vsel %vm991, %v6059, 0.0
        %v6092 = vsel %vm992, %v6060, 0.0
        %v6093 = vsel %vm993, %v6061, 0.0
        %v6094 = vsel %vm994, %v6062, 0.0
        %v6095 = vsel %vm995, %v6063, 0.0
        %v6096 = vsel %vm996, %v6064, 0.0
        %v6097 = vsel %vm997, %v6065, 0.0
        %v6098 = vsel %vm998, %v6066, 0.0
        %v6099 = vsel %vm999, %v6067, 0.0
        %v6100 = vsel %vm1000, %v6068, 0.0
        %v6101 = vsel %vm1001, %v6069, 0.0
        %v6102 = vsel %vm1002, %v6070, 0.0
        %v6103 = vsel %vm1003, %v6071, 0.0
        %v6104 = vsel %vm1004, %v6072, 0.0
        %v6105 = vsel %vm1005, %v6073, 0.0
        %v6106 = vsel %vm1006, %v6074, 0.0
        %v6107 = vsel %vm1007, %v6075, 0.0
        %v6108 = vsel %vm1008, %v6076, 0.0
        %v6109 = vsel %vm1009, %v6077, 0.0
        %v6110 = vsel %vm1010, %v6078, 0.0
        %v6111 = vsel %vm1011, %v6079, 0.0
        %v6112 = vsel %vm1012, %v6080, 0.0
        %v6113 = vsel %vm1013, %v6081, 0.0
        %s6114 = scalar_lea.vmem [#allocation4], 192
        %v6115 = vld [vmem:[%s6114] sm:$0xff]
        %v6116 = vld [vmem:[%s6114 + $0x8] sm:$0xff]
        %v6117 = vld [vmem:[%s6114 + $0x10] sm:$0xff]
        %v6118 = vld [vmem:[%s6114 + $0x18] sm:$0xff]
        %v6119 = vld [vmem:[%s6114 + $0x20] sm:$0xff]
        %v6120 = vld [vmem:[%s6114 + $0x28] sm:$0xff]
        %v6121 = vld [vmem:[%s6114 + $0x30] sm:$0xff]
        %v6122 = vld [vmem:[%s6114 + $0x38] sm:$0xff]
        %v6124 = vsel %vm4766, %v6082, 0
        %v6127 = vsel %vm4766, %v6083, 0
        %v6130 = vsel %vm4766, %v6084, 0
        %v6133 = vsel %vm4766, %v6085, 0
        %v6136 = vsel %vm4766, %v6086, 0
        %v6139 = vsel %vm4766, %v6087, 0
        %v6142 = vsel %vm4766, %v6088, 0
        %v6145 = vsel %vm4766, %v6089, 0
        %v6148 = vsel %vm4766, %v6090, 0
        %v6151 = vsel %vm4766, %v6091, 0
        %v6154 = vsel %vm4766, %v6092, 0
        %v6157 = vsel %vm4766, %v6093, 0
        %v6160 = vsel %vm4766, %v6094, 0
        %v6163 = vsel %vm4766, %v6095, 0
        %v6166 = vsel %vm4766, %v6096, 0
        %v6169 = vsel %vm4766, %v6097, 0
        %v6172 = vsel %vm4766, %v6098, 0
        %v6175 = vsel %vm4766, %v6099, 0
        %v6178 = vsel %vm4766, %v6100, 0
        %v6181 = vsel %vm4766, %v6101, 0
        %v6184 = vsel %vm4766, %v6102, 0
        %v6187 = vsel %vm4766, %v6103, 0
        %v6190 = vsel %vm4766, %v6104, 0
        %v6193 = vsel %vm4766, %v6105, 0
        %v6196 = vsel %vm4766, %v6106, 0
        %v6199 = vsel %vm4766, %v6107, 0
        %v6202 = vsel %vm4766, %v6108, 0
        %v6205 = vsel %vm4766, %v6109, 0
        %v6208 = vsel %vm4766, %v6110, 0
        %v6211 = vsel %vm4766, %v6111, 0
        %v6214 = vsel %vm4766, %v6112, 0
        %v6217 = vsel %vm4766, %v6113, 0
        %6219 = vmatprep.subr.mxu0 0.0
        %6220 = vmatpush1.msra.mxu0 %v6115
        %6221 = vmatprep.subr.mxu0 0.0
        %6222 = vmatpush1.msra.mxu0 %v6116
        %6223 = vmatprep.subr.mxu0 0.0
        %6224 = vmatpush1.msra.mxu0 %v6117
        %6225 = vmatprep.subr.mxu0 0.0
        %6226 = vmatpush1.msra.mxu0 %v6118
        %6227 = vmatprep.subr.mxu0 0.0
        %6228 = vmatpush1.msra.mxu0 %v6119
        %6229 = vmatprep.subr.mxu0 0.0
        %6230 = vmatpush1.msra.mxu0 %v6120
        %6231 = vmatprep.subr.mxu0 0.0
        %6232 = vmatpush1.msra.mxu0 %v6121
        %6233 = vmatprep.subr.mxu0 0.0
        %6234 = vmatpush1.msra.mxu0 %v6122
        %6235 = vmatprep.subr.mxu0 0.0
        %6236 = vmatpush1.msra.mxu0 0.0
        %6237 = vmatprep.subr.mxu0 0.0
        %6238 = vmatpush1.msra.mxu0 0.0
        %6239 = vmatprep.subr.mxu0 0.0
        %6240 = vmatpush1.msra.mxu0 0.0
        %6241 = vmatprep.subr.mxu0 0.0
        %6242 = vmatpush1.msra.mxu0 0.0
        %6243 = vmatprep.subr.mxu0 0.0
        %6244 = vmatpush1.msra.mxu0 0.0
        %6245 = vmatprep.subr.mxu0 0.0
        %6246 = vmatpush1.msra.mxu0 0.0
        %6247 = vmatprep.subr.mxu0 0.0
        %6248 = vmatpush1.msra.mxu0 0.0
        %6249 = vmatprep.subr.mxu0 0.0
        %6250 = vmatpush1.msra.mxu0 0.0
        %6251 = vmatprep.subr.mxu0 0.0
        %6252 = vmatpush1.msra.mxu0 0.0
        %6253 = vmatprep.subr.mxu0 0.0
        %6254 = vmatpush1.msra.mxu0 0.0
        %6255 = vmatprep.subr.mxu0 0.0
        %6256 = vmatpush1.msra.mxu0 0.0
        %6257 = vmatprep.subr.mxu0 0.0
        %6258 = vmatpush1.msra.mxu0 0.0
        %6259 = vmatprep.subr.mxu0 0.0
        %6260 = vmatpush1.msra.mxu0 0.0
        %6261 = vmatprep.subr.mxu0 0.0
        %6262 = vmatpush1.msra.mxu0 0.0
        %6263 = vmatprep.subr.mxu0 0.0
        %6264 = vmatpush1.msra.mxu0 0.0
        %6265 = vmatprep.subr.mxu0 0.0
        %6266 = vmatpush1.msra.mxu0 0.0
        %6267 = vmatprep.subr.mxu0 0.0
        %6268 = vmatpush1.msra.mxu0 0.0
        %6269 = vmatprep.subr.mxu0 0.0
        %6270 = vmatpush1.msra.mxu0 0.0
        %6271 = vmatprep.subr.mxu0 0.0
        %6272 = vmatpush1.msra.mxu0 0.0
        %6273 = vmatprep.subr.mxu0 0.0
        %6274 = vmatpush1.msra.mxu0 0.0
        %6275 = vmatprep.subr.mxu0 0.0
        %6276 = vmatpush1.msra.mxu0 0.0
        %6277 = vmatprep.subr.mxu0 0.0
        %6278 = vmatpush1.msra.mxu0 0.0
        %6279 = vmatprep.subr.mxu0 0.0
        %6280 = vmatpush1.msra.mxu0 0.0
        %6281 = vmatprep.subr.mxu0 0.0
        %6282 = vmatpush1.msra.mxu0 0.0
        %6283 = vmatprep.mubr.f32.mxu0 0.0
        %6284 = vmatmul.mubr.f32.gmra.mrb[0].mxu0 %v6124
        %v6285 = vpop.f32.mrb[0].mxu0
        %v6286 = vadd.f32 0.0, %v6285
        %v6287 = vpop.f32.mrb[0].mxu0
        %6288 = vmatprep.mubr.f32.mxu0 0.0
        %6289 = vmatmul.mubr.f32.gmra.mrb[0].mxu0 %v6127
        %v6290 = vpop.f32.mrb[0].mxu0
        %v6291 = vadd.f32 0.0, %v6290
        %v6292 = vpop.f32.mrb[0].mxu0
        %6293 = vmatprep.mubr.f32.mxu0 0.0
        %6294 = vmatmul.mubr.f32.gmra.mrb[0].mxu0 %v6130
        %v6295 = vpop.f32.mrb[0].mxu0
        %v6296 = vadd.f32 0.0, %v6295
        %v6297 = vpop.f32.mrb[0].mxu0
        %6298 = vmatprep.mubr.f32.mxu0 0.0
        %6299 = vmatmul.mubr.f32.gmra.mrb[0].mxu0 %v6133
        %v6300 = vpop.f32.mrb[0].mxu0
        %v6301 = vadd.f32 0.0, %v6300
        %v6302 = vpop.f32.mrb[0].mxu0
        %6303 = vmatprep.mubr.f32.mxu0 0.0
        %6304 = vmatmul.mubr.f32.gmra.mrb[0].mxu0 %v6136
        %v6305 = vpop.f32.mrb[0].mxu0
        %v6306 = vadd.f32 0.0, %v6305
        %v6307 = vpop.f32.mrb[0].mxu0
        %6308 = vmatprep.mubr.f32.mxu0 0.0
        %6309 = vmatmul.mubr.f32.gmra.mrb[0].mxu0 %v6139
        %v6310 = vpop.f32.mrb[0].mxu0
        %v6311 = vadd.f32 0.0, %v6310
        %v6312 = vpop.f32.mrb[0].mxu0
        %6313 = vmatprep.mubr.f32.mxu0 0.0
        %6314 = vmatmul.mubr.f32.gmra.mrb[0].mxu0 %v6142
        %v6315 = vpop.f32.mrb[0].mxu0
        %v6316 = vadd.f32 0.0, %v6315
        %v6317 = vpop.f32.mrb[0].mxu0
        %6318 = vmatprep.mubr.f32.mxu0 0.0
        %6319 = vmatmul.mubr.f32.gmra.mrb[0].mxu0 %v6145
        %v6320 = vpop.f32.mrb[0].mxu0
        %v6321 = vadd.f32 0.0, %v6320
        %v6322 = vpop.f32.mrb[0].mxu0
        %6323 = vmatprep.mubr.f32.mxu0 0.0
        %6324 = vmatmul.mubr.f32.gmra.mrb[0].mxu0 %v6148
        %v6325 = vpop.f32.mrb[0].mxu0
        %v6326 = vadd.f32 0.0, %v6325
        %v6327 = vpop.f32.mrb[0].mxu0
        %6328 = vmatprep.mubr.f32.mxu0 0.0
        %6329 = vmatmul.mubr.f32.gmra.mrb[0].mxu0 %v6151
        %v6330 = vpop.f32.mrb[0].mxu0
        %v6331 = vadd.f32 0.0, %v6330
        %v6332 = vpop.f32.mrb[0].mxu0
        %6333 = vmatprep.mubr.f32.mxu0 0.0
        %6334 = vmatmul.mubr.f32.gmra.mrb[0].mxu0 %v6154
        %v6335 = vpop.f32.mrb[0].mxu0
        %v6336 = vadd.f32 0.0, %v6335
        %v6337 = vpop.f32.mrb[0].mxu0
        %6338 = vmatprep.mubr.f32.mxu0 0.0
        %6339 = vmatmul.mubr.f32.gmra.mrb[0].mxu0 %v6157
        %v6340 = vpop.f32.mrb[0].mxu0
        %v6341 = vadd.f32 0.0, %v6340
        %v6342 = vpop.f32.mrb[0].mxu0
        %6343 = vmatprep.mubr.f32.mxu0 0.0
        %6344 = vmatmul.mubr.f32.gmra.mrb[0].mxu0 %v6160
        %v6345 = vpop.f32.mrb[0].mxu0
        %v6346 = vadd.f32 0.0, %v6345
        %v6347 = vpop.f32.mrb[0].mxu0
        %6348 = vmatprep.mubr.f32.mxu0 0.0
        %6349 = vmatmul.mubr.f32.gmra.mrb[0].mxu0 %v6163
        %v6350 = vpop.f32.mrb[0].mxu0
        %v6351 = vadd.f32 0.0, %v6350
        %v6352 = vpop.f32.mrb[0].mxu0
        %6353 = vmatprep.mubr.f32.mxu0 0.0
        %6354 = vmatmul.mubr.f32.gmra.mrb[0].mxu0 %v6166
        %v6355 = vpop.f32.mrb[0].mxu0
        %v6356 = vadd.f32 0.0, %v6355
        %v6357 = vpop.f32.mrb[0].mxu0
        %6358 = vmatprep.mubr.f32.mxu0 0.0
        %6359 = vmatmul.mubr.f32.gmra.mrb[0].mxu0 %v6169
        %v6360 = vpop.f32.mrb[0].mxu0
        %v6361 = vadd.f32 0.0, %v6360
        %v6362 = vpop.f32.mrb[0].mxu0
        %6363 = vmatprep.mubr.f32.mxu0 0.0
        %6364 = vmatmul.mubr.f32.gmra.mrb[0].mxu0 %v6172
        %v6365 = vpop.f32.mrb[0].mxu0
        %v6366 = vadd.f32 0.0, %v6365
        %v6367 = vpop.f32.mrb[0].mxu0
        %6368 = vmatprep.mubr.f32.mxu0 0.0
        %6369 = vmatmul.mubr.f32.gmra.mrb[0].mxu0 %v6175
        %v6370 = vpop.f32.mrb[0].mxu0
        %v6371 = vadd.f32 0.0, %v6370
        %v6372 = vpop.f32.mrb[0].mxu0
        %6373 = vmatprep.mubr.f32.mxu0 0.0
        %6374 = vmatmul.mubr.f32.gmra.mrb[0].mxu0 %v6178
        %v6375 = vpop.f32.mrb[0].mxu0
        %v6376 = vadd.f32 0.0, %v6375
        %v6377 = vpop.f32.mrb[0].mxu0
        %6378 = vmatprep.mubr.f32.mxu0 0.0
        %6379 = vmatmul.mubr.f32.gmra.mrb[0].mxu0 %v6181
        %v6380 = vpop.f32.mrb[0].mxu0
        %v6381 = vadd.f32 0.0, %v6380
        %v6382 = vpop.f32.mrb[0].mxu0
        %6383 = vmatprep.mubr.f32.mxu0 0.0
        %6384 = vmatmul.mubr.f32.gmra.mrb[0].mxu0 %v6184
        %v6385 = vpop.f32.mrb[0].mxu0
        %v6386 = vadd.f32 0.0, %v6385
        %v6387 = vpop.f32.mrb[0].mxu0
        %6388 = vmatprep.mubr.f32.mxu0 0.0
        %6389 = vmatmul.mubr.f32.gmra.mrb[0].mxu0 %v6187
        %v6390 = vpop.f32.mrb[0].mxu0
        %v6391 = vadd.f32 0.0, %v6390
        %v6392 = vpop.f32.mrb[0].mxu0
        %6393 = vmatprep.mubr.f32.mxu0 0.0
        %6394 = vmatmul.mubr.f32.gmra.mrb[0].mxu0 %v6190
        %v6395 = vpop.f32.mrb[0].mxu0
        %v6396 = vadd.f32 0.0, %v6395
        %v6397 = vpop.f32.mrb[0].mxu0
        %6398 = vmatprep.mubr.f32.mxu0 0.0
        %6399 = vmatmul.mubr.f32.gmra.mrb[0].mxu0 %v6193
        %v6400 = vpop.f32.mrb[0].mxu0
        %v6401 = vadd.f32 0.0, %v6400
        %v6402 = vpop.f32.mrb[0].mxu0
        %6403 = vmatprep.mubr.f32.mxu0 0.0
        %6404 = vmatmul.mubr.f32.gmra.mrb[0].mxu0 %v6196
        %v6405 = vpop.f32.mrb[0].mxu0
        %v6406 = vadd.f32 0.0, %v6405
        %v6407 = vpop.f32.mrb[0].mxu0
        %6408 = vmatprep.mubr.f32.mxu0 0.0
        %6409 = vmatmul.mubr.f32.gmra.mrb[0].mxu0 %v6199
        %v6410 = vpop.f32.mrb[0].mxu0
        %v6411 = vadd.f32 0.0, %v6410
        %v6412 = vpop.f32.mrb[0].mxu0
        %6413 = vmatprep.mubr.f32.mxu0 0.0
        %6414 = vmatmul.mubr.f32.gmra.mrb[0].mxu0 %v6202
        %v6415 = vpop.f32.mrb[0].mxu0
        %v6416 = vadd.f32 0.0, %v6415
        %v6417 = vpop.f32.mrb[0].mxu0
        %6418 = vmatprep.mubr.f32.mxu0 0.0
        %6419 = vmatmul.mubr.f32.gmra.mrb[0].mxu0 %v6205
        %v6420 = vpop.f32.mrb[0].mxu0
        %v6421 = vadd.f32 0.0, %v6420
        %v6422 = vpop.f32.mrb[0].mxu0
        %6423 = vmatprep.mubr.f32.mxu0 0.0
        %6424 = vmatmul.mubr.f32.gmra.mrb[0].mxu0 %v6208
        %v6425 = vpop.f32.mrb[0].mxu0
        %v6426 = vadd.f32 0.0, %v6425
        %v6427 = vpop.f32.mrb[0].mxu0
        %6428 = vmatprep.mubr.f32.mxu0 0.0
        %6429 = vmatmul.mubr.f32.gmra.mrb[0].mxu0 %v6211
        %v6430 = vpop.f32.mrb[0].mxu0
        %v6431 = vadd.f32 0.0, %v6430
        %v6432 = vpop.f32.mrb[0].mxu0
        %6433 = vmatprep.mubr.f32.mxu0 0.0
        %6434 = vmatmul.mubr.f32.gmra.mrb[0].mxu0 %v6214
        %v6435 = vpop.f32.mrb[0].mxu0
        %v6436 = vadd.f32 0.0, %v6435
        %v6437 = vpop.f32.mrb[0].mxu0
        %6438 = vmatprep.mubr.f32.mxu0 0.0
        %6439 = vmatmul.mubr.f32.gmra.mrb[0].mxu0 %v6217
        %v6440 = vpop.f32.mrb[0].mxu0
        %v6441 = vadd.f32 0.0, %v6440
        %v6442 = vpop.f32.mrb[0].mxu0
        %6443 = vdwg.mxu0
        %v6444 = vadd.f32 %v6018, %v6286
        %v6445 = vadd.f32 %v6019, %v6291
        %v6446 = vadd.f32 %v6020, %v6296
        %v6447 = vadd.f32 %v6021, %v6301
        %v6448 = vadd.f32 %v6022, %v6306
        %v6449 = vadd.f32 %v6023, %v6311
        %v6450 = vadd.f32 %v6024, %v6316
        %v6451 = vadd.f32 %v6025, %v6321
        %v6452 = vadd.f32 %v6026, %v6326
        %v6453 = vadd.f32 %v6027, %v6331
        %v6454 = vadd.f32 %v6028, %v6336
        %v6455 = vadd.f32 %v6029, %v6341
        %v6456 = vadd.f32 %v6030, %v6346
        %v6457 = vadd.f32 %v6031, %v6351
        %v6458 = vadd.f32 %v6032, %v6356
        %v6459 = vadd.f32 %v6033, %v6361
        %v6460 = vadd.f32 %v6034, %v6366
        %v6461 = vadd.f32 %v6035, %v6371
        %v6462 = vadd.f32 %v6036, %v6376
        %v6463 = vadd.f32 %v6037, %v6381
        %v6464 = vadd.f32 %v6038, %v6386
        %v6465 = vadd.f32 %v6039, %v6391
        %v6466 = vadd.f32 %v6040, %v6396
        %v6467 = vadd.f32 %v6041, %v6401
        %v6468 = vadd.f32 %v6042, %v6406
        %v6469 = vadd.f32 %v6043, %v6411
        %v6470 = vadd.f32 %v6044, %v6416
        %v6471 = vadd.f32 %v6045, %v6421
        %v6472 = vadd.f32 %v6046, %v6426
        %v6473 = vadd.f32 %v6047, %v6431
        %v6474 = vadd.f32 %v6048, %v6436
        %v6475 = vadd.f32 %v6049, %v6441
        %v6476 = vld [vmem:[#allocation3 + $0x11] sm:$0xff]
        %v6477 = vld [vmem:[#allocation3 + $0x19] sm:$0xff]
        %v6478 = vld [vmem:[#allocation3 + $0x21] sm:$0xff]
        %v6479 = vld [vmem:[#allocation3 + $0x29] sm:$0xff]
        %v6480 = vld [vmem:[#allocation3 + $0x31] sm:$0xff]
        %v6481 = vld [vmem:[#allocation3 + $0x39] sm:$0xff]
        %v6482 = vld [vmem:[#allocation3 + $0x41] sm:$0xff]
        %v6483 = vld [vmem:[#allocation3 + $0x49] sm:$0xff]
        %v6484 = vld [vmem:[#allocation3 + $0x51] sm:$0xff]
        %v6485 = vld [vmem:[#allocation3 + $0x59] sm:$0xff]
        %v6486 = vld [vmem:[#allocation3 + $0x61] sm:$0xff]
        %v6487 = vld [vmem:[#allocation3 + $0x69] sm:$0xff]
        %v6488 = vld [vmem:[#allocation3 + $0x71] sm:$0xff]
        %v6489 = vld [vmem:[#allocation3 + $0x79] sm:$0xff]
        %v6490 = vld [vmem:[#allocation3 + $0x81] sm:$0xff]
        %v6491 = vld [vmem:[#allocation3 + $0x89] sm:$0xff]
        %v6492 = vld [vmem:[#allocation3 + $0x91] sm:$0xff]
        %v6493 = vld [vmem:[#allocation3 + $0x99] sm:$0xff]
        %v6494 = vld [vmem:[#allocation3 + $0xa1] sm:$0xff]
        %v6495 = vld [vmem:[#allocation3 + $0xa9] sm:$0xff]
        %v6496 = vld [vmem:[#allocation3 + $0xb1] sm:$0xff]
        %v6497 = vld [vmem:[#allocation3 + $0xb9] sm:$0xff]
        %v6498 = vld [vmem:[#allocation3 + $0xc1] sm:$0xff]
        %v6499 = vld [vmem:[#allocation3 + $0xc9] sm:$0xff]
        %v6500 = vld [vmem:[#allocation3 + $0xd1] sm:$0xff]
        %v6501 = vld [vmem:[#allocation3 + $0xd9] sm:$0xff]
        %v6502 = vld [vmem:[#allocation3 + $0xe1] sm:$0xff]
        %v6503 = vld [vmem:[#allocation3 + $0xe9] sm:$0xff]
        %v6504 = vld [vmem:[#allocation3 + $0xf1] sm:$0xff]
        %v6505 = vld [vmem:[#allocation3 + $0xf9] sm:$0xff]
        %v6506 = vld [vmem:[#allocation3 + $0x101] sm:$0xff]
        %v6507 = vld [vmem:[#allocation3 + $0x109] sm:$0xff]
        %s6508 = scalar_lea.vmem [#allocation4], 256
        %v6509 = vld [vmem:[%s6508] sm:$0xff]
        %v6510 = vld [vmem:[%s6508 + $0x8] sm:$0xff]
        %v6511 = vld [vmem:[%s6508 + $0x10] sm:$0xff]
        %v6512 = vld [vmem:[%s6508 + $0x18] sm:$0xff]
        %v6513 = vld [vmem:[%s6508 + $0x20] sm:$0xff]
        %v6514 = vld [vmem:[%s6508 + $0x28] sm:$0xff]
        %v6515 = vld [vmem:[%s6508 + $0x30] sm:$0xff]
        %v6516 = vld [vmem:[%s6508 + $0x38] sm:$0xff]
        %v6518 = vsel %vm4766, %v6476, 0
        %v6521 = vsel %vm4766, %v6477, 0
        %v6524 = vsel %vm4766, %v6478, 0
        %v6527 = vsel %vm4766, %v6479, 0
        %v6530 = vsel %vm4766, %v6480, 0
        %v6533 = vsel %vm4766, %v6481, 0
        %v6536 = vsel %vm4766, %v6482, 0
        %v6539 = vsel %vm4766, %v6483, 0
        %v6542 = vsel %vm4766, %v6484, 0
        %v6545 = vsel %vm4766, %v6485, 0
        %v6548 = vsel %vm4766, %v6486, 0
        %v6551 = vsel %vm4766, %v6487, 0
        %v6554 = vsel %vm4766, %v6488, 0
        %v6557 = vsel %vm4766, %v6489, 0
        %v6560 = vsel %vm4766, %v6490, 0
        %v6563 = vsel %vm4766, %v6491, 0
        %v6566 = vsel %vm4766, %v6492, 0
        %v6569 = vsel %vm4766, %v6493, 0
        %v6572 = vsel %vm4766, %v6494, 0
        %v6575 = vsel %vm4766, %v6495, 0
        %v6578 = vsel %vm4766, %v6496, 0
        %v6581 = vsel %vm4766, %v6497, 0
        %v6584 = vsel %vm4766, %v6498, 0
        %v6587 = vsel %vm4766, %v6499, 0
        %v6590 = vsel %vm4766, %v6500, 0
        %v6593 = vsel %vm4766, %v6501, 0
        %v6596 = vsel %vm4766, %v6502, 0
        %v6599 = vsel %vm4766, %v6503, 0
        %v6602 = vsel %vm4766, %v6504, 0
        %v6605 = vsel %vm4766, %v6505, 0
        %v6608 = vsel %vm4766, %v6506, 0
        %v6611 = vsel %vm4766, %v6507, 0
        %6613 = vmatprep.subr.mxu0 0.0
        %6614 = vmatpush1.msra.mxu0 %v6509
        %6615 = vmatprep.subr.mxu0 0.0
        %6616 = vmatpush1.msra.mxu0 %v6510
        %6617 = vmatprep.subr.mxu0 0.0
        %6618 = vmatpush1.msra.mxu0 %v6511
        %6619 = vmatprep.subr.mxu0 0.0
        %6620 = vmatpush1.msra.mxu0 %v6512
        %6621 = vmatprep.subr.mxu0 0.0
        %6622 = vmatpush1.msra.mxu0 %v6513
        %6623 = vmatprep.subr.mxu0 0.0
        %6624 = vmatpush1.msra.mxu0 %v6514
        %6625 = vmatprep.subr.mxu0 0.0
        %6626 = vmatpush1.msra.mxu0 %v6515
        %6627 = vmatprep.subr.mxu0 0.0
        %6628 = vmatpush1.msra.mxu0 %v6516
        %6629 = vmatprep.subr.mxu0 0.0
        %6630 = vmatpush1.msra.mxu0 0.0
        %6631 = vmatprep.subr.mxu0 0.0
        %6632 = vmatpush1.msra.mxu0 0.0
        %6633 = vmatprep.subr.mxu0 0.0
        %6634 = vmatpush1.msra.mxu0 0.0
        %6635 = vmatprep.subr.mxu0 0.0
        %6636 = vmatpush1.msra.mxu0 0.0
        %6637 = vmatprep.subr.mxu0 0.0
        %6638 = vmatpush1.msra.mxu0 0.0
        %6639 = vmatprep.subr.mxu0 0.0
        %6640 = vmatpush1.msra.mxu0 0.0
        %6641 = vmatprep.subr.mxu0 0.0
        %6642 = vmatpush1.msra.mxu0 0.0
        %6643 = vmatprep.subr.mxu0 0.0
        %6644 = vmatpush1.msra.mxu0 0.0
        %6645 = vmatprep.subr.mxu0 0.0
        %6646 = vmatpush1.msra.mxu0 0.0
        %6647 = vmatprep.subr.mxu0 0.0
        %6648 = vmatpush1.msra.mxu0 0.0
        %6649 = vmatprep.subr.mxu0 0.0
        %6650 = vmatpush1.msra.mxu0 0.0
        %6651 = vmatprep.subr.mxu0 0.0
        %6652 = vmatpush1.msra.mxu0 0.0
        %6653 = vmatprep.subr.mxu0 0.0
        %6654 = vmatpush1.msra.mxu0 0.0
        %6655 = vmatprep.subr.mxu0 0.0
        %6656 = vmatpush1.msra.mxu0 0.0
        %6657 = vmatprep.subr.mxu0 0.0
        %6658 = vmatpush1.msra.mxu0 0.0
        %6659 = vmatprep.subr.mxu0 0.0
        %6660 = vmatpush1.msra.mxu0 0.0
        %6661 = vmatprep.subr.mxu0 0.0
        %6662 = vmatpush1.msra.mxu0 0.0
        %6663 = vmatprep.subr.mxu0 0.0
        %6664 = vmatpush1.msra.mxu0 0.0
        %6665 = vmatprep.subr.mxu0 0.0
        %6666 = vmatpush1.msra.mxu0 0.0
        %6667 = vmatprep.subr.mxu0 0.0
        %6668 = vmatpush1.msra.mxu0 0.0
        %6669 = vmatprep.subr.mxu0 0.0
        %6670 = vmatpush1.msra.mxu0 0.0
        %6671 = vmatprep.subr.mxu0 0.0
        %6672 = vmatpush1.msra.mxu0 0.0
        %6673 = vmatprep.subr.mxu0 0.0
        %6674 = vmatpush1.msra.mxu0 0.0
        %6675 = vmatprep.subr.mxu0 0.0
        %6676 = vmatpush1.msra.mxu0 0.0
        %6677 = vmatprep.mubr.f32.mxu0 0.0
        %6678 = vmatmul.mubr.f32.gmra.mrb[0].mxu0 %v6518
        %v6679 = vpop.f32.mrb[0].mxu0
        %v6680 = vadd.f32 0.0, %v6679
        %v6681 = vpop.f32.mrb[0].mxu0
        %6682 = vmatprep.mubr.f32.mxu0 0.0
        %6683 = vmatmul.mubr.f32.gmra.mrb[0].mxu0 %v6521
        %v6684 = vpop.f32.mrb[0].mxu0
        %v6685 = vadd.f32 0.0, %v6684
        %v6686 = vpop.f32.mrb[0].mxu0
        %6687 = vmatprep.mubr.f32.mxu0 0.0
        %6688 = vmatmul.mubr.f32.gmra.mrb[0].mxu0 %v6524
        %v6689 = vpop.f32.mrb[0].mxu0
        %v6690 = vadd.f32 0.0, %v6689
        %v6691 = vpop.f32.mrb[0].mxu0
        %6692 = vmatprep.mubr.f32.mxu0 0.0
        %6693 = vmatmul.mubr.f32.gmra.mrb[0].mxu0 %v6527
        %v6694 = vpop.f32.mrb[0].mxu0
        %v6695 = vadd.f32 0.0, %v6694
        %v6696 = vpop.f32.mrb[0].mxu0
        %6697 = vmatprep.mubr.f32.mxu0 0.0
        %6698 = vmatmul.mubr.f32.gmra.mrb[0].mxu0 %v6530
        %v6699 = vpop.f32.mrb[0].mxu0
        %v6700 = vadd.f32 0.0, %v6699
        %v6701 = vpop.f32.mrb[0].mxu0
        %6702 = vmatprep.mubr.f32.mxu0 0.0
        %6703 = vmatmul.mubr.f32.gmra.mrb[0].mxu0 %v6533
        %v6704 = vpop.f32.mrb[0].mxu0
        %v6705 = vadd.f32 0.0, %v6704
        %v6706 = vpop.f32.mrb[0].mxu0
        %6707 = vmatprep.mubr.f32.mxu0 0.0
        %6708 = vmatmul.mubr.f32.gmra.mrb[0].mxu0 %v6536
        %v6709 = vpop.f32.mrb[0].mxu0
        %v6710 = vadd.f32 0.0, %v6709
        %v6711 = vpop.f32.mrb[0].mxu0
        %6712 = vmatprep.mubr.f32.mxu0 0.0
        %6713 = vmatmul.mubr.f32.gmra.mrb[0].mxu0 %v6539
        %v6714 = vpop.f32.mrb[0].mxu0
        %v6715 = vadd.f32 0.0, %v6714
        %v6716 = vpop.f32.mrb[0].mxu0
        %6717 = vmatprep.mubr.f32.mxu0 0.0
        %6718 = vmatmul.mubr.f32.gmra.mrb[0].mxu0 %v6542
        %v6719 = vpop.f32.mrb[0].mxu0
        %v6720 = vadd.f32 0.0, %v6719
        %v6721 = vpop.f32.mrb[0].mxu0
        %6722 = vmatprep.mubr.f32.mxu0 0.0
        %6723 = vmatmul.mubr.f32.gmra.mrb[0].mxu0 %v6545
        %v6724 = vpop.f32.mrb[0].mxu0
        %v6725 = vadd.f32 0.0, %v6724
        %v6726 = vpop.f32.mrb[0].mxu0
        %6727 = vmatprep.mubr.f32.mxu0 0.0
        %6728 = vmatmul.mubr.f32.gmra.mrb[0].mxu0 %v6548
        %v6729 = vpop.f32.mrb[0].mxu0
        %v6730 = vadd.f32 0.0, %v6729
        %v6731 = vpop.f32.mrb[0].mxu0
        %6732 = vmatprep.mubr.f32.mxu0 0.0
        %6733 = vmatmul.mubr.f32.gmra.mrb[0].mxu0 %v6551
        %v6734 = vpop.f32.mrb[0].mxu0
        %v6735 = vadd.f32 0.0, %v6734
        %v6736 = vpop.f32.mrb[0].mxu0
        %6737 = vmatprep.mubr.f32.mxu0 0.0
        %6738 = vmatmul.mubr.f32.gmra.mrb[0].mxu0 %v6554
        %v6739 = vpop.f32.mrb[0].mxu0
        %v6740 = vadd.f32 0.0, %v6739
        %v6741 = vpop.f32.mrb[0].mxu0
        %6742 = vmatprep.mubr.f32.mxu0 0.0
        %6743 = vmatmul.mubr.f32.gmra.mrb[0].mxu0 %v6557
        %v6744 = vpop.f32.mrb[0].mxu0
        %v6745 = vadd.f32 0.0, %v6744
        %v6746 = vpop.f32.mrb[0].mxu0
        %6747 = vmatprep.mubr.f32.mxu0 0.0
        %6748 = vmatmul.mubr.f32.gmra.mrb[0].mxu0 %v6560
        %v6749 = vpop.f32.mrb[0].mxu0
        %v6750 = vadd.f32 0.0, %v6749
        %v6751 = vpop.f32.mrb[0].mxu0
        %6752 = vmatprep.mubr.f32.mxu0 0.0
        %6753 = vmatmul.mubr.f32.gmra.mrb[0].mxu0 %v6563
        %v6754 = vpop.f32.mrb[0].mxu0
        %v6755 = vadd.f32 0.0, %v6754
        %v6756 = vpop.f32.mrb[0].mxu0
        %6757 = vmatprep.mubr.f32.mxu0 0.0
        %6758 = vmatmul.mubr.f32.gmra.mrb[0].mxu0 %v6566
        %v6759 = vpop.f32.mrb[0].mxu0
        %v6760 = vadd.f32 0.0, %v6759
        %v6761 = vpop.f32.mrb[0].mxu0
        %6762 = vmatprep.mubr.f32.mxu0 0.0
        %6763 = vmatmul.mubr.f32.gmra.mrb[0].mxu0 %v6569
        %v6764 = vpop.f32.mrb[0].mxu0
        %v6765 = vadd.f32 0.0, %v6764
        %v6766 = vpop.f32.mrb[0].mxu0
        %6767 = vmatprep.mubr.f32.mxu0 0.0
        %6768 = vmatmul.mubr.f32.gmra.mrb[0].mxu0 %v6572
        %v6769 = vpop.f32.mrb[0].mxu0
        %v6770 = vadd.f32 0.0, %v6769
        %v6771 = vpop.f32.mrb[0].mxu0
        %6772 = vmatprep.mubr.f32.mxu0 0.0
        %6773 = vmatmul.mubr.f32.gmra.mrb[0].mxu0 %v6575
        %v6774 = vpop.f32.mrb[0].mxu0
        %v6775 = vadd.f32 0.0, %v6774
        %v6776 = vpop.f32.mrb[0].mxu0
        %6777 = vmatprep.mubr.f32.mxu0 0.0
        %6778 = vmatmul.mubr.f32.gmra.mrb[0].mxu0 %v6578
        %v6779 = vpop.f32.mrb[0].mxu0
        %v6780 = vadd.f32 0.0, %v6779
        %v6781 = vpop.f32.mrb[0].mxu0
        %6782 = vmatprep.mubr.f32.mxu0 0.0
        %6783 = vmatmul.mubr.f32.gmra.mrb[0].mxu0 %v6581
        %v6784 = vpop.f32.mrb[0].mxu0
        %v6785 = vadd.f32 0.0, %v6784
        %v6786 = vpop.f32.mrb[0].mxu0
        %6787 = vmatprep.mubr.f32.mxu0 0.0
        %6788 = vmatmul.mubr.f32.gmra.mrb[0].mxu0 %v6584
        %v6789 = vpop.f32.mrb[0].mxu0
        %v6790 = vadd.f32 0.0, %v6789
        %v6791 = vpop.f32.mrb[0].mxu0
        %6792 = vmatprep.mubr.f32.mxu0 0.0
        %6793 = vmatmul.mubr.f32.gmra.mrb[0].mxu0 %v6587
        %v6794 = vpop.f32.mrb[0].mxu0
        %v6795 = vadd.f32 0.0, %v6794
        %v6796 = vpop.f32.mrb[0].mxu0
        %6797 = vmatprep.mubr.f32.mxu0 0.0
        %6798 = vmatmul.mubr.f32.gmra.mrb[0].mxu0 %v6590
        %v6799 = vpop.f32.mrb[0].mxu0
        %v6800 = vadd.f32 0.0, %v6799
        %v6801 = vpop.f32.mrb[0].mxu0
        %6802 = vmatprep.mubr.f32.mxu0 0.0
        %6803 = vmatmul.mubr.f32.gmra.mrb[0].mxu0 %v6593
        %v6804 = vpop.f32.mrb[0].mxu0
        %v6805 = vadd.f32 0.0, %v6804
        %v6806 = vpop.f32.mrb[0].mxu0
        %6807 = vmatprep.mubr.f32.mxu0 0.0
        %6808 = vmatmul.mubr.f32.gmra.mrb[0].mxu0 %v6596
        %v6809 = vpop.f32.mrb[0].mxu0
        %v6810 = vadd.f32 0.0, %v6809
        %v6811 = vpop.f32.mrb[0].mxu0
        %6812 = vmatprep.mubr.f32.mxu0 0.0
        %6813 = vmatmul.mubr.f32.gmra.mrb[0].mxu0 %v6599
        %v6814 = vpop.f32.mrb[0].mxu0
        %v6815 = vadd.f32 0.0, %v6814
        %v6816 = vpop.f32.mrb[0].mxu0
        %6817 = vmatprep.mubr.f32.mxu0 0.0
        %6818 = vmatmul.mubr.f32.gmra.mrb[0].mxu0 %v6602
        %v6819 = vpop.f32.mrb[0].mxu0
        %v6820 = vadd.f32 0.0, %v6819
        %v6821 = vpop.f32.mrb[0].mxu0
        %6822 = vmatprep.mubr.f32.mxu0 0.0
        %6823 = vmatmul.mubr.f32.gmra.mrb[0].mxu0 %v6605
        %v6824 = vpop.f32.mrb[0].mxu0
        %v6825 = vadd.f32 0.0, %v6824
        %v6826 = vpop.f32.mrb[0].mxu0
        %6827 = vmatprep.mubr.f32.mxu0 0.0
        %6828 = vmatmul.mubr.f32.gmra.mrb[0].mxu0 %v6608
        %v6829 = vpop.f32.mrb[0].mxu0
        %v6830 = vadd.f32 0.0, %v6829
        %v6831 = vpop.f32.mrb[0].mxu0
        %6832 = vmatprep.mubr.f32.mxu0 0.0
        %6833 = vmatmul.mubr.f32.gmra.mrb[0].mxu0 %v6611
        %v6834 = vpop.f32.mrb[0].mxu0
        %v6835 = vadd.f32 0.0, %v6834
        %v6836 = vpop.f32.mrb[0].mxu0
        %6837 = vdwg.mxu0
        %v6838 = vadd.f32 %v6444, %v6680
        %v6839 = vadd.f32 %v6445, %v6685
        %v6840 = vadd.f32 %v6446, %v6690
        %v6841 = vadd.f32 %v6447, %v6695
        %v6842 = vadd.f32 %v6448, %v6700
        %v6843 = vadd.f32 %v6449, %v6705
        %v6844 = vadd.f32 %v6450, %v6710
        %v6845 = vadd.f32 %v6451, %v6715
        %v6846 = vadd.f32 %v6452, %v6720
        %v6847 = vadd.f32 %v6453, %v6725
        %v6848 = vadd.f32 %v6454, %v6730
        %v6849 = vadd.f32 %v6455, %v6735
        %v6850 = vadd.f32 %v6456, %v6740
        %v6851 = vadd.f32 %v6457, %v6745
        %v6852 = vadd.f32 %v6458, %v6750
        %v6853 = vadd.f32 %v6459, %v6755
        %v6854 = vadd.f32 %v6460, %v6760
        %v6855 = vadd.f32 %v6461, %v6765
        %v6856 = vadd.f32 %v6462, %v6770
        %v6857 = vadd.f32 %v6463, %v6775
        %v6858 = vadd.f32 %v6464, %v6780
        %v6859 = vadd.f32 %v6465, %v6785
        %v6860 = vadd.f32 %v6466, %v6790
        %v6861 = vadd.f32 %v6467, %v6795
        %v6862 = vadd.f32 %v6468, %v6800
        %v6863 = vadd.f32 %v6469, %v6805
        %v6864 = vadd.f32 %v6470, %v6810
        %v6865 = vadd.f32 %v6471, %v6815
        %v6866 = vadd.f32 %v6472, %v6820
        %v6867 = vadd.f32 %v6473, %v6825
        %v6868 = vadd.f32 %v6474, %v6830
        %v6869 = vadd.f32 %v6475, %v6835
        %v6870 = vld [vmem:[#allocation3 + $0x12] sm:$0xff]
        %v6871 = vld [vmem:[#allocation3 + $0x1a] sm:$0xff]
        %v6872 = vld [vmem:[#allocation3 + $0x22] sm:$0xff]
        %v6873 = vld [vmem:[#allocation3 + $0x2a] sm:$0xff]
        %v6874 = vld [vmem:[#allocation3 + $0x32] sm:$0xff]
        %v6875 = vld [vmem:[#allocation3 + $0x3a] sm:$0xff]
        %v6876 = vld [vmem:[#allocation3 + $0x42] sm:$0xff]
        %v6877 = vld [vmem:[#allocation3 + $0x4a] sm:$0xff]
        %v6878 = vld [vmem:[#allocation3 + $0x52] sm:$0xff]
        %v6879 = vld [vmem:[#allocation3 + $0x5a] sm:$0xff]
        %v6880 = vld [vmem:[#allocation3 + $0x62] sm:$0xff]
        %v6881 = vld [vmem:[#allocation3 + $0x6a] sm:$0xff]
        %v6882 = vld [vmem:[#allocation3 + $0x72] sm:$0xff]
        %v6883 = vld [vmem:[#allocation3 + $0x7a] sm:$0xff]
        %v6884 = vld [vmem:[#allocation3 + $0x82] sm:$0xff]
        %v6885 = vld [vmem:[#allocation3 + $0x8a] sm:$0xff]
        %v6886 = vld [vmem:[#allocation3 + $0x92] sm:$0xff]
        %v6887 = vld [vmem:[#allocation3 + $0x9a] sm:$0xff]
        %v6888 = vld [vmem:[#allocation3 + $0xa2] sm:$0xff]
        %v6889 = vld [vmem:[#allocation3 + $0xaa] sm:$0xff]
        %v6890 = vld [vmem:[#allocation3 + $0xb2] sm:$0xff]
        %v6891 = vld [vmem:[#allocation3 + $0xba] sm:$0xff]
        %v6892 = vld [vmem:[#allocation3 + $0xc2] sm:$0xff]
        %v6893 = vld [vmem:[#allocation3 + $0xca] sm:$0xff]
        %v6894 = vld [vmem:[#allocation3 + $0xd2] sm:$0xff]
        %v6895 = vld [vmem:[#allocation3 + $0xda] sm:$0xff]
        %v6896 = vld [vmem:[#allocation3 + $0xe2] sm:$0xff]
        %v6897 = vld [vmem:[#allocation3 + $0xea] sm:$0xff]
        %v6898 = vld [vmem:[#allocation3 + $0xf2] sm:$0xff]
        %v6899 = vld [vmem:[#allocation3 + $0xfa] sm:$0xff]
        %v6900 = vld [vmem:[#allocation3 + $0x102] sm:$0xff]
        %v6901 = vld [vmem:[#allocation3 + $0x10a] sm:$0xff]
        %v6902 = vsel %vm1787, %v6870, 0.0
        %v6903 = vsel %vm1788, %v6871, 0.0
        %v6904 = vsel %vm1789, %v6872, 0.0
        %v6905 = vsel %vm1790, %v6873, 0.0
        %v6906 = vsel %vm1791, %v6874, 0.0
        %v6907 = vsel %vm1792, %v6875, 0.0
        %v6908 = vsel %vm1793, %v6876, 0.0
        %v6909 = vsel %vm1794, %v6877, 0.0
        %v6910 = vsel %vm1795, %v6878, 0.0
        %v6911 = vsel %vm1796, %v6879, 0.0
        %v6912 = vsel %vm1797, %v6880, 0.0
        %v6913 = vsel %vm1798, %v6881, 0.0
        %v6914 = vsel %vm1799, %v6882, 0.0
        %v6915 = vsel %vm1800, %v6883, 0.0
        %v6916 = vsel %vm1801, %v6884, 0.0
        %v6917 = vsel %vm1802, %v6885, 0.0
        %v6918 = vsel %vm1803, %v6886, 0.0
        %v6919 = vsel %vm1804, %v6887, 0.0
        %v6920 = vsel %vm1805, %v6888, 0.0
        %v6921 = vsel %vm1806, %v6889, 0.0
        %v6922 = vsel %vm1807, %v6890, 0.0
        %v6923 = vsel %vm1808, %v6891, 0.0
        %v6924 = vsel %vm1809, %v6892, 0.0
        %v6925 = vsel %vm1810, %v6893, 0.0
        %v6926 = vsel %vm1811, %v6894, 0.0
        %v6927 = vsel %vm1812, %v6895, 0.0
        %v6928 = vsel %vm1813, %v6896, 0.0
        %v6929 = vsel %vm1814, %v6897, 0.0
        %v6930 = vsel %vm1815, %v6898, 0.0
        %v6931 = vsel %vm1816, %v6899, 0.0
        %v6932 = vsel %vm1817, %v6900, 0.0
        %v6933 = vsel %vm1818, %v6901, 0.0
        %s6934 = scalar_lea.vmem [#allocation4], 320
        %v6935 = vld [vmem:[%s6934] sm:$0xff]
        %v6936 = vld [vmem:[%s6934 + $0x8] sm:$0xff]
        %v6937 = vld [vmem:[%s6934 + $0x10] sm:$0xff]
        %v6938 = vld [vmem:[%s6934 + $0x18] sm:$0xff]
        %v6939 = vld [vmem:[%s6934 + $0x20] sm:$0xff]
        %v6940 = vld [vmem:[%s6934 + $0x28] sm:$0xff]
        %v6941 = vld [vmem:[%s6934 + $0x30] sm:$0xff]
        %v6942 = vld [vmem:[%s6934 + $0x38] sm:$0xff]
        %v6944 = vsel %vm4766, %v6902, 0
        %v6947 = vsel %vm4766, %v6903, 0
        %v6950 = vsel %vm4766, %v6904, 0
        %v6953 = vsel %vm4766, %v6905, 0
        %v6956 = vsel %vm4766, %v6906, 0
        %v6959 = vsel %vm4766, %v6907, 0
        %v6962 = vsel %vm4766, %v6908, 0
        %v6965 = vsel %vm4766, %v6909, 0
        %v6968 = vsel %vm4766, %v6910, 0
        %v6971 = vsel %vm4766, %v6911, 0
        %v6974 = vsel %vm4766, %v6912, 0
        %v6977 = vsel %vm4766, %v6913, 0
        %v6980 = vsel %vm4766, %v6914, 0
        %v6983 = vsel %vm4766, %v6915, 0
        %v6986 = vsel %vm4766, %v6916, 0
        %v6989 = vsel %vm4766, %v6917, 0
        %v6992 = vsel %vm4766, %v6918, 0
        %v6995 = vsel %vm4766, %v6919, 0
        %v6998 = vsel %vm4766, %v6920, 0
        %v7001 = vsel %vm4766, %v6921, 0
        %v7004 = vsel %vm4766, %v6922, 0
        %v7007 = vsel %vm4766, %v6923, 0
        %v7010 = vsel %vm4766, %v6924, 0
        %v7013 = vsel %vm4766, %v6925, 0
        %v7016 = vsel %vm4766, %v6926, 0
        %v7019 = vsel %vm4766, %v6927, 0
        %v7022 = vsel %vm4766, %v6928, 0
        %v7025 = vsel %vm4766, %v6929, 0
        %v7028 = vsel %vm4766, %v6930, 0
        %v7031 = vsel %vm4766, %v6931, 0
        %v7034 = vsel %vm4766, %v6932, 0
        %v7037 = vsel %vm4766, %v6933, 0
        %7039 = vmatprep.subr.mxu0 0.0
        %7040 = vmatpush1.msra.mxu0 %v6935
        %7041 = vmatprep.subr.mxu0 0.0
        %7042 = vmatpush1.msra.mxu0 %v6936
        %7043 = vmatprep.subr.mxu0 0.0
        %7044 = vmatpush1.msra.mxu0 %v6937
        %7045 = vmatprep.subr.mxu0 0.0
        %7046 = vmatpush1.msra.mxu0 %v6938
        %7047 = vmatprep.subr.mxu0 0.0
        %7048 = vmatpush1.msra.mxu0 %v6939
        %7049 = vmatprep.subr.mxu0 0.0
        %7050 = vmatpush1.msra.mxu0 %v6940
        %7051 = vmatprep.subr.mxu0 0.0
        %7052 = vmatpush1.msra.mxu0 %v6941
        %7053 = vmatprep.subr.mxu0 0.0
        %7054 = vmatpush1.msra.mxu0 %v6942
        %7055 = vmatprep.subr.mxu0 0.0
        %7056 = vmatpush1.msra.mxu0 0.0
        %7057 = vmatprep.subr.mxu0 0.0
        %7058 = vmatpush1.msra.mxu0 0.0
        %7059 = vmatprep.subr.mxu0 0.0
        %7060 = vmatpush1.msra.mxu0 0.0
        %7061 = vmatprep.subr.mxu0 0.0
        %7062 = vmatpush1.msra.mxu0 0.0
        %7063 = vmatprep.subr.mxu0 0.0
        %7064 = vmatpush1.msra.mxu0 0.0
        %7065 = vmatprep.subr.mxu0 0.0
        %7066 = vmatpush1.msra.mxu0 0.0
        %7067 = vmatprep.subr.mxu0 0.0
        %7068 = vmatpush1.msra.mxu0 0.0
        %7069 = vmatprep.subr.mxu0 0.0
        %7070 = vmatpush1.msra.mxu0 0.0
        %7071 = vmatprep.subr.mxu0 0.0
        %7072 = vmatpush1.msra.mxu0 0.0
        %7073 = vmatprep.subr.mxu0 0.0
        %7074 = vmatpush1.msra.mxu0 0.0
        %7075 = vmatprep.subr.mxu0 0.0
        %7076 = vmatpush1.msra.mxu0 0.0
        %7077 = vmatprep.subr.mxu0 0.0
        %7078 = vmatpush1.msra.mxu0 0.0
        %7079 = vmatprep.subr.mxu0 0.0
        %7080 = vmatpush1.msra.mxu0 0.0
        %7081 = vmatprep.subr.mxu0 0.0
        %7082 = vmatpush1.msra.mxu0 0.0
        %7083 = vmatprep.subr.mxu0 0.0
        %7084 = vmatpush1.msra.mxu0 0.0
        %7085 = vmatprep.subr.mxu0 0.0
        %7086 = vmatpush1.msra.mxu0 0.0
        %7087 = vmatprep.subr.mxu0 0.0
        %7088 = vmatpush1.msra.mxu0 0.0
        %7089 = vmatprep.subr.mxu0 0.0
        %7090 = vmatpush1.msra.mxu0 0.0
        %7091 = vmatprep.subr.mxu0 0.0
        %7092 = vmatpush1.msra.mxu0 0.0
        %7093 = vmatprep.subr.mxu0 0.0
        %7094 = vmatpush1.msra.mxu0 0.0
        %7095 = vmatprep.subr.mxu0 0.0
        %7096 = vmatpush1.msra.mxu0 0.0
        %7097 = vmatprep.subr.mxu0 0.0
        %7098 = vmatpush1.msra.mxu0 0.0
        %7099 = vmatprep.subr.mxu0 0.0
        %7100 = vmatpush1.msra.mxu0 0.0
        %7101 = vmatprep.subr.mxu0 0.0
        %7102 = vmatpush1.msra.mxu0 0.0
        %7103 = vmatprep.mubr.f32.mxu0 0.0
        %7104 = vmatmul.mubr.f32.gmra.mrb[0].mxu0 %v6944
        %v7105 = vpop.f32.mrb[0].mxu0
        %v7106 = vadd.f32 0.0, %v7105
        %v7107 = vpop.f32.mrb[0].mxu0
        %7108 = vmatprep.mubr.f32.mxu0 0.0
        %7109 = vmatmul.mubr.f32.gmra.mrb[0].mxu0 %v6947
        %v7110 = vpop.f32.mrb[0].mxu0
        %v7111 = vadd.f32 0.0, %v7110
        %v7112 = vpop.f32.mrb[0].mxu0
        %7113 = vmatprep.mubr.f32.mxu0 0.0
        %7114 = vmatmul.mubr.f32.gmra.mrb[0].mxu0 %v6950
        %v7115 = vpop.f32.mrb[0].mxu0
        %v7116 = vadd.f32 0.0, %v7115
        %v7117 = vpop.f32.mrb[0].mxu0
        %7118 = vmatprep.mubr.f32.mxu0 0.0
        %7119 = vmatmul.mubr.f32.gmra.mrb[0].mxu0 %v6953
        %v7120 = vpop.f32.mrb[0].mxu0
        %v7121 = vadd.f32 0.0, %v7120
        %v7122 = vpop.f32.mrb[0].mxu0
        %7123 = vmatprep.mubr.f32.mxu0 0.0
        %7124 = vmatmul.mubr.f32.gmra.mrb[0].mxu0 %v6956
        %v7125 = vpop.f32.mrb[0].mxu0
        %v7126 = vadd.f32 0.0, %v7125
        %v7127 = vpop.f32.mrb[0].mxu0
        %7128 = vmatprep.mubr.f32.mxu0 0.0
        %7129 = vmatmul.mubr.f32.gmra.mrb[0].mxu0 %v6959
        %v7130 = vpop.f32.mrb[0].mxu0
        %v7131 = vadd.f32 0.0, %v7130
        %v7132 = vpop.f32.mrb[0].mxu0
        %7133 = vmatprep.mubr.f32.mxu0 0.0
        %7134 = vmatmul.mubr.f32.gmra.mrb[0].mxu0 %v6962
        %v7135 = vpop.f32.mrb[0].mxu0
        %v7136 = vadd.f32 0.0, %v7135
        %v7137 = vpop.f32.mrb[0].mxu0
        %7138 = vmatprep.mubr.f32.mxu0 0.0
        %7139 = vmatmul.mubr.f32.gmra.mrb[0].mxu0 %v6965
        %v7140 = vpop.f32.mrb[0].mxu0
        %v7141 = vadd.f32 0.0, %v7140
        %v7142 = vpop.f32.mrb[0].mxu0
        %7143 = vmatprep.mubr.f32.mxu0 0.0
        %7144 = vmatmul.mubr.f32.gmra.mrb[0].mxu0 %v6968
        %v7145 = vpop.f32.mrb[0].mxu0
        %v7146 = vadd.f32 0.0, %v7145
        %v7147 = vpop.f32.mrb[0].mxu0
        %7148 = vmatprep.mubr.f32.mxu0 0.0
        %7149 = vmatmul.mubr.f32.gmra.mrb[0].mxu0 %v6971
        %v7150 = vpop.f32.mrb[0].mxu0
        %v7151 = vadd.f32 0.0, %v7150
        %v7152 = vpop.f32.mrb[0].mxu0
        %7153 = vmatprep.mubr.f32.mxu0 0.0
        %7154 = vmatmul.mubr.f32.gmra.mrb[0].mxu0 %v6974
        %v7155 = vpop.f32.mrb[0].mxu0
        %v7156 = vadd.f32 0.0, %v7155
        %v7157 = vpop.f32.mrb[0].mxu0
        %7158 = vmatprep.mubr.f32.mxu0 0.0
        %7159 = vmatmul.mubr.f32.gmra.mrb[0].mxu0 %v6977
        %v7160 = vpop.f32.mrb[0].mxu0
        %v7161 = vadd.f32 0.0, %v7160
        %v7162 = vpop.f32.mrb[0].mxu0
        %7163 = vmatprep.mubr.f32.mxu0 0.0
        %7164 = vmatmul.mubr.f32.gmra.mrb[0].mxu0 %v6980
        %v7165 = vpop.f32.mrb[0].mxu0
        %v7166 = vadd.f32 0.0, %v7165
        %v7167 = vpop.f32.mrb[0].mxu0
        %7168 = vmatprep.mubr.f32.mxu0 0.0
        %7169 = vmatmul.mubr.f32.gmra.mrb[0].mxu0 %v6983
        %v7170 = vpop.f32.mrb[0].mxu0
        %v7171 = vadd.f32 0.0, %v7170
        %v7172 = vpop.f32.mrb[0].mxu0
        %7173 = vmatprep.mubr.f32.mxu0 0.0
        %7174 = vmatmul.mubr.f32.gmra.mrb[0].mxu0 %v6986
        %v7175 = vpop.f32.mrb[0].mxu0
        %v7176 = vadd.f32 0.0, %v7175
        %v7177 = vpop.f32.mrb[0].mxu0
        %7178 = vmatprep.mubr.f32.mxu0 0.0
        %7179 = vmatmul.mubr.f32.gmra.mrb[0].mxu0 %v6989
        %v7180 = vpop.f32.mrb[0].mxu0
        %v7181 = vadd.f32 0.0, %v7180
        %v7182 = vpop.f32.mrb[0].mxu0
        %7183 = vmatprep.mubr.f32.mxu0 0.0
        %7184 = vmatmul.mubr.f32.gmra.mrb[0].mxu0 %v6992
        %v7185 = vpop.f32.mrb[0].mxu0
        %v7186 = vadd.f32 0.0, %v7185
        %v7187 = vpop.f32.mrb[0].mxu0
        %7188 = vmatprep.mubr.f32.mxu0 0.0
        %7189 = vmatmul.mubr.f32.gmra.mrb[0].mxu0 %v6995
        %v7190 = vpop.f32.mrb[0].mxu0
        %v7191 = vadd.f32 0.0, %v7190
        %v7192 = vpop.f32.mrb[0].mxu0
        %7193 = vmatprep.mubr.f32.mxu0 0.0
        %7194 = vmatmul.mubr.f32.gmra.mrb[0].mxu0 %v6998
        %v7195 = vpop.f32.mrb[0].mxu0
        %v7196 = vadd.f32 0.0, %v7195
        %v7197 = vpop.f32.mrb[0].mxu0
        %7198 = vmatprep.mubr.f32.mxu0 0.0
        %7199 = vmatmul.mubr.f32.gmra.mrb[0].mxu0 %v7001
        %v7200 = vpop.f32.mrb[0].mxu0
        %v7201 = vadd.f32 0.0, %v7200
        %v7202 = vpop.f32.mrb[0].mxu0
        %7203 = vmatprep.mubr.f32.mxu0 0.0
        %7204 = vmatmul.mubr.f32.gmra.mrb[0].mxu0 %v7004
        %v7205 = vpop.f32.mrb[0].mxu0
        %v7206 = vadd.f32 0.0, %v7205
        %v7207 = vpop.f32.mrb[0].mxu0
        %7208 = vmatprep.mubr.f32.mxu0 0.0
        %7209 = vmatmul.mubr.f32.gmra.mrb[0].mxu0 %v7007
        %v7210 = vpop.f32.mrb[0].mxu0
        %v7211 = vadd.f32 0.0, %v7210
        %v7212 = vpop.f32.mrb[0].mxu0
        %7213 = vmatprep.mubr.f32.mxu0 0.0
        %7214 = vmatmul.mubr.f32.gmra.mrb[0].mxu0 %v7010
        %v7215 = vpop.f32.mrb[0].mxu0
        %v7216 = vadd.f32 0.0, %v7215
        %v7217 = vpop.f32.mrb[0].mxu0
        %7218 = vmatprep.mubr.f32.mxu0 0.0
        %7219 = vmatmul.mubr.f32.gmra.mrb[0].mxu0 %v7013
        %v7220 = vpop.f32.mrb[0].mxu0
        %v7221 = vadd.f32 0.0, %v7220
        %v7222 = vpop.f32.mrb[0].mxu0
        %7223 = vmatprep.mubr.f32.mxu0 0.0
        %7224 = vmatmul.mubr.f32.gmra.mrb[0].mxu0 %v7016
        %v7225 = vpop.f32.mrb[0].mxu0
        %v7226 = vadd.f32 0.0, %v7225
        %v7227 = vpop.f32.mrb[0].mxu0
        %7228 = vmatprep.mubr.f32.mxu0 0.0
        %7229 = vmatmul.mubr.f32.gmra.mrb[0].mxu0 %v7019
        %v7230 = vpop.f32.mrb[0].mxu0
        %v7231 = vadd.f32 0.0, %v7230
        %v7232 = vpop.f32.mrb[0].mxu0
        %7233 = vmatprep.mubr.f32.mxu0 0.0
        %7234 = vmatmul.mubr.f32.gmra.mrb[0].mxu0 %v7022
        %v7235 = vpop.f32.mrb[0].mxu0
        %v7236 = vadd.f32 0.0, %v7235
        %v7237 = vpop.f32.mrb[0].mxu0
        %7238 = vmatprep.mubr.f32.mxu0 0.0
        %7239 = vmatmul.mubr.f32.gmra.mrb[0].mxu0 %v7025
        %v7240 = vpop.f32.mrb[0].mxu0
        %v7241 = vadd.f32 0.0, %v7240
        %v7242 = vpop.f32.mrb[0].mxu0
        %7243 = vmatprep.mubr.f32.mxu0 0.0
        %7244 = vmatmul.mubr.f32.gmra.mrb[0].mxu0 %v7028
        %v7245 = vpop.f32.mrb[0].mxu0
        %v7246 = vadd.f32 0.0, %v7245
        %v7247 = vpop.f32.mrb[0].mxu0
        %7248 = vmatprep.mubr.f32.mxu0 0.0
        %7249 = vmatmul.mubr.f32.gmra.mrb[0].mxu0 %v7031
        %v7250 = vpop.f32.mrb[0].mxu0
        %v7251 = vadd.f32 0.0, %v7250
        %v7252 = vpop.f32.mrb[0].mxu0
        %7253 = vmatprep.mubr.f32.mxu0 0.0
        %7254 = vmatmul.mubr.f32.gmra.mrb[0].mxu0 %v7034
        %v7255 = vpop.f32.mrb[0].mxu0
        %v7256 = vadd.f32 0.0, %v7255
        %v7257 = vpop.f32.mrb[0].mxu0
        %7258 = vmatprep.mubr.f32.mxu0 0.0
        %7259 = vmatmul.mubr.f32.gmra.mrb[0].mxu0 %v7037
        %v7260 = vpop.f32.mrb[0].mxu0
        %v7261 = vadd.f32 0.0, %v7260
        %v7262 = vpop.f32.mrb[0].mxu0
        %7263 = vdwg.mxu0
        %v7264 = vadd.f32 %v6838, %v7106
        %v7265 = vadd.f32 %v6839, %v7111
        %v7266 = vadd.f32 %v6840, %v7116
        %v7267 = vadd.f32 %v6841, %v7121
        %v7268 = vadd.f32 %v6842, %v7126
        %v7269 = vadd.f32 %v6843, %v7131
        %v7270 = vadd.f32 %v6844, %v7136
        %v7271 = vadd.f32 %v6845, %v7141
        %v7272 = vadd.f32 %v6846, %v7146
        %v7273 = vadd.f32 %v6847, %v7151
        %v7274 = vadd.f32 %v6848, %v7156
        %v7275 = vadd.f32 %v6849, %v7161
        %v7276 = vadd.f32 %v6850, %v7166
        %v7277 = vadd.f32 %v6851, %v7171
        %v7278 = vadd.f32 %v6852, %v7176
        %v7279 = vadd.f32 %v6853, %v7181
        %v7280 = vadd.f32 %v6854, %v7186
        %v7281 = vadd.f32 %v6855, %v7191
        %v7282 = vadd.f32 %v6856, %v7196
        %v7283 = vadd.f32 %v6857, %v7201
        %v7284 = vadd.f32 %v6858, %v7206
        %v7285 = vadd.f32 %v6859, %v7211
        %v7286 = vadd.f32 %v6860, %v7216
        %v7287 = vadd.f32 %v6861, %v7221
        %v7288 = vadd.f32 %v6862, %v7226
        %v7289 = vadd.f32 %v6863, %v7231
        %v7290 = vadd.f32 %v6864, %v7236
        %v7291 = vadd.f32 %v6865, %v7241
        %v7292 = vadd.f32 %v6866, %v7246
        %v7293 = vadd.f32 %v6867, %v7251
        %v7294 = vadd.f32 %v6868, %v7256
        %v7295 = vadd.f32 %v6869, %v7261
        %v7296 = vld [vmem:[#allocation3 + $0x20] sm:$0xff]
        %v7297 = vld [vmem:[#allocation3 + $0x28] sm:$0xff]
        %v7298 = vld [vmem:[#allocation3 + $0x30] sm:$0xff]
        %v7299 = vld [vmem:[#allocation3 + $0x38] sm:$0xff]
        %v7300 = vld [vmem:[#allocation3 + $0x40] sm:$0xff]
        %v7301 = vld [vmem:[#allocation3 + $0x48] sm:$0xff]
        %v7302 = vld [vmem:[#allocation3 + $0x50] sm:$0xff]
        %v7303 = vld [vmem:[#allocation3 + $0x58] sm:$0xff]
        %v7304 = vld [vmem:[#allocation3 + $0x60] sm:$0xff]
        %v7305 = vld [vmem:[#allocation3 + $0x68] sm:$0xff]
        %v7306 = vld [vmem:[#allocation3 + $0x70] sm:$0xff]
        %v7307 = vld [vmem:[#allocation3 + $0x78] sm:$0xff]
        %v7308 = vld [vmem:[#allocation3 + $0x80] sm:$0xff]
        %v7309 = vld [vmem:[#allocation3 + $0x88] sm:$0xff]
        %v7310 = vld [vmem:[#allocation3 + $0x90] sm:$0xff]
        %v7311 = vld [vmem:[#allocation3 + $0x98] sm:$0xff]
        %v7312 = vld [vmem:[#allocation3 + $0xa0] sm:$0xff]
        %v7313 = vld [vmem:[#allocation3 + $0xa8] sm:$0xff]
        %v7314 = vld [vmem:[#allocation3 + $0xb0] sm:$0xff]
        %v7315 = vld [vmem:[#allocation3 + $0xb8] sm:$0xff]
        %v7316 = vld [vmem:[#allocation3 + $0xc0] sm:$0xff]
        %v7317 = vld [vmem:[#allocation3 + $0xc8] sm:$0xff]
        %v7318 = vld [vmem:[#allocation3 + $0xd0] sm:$0xff]
        %v7319 = vld [vmem:[#allocation3 + $0xd8] sm:$0xff]
        %v7320 = vld [vmem:[#allocation3 + $0xe0] sm:$0xff]
        %v7321 = vld [vmem:[#allocation3 + $0xe8] sm:$0xff]
        %v7322 = vld [vmem:[#allocation3 + $0xf0] sm:$0xff]
        %v7323 = vld [vmem:[#allocation3 + $0xf8] sm:$0xff]
        %v7324 = vld [vmem:[#allocation3 + $0x100] sm:$0xff]
        %v7325 = vld [vmem:[#allocation3 + $0x108] sm:$0xff]
        %v7326 = vld [vmem:[#allocation3 + $0x110] sm:$0xff]
        %v7327 = vld [vmem:[#allocation3 + $0x118] sm:$0xff]
        %v7328 = vsel %vm982, %v7296, 0.0
        %v7329 = vsel %vm983, %v7297, 0.0
        %v7330 = vsel %vm984, %v7298, 0.0
        %v7331 = vsel %vm985, %v7299, 0.0
        %v7332 = vsel %vm986, %v7300, 0.0
        %v7333 = vsel %vm987, %v7301, 0.0
        %v7334 = vsel %vm988, %v7302, 0.0
        %v7335 = vsel %vm989, %v7303, 0.0
        %v7336 = vsel %vm990, %v7304, 0.0
        %v7337 = vsel %vm991, %v7305, 0.0
        %v7338 = vsel %vm992, %v7306, 0.0
        %v7339 = vsel %vm993, %v7307, 0.0
        %v7340 = vsel %vm994, %v7308, 0.0
        %v7341 = vsel %vm995, %v7309, 0.0
        %v7342 = vsel %vm996, %v7310, 0.0
        %v7343 = vsel %vm997, %v7311, 0.0
        %v7344 = vsel %vm998, %v7312, 0.0
        %v7345 = vsel %vm999, %v7313, 0.0
        %v7346 = vsel %vm1000, %v7314, 0.0
        %v7347 = vsel %vm1001, %v7315, 0.0
        %v7348 = vsel %vm1002, %v7316, 0.0
        %v7349 = vsel %vm1003, %v7317, 0.0
        %v7350 = vsel %vm1004, %v7318, 0.0
        %v7351 = vsel %vm1005, %v7319, 0.0
        %v7352 = vsel %vm1006, %v7320, 0.0
        %v7353 = vsel %vm1007, %v7321, 0.0
        %v7354 = vsel %vm1008, %v7322, 0.0
        %v7355 = vsel %vm1009, %v7323, 0.0
        %v7356 = vsel %vm1010, %v7324, 0.0
        %v7357 = vsel %vm1011, %v7325, 0.0
        %v7358 = vsel %vm1012, %v7326, 0.0
        %v7359 = vsel %vm1013, %v7327, 0.0
        %s7360 = scalar_lea.vmem [#allocation4], 384
        %v7361 = vld [vmem:[%s7360] sm:$0xff]
        %v7362 = vld [vmem:[%s7360 + $0x8] sm:$0xff]
        %v7363 = vld [vmem:[%s7360 + $0x10] sm:$0xff]
        %v7364 = vld [vmem:[%s7360 + $0x18] sm:$0xff]
        %v7365 = vld [vmem:[%s7360 + $0x20] sm:$0xff]
        %v7366 = vld [vmem:[%s7360 + $0x28] sm:$0xff]
        %v7367 = vld [vmem:[%s7360 + $0x30] sm:$0xff]
        %v7368 = vld [vmem:[%s7360 + $0x38] sm:$0xff]
        %v7370 = vsel %vm4766, %v7328, 0
        %v7373 = vsel %vm4766, %v7329, 0
        %v7376 = vsel %vm4766, %v7330, 0
        %v7379 = vsel %vm4766, %v7331, 0
        %v7382 = vsel %vm4766, %v7332, 0
        %v7385 = vsel %vm4766, %v7333, 0
        %v7388 = vsel %vm4766, %v7334, 0
        %v7391 = vsel %vm4766, %v7335, 0
        %v7394 = vsel %vm4766, %v7336, 0
        %v7397 = vsel %vm4766, %v7337, 0
        %v7400 = vsel %vm4766, %v7338, 0
        %v7403 = vsel %vm4766, %v7339, 0
        %v7406 = vsel %vm4766, %v7340, 0
        %v7409 = vsel %vm4766, %v7341, 0
        %v7412 = vsel %vm4766, %v7342, 0
        %v7415 = vsel %vm4766, %v7343, 0
        %v7418 = vsel %vm4766, %v7344, 0
        %v7421 = vsel %vm4766, %v7345, 0
        %v7424 = vsel %vm4766, %v7346, 0
        %v7427 = vsel %vm4766, %v7347, 0
        %v7430 = vsel %vm4766, %v7348, 0
        %v7433 = vsel %vm4766, %v7349, 0
        %v7436 = vsel %vm4766, %v7350, 0
        %v7439 = vsel %vm4766, %v7351, 0
        %v7442 = vsel %vm4766, %v7352, 0
        %v7445 = vsel %vm4766, %v7353, 0
        %v7448 = vsel %vm4766, %v7354, 0
        %v7451 = vsel %vm4766, %v7355, 0
        %v7454 = vsel %vm4766, %v7356, 0
        %v7457 = vsel %vm4766, %v7357, 0
        %v7460 = vsel %vm4766, %v7358, 0
        %v7463 = vsel %vm4766, %v7359, 0
        %7465 = vmatprep.subr.mxu0 0.0
        %7466 = vmatpush1.msra.mxu0 %v7361
        %7467 = vmatprep.subr.mxu0 0.0
        %7468 = vmatpush1.msra.mxu0 %v7362
        %7469 = vmatprep.subr.mxu0 0.0
        %7470 = vmatpush1.msra.mxu0 %v7363
        %7471 = vmatprep.subr.mxu0 0.0
        %7472 = vmatpush1.msra.mxu0 %v7364
        %7473 = vmatprep.subr.mxu0 0.0
        %7474 = vmatpush1.msra.mxu0 %v7365
        %7475 = vmatprep.subr.mxu0 0.0
        %7476 = vmatpush1.msra.mxu0 %v7366
        %7477 = vmatprep.subr.mxu0 0.0
        %7478 = vmatpush1.msra.mxu0 %v7367
        %7479 = vmatprep.subr.mxu0 0.0
        %7480 = vmatpush1.msra.mxu0 %v7368
        %7481 = vmatprep.subr.mxu0 0.0
        %7482 = vmatpush1.msra.mxu0 0.0
        %7483 = vmatprep.subr.mxu0 0.0
        %7484 = vmatpush1.msra.mxu0 0.0
        %7485 = vmatprep.subr.mxu0 0.0
        %7486 = vmatpush1.msra.mxu0 0.0
        %7487 = vmatprep.subr.mxu0 0.0
        %7488 = vmatpush1.msra.mxu0 0.0
        %7489 = vmatprep.subr.mxu0 0.0
        %7490 = vmatpush1.msra.mxu0 0.0
        %7491 = vmatprep.subr.mxu0 0.0
        %7492 = vmatpush1.msra.mxu0 0.0
        %7493 = vmatprep.subr.mxu0 0.0
        %7494 = vmatpush1.msra.mxu0 0.0
        %7495 = vmatprep.subr.mxu0 0.0
        %7496 = vmatpush1.msra.mxu0 0.0
        %7497 = vmatprep.subr.mxu0 0.0
        %7498 = vmatpush1.msra.mxu0 0.0
        %7499 = vmatprep.subr.mxu0 0.0
        %7500 = vmatpush1.msra.mxu0 0.0
        %7501 = vmatprep.subr.mxu0 0.0
        %7502 = vmatpush1.msra.mxu0 0.0
        %7503 = vmatprep.subr.mxu0 0.0
        %7504 = vmatpush1.msra.mxu0 0.0
        %7505 = vmatprep.subr.mxu0 0.0
        %7506 = vmatpush1.msra.mxu0 0.0
        %7507 = vmatprep.subr.mxu0 0.0
        %7508 = vmatpush1.msra.mxu0 0.0
        %7509 = vmatprep.subr.mxu0 0.0
        %7510 = vmatpush1.msra.mxu0 0.0
        %7511 = vmatprep.subr.mxu0 0.0
        %7512 = vmatpush1.msra.mxu0 0.0
        %7513 = vmatprep.subr.mxu0 0.0
        %7514 = vmatpush1.msra.mxu0 0.0
        %7515 = vmatprep.subr.mxu0 0.0
        %7516 = vmatpush1.msra.mxu0 0.0
        %7517 = vmatprep.subr.mxu0 0.0
        %7518 = vmatpush1.msra.mxu0 0.0
        %7519 = vmatprep.subr.mxu0 0.0
        %7520 = vmatpush1.msra.mxu0 0.0
        %7521 = vmatprep.subr.mxu0 0.0
        %7522 = vmatpush1.msra.mxu0 0.0
        %7523 = vmatprep.subr.mxu0 0.0
        %7524 = vmatpush1.msra.mxu0 0.0
        %7525 = vmatprep.subr.mxu0 0.0
        %7526 = vmatpush1.msra.mxu0 0.0
        %7527 = vmatprep.subr.mxu0 0.0
        %7528 = vmatpush1.msra.mxu0 0.0
        %7529 = vmatprep.mubr.f32.mxu0 0.0
        %7530 = vmatmul.mubr.f32.gmra.mrb[0].mxu0 %v7370
        %v7531 = vpop.f32.mrb[0].mxu0
        %v7532 = vadd.f32 0.0, %v7531
        %v7533 = vpop.f32.mrb[0].mxu0
        %7534 = vmatprep.mubr.f32.mxu0 0.0
        %7535 = vmatmul.mubr.f32.gmra.mrb[0].mxu0 %v7373
        %v7536 = vpop.f32.mrb[0].mxu0
        %v7537 = vadd.f32 0.0, %v7536
        %v7538 = vpop.f32.mrb[0].mxu0
        %7539 = vmatprep.mubr.f32.mxu0 0.0
        %7540 = vmatmul.mubr.f32.gmra.mrb[0].mxu0 %v7376
        %v7541 = vpop.f32.mrb[0].mxu0
        %v7542 = vadd.f32 0.0, %v7541
        %v7543 = vpop.f32.mrb[0].mxu0
        %7544 = vmatprep.mubr.f32.mxu0 0.0
        %7545 = vmatmul.mubr.f32.gmra.mrb[0].mxu0 %v7379
        %v7546 = vpop.f32.mrb[0].mxu0
        %v7547 = vadd.f32 0.0, %v7546
        %v7548 = vpop.f32.mrb[0].mxu0
        %7549 = vmatprep.mubr.f32.mxu0 0.0
        %7550 = vmatmul.mubr.f32.gmra.mrb[0].mxu0 %v7382
        %v7551 = vpop.f32.mrb[0].mxu0
        %v7552 = vadd.f32 0.0, %v7551
        %v7553 = vpop.f32.mrb[0].mxu0
        %7554 = vmatprep.mubr.f32.mxu0 0.0
        %7555 = vmatmul.mubr.f32.gmra.mrb[0].mxu0 %v7385
        %v7556 = vpop.f32.mrb[0].mxu0
        %v7557 = vadd.f32 0.0, %v7556
        %v7558 = vpop.f32.mrb[0].mxu0
        %7559 = vmatprep.mubr.f32.mxu0 0.0
        %7560 = vmatmul.mubr.f32.gmra.mrb[0].mxu0 %v7388
        %v7561 = vpop.f32.mrb[0].mxu0
        %v7562 = vadd.f32 0.0, %v7561
        %v7563 = vpop.f32.mrb[0].mxu0
        %7564 = vmatprep.mubr.f32.mxu0 0.0
        %7565 = vmatmul.mubr.f32.gmra.mrb[0].mxu0 %v7391
        %v7566 = vpop.f32.mrb[0].mxu0
        %v7567 = vadd.f32 0.0, %v7566
        %v7568 = vpop.f32.mrb[0].mxu0
        %7569 = vmatprep.mubr.f32.mxu0 0.0
        %7570 = vmatmul.mubr.f32.gmra.mrb[0].mxu0 %v7394
        %v7571 = vpop.f32.mrb[0].mxu0
        %v7572 = vadd.f32 0.0, %v7571
        %v7573 = vpop.f32.mrb[0].mxu0
        %7574 = vmatprep.mubr.f32.mxu0 0.0
        %7575 = vmatmul.mubr.f32.gmra.mrb[0].mxu0 %v7397
        %v7576 = vpop.f32.mrb[0].mxu0
        %v7577 = vadd.f32 0.0, %v7576
        %v7578 = vpop.f32.mrb[0].mxu0
        %7579 = vmatprep.mubr.f32.mxu0 0.0
        %7580 = vmatmul.mubr.f32.gmra.mrb[0].mxu0 %v7400
        %v7581 = vpop.f32.mrb[0].mxu0
        %v7582 = vadd.f32 0.0, %v7581
        %v7583 = vpop.f32.mrb[0].mxu0
        %7584 = vmatprep.mubr.f32.mxu0 0.0
        %7585 = vmatmul.mubr.f32.gmra.mrb[0].mxu0 %v7403
        %v7586 = vpop.f32.mrb[0].mxu0
        %v7587 = vadd.f32 0.0, %v7586
        %v7588 = vpop.f32.mrb[0].mxu0
        %7589 = vmatprep.mubr.f32.mxu0 0.0
        %7590 = vmatmul.mubr.f32.gmra.mrb[0].mxu0 %v7406
        %v7591 = vpop.f32.mrb[0].mxu0
        %v7592 = vadd.f32 0.0, %v7591
        %v7593 = vpop.f32.mrb[0].mxu0
        %7594 = vmatprep.mubr.f32.mxu0 0.0
        %7595 = vmatmul.mubr.f32.gmra.mrb[0].mxu0 %v7409
        %v7596 = vpop.f32.mrb[0].mxu0
        %v7597 = vadd.f32 0.0, %v7596
        %v7598 = vpop.f32.mrb[0].mxu0
        %7599 = vmatprep.mubr.f32.mxu0 0.0
        %7600 = vmatmul.mubr.f32.gmra.mrb[0].mxu0 %v7412
        %v7601 = vpop.f32.mrb[0].mxu0
        %v7602 = vadd.f32 0.0, %v7601
        %v7603 = vpop.f32.mrb[0].mxu0
        %7604 = vmatprep.mubr.f32.mxu0 0.0
        %7605 = vmatmul.mubr.f32.gmra.mrb[0].mxu0 %v7415
        %v7606 = vpop.f32.mrb[0].mxu0
        %v7607 = vadd.f32 0.0, %v7606
        %v7608 = vpop.f32.mrb[0].mxu0
        %7609 = vmatprep.mubr.f32.mxu0 0.0
        %7610 = vmatmul.mubr.f32.gmra.mrb[0].mxu0 %v7418
        %v7611 = vpop.f32.mrb[0].mxu0
        %v7612 = vadd.f32 0.0, %v7611
        %v7613 = vpop.f32.mrb[0].mxu0
        %7614 = vmatprep.mubr.f32.mxu0 0.0
        %7615 = vmatmul.mubr.f32.gmra.mrb[0].mxu0 %v7421
        %v7616 = vpop.f32.mrb[0].mxu0
        %v7617 = vadd.f32 0.0, %v7616
        %v7618 = vpop.f32.mrb[0].mxu0
        %7619 = vmatprep.mubr.f32.mxu0 0.0
        %7620 = vmatmul.mubr.f32.gmra.mrb[0].mxu0 %v7424
        %v7621 = vpop.f32.mrb[0].mxu0
        %v7622 = vadd.f32 0.0, %v7621
        %v7623 = vpop.f32.mrb[0].mxu0
        %7624 = vmatprep.mubr.f32.mxu0 0.0
        %7625 = vmatmul.mubr.f32.gmra.mrb[0].mxu0 %v7427
        %v7626 = vpop.f32.mrb[0].mxu0
        %v7627 = vadd.f32 0.0, %v7626
        %v7628 = vpop.f32.mrb[0].mxu0
        %7629 = vmatprep.mubr.f32.mxu0 0.0
        %7630 = vmatmul.mubr.f32.gmra.mrb[0].mxu0 %v7430
        %v7631 = vpop.f32.mrb[0].mxu0
        %v7632 = vadd.f32 0.0, %v7631
        %v7633 = vpop.f32.mrb[0].mxu0
        %7634 = vmatprep.mubr.f32.mxu0 0.0
        %7635 = vmatmul.mubr.f32.gmra.mrb[0].mxu0 %v7433
        %v7636 = vpop.f32.mrb[0].mxu0
        %v7637 = vadd.f32 0.0, %v7636
        %v7638 = vpop.f32.mrb[0].mxu0
        %7639 = vmatprep.mubr.f32.mxu0 0.0
        %7640 = vmatmul.mubr.f32.gmra.mrb[0].mxu0 %v7436
        %v7641 = vpop.f32.mrb[0].mxu0
        %v7642 = vadd.f32 0.0, %v7641
        %v7643 = vpop.f32.mrb[0].mxu0
        %7644 = vmatprep.mubr.f32.mxu0 0.0
        %7645 = vmatmul.mubr.f32.gmra.mrb[0].mxu0 %v7439
        %v7646 = vpop.f32.mrb[0].mxu0
        %v7647 = vadd.f32 0.0, %v7646
        %v7648 = vpop.f32.mrb[0].mxu0
        %7649 = vmatprep.mubr.f32.mxu0 0.0
        %7650 = vmatmul.mubr.f32.gmra.mrb[0].mxu0 %v7442
        %v7651 = vpop.f32.mrb[0].mxu0
        %v7652 = vadd.f32 0.0, %v7651
        %v7653 = vpop.f32.mrb[0].mxu0
        %7654 = vmatprep.mubr.f32.mxu0 0.0
        %7655 = vmatmul.mubr.f32.gmra.mrb[0].mxu0 %v7445
        %v7656 = vpop.f32.mrb[0].mxu0
        %v7657 = vadd.f32 0.0, %v7656
        %v7658 = vpop.f32.mrb[0].mxu0
        %7659 = vmatprep.mubr.f32.mxu0 0.0
        %7660 = vmatmul.mubr.f32.gmra.mrb[0].mxu0 %v7448
        %v7661 = vpop.f32.mrb[0].mxu0
        %v7662 = vadd.f32 0.0, %v7661
        %v7663 = vpop.f32.mrb[0].mxu0
        %7664 = vmatprep.mubr.f32.mxu0 0.0
        %7665 = vmatmul.mubr.f32.gmra.mrb[0].mxu0 %v7451
        %v7666 = vpop.f32.mrb[0].mxu0
        %v7667 = vadd.f32 0.0, %v7666
        %v7668 = vpop.f32.mrb[0].mxu0
        %7669 = vmatprep.mubr.f32.mxu0 0.0
        %7670 = vmatmul.mubr.f32.gmra.mrb[0].mxu0 %v7454
        %v7671 = vpop.f32.mrb[0].mxu0
        %v7672 = vadd.f32 0.0, %v7671
        %v7673 = vpop.f32.mrb[0].mxu0
        %7674 = vmatprep.mubr.f32.mxu0 0.0
        %7675 = vmatmul.mubr.f32.gmra.mrb[0].mxu0 %v7457
        %v7676 = vpop.f32.mrb[0].mxu0
        %v7677 = vadd.f32 0.0, %v7676
        %v7678 = vpop.f32.mrb[0].mxu0
        %7679 = vmatprep.mubr.f32.mxu0 0.0
        %7680 = vmatmul.mubr.f32.gmra.mrb[0].mxu0 %v7460
        %v7681 = vpop.f32.mrb[0].mxu0
        %v7682 = vadd.f32 0.0, %v7681
        %v7683 = vpop.f32.mrb[0].mxu0
        %7684 = vmatprep.mubr.f32.mxu0 0.0
        %7685 = vmatmul.mubr.f32.gmra.mrb[0].mxu0 %v7463
        %v7686 = vpop.f32.mrb[0].mxu0
        %v7687 = vadd.f32 0.0, %v7686
        %v7688 = vpop.f32.mrb[0].mxu0
        %7689 = vdwg.mxu0
        %v7690 = vadd.f32 %v7264, %v7532
        %v7691 = vadd.f32 %v7265, %v7537
        %v7692 = vadd.f32 %v7266, %v7542
        %v7693 = vadd.f32 %v7267, %v7547
        %v7694 = vadd.f32 %v7268, %v7552
        %v7695 = vadd.f32 %v7269, %v7557
        %v7696 = vadd.f32 %v7270, %v7562
        %v7697 = vadd.f32 %v7271, %v7567
        %v7698 = vadd.f32 %v7272, %v7572
        %v7699 = vadd.f32 %v7273, %v7577
        %v7700 = vadd.f32 %v7274, %v7582
        %v7701 = vadd.f32 %v7275, %v7587
        %v7702 = vadd.f32 %v7276, %v7592
        %v7703 = vadd.f32 %v7277, %v7597
        %v7704 = vadd.f32 %v7278, %v7602
        %v7705 = vadd.f32 %v7279, %v7607
        %v7706 = vadd.f32 %v7280, %v7612
        %v7707 = vadd.f32 %v7281, %v7617
        %v7708 = vadd.f32 %v7282, %v7622
        %v7709 = vadd.f32 %v7283, %v7627
        %v7710 = vadd.f32 %v7284, %v7632
        %v7711 = vadd.f32 %v7285, %v7637
        %v7712 = vadd.f32 %v7286, %v7642
        %v7713 = vadd.f32 %v7287, %v7647
        %v7714 = vadd.f32 %v7288, %v7652
        %v7715 = vadd.f32 %v7289, %v7657
        %v7716 = vadd.f32 %v7290, %v7662
        %v7717 = vadd.f32 %v7291, %v7667
        %v7718 = vadd.f32 %v7292, %v7672
        %v7719 = vadd.f32 %v7293, %v7677
        %v7720 = vadd.f32 %v7294, %v7682
        %v7721 = vadd.f32 %v7295, %v7687
        %v7722 = vld [vmem:[#allocation3 + $0x21] sm:$0xff]
        %v7723 = vld [vmem:[#allocation3 + $0x29] sm:$0xff]
        %v7724 = vld [vmem:[#allocation3 + $0x31] sm:$0xff]
        %v7725 = vld [vmem:[#allocation3 + $0x39] sm:$0xff]
        %v7726 = vld [vmem:[#allocation3 + $0x41] sm:$0xff]
        %v7727 = vld [vmem:[#allocation3 + $0x49] sm:$0xff]
        %v7728 = vld [vmem:[#allocation3 + $0x51] sm:$0xff]
        %v7729 = vld [vmem:[#allocation3 + $0x59] sm:$0xff]
        %v7730 = vld [vmem:[#allocation3 + $0x61] sm:$0xff]
        %v7731 = vld [vmem:[#allocation3 + $0x69] sm:$0xff]
        %v7732 = vld [vmem:[#allocation3 + $0x71] sm:$0xff]
        %v7733 = vld [vmem:[#allocation3 + $0x79] sm:$0xff]
        %v7734 = vld [vmem:[#allocation3 + $0x81] sm:$0xff]
        %v7735 = vld [vmem:[#allocation3 + $0x89] sm:$0xff]
        %v7736 = vld [vmem:[#allocation3 + $0x91] sm:$0xff]
        %v7737 = vld [vmem:[#allocation3 + $0x99] sm:$0xff]
        %v7738 = vld [vmem:[#allocation3 + $0xa1] sm:$0xff]
        %v7739 = vld [vmem:[#allocation3 + $0xa9] sm:$0xff]
        %v7740 = vld [vmem:[#allocation3 + $0xb1] sm:$0xff]
        %v7741 = vld [vmem:[#allocation3 + $0xb9] sm:$0xff]
        %v7742 = vld [vmem:[#allocation3 + $0xc1] sm:$0xff]
        %v7743 = vld [vmem:[#allocation3 + $0xc9] sm:$0xff]
        %v7744 = vld [vmem:[#allocation3 + $0xd1] sm:$0xff]
        %v7745 = vld [vmem:[#allocation3 + $0xd9] sm:$0xff]
        %v7746 = vld [vmem:[#allocation3 + $0xe1] sm:$0xff]
        %v7747 = vld [vmem:[#allocation3 + $0xe9] sm:$0xff]
        %v7748 = vld [vmem:[#allocation3 + $0xf1] sm:$0xff]
        %v7749 = vld [vmem:[#allocation3 + $0xf9] sm:$0xff]
        %v7750 = vld [vmem:[#allocation3 + $0x101] sm:$0xff]
        %v7751 = vld [vmem:[#allocation3 + $0x109] sm:$0xff]
        %v7752 = vld [vmem:[#allocation3 + $0x111] sm:$0xff]
        %v7753 = vld [vmem:[#allocation3 + $0x119] sm:$0xff]
        %s7754 = scalar_lea.vmem [#allocation4], 448
        %v7755 = vld [vmem:[%s7754] sm:$0xff]
        %v7756 = vld [vmem:[%s7754 + $0x8] sm:$0xff]
        %v7757 = vld [vmem:[%s7754 + $0x10] sm:$0xff]
        %v7758 = vld [vmem:[%s7754 + $0x18] sm:$0xff]
        %v7759 = vld [vmem:[%s7754 + $0x20] sm:$0xff]
        %v7760 = vld [vmem:[%s7754 + $0x28] sm:$0xff]
        %v7761 = vld [vmem:[%s7754 + $0x30] sm:$0xff]
        %v7762 = vld [vmem:[%s7754 + $0x38] sm:$0xff]
        %v7764 = vsel %vm4766, %v7722, 0
        %v7767 = vsel %vm4766, %v7723, 0
        %v7770 = vsel %vm4766, %v7724, 0
        %v7773 = vsel %vm4766, %v7725, 0
        %v7776 = vsel %vm4766, %v7726, 0
        %v7779 = vsel %vm4766, %v7727, 0
        %v7782 = vsel %vm4766, %v7728, 0
        %v7785 = vsel %vm4766, %v7729, 0
        %v7788 = vsel %vm4766, %v7730, 0
        %v7791 = vsel %vm4766, %v7731, 0
        %v7794 = vsel %vm4766, %v7732, 0
        %v7797 = vsel %vm4766, %v7733, 0
        %v7800 = vsel %vm4766, %v7734, 0
        %v7803 = vsel %vm4766, %v7735, 0
        %v7806 = vsel %vm4766, %v7736, 0
        %v7809 = vsel %vm4766, %v7737, 0
        %v7812 = vsel %vm4766, %v7738, 0
        %v7815 = vsel %vm4766, %v7739, 0
        %v7818 = vsel %vm4766, %v7740, 0
        %v7821 = vsel %vm4766, %v7741, 0
        %v7824 = vsel %vm4766, %v7742, 0
        %v7827 = vsel %vm4766, %v7743, 0
        %v7830 = vsel %vm4766, %v7744, 0
        %v7833 = vsel %vm4766, %v7745, 0
        %v7836 = vsel %vm4766, %v7746, 0
        %v7839 = vsel %vm4766, %v7747, 0
        %v7842 = vsel %vm4766, %v7748, 0
        %v7845 = vsel %vm4766, %v7749, 0
        %v7848 = vsel %vm4766, %v7750, 0
        %v7851 = vsel %vm4766, %v7751, 0
        %v7854 = vsel %vm4766, %v7752, 0
        %v7857 = vsel %vm4766, %v7753, 0
        %7859 = vmatprep.subr.mxu0 0.0
        %7860 = vmatpush1.msra.mxu0 %v7755
        %7861 = vmatprep.subr.mxu0 0.0
        %7862 = vmatpush1.msra.mxu0 %v7756
        %7863 = vmatprep.subr.mxu0 0.0
        %7864 = vmatpush1.msra.mxu0 %v7757
        %7865 = vmatprep.subr.mxu0 0.0
        %7866 = vmatpush1.msra.mxu0 %v7758
        %7867 = vmatprep.subr.mxu0 0.0
        %7868 = vmatpush1.msra.mxu0 %v7759
        %7869 = vmatprep.subr.mxu0 0.0
        %7870 = vmatpush1.msra.mxu0 %v7760
        %7871 = vmatprep.subr.mxu0 0.0
        %7872 = vmatpush1.msra.mxu0 %v7761
        %7873 = vmatprep.subr.mxu0 0.0
        %7874 = vmatpush1.msra.mxu0 %v7762
        %7875 = vmatprep.subr.mxu0 0.0
        %7876 = vmatpush1.msra.mxu0 0.0
        %7877 = vmatprep.subr.mxu0 0.0
        %7878 = vmatpush1.msra.mxu0 0.0
        %7879 = vmatprep.subr.mxu0 0.0
        %7880 = vmatpush1.msra.mxu0 0.0
        %7881 = vmatprep.subr.mxu0 0.0
        %7882 = vmatpush1.msra.mxu0 0.0
        %7883 = vmatprep.subr.mxu0 0.0
        %7884 = vmatpush1.msra.mxu0 0.0
        %7885 = vmatprep.subr.mxu0 0.0
        %7886 = vmatpush1.msra.mxu0 0.0
        %7887 = vmatprep.subr.mxu0 0.0
        %7888 = vmatpush1.msra.mxu0 0.0
        %7889 = vmatprep.subr.mxu0 0.0
        %7890 = vmatpush1.msra.mxu0 0.0
        %7891 = vmatprep.subr.mxu0 0.0
        %7892 = vmatpush1.msra.mxu0 0.0
        %7893 = vmatprep.subr.mxu0 0.0
        %7894 = vmatpush1.msra.mxu0 0.0
        %7895 = vmatprep.subr.mxu0 0.0
        %7896 = vmatpush1.msra.mxu0 0.0
        %7897 = vmatprep.subr.mxu0 0.0
        %7898 = vmatpush1.msra.mxu0 0.0
        %7899 = vmatprep.subr.mxu0 0.0
        %7900 = vmatpush1.msra.mxu0 0.0
        %7901 = vmatprep.subr.mxu0 0.0
        %7902 = vmatpush1.msra.mxu0 0.0
        %7903 = vmatprep.subr.mxu0 0.0
        %7904 = vmatpush1.msra.mxu0 0.0
        %7905 = vmatprep.subr.mxu0 0.0
        %7906 = vmatpush1.msra.mxu0 0.0
        %7907 = vmatprep.subr.mxu0 0.0
        %7908 = vmatpush1.msra.mxu0 0.0
        %7909 = vmatprep.subr.mxu0 0.0
        %7910 = vmatpush1.msra.mxu0 0.0
        %7911 = vmatprep.subr.mxu0 0.0
        %7912 = vmatpush1.msra.mxu0 0.0
        %7913 = vmatprep.subr.mxu0 0.0
        %7914 = vmatpush1.msra.mxu0 0.0
        %7915 = vmatprep.subr.mxu0 0.0
        %7916 = vmatpush1.msra.mxu0 0.0
        %7917 = vmatprep.subr.mxu0 0.0
        %7918 = vmatpush1.msra.mxu0 0.0
        %7919 = vmatprep.subr.mxu0 0.0
        %7920 = vmatpush1.msra.mxu0 0.0
        %7921 = vmatprep.subr.mxu0 0.0
        %7922 = vmatpush1.msra.mxu0 0.0
        %7923 = vmatprep.mubr.f32.mxu0 0.0
        %7924 = vmatmul.mubr.f32.gmra.mrb[0].mxu0 %v7764
        %v7925 = vpop.f32.mrb[0].mxu0
        %v7926 = vadd.f32 0.0, %v7925
        %v7927 = vpop.f32.mrb[0].mxu0
        %7928 = vmatprep.mubr.f32.mxu0 0.0
        %7929 = vmatmul.mubr.f32.gmra.mrb[0].mxu0 %v7767
        %v7930 = vpop.f32.mrb[0].mxu0
        %v7931 = vadd.f32 0.0, %v7930
        %v7932 = vpop.f32.mrb[0].mxu0
        %7933 = vmatprep.mubr.f32.mxu0 0.0
        %7934 = vmatmul.mubr.f32.gmra.mrb[0].mxu0 %v7770
        %v7935 = vpop.f32.mrb[0].mxu0
        %v7936 = vadd.f32 0.0, %v7935
        %v7937 = vpop.f32.mrb[0].mxu0
        %7938 = vmatprep.mubr.f32.mxu0 0.0
        %7939 = vmatmul.mubr.f32.gmra.mrb[0].mxu0 %v7773
        %v7940 = vpop.f32.mrb[0].mxu0
        %v7941 = vadd.f32 0.0, %v7940
        %v7942 = vpop.f32.mrb[0].mxu0
        %7943 = vmatprep.mubr.f32.mxu0 0.0
        %7944 = vmatmul.mubr.f32.gmra.mrb[0].mxu0 %v7776
        %v7945 = vpop.f32.mrb[0].mxu0
        %v7946 = vadd.f32 0.0, %v7945
        %v7947 = vpop.f32.mrb[0].mxu0
        %7948 = vmatprep.mubr.f32.mxu0 0.0
        %7949 = vmatmul.mubr.f32.gmra.mrb[0].mxu0 %v7779
        %v7950 = vpop.f32.mrb[0].mxu0
        %v7951 = vadd.f32 0.0, %v7950
        %v7952 = vpop.f32.mrb[0].mxu0
        %7953 = vmatprep.mubr.f32.mxu0 0.0
        %7954 = vmatmul.mubr.f32.gmra.mrb[0].mxu0 %v7782
        %v7955 = vpop.f32.mrb[0].mxu0
        %v7956 = vadd.f32 0.0, %v7955
        %v7957 = vpop.f32.mrb[0].mxu0
        %7958 = vmatprep.mubr.f32.mxu0 0.0
        %7959 = vmatmul.mubr.f32.gmra.mrb[0].mxu0 %v7785
        %v7960 = vpop.f32.mrb[0].mxu0
        %v7961 = vadd.f32 0.0, %v7960
        %v7962 = vpop.f32.mrb[0].mxu0
        %7963 = vmatprep.mubr.f32.mxu0 0.0
        %7964 = vmatmul.mubr.f32.gmra.mrb[0].mxu0 %v7788
        %v7965 = vpop.f32.mrb[0].mxu0
        %v7966 = vadd.f32 0.0, %v7965
        %v7967 = vpop.f32.mrb[0].mxu0
        %7968 = vmatprep.mubr.f32.mxu0 0.0
        %7969 = vmatmul.mubr.f32.gmra.mrb[0].mxu0 %v7791
        %v7970 = vpop.f32.mrb[0].mxu0
        %v7971 = vadd.f32 0.0, %v7970
        %v7972 = vpop.f32.mrb[0].mxu0
        %7973 = vmatprep.mubr.f32.mxu0 0.0
        %7974 = vmatmul.mubr.f32.gmra.mrb[0].mxu0 %v7794
        %v7975 = vpop.f32.mrb[0].mxu0
        %v7976 = vadd.f32 0.0, %v7975
        %v7977 = vpop.f32.mrb[0].mxu0
        %7978 = vmatprep.mubr.f32.mxu0 0.0
        %7979 = vmatmul.mubr.f32.gmra.mrb[0].mxu0 %v7797
        %v7980 = vpop.f32.mrb[0].mxu0
        %v7981 = vadd.f32 0.0, %v7980
        %v7982 = vpop.f32.mrb[0].mxu0
        %7983 = vmatprep.mubr.f32.mxu0 0.0
        %7984 = vmatmul.mubr.f32.gmra.mrb[0].mxu0 %v7800
        %v7985 = vpop.f32.mrb[0].mxu0
        %v7986 = vadd.f32 0.0, %v7985
        %v7987 = vpop.f32.mrb[0].mxu0
        %7988 = vmatprep.mubr.f32.mxu0 0.0
        %7989 = vmatmul.mubr.f32.gmra.mrb[0].mxu0 %v7803
        %v7990 = vpop.f32.mrb[0].mxu0
        %v7991 = vadd.f32 0.0, %v7990
        %v7992 = vpop.f32.mrb[0].mxu0
        %7993 = vmatprep.mubr.f32.mxu0 0.0
        %7994 = vmatmul.mubr.f32.gmra.mrb[0].mxu0 %v7806
        %v7995 = vpop.f32.mrb[0].mxu0
        %v7996 = vadd.f32 0.0, %v7995
        %v7997 = vpop.f32.mrb[0].mxu0
        %7998 = vmatprep.mubr.f32.mxu0 0.0
        %7999 = vmatmul.mubr.f32.gmra.mrb[0].mxu0 %v7809
        %v8000 = vpop.f32.mrb[0].mxu0
        %v8001 = vadd.f32 0.0, %v8000
        %v8002 = vpop.f32.mrb[0].mxu0
        %8003 = vmatprep.mubr.f32.mxu0 0.0
        %8004 = vmatmul.mubr.f32.gmra.mrb[0].mxu0 %v7812
        %v8005 = vpop.f32.mrb[0].mxu0
        %v8006 = vadd.f32 0.0, %v8005
        %v8007 = vpop.f32.mrb[0].mxu0
        %8008 = vmatprep.mubr.f32.mxu0 0.0
        %8009 = vmatmul.mubr.f32.gmra.mrb[0].mxu0 %v7815
        %v8010 = vpop.f32.mrb[0].mxu0
        %v8011 = vadd.f32 0.0, %v8010
        %v8012 = vpop.f32.mrb[0].mxu0
        %8013 = vmatprep.mubr.f32.mxu0 0.0
        %8014 = vmatmul.mubr.f32.gmra.mrb[0].mxu0 %v7818
        %v8015 = vpop.f32.mrb[0].mxu0
        %v8016 = vadd.f32 0.0, %v8015
        %v8017 = vpop.f32.mrb[0].mxu0
        %8018 = vmatprep.mubr.f32.mxu0 0.0
        %8019 = vmatmul.mubr.f32.gmra.mrb[0].mxu0 %v7821
        %v8020 = vpop.f32.mrb[0].mxu0
        %v8021 = vadd.f32 0.0, %v8020
        %v8022 = vpop.f32.mrb[0].mxu0
        %8023 = vmatprep.mubr.f32.mxu0 0.0
        %8024 = vmatmul.mubr.f32.gmra.mrb[0].mxu0 %v7824
        %v8025 = vpop.f32.mrb[0].mxu0
        %v8026 = vadd.f32 0.0, %v8025
        %v8027 = vpop.f32.mrb[0].mxu0
        %8028 = vmatprep.mubr.f32.mxu0 0.0
        %8029 = vmatmul.mubr.f32.gmra.mrb[0].mxu0 %v7827
        %v8030 = vpop.f32.mrb[0].mxu0
        %v8031 = vadd.f32 0.0, %v8030
        %v8032 = vpop.f32.mrb[0].mxu0
        %8033 = vmatprep.mubr.f32.mxu0 0.0
        %8034 = vmatmul.mubr.f32.gmra.mrb[0].mxu0 %v7830
        %v8035 = vpop.f32.mrb[0].mxu0
        %v8036 = vadd.f32 0.0, %v8035
        %v8037 = vpop.f32.mrb[0].mxu0
        %8038 = vmatprep.mubr.f32.mxu0 0.0
        %8039 = vmatmul.mubr.f32.gmra.mrb[0].mxu0 %v7833
        %v8040 = vpop.f32.mrb[0].mxu0
        %v8041 = vadd.f32 0.0, %v8040
        %v8042 = vpop.f32.mrb[0].mxu0
        %8043 = vmatprep.mubr.f32.mxu0 0.0
        %8044 = vmatmul.mubr.f32.gmra.mrb[0].mxu0 %v7836
        %v8045 = vpop.f32.mrb[0].mxu0
        %v8046 = vadd.f32 0.0, %v8045
        %v8047 = vpop.f32.mrb[0].mxu0
        %8048 = vmatprep.mubr.f32.mxu0 0.0
        %8049 = vmatmul.mubr.f32.gmra.mrb[0].mxu0 %v7839
        %v8050 = vpop.f32.mrb[0].mxu0
        %v8051 = vadd.f32 0.0, %v8050
        %v8052 = vpop.f32.mrb[0].mxu0
        %8053 = vmatprep.mubr.f32.mxu0 0.0
        %8054 = vmatmul.mubr.f32.gmra.mrb[0].mxu0 %v7842
        %v8055 = vpop.f32.mrb[0].mxu0
        %v8056 = vadd.f32 0.0, %v8055
        %v8057 = vpop.f32.mrb[0].mxu0
        %8058 = vmatprep.mubr.f32.mxu0 0.0
        %8059 = vmatmul.mubr.f32.gmra.mrb[0].mxu0 %v7845
        %v8060 = vpop.f32.mrb[0].mxu0
        %v8061 = vadd.f32 0.0, %v8060
        %v8062 = vpop.f32.mrb[0].mxu0
        %8063 = vmatprep.mubr.f32.mxu0 0.0
        %8064 = vmatmul.mubr.f32.gmra.mrb[0].mxu0 %v7848
        %v8065 = vpop.f32.mrb[0].mxu0
        %v8066 = vadd.f32 0.0, %v8065
        %v8067 = vpop.f32.mrb[0].mxu0
        %8068 = vmatprep.mubr.f32.mxu0 0.0
        %8069 = vmatmul.mubr.f32.gmra.mrb[0].mxu0 %v7851
        %v8070 = vpop.f32.mrb[0].mxu0
        %v8071 = vadd.f32 0.0, %v8070
        %v8072 = vpop.f32.mrb[0].mxu0
        %8073 = vmatprep.mubr.f32.mxu0 0.0
        %8074 = vmatmul.mubr.f32.gmra.mrb[0].mxu0 %v7854
        %v8075 = vpop.f32.mrb[0].mxu0
        %v8076 = vadd.f32 0.0, %v8075
        %v8077 = vpop.f32.mrb[0].mxu0
        %8078 = vmatprep.mubr.f32.mxu0 0.0
        %8079 = vmatmul.mubr.f32.gmra.mrb[0].mxu0 %v7857
        %v8080 = vpop.f32.mrb[0].mxu0
        %v8081 = vadd.f32 0.0, %v8080
        %v8082 = vpop.f32.mrb[0].mxu0
        %8083 = vdwg.mxu0
        %v8084 = vadd.f32 %v7690, %v7926
        %v8085 = vadd.f32 %v7691, %v7931
        %v8086 = vadd.f32 %v7692, %v7936
        %v8087 = vadd.f32 %v7693, %v7941
        %v8088 = vadd.f32 %v7694, %v7946
        %v8089 = vadd.f32 %v7695, %v7951
        %v8090 = vadd.f32 %v7696, %v7956
        %v8091 = vadd.f32 %v7697, %v7961
        %v8092 = vadd.f32 %v7698, %v7966
        %v8093 = vadd.f32 %v7699, %v7971
        %v8094 = vadd.f32 %v7700, %v7976
        %v8095 = vadd.f32 %v7701, %v7981
        %v8096 = vadd.f32 %v7702, %v7986
        %v8097 = vadd.f32 %v7703, %v7991
        %v8098 = vadd.f32 %v7704, %v7996
        %v8099 = vadd.f32 %v7705, %v8001
        %v8100 = vadd.f32 %v7706, %v8006
        %v8101 = vadd.f32 %v7707, %v8011
        %v8102 = vadd.f32 %v7708, %v8016
        %v8103 = vadd.f32 %v7709, %v8021
        %v8104 = vadd.f32 %v7710, %v8026
        %v8105 = vadd.f32 %v7711, %v8031
        %v8106 = vadd.f32 %v7712, %v8036
        %v8107 = vadd.f32 %v7713, %v8041
        %v8108 = vadd.f32 %v7714, %v8046
        %v8109 = vadd.f32 %v7715, %v8051
        %v8110 = vadd.f32 %v7716, %v8056
        %v8111 = vadd.f32 %v7717, %v8061
        %v8112 = vadd.f32 %v7718, %v8066
        %v8113 = vadd.f32 %v7719, %v8071
        %v8114 = vadd.f32 %v7720, %v8076
        %v8115 = vadd.f32 %v7721, %v8081
        %v8116 = vld [vmem:[#allocation3 + $0x22] sm:$0xff]
        %v8117 = vld [vmem:[#allocation3 + $0x2a] sm:$0xff]
        %v8118 = vld [vmem:[#allocation3 + $0x32] sm:$0xff]
        %v8119 = vld [vmem:[#allocation3 + $0x3a] sm:$0xff]
        %v8120 = vld [vmem:[#allocation3 + $0x42] sm:$0xff]
        %v8121 = vld [vmem:[#allocation3 + $0x4a] sm:$0xff]
        %v8122 = vld [vmem:[#allocation3 + $0x52] sm:$0xff]
        %v8123 = vld [vmem:[#allocation3 + $0x5a] sm:$0xff]
        %v8124 = vld [vmem:[#allocation3 + $0x62] sm:$0xff]
        %v8125 = vld [vmem:[#allocation3 + $0x6a] sm:$0xff]
        %v8126 = vld [vmem:[#allocation3 + $0x72] sm:$0xff]
        %v8127 = vld [vmem:[#allocation3 + $0x7a] sm:$0xff]
        %v8128 = vld [vmem:[#allocation3 + $0x82] sm:$0xff]
        %v8129 = vld [vmem:[#allocation3 + $0x8a] sm:$0xff]
        %v8130 = vld [vmem:[#allocation3 + $0x92] sm:$0xff]
        %v8131 = vld [vmem:[#allocation3 + $0x9a] sm:$0xff]
        %v8132 = vld [vmem:[#allocation3 + $0xa2] sm:$0xff]
        %v8133 = vld [vmem:[#allocation3 + $0xaa] sm:$0xff]
        %v8134 = vld [vmem:[#allocation3 + $0xb2] sm:$0xff]
        %v8135 = vld [vmem:[#allocation3 + $0xba] sm:$0xff]
        %v8136 = vld [vmem:[#allocation3 + $0xc2] sm:$0xff]
        %v8137 = vld [vmem:[#allocation3 + $0xca] sm:$0xff]
        %v8138 = vld [vmem:[#allocation3 + $0xd2] sm:$0xff]
        %v8139 = vld [vmem:[#allocation3 + $0xda] sm:$0xff]
        %v8140 = vld [vmem:[#allocation3 + $0xe2] sm:$0xff]
        %v8141 = vld [vmem:[#allocation3 + $0xea] sm:$0xff]
        %v8142 = vld [vmem:[#allocation3 + $0xf2] sm:$0xff]
        %v8143 = vld [vmem:[#allocation3 + $0xfa] sm:$0xff]
        %v8144 = vld [vmem:[#allocation3 + $0x102] sm:$0xff]
        %v8145 = vld [vmem:[#allocation3 + $0x10a] sm:$0xff]
        %v8146 = vld [vmem:[#allocation3 + $0x112] sm:$0xff]
        %v8147 = vld [vmem:[#allocation3 + $0x11a] sm:$0xff]
        %v8148 = vsel %vm1787, %v8116, 0.0
        %v8149 = vsel %vm1788, %v8117, 0.0
        %v8150 = vsel %vm1789, %v8118, 0.0
        %v8151 = vsel %vm1790, %v8119, 0.0
        %v8152 = vsel %vm1791, %v8120, 0.0
        %v8153 = vsel %vm1792, %v8121, 0.0
        %v8154 = vsel %vm1793, %v8122, 0.0
        %v8155 = vsel %vm1794, %v8123, 0.0
        %v8156 = vsel %vm1795, %v8124, 0.0
        %v8157 = vsel %vm1796, %v8125, 0.0
        %v8158 = vsel %vm1797, %v8126, 0.0
        %v8159 = vsel %vm1798, %v8127, 0.0
        %v8160 = vsel %vm1799, %v8128, 0.0
        %v8161 = vsel %vm1800, %v8129, 0.0
        %v8162 = vsel %vm1801, %v8130, 0.0
        %v8163 = vsel %vm1802, %v8131, 0.0
        %v8164 = vsel %vm1803, %v8132, 0.0
        %v8165 = vsel %vm1804, %v8133, 0.0
        %v8166 = vsel %vm1805, %v8134, 0.0
        %v8167 = vsel %vm1806, %v8135, 0.0
        %v8168 = vsel %vm1807, %v8136, 0.0
        %v8169 = vsel %vm1808, %v8137, 0.0
        %v8170 = vsel %vm1809, %v8138, 0.0
        %v8171 = vsel %vm1810, %v8139, 0.0
        %v8172 = vsel %vm1811, %v8140, 0.0
        %v8173 = vsel %vm1812, %v8141, 0.0
        %v8174 = vsel %vm1813, %v8142, 0.0
        %v8175 = vsel %vm1814, %v8143, 0.0
        %v8176 = vsel %vm1815, %v8144, 0.0
        %v8177 = vsel %vm1816, %v8145, 0.0
        %v8178 = vsel %vm1817, %v8146, 0.0
        %v8179 = vsel %vm1818, %v8147, 0.0
        %s8180 = scalar_lea.vmem [#allocation4], 512
        %v8181 = vld [vmem:[%s8180] sm:$0xff]
        %v8182 = vld [vmem:[%s8180 + $0x8] sm:$0xff]
        %v8183 = vld [vmem:[%s8180 + $0x10] sm:$0xff]
        %v8184 = vld [vmem:[%s8180 + $0x18] sm:$0xff]
        %v8185 = vld [vmem:[%s8180 + $0x20] sm:$0xff]
        %v8186 = vld [vmem:[%s8180 + $0x28] sm:$0xff]
        %v8187 = vld [vmem:[%s8180 + $0x30] sm:$0xff]
        %v8188 = vld [vmem:[%s8180 + $0x38] sm:$0xff]
        %v8190 = vsel %vm4766, %v8148, 0
        %v8193 = vsel %vm4766, %v8149, 0
        %v8196 = vsel %vm4766, %v8150, 0
        %v8199 = vsel %vm4766, %v8151, 0
        %v8202 = vsel %vm4766, %v8152, 0
        %v8205 = vsel %vm4766, %v8153, 0
        %v8208 = vsel %vm4766, %v8154, 0
        %v8211 = vsel %vm4766, %v8155, 0
        %v8214 = vsel %vm4766, %v8156, 0
        %v8217 = vsel %vm4766, %v8157, 0
        %v8220 = vsel %vm4766, %v8158, 0
        %v8223 = vsel %vm4766, %v8159, 0
        %v8226 = vsel %vm4766, %v8160, 0
        %v8229 = vsel %vm4766, %v8161, 0
        %v8232 = vsel %vm4766, %v8162, 0
        %v8235 = vsel %vm4766, %v8163, 0
        %v8238 = vsel %vm4766, %v8164, 0
        %v8241 = vsel %vm4766, %v8165, 0
        %v8244 = vsel %vm4766, %v8166, 0
        %v8247 = vsel %vm4766, %v8167, 0
        %v8250 = vsel %vm4766, %v8168, 0
        %v8253 = vsel %vm4766, %v8169, 0
        %v8256 = vsel %vm4766, %v8170, 0
        %v8259 = vsel %vm4766, %v8171, 0
        %v8262 = vsel %vm4766, %v8172, 0
        %v8265 = vsel %vm4766, %v8173, 0
        %v8268 = vsel %vm4766, %v8174, 0
        %v8271 = vsel %vm4766, %v8175, 0
        %v8274 = vsel %vm4766, %v8176, 0
        %v8277 = vsel %vm4766, %v8177, 0
        %v8280 = vsel %vm4766, %v8178, 0
        %v8283 = vsel %vm4766, %v8179, 0
        %8285 = vmatprep.subr.mxu0 0.0
        %8286 = vmatpush1.msra.mxu0 %v8181
        %8287 = vmatprep.subr.mxu0 0.0
        %8288 = vmatpush1.msra.mxu0 %v8182
        %8289 = vmatprep.subr.mxu0 0.0
        %8290 = vmatpush1.msra.mxu0 %v8183
        %8291 = vmatprep.subr.mxu0 0.0
        %8292 = vmatpush1.msra.mxu0 %v8184
        %8293 = vmatprep.subr.mxu0 0.0
        %8294 = vmatpush1.msra.mxu0 %v8185
        %8295 = vmatprep.subr.mxu0 0.0
        %8296 = vmatpush1.msra.mxu0 %v8186
        %8297 = vmatprep.subr.mxu0 0.0
        %8298 = vmatpush1.msra.mxu0 %v8187
        %8299 = vmatprep.subr.mxu0 0.0
        %8300 = vmatpush1.msra.mxu0 %v8188
        %8301 = vmatprep.subr.mxu0 0.0
        %8302 = vmatpush1.msra.mxu0 0.0
        %8303 = vmatprep.subr.mxu0 0.0
        %8304 = vmatpush1.msra.mxu0 0.0
        %8305 = vmatprep.subr.mxu0 0.0
        %8306 = vmatpush1.msra.mxu0 0.0
        %8307 = vmatprep.subr.mxu0 0.0
        %8308 = vmatpush1.msra.mxu0 0.0
        %8309 = vmatprep.subr.mxu0 0.0
        %8310 = vmatpush1.msra.mxu0 0.0
        %8311 = vmatprep.subr.mxu0 0.0
        %8312 = vmatpush1.msra.mxu0 0.0
        %8313 = vmatprep.subr.mxu0 0.0
        %8314 = vmatpush1.msra.mxu0 0.0
        %8315 = vmatprep.subr.mxu0 0.0
        %8316 = vmatpush1.msra.mxu0 0.0
        %8317 = vmatprep.subr.mxu0 0.0
        %8318 = vmatpush1.msra.mxu0 0.0
        %8319 = vmatprep.subr.mxu0 0.0
        %8320 = vmatpush1.msra.mxu0 0.0
        %8321 = vmatprep.subr.mxu0 0.0
        %8322 = vmatpush1.msra.mxu0 0.0
        %8323 = vmatprep.subr.mxu0 0.0
        %8324 = vmatpush1.msra.mxu0 0.0
        %8325 = vmatprep.subr.mxu0 0.0
        %8326 = vmatpush1.msra.mxu0 0.0
        %8327 = vmatprep.subr.mxu0 0.0
        %8328 = vmatpush1.msra.mxu0 0.0
        %8329 = vmatprep.subr.mxu0 0.0
        %8330 = vmatpush1.msra.mxu0 0.0
        %8331 = vmatprep.subr.mxu0 0.0
        %8332 = vmatpush1.msra.mxu0 0.0
        %8333 = vmatprep.subr.mxu0 0.0
        %8334 = vmatpush1.msra.mxu0 0.0
        %8335 = vmatprep.subr.mxu0 0.0
        %8336 = vmatpush1.msra.mxu0 0.0
        %8337 = vmatprep.subr.mxu0 0.0
        %8338 = vmatpush1.msra.mxu0 0.0
        %8339 = vmatprep.subr.mxu0 0.0
        %8340 = vmatpush1.msra.mxu0 0.0
        %8341 = vmatprep.subr.mxu0 0.0
        %8342 = vmatpush1.msra.mxu0 0.0
        %8343 = vmatprep.subr.mxu0 0.0
        %8344 = vmatpush1.msra.mxu0 0.0
        %8345 = vmatprep.subr.mxu0 0.0
        %8346 = vmatpush1.msra.mxu0 0.0
        %8347 = vmatprep.subr.mxu0 0.0
        %8348 = vmatpush1.msra.mxu0 0.0
        %8349 = vmatprep.mubr.f32.mxu0 0.0
        %8350 = vmatmul.mubr.f32.gmra.mrb[0].mxu0 %v8190
        %v8351 = vpop.f32.mrb[0].mxu0
        %v8352 = vadd.f32 0.0, %v8351
        %v8353 = vpop.f32.mrb[0].mxu0
        %8354 = vmatprep.mubr.f32.mxu0 0.0
        %8355 = vmatmul.mubr.f32.gmra.mrb[0].mxu0 %v8193
        %v8356 = vpop.f32.mrb[0].mxu0
        %v8357 = vadd.f32 0.0, %v8356
        %v8358 = vpop.f32.mrb[0].mxu0
        %8359 = vmatprep.mubr.f32.mxu0 0.0
        %8360 = vmatmul.mubr.f32.gmra.mrb[0].mxu0 %v8196
        %v8361 = vpop.f32.mrb[0].mxu0
        %v8362 = vadd.f32 0.0, %v8361
        %v8363 = vpop.f32.mrb[0].mxu0
        %8364 = vmatprep.mubr.f32.mxu0 0.0
        %8365 = vmatmul.mubr.f32.gmra.mrb[0].mxu0 %v8199
        %v8366 = vpop.f32.mrb[0].mxu0
        %v8367 = vadd.f32 0.0, %v8366
        %v8368 = vpop.f32.mrb[0].mxu0
        %8369 = vmatprep.mubr.f32.mxu0 0.0
        %8370 = vmatmul.mubr.f32.gmra.mrb[0].mxu0 %v8202
        %v8371 = vpop.f32.mrb[0].mxu0
        %v8372 = vadd.f32 0.0, %v8371
        %v8373 = vpop.f32.mrb[0].mxu0
        %8374 = vmatprep.mubr.f32.mxu0 0.0
        %8375 = vmatmul.mubr.f32.gmra.mrb[0].mxu0 %v8205
        %v8376 = vpop.f32.mrb[0].mxu0
        %v8377 = vadd.f32 0.0, %v8376
        %v8378 = vpop.f32.mrb[0].mxu0
        %8379 = vmatprep.mubr.f32.mxu0 0.0
        %8380 = vmatmul.mubr.f32.gmra.mrb[0].mxu0 %v8208
        %v8381 = vpop.f32.mrb[0].mxu0
        %v8382 = vadd.f32 0.0, %v8381
        %v8383 = vpop.f32.mrb[0].mxu0
        %8384 = vmatprep.mubr.f32.mxu0 0.0
        %8385 = vmatmul.mubr.f32.gmra.mrb[0].mxu0 %v8211
        %v8386 = vpop.f32.mrb[0].mxu0
        %v8387 = vadd.f32 0.0, %v8386
        %v8388 = vpop.f32.mrb[0].mxu0
        %8389 = vmatprep.mubr.f32.mxu0 0.0
        %8390 = vmatmul.mubr.f32.gmra.mrb[0].mxu0 %v8214
        %v8391 = vpop.f32.mrb[0].mxu0
        %v8392 = vadd.f32 0.0, %v8391
        %v8393 = vpop.f32.mrb[0].mxu0
        %8394 = vmatprep.mubr.f32.mxu0 0.0
        %8395 = vmatmul.mubr.f32.gmra.mrb[0].mxu0 %v8217
        %v8396 = vpop.f32.mrb[0].mxu0
        %v8397 = vadd.f32 0.0, %v8396
        %v8398 = vpop.f32.mrb[0].mxu0
        %8399 = vmatprep.mubr.f32.mxu0 0.0
        %8400 = vmatmul.mubr.f32.gmra.mrb[0].mxu0 %v8220
        %v8401 = vpop.f32.mrb[0].mxu0
        %v8402 = vadd.f32 0.0, %v8401
        %v8403 = vpop.f32.mrb[0].mxu0
        %8404 = vmatprep.mubr.f32.mxu0 0.0
        %8405 = vmatmul.mubr.f32.gmra.mrb[0].mxu0 %v8223
        %v8406 = vpop.f32.mrb[0].mxu0
        %v8407 = vadd.f32 0.0, %v8406
        %v8408 = vpop.f32.mrb[0].mxu0
        %8409 = vmatprep.mubr.f32.mxu0 0.0
        %8410 = vmatmul.mubr.f32.gmra.mrb[0].mxu0 %v8226
        %v8411 = vpop.f32.mrb[0].mxu0
        %v8412 = vadd.f32 0.0, %v8411
        %v8413 = vpop.f32.mrb[0].mxu0
        %8414 = vmatprep.mubr.f32.mxu0 0.0
        %8415 = vmatmul.mubr.f32.gmra.mrb[0].mxu0 %v8229
        %v8416 = vpop.f32.mrb[0].mxu0
        %v8417 = vadd.f32 0.0, %v8416
        %v8418 = vpop.f32.mrb[0].mxu0
        %8419 = vmatprep.mubr.f32.mxu0 0.0
        %8420 = vmatmul.mubr.f32.gmra.mrb[0].mxu0 %v8232
        %v8421 = vpop.f32.mrb[0].mxu0
        %v8422 = vadd.f32 0.0, %v8421
        %v8423 = vpop.f32.mrb[0].mxu0
        %8424 = vmatprep.mubr.f32.mxu0 0.0
        %8425 = vmatmul.mubr.f32.gmra.mrb[0].mxu0 %v8235
        %v8426 = vpop.f32.mrb[0].mxu0
        %v8427 = vadd.f32 0.0, %v8426
        %v8428 = vpop.f32.mrb[0].mxu0
        %8429 = vmatprep.mubr.f32.mxu0 0.0
        %8430 = vmatmul.mubr.f32.gmra.mrb[0].mxu0 %v8238
        %v8431 = vpop.f32.mrb[0].mxu0
        %v8432 = vadd.f32 0.0, %v8431
        %v8433 = vpop.f32.mrb[0].mxu0
        %8434 = vmatprep.mubr.f32.mxu0 0.0
        %8435 = vmatmul.mubr.f32.gmra.mrb[0].mxu0 %v8241
        %v8436 = vpop.f32.mrb[0].mxu0
        %v8437 = vadd.f32 0.0, %v8436
        %v8438 = vpop.f32.mrb[0].mxu0
        %8439 = vmatprep.mubr.f32.mxu0 0.0
        %8440 = vmatmul.mubr.f32.gmra.mrb[0].mxu0 %v8244
        %v8441 = vpop.f32.mrb[0].mxu0
        %v8442 = vadd.f32 0.0, %v8441
        %v8443 = vpop.f32.mrb[0].mxu0
        %8444 = vmatprep.mubr.f32.mxu0 0.0
        %8445 = vmatmul.mubr.f32.gmra.mrb[0].mxu0 %v8247
        %v8446 = vpop.f32.mrb[0].mxu0
        %v8447 = vadd.f32 0.0, %v8446
        %v8448 = vpop.f32.mrb[0].mxu0
        %8449 = vmatprep.mubr.f32.mxu0 0.0
        %8450 = vmatmul.mubr.f32.gmra.mrb[0].mxu0 %v8250
        %v8451 = vpop.f32.mrb[0].mxu0
        %v8452 = vadd.f32 0.0, %v8451
        %v8453 = vpop.f32.mrb[0].mxu0
        %8454 = vmatprep.mubr.f32.mxu0 0.0
        %8455 = vmatmul.mubr.f32.gmra.mrb[0].mxu0 %v8253
        %v8456 = vpop.f32.mrb[0].mxu0
        %v8457 = vadd.f32 0.0, %v8456
        %v8458 = vpop.f32.mrb[0].mxu0
        %8459 = vmatprep.mubr.f32.mxu0 0.0
        %8460 = vmatmul.mubr.f32.gmra.mrb[0].mxu0 %v8256
        %v8461 = vpop.f32.mrb[0].mxu0
        %v8462 = vadd.f32 0.0, %v8461
        %v8463 = vpop.f32.mrb[0].mxu0
        %8464 = vmatprep.mubr.f32.mxu0 0.0
        %8465 = vmatmul.mubr.f32.gmra.mrb[0].mxu0 %v8259
        %v8466 = vpop.f32.mrb[0].mxu0
        %v8467 = vadd.f32 0.0, %v8466
        %v8468 = vpop.f32.mrb[0].mxu0
        %8469 = vmatprep.mubr.f32.mxu0 0.0
        %8470 = vmatmul.mubr.f32.gmra.mrb[0].mxu0 %v8262
        %v8471 = vpop.f32.mrb[0].mxu0
        %v8472 = vadd.f32 0.0, %v8471
        %v8473 = vpop.f32.mrb[0].mxu0
        %8474 = vmatprep.mubr.f32.mxu0 0.0
        %8475 = vmatmul.mubr.f32.gmra.mrb[0].mxu0 %v8265
        %v8476 = vpop.f32.mrb[0].mxu0
        %v8477 = vadd.f32 0.0, %v8476
        %v8478 = vpop.f32.mrb[0].mxu0
        %8479 = vmatprep.mubr.f32.mxu0 0.0
        %8480 = vmatmul.mubr.f32.gmra.mrb[0].mxu0 %v8268
        %v8481 = vpop.f32.mrb[0].mxu0
        %v8482 = vadd.f32 0.0, %v8481
        %v8483 = vpop.f32.mrb[0].mxu0
        %8484 = vmatprep.mubr.f32.mxu0 0.0
        %8485 = vmatmul.mubr.f32.gmra.mrb[0].mxu0 %v8271
        %v8486 = vpop.f32.mrb[0].mxu0
        %v8487 = vadd.f32 0.0, %v8486
        %v8488 = vpop.f32.mrb[0].mxu0
        %8489 = vmatprep.mubr.f32.mxu0 0.0
        %8490 = vmatmul.mubr.f32.gmra.mrb[0].mxu0 %v8274
        %v8491 = vpop.f32.mrb[0].mxu0
        %v8492 = vadd.f32 0.0, %v8491
        %v8493 = vpop.f32.mrb[0].mxu0
        %8494 = vmatprep.mubr.f32.mxu0 0.0
        %8495 = vmatmul.mubr.f32.gmra.mrb[0].mxu0 %v8277
        %v8496 = vpop.f32.mrb[0].mxu0
        %v8497 = vadd.f32 0.0, %v8496
        %v8498 = vpop.f32.mrb[0].mxu0
        %8499 = vmatprep.mubr.f32.mxu0 0.0
        %8500 = vmatmul.mubr.f32.gmra.mrb[0].mxu0 %v8280
        %v8501 = vpop.f32.mrb[0].mxu0
        %v8502 = vadd.f32 0.0, %v8501
        %v8503 = vpop.f32.mrb[0].mxu0
        %8504 = vmatprep.mubr.f32.mxu0 0.0
        %8505 = vmatmul.mubr.f32.gmra.mrb[0].mxu0 %v8283
        %v8506 = vpop.f32.mrb[0].mxu0
        %v8507 = vadd.f32 0.0, %v8506
        %v8508 = vpop.f32.mrb[0].mxu0
        %8509 = vdwg.mxu0
        %v8510 = vadd.f32 %v8084, %v8352
        %v8511 = vadd.f32 %v8085, %v8357
        %v8512 = vadd.f32 %v8086, %v8362
        %v8513 = vadd.f32 %v8087, %v8367
        %v8514 = vadd.f32 %v8088, %v8372
        %v8515 = vadd.f32 %v8089, %v8377
        %v8516 = vadd.f32 %v8090, %v8382
        %v8517 = vadd.f32 %v8091, %v8387
        %v8518 = vadd.f32 %v8092, %v8392
        %v8519 = vadd.f32 %v8093, %v8397
        %v8520 = vadd.f32 %v8094, %v8402
        %v8521 = vadd.f32 %v8095, %v8407
        %v8522 = vadd.f32 %v8096, %v8412
        %v8523 = vadd.f32 %v8097, %v8417
        %v8524 = vadd.f32 %v8098, %v8422
        %v8525 = vadd.f32 %v8099, %v8427
        %v8526 = vadd.f32 %v8100, %v8432
        %v8527 = vadd.f32 %v8101, %v8437
        %v8528 = vadd.f32 %v8102, %v8442
        %v8529 = vadd.f32 %v8103, %v8447
        %v8530 = vadd.f32 %v8104, %v8452
        %v8531 = vadd.f32 %v8105, %v8457
        %v8532 = vadd.f32 %v8106, %v8462
        %v8533 = vadd.f32 %v8107, %v8467
        %v8534 = vadd.f32 %v8108, %v8472
        %v8535 = vadd.f32 %v8109, %v8477
        %v8536 = vadd.f32 %v8110, %v8482
        %v8537 = vadd.f32 %v8111, %v8487
        %v8538 = vadd.f32 %v8112, %v8492
        %v8539 = vadd.f32 %v8113, %v8497
        %v8540 = vadd.f32 %v8114, %v8502
        %v8541 = vadd.f32 %v8115, %v8507
        %v8542 = vld [vmem:[%s5] sm:$0x1]
        %v8544 = vlaneseq
        %v8545 = vshrl.u32 %v8544, 7
        %v8546 = vsub.s32 0, %v8545
        %v8547 = vrot.slane %v8542, %v8546
        %v8549 = vmul.f32 %v8510, %v8547
        %v8550 = vmul.f32 %v8511, %v8547
        %v8551 = vmul.f32 %v8512, %v8547
        %v8552 = vmul.f32 %v8513, %v8547
        %v8553 = vmul.f32 %v8514, %v8547
        %v8554 = vmul.f32 %v8515, %v8547
        %v8555 = vmul.f32 %v8516, %v8547
        %v8556 = vmul.f32 %v8517, %v8547
        %v8557 = vmul.f32 %v8518, %v8547
        %v8558 = vmul.f32 %v8519, %v8547
        %v8559 = vmul.f32 %v8520, %v8547
        %v8560 = vmul.f32 %v8521, %v8547
        %v8561 = vmul.f32 %v8522, %v8547
        %v8562 = vmul.f32 %v8523, %v8547
        %v8563 = vmul.f32 %v8524, %v8547
        %v8564 = vmul.f32 %v8525, %v8547
        %v8565 = vmul.f32 %v8526, %v8547
        %v8566 = vmul.f32 %v8527, %v8547
        %v8567 = vmul.f32 %v8528, %v8547
        %v8568 = vmul.f32 %v8529, %v8547
        %v8569 = vmul.f32 %v8530, %v8547
        %v8570 = vmul.f32 %v8531, %v8547
        %v8571 = vmul.f32 %v8532, %v8547
        %v8572 = vmul.f32 %v8533, %v8547
        %v8573 = vmul.f32 %v8534, %v8547
        %v8574 = vmul.f32 %v8535, %v8547
        %v8575 = vmul.f32 %v8536, %v8547
        %v8576 = vmul.f32 %v8537, %v8547
        %v8577 = vmul.f32 %v8538, %v8547
        %v8578 = vmul.f32 %v8539, %v8547
        %v8579 = vmul.f32 %v8540, %v8547
        %v8580 = vmul.f32 %v8541, %v8547
        %v8581 = vld [vmem:[%s6] sm:$0x1]
        %v8583 = vlaneseq
        %v8584 = vshrl.u32 %v8583, 7
        %v8585 = vsub.s32 0, %v8584
        %v8586 = vrot.slane %v8581, %v8585
        %v8588 = vadd.f32 %v8549, %v8586
        %v8589 = vadd.f32 %v8550, %v8586
        %v8590 = vadd.f32 %v8551, %v8586
        %v8591 = vadd.f32 %v8552, %v8586
        %v8592 = vadd.f32 %v8553, %v8586
        %v8593 = vadd.f32 %v8554, %v8586
        %v8594 = vadd.f32 %v8555, %v8586
        %v8595 = vadd.f32 %v8556, %v8586
        %v8596 = vadd.f32 %v8557, %v8586
        %v8597 = vadd.f32 %v8558, %v8586
        %v8598 = vadd.f32 %v8559, %v8586
        %v8599 = vadd.f32 %v8560, %v8586
        %v8600 = vadd.f32 %v8561, %v8586
        %v8601 = vadd.f32 %v8562, %v8586
        %v8602 = vadd.f32 %v8563, %v8586
        %v8603 = vadd.f32 %v8564, %v8586
        %v8604 = vadd.f32 %v8565, %v8586
        %v8605 = vadd.f32 %v8566, %v8586
        %v8606 = vadd.f32 %v8567, %v8586
        %v8607 = vadd.f32 %v8568, %v8586
        %v8608 = vadd.f32 %v8569, %v8586
        %v8609 = vadd.f32 %v8570, %v8586
        %v8610 = vadd.f32 %v8571, %v8586
        %v8611 = vadd.f32 %v8572, %v8586
        %v8612 = vadd.f32 %v8573, %v8586
        %v8613 = vadd.f32 %v8574, %v8586
        %v8614 = vadd.f32 %v8575, %v8586
        %v8615 = vadd.f32 %v8576, %v8586
        %v8616 = vadd.f32 %v8577, %v8586
        %v8617 = vadd.f32 %v8578, %v8586
        %v8618 = vadd.f32 %v8579, %v8586
        %v8619 = vadd.f32 %v8580, %v8586
        %v8620 = vmax.f32 %v8588, 0.0
        %v8621 = vmax.f32 %v8589, 0.0
        %v8622 = vmax.f32 %v8590, 0.0
        %v8623 = vmax.f32 %v8591, 0.0
        %v8624 = vmax.f32 %v8592, 0.0
        %v8625 = vmax.f32 %v8593, 0.0
        %v8626 = vmax.f32 %v8594, 0.0
        %v8627 = vmax.f32 %v8595, 0.0
        %v8628 = vmax.f32 %v8596, 0.0
        %v8629 = vmax.f32 %v8597, 0.0
        %v8630 = vmax.f32 %v8598, 0.0
        %v8631 = vmax.f32 %v8599, 0.0
        %v8632 = vmax.f32 %v8600, 0.0
        %v8633 = vmax.f32 %v8601, 0.0
        %v8634 = vmax.f32 %v8602, 0.0
        %v8635 = vmax.f32 %v8603, 0.0
        %v8636 = vmax.f32 %v8604, 0.0
        %v8637 = vmax.f32 %v8605, 0.0
        %v8638 = vmax.f32 %v8606, 0.0
        %v8639 = vmax.f32 %v8607, 0.0
        %v8640 = vmax.f32 %v8608, 0.0
        %v8641 = vmax.f32 %v8609, 0.0
        %v8642 = vmax.f32 %v8610, 0.0
        %v8643 = vmax.f32 %v8611, 0.0
        %v8644 = vmax.f32 %v8612, 0.0
        %v8645 = vmax.f32 %v8613, 0.0
        %v8646 = vmax.f32 %v8614, 0.0
        %v8647 = vmax.f32 %v8615, 0.0
        %v8648 = vmax.f32 %v8616, 0.0
        %v8649 = vmax.f32 %v8617, 0.0
        %v8650 = vmax.f32 %v8618, 0.0
        %v8651 = vmax.f32 %v8619, 0.0
        %8652 = vst.msk [vmem:[%s328] sm:$0xff] %vm4766, %v8620
        %8653 = vst.msk [vmem:[%s328 + $0x8] sm:$0xff] %vm4766, %v8621
        %8654 = vst.msk [vmem:[%s328 + $0x10] sm:$0xff] %vm4766, %v8622
        %8655 = vst.msk [vmem:[%s328 + $0x18] sm:$0xff] %vm4766, %v8623
        %8656 = vst.msk [vmem:[%s328 + $0x20] sm:$0xff] %vm4766, %v8624
        %8657 = vst.msk [vmem:[%s328 + $0x28] sm:$0xff] %vm4766, %v8625
        %8658 = vst.msk [vmem:[%s328 + $0x30] sm:$0xff] %vm4766, %v8626
        %8659 = vst.msk [vmem:[%s328 + $0x38] sm:$0xff] %vm4766, %v8627
        %8660 = vst.msk [vmem:[%s328 + $0x40] sm:$0xff] %vm4766, %v8628
        %8661 = vst.msk [vmem:[%s328 + $0x48] sm:$0xff] %vm4766, %v8629
        %8662 = vst.msk [vmem:[%s328 + $0x50] sm:$0xff] %vm4766, %v8630
        %8663 = vst.msk [vmem:[%s328 + $0x58] sm:$0xff] %vm4766, %v8631
        %8664 = vst.msk [vmem:[%s328 + $0x60] sm:$0xff] %vm4766, %v8632
        %8665 = vst.msk [vmem:[%s328 + $0x68] sm:$0xff] %vm4766, %v8633
        %8666 = vst.msk [vmem:[%s328 + $0x70] sm:$0xff] %vm4766, %v8634
        %8667 = vst.msk [vmem:[%s328 + $0x78] sm:$0xff] %vm4766, %v8635
        %8668 = vst.msk [vmem:[%s328 + $0x80] sm:$0xff] %vm4766, %v8636
        %8669 = vst.msk [vmem:[%s328 + $0x88] sm:$0xff] %vm4766, %v8637
        %8670 = vst.msk [vmem:[%s328 + $0x90] sm:$0xff] %vm4766, %v8638
        %8671 = vst.msk [vmem:[%s328 + $0x98] sm:$0xff] %vm4766, %v8639
        %8672 = vst.msk [vmem:[%s328 + $0xa0] sm:$0xff] %vm4766, %v8640
        %8673 = vst.msk [vmem:[%s328 + $0xa8] sm:$0xff] %vm4766, %v8641
        %8674 = vst.msk [vmem:[%s328 + $0xb0] sm:$0xff] %vm4766, %v8642
        %8675 = vst.msk [vmem:[%s328 + $0xb8] sm:$0xff] %vm4766, %v8643
        %8676 = vst.msk [vmem:[%s328 + $0xc0] sm:$0xff] %vm4766, %v8644
        %8677 = vst.msk [vmem:[%s328 + $0xc8] sm:$0xff] %vm4766, %v8645
        %8678 = vst.msk [vmem:[%s328 + $0xd0] sm:$0xff] %vm4766, %v8646
        %8679 = vst.msk [vmem:[%s328 + $0xd8] sm:$0xff] %vm4766, %v8647
        %8680 = vst.msk [vmem:[%s328 + $0xe0] sm:$0xff] %vm4766, %v8648
        %8681 = vst.msk [vmem:[%s328 + $0xe8] sm:$0xff] %vm4766, %v8649
        %8682 = vst.msk [vmem:[%s328 + $0xf0] sm:$0xff] %vm4766, %v8650
        %8683 = vst.msk [vmem:[%s328 + $0xf8] sm:$0xff] %vm4766, %v8651
        %p8684 = scmp.lt.s32.totalorder %s21, 1
        %s8685 = scalar_select %p8684, %s21, 1
        %s8686 = smul.addr %s8685, 32
        %s8687 = smul.addr %s8686, 8
        %s8688 = scalar_lea.vmem %s7, %s8687
        %p8689 = scmp.lt.s32.totalorder %s21, 1
        %s8690 = scalar_select %p8689, %s21, 1
        %s8691 = smul.addr %s8690, 32
        %s8692 = smul.addr %s8691, 8
        %s8693 = scalar_lea.vmem %s8, %s8692
        // Predicated region
        $region53: #{tpu_custom_call.1} parent=47 // pred_check
          %p8694 = pneg %p191
        $region54: #{tpu_custom_call.1} parent=47 // pred_check_branch
          %8696 = sbr.rel (%p8694) target = $region56
        $region55: #{tpu_custom_call.1} parent=47 // pred_region
          _
        $region56: #{tpu_custom_call.1} parent=47 // pred_fallthru
          _
        // Predicated region
        $region57: #{tpu_custom_call.1} parent=47 // pred_check
          %p8697 = pneg %p217
        $region58: #{tpu_custom_call.1} parent=47 // pred_check_branch
          %8699 = sbr.rel (%p8697) target = $region60
        $region59: #{tpu_custom_call.1} parent=47 // pred_region
          _
        $region60: #{tpu_custom_call.1} parent=47 // pred_fallthru
          _
      $region48: #{tpu_custom_call.1} parent=5 // pred_fallthru
        _
      %p8700 = scmp.le.s32.totalorder 2, %s16
      // Predicated region
      $region61: #{tpu_custom_call.1} parent=5 // pred_check
        %p8701 = pneg %p8700
      $region62: #{tpu_custom_call.1} parent=5 // pred_check_branch
        %8703 = sbr.rel (%p8701) target = $region64
      $region63: #{tpu_custom_call.1} parent=5 // pred_region
        %s8704 = ssub.s32 %s16, 2
        // Predicated region
        $region65: #{tpu_custom_call.1} parent=63 // pred_check
          %p8705 = pneg %p197
        $region66: #{tpu_custom_call.1} parent=63 // pred_check_branch
          %8707 = sbr.rel (%p8705) target = $region68
        $region67: #{tpu_custom_call.1} parent=63 // pred_region
          %p8708 = scmp.lt.s32.totalorder %s22, 1
          %s8709 = scalar_select %p8708, %s22, 1
          %s8710 = smul.addr %s8709, 32
          %s8711 = smul.addr %s8710, 8
          %s8712 = scalar_lea.vmem %s7, %s8711
        $region68: #{tpu_custom_call.1} parent=63 // pred_fallthru
          _
        // Predicated region
        $region69: #{tpu_custom_call.1} parent=63 // pred_check
          %p8713 = pneg %p223
        $region70: #{tpu_custom_call.1} parent=63 // pred_check_branch
          %8715 = sbr.rel (%p8713) target = $region72
        $region71: #{tpu_custom_call.1} parent=63 // pred_region
          %p8716 = scmp.lt.s32.totalorder %s22, 1
          %s8717 = scalar_select %p8716, %s22, 1
          %s8718 = smul.addr %s8717, 32
          %s8719 = smul.addr %s8718, 8
          %s8720 = scalar_lea.vmem %s8, %s8719
        $region72: #{tpu_custom_call.1} parent=63 // pred_fallthru
          _
      $region64: #{tpu_custom_call.1} parent=5 // pred_fallthru
        _
    $region6: #{tpu_custom_call.1} parent=1 // loop_footer
      %s20 = sadd.s32 1, %s16
    $region7: #{tpu_custom_call.1} parent=1 // loop_footer_branch
      %15 = sbr.rel target = $region3
    $region8: #{tpu_custom_call.1} parent=1 // loop_exit
      _
    %8721 = vsyncpa [#allocation5], 1
    %s8722 = scalar_lea.sflag [#allocation5], 1
    %8723 = vsyncpa %s8722, 1

</llo_original>
